<compile_context>
chip_gen: v7x
topology: tpu7x:2x2x1
jax: 0.10.0
libtpu: 0.0.40
codegen_flags: <defaults>
</compile_context>

<pallas_src>
import numpy as np
import jax
import jax.numpy as jnp
from jax import lax
from jax.experimental import pallas as pl
from jax.experimental.pallas import tpu as pltpu

LEAKY_SLOPE = 0.2
BN_EPS = 1e-5
GRAY_COEFF = (0.2989, 0.587, 0.114)

# Conv stack geometry (valid 3x3 convs on a 96x96 grayscale input):
#   conv1: 1->2, stride 1, 96 -> 94
#   conv2: 2->4, stride 2, 94 -> 46
#   conv3: 4->8, stride 2, 46 -> 22      (8 * 22 * 22 = 3872 FC inputs)
H1, H2, H3 = 94, 46, 22
C1, C2, C3 = 2, 4, 8


def _leaky(v):
    return jnp.where(v >= 0.0, v, LEAKY_SLOPE * v)


# ----------------------------------------------------------------------------
# The single fused kernel: one image per grid step, everything VMEM-resident.
# ----------------------------------------------------------------------------
def _fused_kernel(obs_ref,
                  gwb1_ref, rs2_ref, wb2_ref, rs3_ref, wb3_ref,
                  cb1_ref, cb2_ref, cb3_ref,
                  w1p_ref, fb1_ref, w2_ref, fb2_ref, w3_ref, fb3_ref,
                  w4_ref, fb4_ref, w5_ref, fb5_ref,
                  out_ref):
    f32 = jnp.float32
    obs = obs_ref[0]                       # (96, 288): row-major (x, rgb) on the lane axis

    # conv1: grayscale weights, 3x3 stride-1 conv and BN scale are all folded into GWB1.
    a1 = None
    for ky in range(3):
        c = jnp.dot(obs[ky:ky + H1, :], gwb1_ref[ky], preferred_element_type=f32)
        a1 = c if a1 is None else a1 + c
    a1 = _leaky(a1 + cb1_ref[...])         # (94, 2*94)  = a1[row, ci*94 + col]

    # conv2 (stride 2): 0/1 row-subsample matmul, then banded weight matmul.
    a2 = None
    for ky in range(3):
        rows = jnp.dot(rs2_ref[ky], a1, preferred_element_type=f32)    # (46, 188)
        c = jnp.dot(rows, wb2_ref[ky], preferred_element_type=f32)     # (46, 184)
        a2 = c if a2 is None else a2 + c
    a2 = _leaky(a2 + cb2_ref[...])         # (46, 4*46)

    # conv3 (stride 2): same structure -> lane-dense features (22, 8*22).
    ft = None
    for ky in range(3):
        rows = jnp.dot(rs3_ref[ky], a2, preferred_element_type=f32)    # (22, 184)
        c = jnp.dot(rows, wb3_ref[ky], preferred_element_type=f32)     # (22, 176)
        ft = c if ft is None else ft + c
    ft = _leaky(ft + cb3_ref[...])         # (22, 176) = feat[y, co*22 + x]

    # fc1: W1 is host-permuted to (22, 176, 64), matching the feature layout, so the
    # 3872-wide contraction is 22 small accumulated matmuls and needs no relayout.
    h = None
    for y in range(H3):
        c = jnp.dot(ft[y:y + 1, :], w1p_ref[y], preferred_element_type=f32)   # (1, 64)
        h = c if h is None else h + c
    h = _leaky(h + fb1_ref[...])

    # fc2..fc5 (BN folded into weights / bias rows), then the final Sigmoid.
    h = _leaky(jnp.dot(h, w2_ref[...], preferred_element_type=f32) + fb2_ref[...])
    h = _leaky(jnp.dot(h, w3_ref[...], preferred_element_type=f32) + fb3_ref[...])
    h = _leaky(jnp.dot(h, w4_ref[...], preferred_element_type=f32) + fb4_ref[...])
    h = _leaky(jnp.dot(h, w5_ref[...], preferred_element_type=f32) + fb5_ref[...])
    # Spec head is Linear -> BatchNorm1d -> LeakyReLU -> Sigmoid, so sigmoid comes last.
    out_ref[0] = 1.0 / (1.0 + jnp.exp(-h))


def multi_class_network_forward(observation, prep):
    """Jitted forward: two free reshapes + one pallas_call."""
    B = observation.shape[0]
    obs2 = observation.reshape(B, 96, 96 * 3)      # free reshape of contiguous NHWC

    def const_spec(a):
        nd = a.ndim
        return pl.BlockSpec(a.shape, lambda b, _nd=nd: (0,) * _nd)  # VMEM-resident

    out = pl.pallas_call(
        _fused_kernel,
        out_shape=jax.ShapeDtypeStruct((B, 1, 4), jnp.float32),
        grid=(B,),
        in_specs=[pl.BlockSpec((1, 96, 288), lambda b: (b, 0, 0))]
                 + [const_spec(a) for a in prep],
        out_specs=pl.BlockSpec((1, 1, 4), lambda b: (b, 0, 0)),
        compiler_params=pltpu.CompilerParams(dimension_semantics=("parallel",)),
    )(obs2, *prep)
    return out.reshape(B, 4)


# ----------------------------------------------------------------------------
# One-time, host-side parameter preprocessing (model-load time, NOT in the jit).
# ----------------------------------------------------------------------------
def _fold_bn(bias, gamma, beta, mean, var):
    s = gamma / np.sqrt(var + BN_EPS)
    return s.astype(np.float32), (beta + (bias - mean) * s).astype(np.float32)


def _rsel_stack(h_out, h_in, stride):
    m = np.zeros((3, h_out, h_in), np.float32)
    for ky in range(3):
        m[ky, np.arange(h_out), stride * np.arange(h_out) + ky] = 1.0
    return m


def _banded_stack(w, scale, stride, w_in, w_out):
    cout, cin = w.shape[0], w.shape[1]
    m = np.zeros((3, cin * w_in, cout * w_out), np.float32)
    xo = np.arange(w_out)
    for ky in range(3):
        for co in range(cout):
            for ci in range(cin):
                for kx in range(3):
                    m[ky, ci * w_in + stride * xo + kx, co * w_out + xo] += (
                        w[co, ci, ky, kx] * scale[co])
    return m


def prepare_inputs(params):
    conv = [{k: np.asarray(v, np.float32) for k, v in c.items()} for c in params["conv"]]
    fc = [{k: np.asarray(v, np.float32) for k, v in f.items()} for f in params["fc"]]

    s1, b1 = _fold_bn(conv[0]["b"], conv[0]["gamma"], conv[0]["beta"], conv[0]["mean"], conv[0]["var"])
    s2, b2 = _fold_bn(conv[1]["b"], conv[1]["gamma"], conv[1]["beta"], conv[1]["mean"], conv[1]["var"])
    s3, b3 = _fold_bn(conv[2]["b"], conv[2]["gamma"], conv[2]["beta"], conv[2]["mean"], conv[2]["var"])

    # conv1 + grayscale fused: GWB1_ky[3*(xo+kx)+ch, co*94+xo] = coeff[ch]*w1[co,0,ky,kx]*s1[co]
    coeff = np.asarray(GRAY_COEFF, np.float32)
    w1c = conv[0]["w"]
    gwb1 = np.zeros((3, 3 * 96, C1 * H1), np.float32)
    for ky in range(3):
        for co in range(C1):
            for kx in range(3):
                wv = w1c[co, 0, ky, kx] * s1[co]
                for xo in range(H1):
                    gwb1[ky, 3 * (xo + kx):3 * (xo + kx) + 3, co * H1 + xo] += coeff * wv

    rs2 = _rsel_stack(H2, H1, 2)
    wb2 = _banded_stack(conv[1]["w"], s2, 2, H1, H2)
    rs3 = _rsel_stack(H3, H2, 2)
    wb3 = _banded_stack(conv[2]["w"], s3, 2, H2, H3)

    cb1 = np.repeat(b1, H1)[None, :].astype(np.float32)    # (1, 188)
    cb2 = np.repeat(b2, H2)[None, :].astype(np.float32)    # (1, 184)
    cb3 = np.repeat(b3, H3)[None, :].astype(np.float32)    # (1, 176)

    fc_mats = []
    for i, f in enumerate(fc):
        s, bb = _fold_bn(f["b"], f["gamma"], f["beta"], f["mean"], f["var"])
        wt = (f["w"].T * s[None, :]).astype(np.float32)     # (fin, fout), BN scale folded
        if i == 0:
            # PyTorch flatten order is c*484 + y*22 + x; permute to kernel's (y, c*22+x).
            wt = wt.reshape(C3, H3, H3, 64).transpose(1, 0, 2, 3).reshape(H3, C3 * H3, 64)
        fc_mats += [wt, bb[None, :].astype(np.float32)]

    return tuple([gwb1, rs2, wb2, rs3, wb3, cb1, cb2, cb3] + fc_mats)


# ----------------------------------------------------------------------------
# Pure-JAX reference (PyTorch semantics, eval-mode BN) for correctness checking.
# ----------------------------------------------------------------------------
def reference_forward(observation, params):
    B = observation.shape[0]
    gray = (observation[..., 0] * GRAY_COEFF[0] + observation[..., 1] * GRAY_COEFF[1]
            + observation[..., 2] * GRAY_COEFF[2])
    x = gray.reshape(B, 1, 96, 96)
    sh = (1, -1, 1, 1)
    for c, s in zip(params["conv"], (1, 2, 2)):
        x = lax.conv_general_dilated(x, c["w"], (s, s), "VALID",
                                     dimension_numbers=("NCHW", "OIHW", "NCHW"))
        x = x + c["b"].reshape(sh)
        x = ((x - c["mean"].reshape(sh)) / jnp.sqrt(c["var"].reshape(sh) + BN_EPS)
             * c["gamma"].reshape(sh) + c["beta"].reshape(sh))
        x = jnp.where(x >= 0.0, x, LEAKY_SLOPE * x)
    h = x.reshape(B, -1)
    for f in params["fc"]:
        h = h @ f["w"].T + f["b"]
        h = (h - f["mean"]) / jnp.sqrt(f["var"] + BN_EPS) * f["gamma"] + f["beta"]
        h = jnp.where(h >= 0.0, h, LEAKY_SLOPE * h)
    return 1.0 / (1.0 + jnp.exp(-h))


# ----------------------------------------------------------------------------
# Deterministic parameter construction (synthetic, matching the module's shapes)
# ----------------------------------------------------------------------------
def init_params(key):
    conv_specs = [(1, 2), (2, 4), (4, 8)]            # (Cin, Cout), k=3
    fc_specs = [(8 * 22 * 22, 64), (64, 32), (32, 16), (16, 8), (8, 4)]
    keys = iter(jax.random.split(key, 8 * (len(conv_specs) + len(fc_specs))))

    def bn(n):
        return dict(
            gamma=1.0 + 0.1 * jax.random.normal(next(keys), (n,), jnp.float32),
            beta=0.1 * jax.random.normal(next(keys), (n,), jnp.float32),
            mean=0.1 * jax.random.normal(next(keys), (n,), jnp.float32),
            var=0.5 + jax.random.uniform(next(keys), (n,), jnp.float32),
        )

    convs = []
    for cin, cout in conv_specs:
        w = 0.1 * jax.random.normal(next(keys), (cout, cin, 3, 3), jnp.float32)
        b = 0.1 * jax.random.normal(next(keys), (cout,), jnp.float32)
        convs.append(dict(w=w, b=b, **bn(cout)))

    fcs = []
    for fin, fout in fc_specs:
        w = 0.05 * jax.random.normal(next(keys), (fout, fin), jnp.float32)
        b = 0.1 * jax.random.normal(next(keys), (fout,), jnp.float32)
        fcs.append(dict(w=w, b=b, **bn(fout)))

    return dict(conv=convs, fc=fcs)


if __name__ == "__main__":
    key = jax.random.PRNGKey(0)
    k_obs, k_par = jax.random.split(key)
    # batch=2; 96x96x3 is dictated by the architecture (8*22*22 FC input)
    observation = jax.random.uniform(k_obs, (2, 96, 96, 3), jnp.float32)
    params = init_params(k_par)

    prep = prepare_inputs(params)     # model-load time; hoisted out of the hot path

    fwd = jax.jit(multi_class_network_forward)
    out = jax.block_until_ready(fwd(observation, prep))

    assert out.shape == (2, 4) and out.dtype == jnp.float32
    assert bool(jnp.all(jnp.isfinite(out)))
    assert bool(jnp.all((out >= 0.0) & (out <= 1.0)))

    ref = jax.block_until_ready(jax.jit(reference_forward)(observation, params))
    max_err = float(jnp.max(jnp.abs(out - ref)))
    assert max_err < 2e-3, f"mismatch vs reference: {max_err}"

    print("KERNEL_OK")
</pallas_src>

<mosaic_0001>
module attributes {stable_mosaic.version = 11 : i64} {
  func.func @_fused_kernel(%arg0: i32, %arg1: memref<1x96x288xf32, #tpu.memory_space<vmem>>, %arg2: memref<3x288x188xf32, #tpu.memory_space<vmem>>, %arg3: memref<3x46x94xf32, #tpu.memory_space<vmem>>, %arg4: memref<3x188x184xf32, #tpu.memory_space<vmem>>, %arg5: memref<3x22x46xf32, #tpu.memory_space<vmem>>, %arg6: memref<3x184x176xf32, #tpu.memory_space<vmem>>, %arg7: memref<1x188xf32, #tpu.memory_space<vmem>>, %arg8: memref<1x184xf32, #tpu.memory_space<vmem>>, %arg9: memref<1x176xf32, #tpu.memory_space<vmem>>, %arg10: memref<22x176x64xf32, #tpu.memory_space<vmem>>, %arg11: memref<1x64xf32, #tpu.memory_space<vmem>>, %arg12: memref<64x32xf32, #tpu.memory_space<vmem>>, %arg13: memref<1x32xf32, #tpu.memory_space<vmem>>, %arg14: memref<32x16xf32, #tpu.memory_space<vmem>>, %arg15: memref<1x16xf32, #tpu.memory_space<vmem>>, %arg16: memref<16x8xf32, #tpu.memory_space<vmem>>, %arg17: memref<1x8xf32, #tpu.memory_space<vmem>>, %arg18: memref<8x4xf32, #tpu.memory_space<vmem>>, %arg19: memref<1x4xf32, #tpu.memory_space<vmem>>, %arg20: memref<1x1x4xf32, #tpu.memory_space<vmem>>) attributes {dimension_semantics = [#tpu.dimension_semantics<parallel>], iteration_bounds = array<i64: 2>, scalar_prefetch = 0 : i64, scratch_operands = 0 : i64, tpu.core_type = #tpu.core_type<tc>, window_params = [{transform_indices = @transform_0, window_bounds = array<i64: 1, 96, 288>}, {pipeline_mode = #tpu.pipeline_mode<synchronous>, transform_indices = @transform_1, window_bounds = array<i64: 3, 288, 188>}, {pipeline_mode = #tpu.pipeline_mode<synchronous>, transform_indices = @transform_2, window_bounds = array<i64: 3, 46, 94>}, {pipeline_mode = #tpu.pipeline_mode<synchronous>, transform_indices = @transform_3, window_bounds = array<i64: 3, 188, 184>}, {pipeline_mode = #tpu.pipeline_mode<synchronous>, transform_indices = @transform_4, window_bounds = array<i64: 3, 22, 46>}, {pipeline_mode = #tpu.pipeline_mode<synchronous>, transform_indices = @transform_5, window_bounds = array<i64: 3, 184, 176>}, {pipeline_mode = #tpu.pipeline_mode<synchronous>, transform_indices = @transform_6, window_bounds = array<i64: 1, 188>}, {pipeline_mode = #tpu.pipeline_mode<synchronous>, transform_indices = @transform_7, window_bounds = array<i64: 1, 184>}, {pipeline_mode = #tpu.pipeline_mode<synchronous>, transform_indices = @transform_8, window_bounds = array<i64: 1, 176>}, {pipeline_mode = #tpu.pipeline_mode<synchronous>, transform_indices = @transform_9, window_bounds = array<i64: 22, 176, 64>}, {pipeline_mode = #tpu.pipeline_mode<synchronous>, transform_indices = @transform_10, window_bounds = array<i64: 1, 64>}, {pipeline_mode = #tpu.pipeline_mode<synchronous>, transform_indices = @transform_11, window_bounds = array<i64: 64, 32>}, {pipeline_mode = #tpu.pipeline_mode<synchronous>, transform_indices = @transform_12, window_bounds = array<i64: 1, 32>}, {pipeline_mode = #tpu.pipeline_mode<synchronous>, transform_indices = @transform_13, window_bounds = array<i64: 32, 16>}, {pipeline_mode = #tpu.pipeline_mode<synchronous>, transform_indices = @transform_14, window_bounds = array<i64: 1, 16>}, {pipeline_mode = #tpu.pipeline_mode<synchronous>, transform_indices = @transform_15, window_bounds = array<i64: 16, 8>}, {pipeline_mode = #tpu.pipeline_mode<synchronous>, transform_indices = @transform_16, window_bounds = array<i64: 1, 8>}, {pipeline_mode = #tpu.pipeline_mode<synchronous>, transform_indices = @transform_17, window_bounds = array<i64: 8, 4>}, {pipeline_mode = #tpu.pipeline_mode<synchronous>, transform_indices = @transform_18, window_bounds = array<i64: 1, 4>}, {transform_indices = @transform_19, window_bounds = array<i64: 1, 1, 4>}]} {
    %c0 = arith.constant 0 : index
    %c0_0 = arith.constant 0 : index
    %c0_1 = arith.constant 0 : index
    %0 = vector.load %arg1[%c0, %c0_0, %c0_1] : memref<1x96x288xf32, #tpu.memory_space<vmem>>, vector<1x96x288xf32>
    %1 = vector.shape_cast %0 : vector<1x96x288xf32> to vector<96x288xf32>
    %2 = vector.extract_strided_slice %1 {offsets = [0, 0], sizes = [94, 288], strides = [1, 1]} : vector<96x288xf32> to vector<94x288xf32>
    %c0_2 = arith.constant 0 : index
    %c0_3 = arith.constant 0 : index
    %c0_4 = arith.constant 0 : index
    %3 = vector.load %arg2[%c0_2, %c0_3, %c0_4] : memref<3x288x188xf32, #tpu.memory_space<vmem>>, vector<1x288x188xf32>
    %4 = vector.shape_cast %3 : vector<1x288x188xf32> to vector<288x188xf32>
    %cst = arith.constant dense<0.000000e+00> : vector<94x188xf32>
    %5 = tpu.matmul %2, %4, %cst {dimension_numbers = #tpu.dot_dimension_numbers<[1], [0], [0], [1], [0, 0, 1, 1], [], []>} : vector<94x288xf32>, vector<288x188xf32>, vector<94x188xf32> -> vector<94x188xf32>
    %6 = vector.extract_strided_slice %1 {offsets = [1, 0], sizes = [94, 288], strides = [1, 1]} : vector<96x288xf32> to vector<94x288xf32>
    %c1 = arith.constant 1 : index
    %c0_5 = arith.constant 0 : index
    %c0_6 = arith.constant 0 : index
    %7 = vector.load %arg2[%c1, %c0_5, %c0_6] : memref<3x288x188xf32, #tpu.memory_space<vmem>>, vector<1x288x188xf32>
    %8 = vector.shape_cast %7 : vector<1x288x188xf32> to vector<288x188xf32>
    %cst_7 = arith.constant dense<0.000000e+00> : vector<94x188xf32>
    %9 = tpu.matmul %6, %8, %cst_7 {dimension_numbers = #tpu.dot_dimension_numbers<[1], [0], [0], [1], [0, 0, 1, 1], [], []>} : vector<94x288xf32>, vector<288x188xf32>, vector<94x188xf32> -> vector<94x188xf32>
    %10 = arith.addf %5, %9 : vector<94x188xf32>
    %11 = vector.extract_strided_slice %1 {offsets = [2, 0], sizes = [94, 288], strides = [1, 1]} : vector<96x288xf32> to vector<94x288xf32>
    %c2 = arith.constant 2 : index
    %c0_8 = arith.constant 0 : index
    %c0_9 = arith.constant 0 : index
    %12 = vector.load %arg2[%c2, %c0_8, %c0_9] : memref<3x288x188xf32, #tpu.memory_space<vmem>>, vector<1x288x188xf32>
    %13 = vector.shape_cast %12 : vector<1x288x188xf32> to vector<288x188xf32>
    %cst_10 = arith.constant dense<0.000000e+00> : vector<94x188xf32>
    %14 = tpu.matmul %11, %13, %cst_10 {dimension_numbers = #tpu.dot_dimension_numbers<[1], [0], [0], [1], [0, 0, 1, 1], [], []>} : vector<94x288xf32>, vector<288x188xf32>, vector<94x188xf32> -> vector<94x188xf32>
    %15 = arith.addf %10, %14 : vector<94x188xf32>
    %c0_11 = arith.constant 0 : index
    %c0_12 = arith.constant 0 : index
    %16 = vector.load %arg7[%c0_11, %c0_12] : memref<1x188xf32, #tpu.memory_space<vmem>>, vector<1x188xf32>
    %17 = vector.broadcast %16 : vector<1x188xf32> to vector<94x188xf32>
    %18 = arith.addf %15, %17 : vector<94x188xf32>
    %cst_13 = arith.constant 0.000000e+00 : f32
    %19 = vector.broadcast %cst_13 : f32 to vector<94x188xf32>
    %20 = arith.cmpf oge, %18, %19 : vector<94x188xf32>
    %cst_14 = arith.constant 2.000000e-01 : f32
    %21 = vector.broadcast %cst_14 : f32 to vector<94x188xf32>
    %22 = arith.mulf %21, %18 : vector<94x188xf32>
    %23 = arith.select %20, %18, %22 : vector<94x188xi1>, vector<94x188xf32>
    %c0_15 = arith.constant 0 : index
    %c0_16 = arith.constant 0 : index
    %c0_17 = arith.constant 0 : index
    %24 = vector.load %arg3[%c0_15, %c0_16, %c0_17] : memref<3x46x94xf32, #tpu.memory_space<vmem>>, vector<1x46x94xf32>
    %25 = vector.shape_cast %24 : vector<1x46x94xf32> to vector<46x94xf32>
    %cst_18 = arith.constant dense<0.000000e+00> : vector<46x188xf32>
    %26 = tpu.matmul %25, %23, %cst_18 {dimension_numbers = #tpu.dot_dimension_numbers<[1], [0], [0], [1], [0, 0, 1, 1], [], []>} : vector<46x94xf32>, vector<94x188xf32>, vector<46x188xf32> -> vector<46x188xf32>
    %c0_19 = arith.constant 0 : index
    %c0_20 = arith.constant 0 : index
    %c0_21 = arith.constant 0 : index
    %27 = vector.load %arg4[%c0_19, %c0_20, %c0_21] : memref<3x188x184xf32, #tpu.memory_space<vmem>>, vector<1x188x184xf32>
    %28 = vector.shape_cast %27 : vector<1x188x184xf32> to vector<188x184xf32>
    %cst_22 = arith.constant dense<0.000000e+00> : vector<46x184xf32>
    %29 = tpu.matmul %26, %28, %cst_22 {dimension_numbers = #tpu.dot_dimension_numbers<[1], [0], [0], [1], [0, 0, 1, 1], [], []>} : vector<46x188xf32>, vector<188x184xf32>, vector<46x184xf32> -> vector<46x184xf32>
    %c1_23 = arith.constant 1 : index
    %c0_24 = arith.constant 0 : index
    %c0_25 = arith.constant 0 : index
    %30 = vector.load %arg3[%c1_23, %c0_24, %c0_25] : memref<3x46x94xf32, #tpu.memory_space<vmem>>, vector<1x46x94xf32>
    %31 = vector.shape_cast %30 : vector<1x46x94xf32> to vector<46x94xf32>
    %cst_26 = arith.constant dense<0.000000e+00> : vector<46x188xf32>
    %32 = tpu.matmul %31, %23, %cst_26 {dimension_numbers = #tpu.dot_dimension_numbers<[1], [0], [0], [1], [0, 0, 1, 1], [], []>} : vector<46x94xf32>, vector<94x188xf32>, vector<46x188xf32> -> vector<46x188xf32>
    %c1_27 = arith.constant 1 : index
    %c0_28 = arith.constant 0 : index
    %c0_29 = arith.constant 0 : index
    %33 = vector.load %arg4[%c1_27, %c0_28, %c0_29] : memref<3x188x184xf32, #tpu.memory_space<vmem>>, vector<1x188x184xf32>
    %34 = vector.shape_cast %33 : vector<1x188x184xf32> to vector<188x184xf32>
    %cst_30 = arith.constant dense<0.000000e+00> : vector<46x184xf32>
    %35 = tpu.matmul %32, %34, %cst_30 {dimension_numbers = #tpu.dot_dimension_numbers<[1], [0], [0], [1], [0, 0, 1, 1], [], []>} : vector<46x188xf32>, vector<188x184xf32>, vector<46x184xf32> -> vector<46x184xf32>
    %36 = arith.addf %29, %35 : vector<46x184xf32>
    %c2_31 = arith.constant 2 : index
    %c0_32 = arith.constant 0 : index
    %c0_33 = arith.constant 0 : index
    %37 = vector.load %arg3[%c2_31, %c0_32, %c0_33] : memref<3x46x94xf32, #tpu.memory_space<vmem>>, vector<1x46x94xf32>
    %38 = vector.shape_cast %37 : vector<1x46x94xf32> to vector<46x94xf32>
    %cst_34 = arith.constant dense<0.000000e+00> : vector<46x188xf32>
    %39 = tpu.matmul %38, %23, %cst_34 {dimension_numbers = #tpu.dot_dimension_numbers<[1], [0], [0], [1], [0, 0, 1, 1], [], []>} : vector<46x94xf32>, vector<94x188xf32>, vector<46x188xf32> -> vector<46x188xf32>
    %c2_35 = arith.constant 2 : index
    %c0_36 = arith.constant 0 : index
    %c0_37 = arith.constant 0 : index
    %40 = vector.load %arg4[%c2_35, %c0_36, %c0_37] : memref<3x188x184xf32, #tpu.memory_space<vmem>>, vector<1x188x184xf32>
    %41 = vector.shape_cast %40 : vector<1x188x184xf32> to vector<188x184xf32>
    %cst_38 = arith.constant dense<0.000000e+00> : vector<46x184xf32>
    %42 = tpu.matmul %39, %41, %cst_38 {dimension_numbers = #tpu.dot_dimension_numbers<[1], [0], [0], [1], [0, 0, 1, 1], [], []>} : vector<46x188xf32>, vector<188x184xf32>, vector<46x184xf32> -> vector<46x184xf32>
    %43 = arith.addf %36, %42 : vector<46x184xf32>
    %c0_39 = arith.constant 0 : index
    %c0_40 = arith.constant 0 : index
    %44 = vector.load %arg8[%c0_39, %c0_40] : memref<1x184xf32, #tpu.memory_space<vmem>>, vector<1x184xf32>
    %45 = vector.broadcast %44 : vector<1x184xf32> to vector<46x184xf32>
    %46 = arith.addf %43, %45 : vector<46x184xf32>
    %cst_41 = arith.constant 0.000000e+00 : f32
    %47 = vector.broadcast %cst_41 : f32 to vector<46x184xf32>
    %48 = arith.cmpf oge, %46, %47 : vector<46x184xf32>
    %cst_42 = arith.constant 2.000000e-01 : f32
    %49 = vector.broadcast %cst_42 : f32 to vector<46x184xf32>
    %50 = arith.mulf %49, %46 : vector<46x184xf32>
    %51 = arith.select %48, %46, %50 : vector<46x184xi1>, vector<46x184xf32>
    %c0_43 = arith.constant 0 : index
    %c0_44 = arith.constant 0 : index
    %c0_45 = arith.constant 0 : index
    %52 = vector.load %arg5[%c0_43, %c0_44, %c0_45] : memref<3x22x46xf32, #tpu.memory_space<vmem>>, vector<1x22x46xf32>
    %53 = vector.shape_cast %52 : vector<1x22x46xf32> to vector<22x46xf32>
    %cst_46 = arith.constant dense<0.000000e+00> : vector<22x184xf32>
    %54 = tpu.matmul %53, %51, %cst_46 {dimension_numbers = #tpu.dot_dimension_numbers<[1], [0], [0], [1], [0, 0, 1, 1], [], []>} : vector<22x46xf32>, vector<46x184xf32>, vector<22x184xf32> -> vector<22x184xf32>
    %c0_47 = arith.constant 0 : index
    %c0_48 = arith.constant 0 : index
    %c0_49 = arith.constant 0 : index
    %55 = vector.load %arg6[%c0_47, %c0_48, %c0_49] : memref<3x184x176xf32, #tpu.memory_space<vmem>>, vector<1x184x176xf32>
    %56 = vector.shape_cast %55 : vector<1x184x176xf32> to vector<184x176xf32>
    %cst_50 = arith.constant dense<0.000000e+00> : vector<22x176xf32>
    %57 = tpu.matmul %54, %56, %cst_50 {dimension_numbers = #tpu.dot_dimension_numbers<[1], [0], [0], [1], [0, 0, 1, 1], [], []>} : vector<22x184xf32>, vector<184x176xf32>, vector<22x176xf32> -> vector<22x176xf32>
    %c1_51 = arith.constant 1 : index
    %c0_52 = arith.constant 0 : index
    %c0_53 = arith.constant 0 : index
    %58 = vector.load %arg5[%c1_51, %c0_52, %c0_53] : memref<3x22x46xf32, #tpu.memory_space<vmem>>, vector<1x22x46xf32>
    %59 = vector.shape_cast %58 : vector<1x22x46xf32> to vector<22x46xf32>
    %cst_54 = arith.constant dense<0.000000e+00> : vector<22x184xf32>
    %60 = tpu.matmul %59, %51, %cst_54 {dimension_numbers = #tpu.dot_dimension_numbers<[1], [0], [0], [1], [0, 0, 1, 1], [], []>} : vector<22x46xf32>, vector<46x184xf32>, vector<22x184xf32> -> vector<22x184xf32>
    %c1_55 = arith.constant 1 : index
    %c0_56 = arith.constant 0 : index
    %c0_57 = arith.constant 0 : index
    %61 = vector.load %arg6[%c1_55, %c0_56, %c0_57] : memref<3x184x176xf32, #tpu.memory_space<vmem>>, vector<1x184x176xf32>
    %62 = vector.shape_cast %61 : vector<1x184x176xf32> to vector<184x176xf32>
    %cst_58 = arith.constant dense<0.000000e+00> : vector<22x176xf32>
    %63 = tpu.matmul %60, %62, %cst_58 {dimension_numbers = #tpu.dot_dimension_numbers<[1], [0], [0], [1], [0, 0, 1, 1], [], []>} : vector<22x184xf32>, vector<184x176xf32>, vector<22x176xf32> -> vector<22x176xf32>
    %64 = arith.addf %57, %63 : vector<22x176xf32>
    %c2_59 = arith.constant 2 : index
    %c0_60 = arith.constant 0 : index
    %c0_61 = arith.constant 0 : index
    %65 = vector.load %arg5[%c2_59, %c0_60, %c0_61] : memref<3x22x46xf32, #tpu.memory_space<vmem>>, vector<1x22x46xf32>
    %66 = vector.shape_cast %65 : vector<1x22x46xf32> to vector<22x46xf32>
    %cst_62 = arith.constant dense<0.000000e+00> : vector<22x184xf32>
    %67 = tpu.matmul %66, %51, %cst_62 {dimension_numbers = #tpu.dot_dimension_numbers<[1], [0], [0], [1], [0, 0, 1, 1], [], []>} : vector<22x46xf32>, vector<46x184xf32>, vector<22x184xf32> -> vector<22x184xf32>
    %c2_63 = arith.constant 2 : index
    %c0_64 = arith.constant 0 : index
    %c0_65 = arith.constant 0 : index
    %68 = vector.load %arg6[%c2_63, %c0_64, %c0_65] : memref<3x184x176xf32, #tpu.memory_space<vmem>>, vector<1x184x176xf32>
    %69 = vector.shape_cast %68 : vector<1x184x176xf32> to vector<184x176xf32>
    %cst_66 = arith.constant dense<0.000000e+00> : vector<22x176xf32>
    %70 = tpu.matmul %67, %69, %cst_66 {dimension_numbers = #tpu.dot_dimension_numbers<[1], [0], [0], [1], [0, 0, 1, 1], [], []>} : vector<22x184xf32>, vector<184x176xf32>, vector<22x176xf32> -> vector<22x176xf32>
    %71 = arith.addf %64, %70 : vector<22x176xf32>
    %c0_67 = arith.constant 0 : index
    %c0_68 = arith.constant 0 : index
    %72 = vector.load %arg9[%c0_67, %c0_68] : memref<1x176xf32, #tpu.memory_space<vmem>>, vector<1x176xf32>
    %73 = vector.broadcast %72 : vector<1x176xf32> to vector<22x176xf32>
    %74 = arith.addf %71, %73 : vector<22x176xf32>
    %cst_69 = arith.constant 0.000000e+00 : f32
    %75 = vector.broadcast %cst_69 : f32 to vector<22x176xf32>
    %76 = arith.cmpf oge, %74, %75 : vector<22x176xf32>
    %cst_70 = arith.constant 2.000000e-01 : f32
    %77 = vector.broadcast %cst_70 : f32 to vector<22x176xf32>
    %78 = arith.mulf %77, %74 : vector<22x176xf32>
    %79 = arith.select %76, %74, %78 : vector<22x176xi1>, vector<22x176xf32>
    %80 = vector.extract_strided_slice %79 {offsets = [0, 0], sizes = [1, 176], strides = [1, 1]} : vector<22x176xf32> to vector<1x176xf32>
    %c0_71 = arith.constant 0 : index
    %c0_72 = arith.constant 0 : index
    %c0_73 = arith.constant 0 : index
    %81 = vector.load %arg10[%c0_71, %c0_72, %c0_73] : memref<22x176x64xf32, #tpu.memory_space<vmem>>, vector<1x176x64xf32>
    %82 = vector.shape_cast %81 : vector<1x176x64xf32> to vector<176x64xf32>
    %cst_74 = arith.constant dense<0.000000e+00> : vector<1x64xf32>
    %83 = tpu.matmul %80, %82, %cst_74 {dimension_numbers = #tpu.dot_dimension_numbers<[1], [0], [0], [1], [0, 0, 1, 1], [], []>} : vector<1x176xf32>, vector<176x64xf32>, vector<1x64xf32> -> vector<1x64xf32>
    %84 = vector.extract_strided_slice %79 {offsets = [1, 0], sizes = [1, 176], strides = [1, 1]} : vector<22x176xf32> to vector<1x176xf32>
    %c1_75 = arith.constant 1 : index
    %c0_76 = arith.constant 0 : index
    %c0_77 = arith.constant 0 : index
    %85 = vector.load %arg10[%c1_75, %c0_76, %c0_77] : memref<22x176x64xf32, #tpu.memory_space<vmem>>, vector<1x176x64xf32>
    %86 = vector.shape_cast %85 : vector<1x176x64xf32> to vector<176x64xf32>
    %cst_78 = arith.constant dense<0.000000e+00> : vector<1x64xf32>
    %87 = tpu.matmul %84, %86, %cst_78 {dimension_numbers = #tpu.dot_dimension_numbers<[1], [0], [0], [1], [0, 0, 1, 1], [], []>} : vector<1x176xf32>, vector<176x64xf32>, vector<1x64xf32> -> vector<1x64xf32>
    %88 = arith.addf %83, %87 : vector<1x64xf32>
    %89 = vector.extract_strided_slice %79 {offsets = [2, 0], sizes = [1, 176], strides = [1, 1]} : vector<22x176xf32> to vector<1x176xf32>
    %c2_79 = arith.constant 2 : index
    %c0_80 = arith.constant 0 : index
    %c0_81 = arith.constant 0 : index
    %90 = vector.load %arg10[%c2_79, %c0_80, %c0_81] : memref<22x176x64xf32, #tpu.memory_space<vmem>>, vector<1x176x64xf32>
    %91 = vector.shape_cast %90 : vector<1x176x64xf32> to vector<176x64xf32>
    %cst_82 = arith.constant dense<0.000000e+00> : vector<1x64xf32>
    %92 = tpu.matmul %89, %91, %cst_82 {dimension_numbers = #tpu.dot_dimension_numbers<[1], [0], [0], [1], [0, 0, 1, 1], [], []>} : vector<1x176xf32>, vector<176x64xf32>, vector<1x64xf32> -> vector<1x64xf32>
    %93 = arith.addf %88, %92 : vector<1x64xf32>
    %94 = vector.extract_strided_slice %79 {offsets = [3, 0], sizes = [1, 176], strides = [1, 1]} : vector<22x176xf32> to vector<1x176xf32>
    %c3 = arith.constant 3 : index
    %c0_83 = arith.constant 0 : index
    %c0_84 = arith.constant 0 : index
    %95 = vector.load %arg10[%c3, %c0_83, %c0_84] : memref<22x176x64xf32, #tpu.memory_space<vmem>>, vector<1x176x64xf32>
    %96 = vector.shape_cast %95 : vector<1x176x64xf32> to vector<176x64xf32>
    %cst_85 = arith.constant dense<0.000000e+00> : vector<1x64xf32>
    %97 = tpu.matmul %94, %96, %cst_85 {dimension_numbers = #tpu.dot_dimension_numbers<[1], [0], [0], [1], [0, 0, 1, 1], [], []>} : vector<1x176xf32>, vector<176x64xf32>, vector<1x64xf32> -> vector<1x64xf32>
    %98 = arith.addf %93, %97 : vector<1x64xf32>
    %99 = vector.extract_strided_slice %79 {offsets = [4, 0], sizes = [1, 176], strides = [1, 1]} : vector<22x176xf32> to vector<1x176xf32>
    %c4 = arith.constant 4 : index
    %c0_86 = arith.constant 0 : index
    %c0_87 = arith.constant 0 : index
    %100 = vector.load %arg10[%c4, %c0_86, %c0_87] : memref<22x176x64xf32, #tpu.memory_space<vmem>>, vector<1x176x64xf32>
    %101 = vector.shape_cast %100 : vector<1x176x64xf32> to vector<176x64xf32>
    %cst_88 = arith.constant dense<0.000000e+00> : vector<1x64xf32>
    %102 = tpu.matmul %99, %101, %cst_88 {dimension_numbers = #tpu.dot_dimension_numbers<[1], [0], [0], [1], [0, 0, 1, 1], [], []>} : vector<1x176xf32>, vector<176x64xf32>, vector<1x64xf32> -> vector<1x64xf32>
    %103 = arith.addf %98, %102 : vector<1x64xf32>
    %104 = vector.extract_strided_slice %79 {offsets = [5, 0], sizes = [1, 176], strides = [1, 1]} : vector<22x176xf32> to vector<1x176xf32>
    %c5 = arith.constant 5 : index
    %c0_89 = arith.constant 0 : index
    %c0_90 = arith.constant 0 : index
    %105 = vector.load %arg10[%c5, %c0_89, %c0_90] : memref<22x176x64xf32, #tpu.memory_space<vmem>>, vector<1x176x64xf32>
    %106 = vector.shape_cast %105 : vector<1x176x64xf32> to vector<176x64xf32>
    %cst_91 = arith.constant dense<0.000000e+00> : vector<1x64xf32>
    %107 = tpu.matmul %104, %106, %cst_91 {dimension_numbers = #tpu.dot_dimension_numbers<[1], [0], [0], [1], [0, 0, 1, 1], [], []>} : vector<1x176xf32>, vector<176x64xf32>, vector<1x64xf32> -> vector<1x64xf32>
    %108 = arith.addf %103, %107 : vector<1x64xf32>
    %109 = vector.extract_strided_slice %79 {offsets = [6, 0], sizes = [1, 176], strides = [1, 1]} : vector<22x176xf32> to vector<1x176xf32>
    %c6 = arith.constant 6 : index
    %c0_92 = arith.constant 0 : index
    %c0_93 = arith.constant 0 : index
    %110 = vector.load %arg10[%c6, %c0_92, %c0_93] : memref<22x176x64xf32, #tpu.memory_space<vmem>>, vector<1x176x64xf32>
    %111 = vector.shape_cast %110 : vector<1x176x64xf32> to vector<176x64xf32>
    %cst_94 = arith.constant dense<0.000000e+00> : vector<1x64xf32>
    %112 = tpu.matmul %109, %111, %cst_94 {dimension_numbers = #tpu.dot_dimension_numbers<[1], [0], [0], [1], [0, 0, 1, 1], [], []>} : vector<1x176xf32>, vector<176x64xf32>, vector<1x64xf32> -> vector<1x64xf32>
    %113 = arith.addf %108, %112 : vector<1x64xf32>
    %114 = vector.extract_strided_slice %79 {offsets = [7, 0], sizes = [1, 176], strides = [1, 1]} : vector<22x176xf32> to vector<1x176xf32>
    %c7 = arith.constant 7 : index
    %c0_95 = arith.constant 0 : index
    %c0_96 = arith.constant 0 : index
    %115 = vector.load %arg10[%c7, %c0_95, %c0_96] : memref<22x176x64xf32, #tpu.memory_space<vmem>>, vector<1x176x64xf32>
    %116 = vector.shape_cast %115 : vector<1x176x64xf32> to vector<176x64xf32>
    %cst_97 = arith.constant dense<0.000000e+00> : vector<1x64xf32>
    %117 = tpu.matmul %114, %116, %cst_97 {dimension_numbers = #tpu.dot_dimension_numbers<[1], [0], [0], [1], [0, 0, 1, 1], [], []>} : vector<1x176xf32>, vector<176x64xf32>, vector<1x64xf32> -> vector<1x64xf32>
    %118 = arith.addf %113, %117 : vector<1x64xf32>
    %119 = vector.extract_strided_slice %79 {offsets = [8, 0], sizes = [1, 176], strides = [1, 1]} : vector<22x176xf32> to vector<1x176xf32>
    %c8 = arith.constant 8 : index
    %c0_98 = arith.constant 0 : index
    %c0_99 = arith.constant 0 : index
    %120 = vector.load %arg10[%c8, %c0_98, %c0_99] : memref<22x176x64xf32, #tpu.memory_space<vmem>>, vector<1x176x64xf32>
    %121 = vector.shape_cast %120 : vector<1x176x64xf32> to vector<176x64xf32>
    %cst_100 = arith.constant dense<0.000000e+00> : vector<1x64xf32>
    %122 = tpu.matmul %119, %121, %cst_100 {dimension_numbers = #tpu.dot_dimension_numbers<[1], [0], [0], [1], [0, 0, 1, 1], [], []>} : vector<1x176xf32>, vector<176x64xf32>, vector<1x64xf32> -> vector<1x64xf32>
    %123 = arith.addf %118, %122 : vector<1x64xf32>
    %124 = vector.extract_strided_slice %79 {offsets = [9, 0], sizes = [1, 176], strides = [1, 1]} : vector<22x176xf32> to vector<1x176xf32>
    %c9 = arith.constant 9 : index
    %c0_101 = arith.constant 0 : index
    %c0_102 = arith.constant 0 : index
    %125 = vector.load %arg10[%c9, %c0_101, %c0_102] : memref<22x176x64xf32, #tpu.memory_space<vmem>>, vector<1x176x64xf32>
    %126 = vector.shape_cast %125 : vector<1x176x64xf32> to vector<176x64xf32>
    %cst_103 = arith.constant dense<0.000000e+00> : vector<1x64xf32>
    %127 = tpu.matmul %124, %126, %cst_103 {dimension_numbers = #tpu.dot_dimension_numbers<[1], [0], [0], [1], [0, 0, 1, 1], [], []>} : vector<1x176xf32>, vector<176x64xf32>, vector<1x64xf32> -> vector<1x64xf32>
    %128 = arith.addf %123, %127 : vector<1x64xf32>
    %129 = vector.extract_strided_slice %79 {offsets = [10, 0], sizes = [1, 176], strides = [1, 1]} : vector<22x176xf32> to vector<1x176xf32>
    %c10 = arith.constant 10 : index
    %c0_104 = arith.constant 0 : index
    %c0_105 = arith.constant 0 : index
    %130 = vector.load %arg10[%c10, %c0_104, %c0_105] : memref<22x176x64xf32, #tpu.memory_space<vmem>>, vector<1x176x64xf32>
    %131 = vector.shape_cast %130 : vector<1x176x64xf32> to vector<176x64xf32>
    %cst_106 = arith.constant dense<0.000000e+00> : vector<1x64xf32>
    %132 = tpu.matmul %129, %131, %cst_106 {dimension_numbers = #tpu.dot_dimension_numbers<[1], [0], [0], [1], [0, 0, 1, 1], [], []>} : vector<1x176xf32>, vector<176x64xf32>, vector<1x64xf32> -> vector<1x64xf32>
    %133 = arith.addf %128, %132 : vector<1x64xf32>
    %134 = vector.extract_strided_slice %79 {offsets = [11, 0], sizes = [1, 176], strides = [1, 1]} : vector<22x176xf32> to vector<1x176xf32>
    %c11 = arith.constant 11 : index
    %c0_107 = arith.constant 0 : index
    %c0_108 = arith.constant 0 : index
    %135 = vector.load %arg10[%c11, %c0_107, %c0_108] : memref<22x176x64xf32, #tpu.memory_space<vmem>>, vector<1x176x64xf32>
    %136 = vector.shape_cast %135 : vector<1x176x64xf32> to vector<176x64xf32>
    %cst_109 = arith.constant dense<0.000000e+00> : vector<1x64xf32>
    %137 = tpu.matmul %134, %136, %cst_109 {dimension_numbers = #tpu.dot_dimension_numbers<[1], [0], [0], [1], [0, 0, 1, 1], [], []>} : vector<1x176xf32>, vector<176x64xf32>, vector<1x64xf32> -> vector<1x64xf32>
    %138 = arith.addf %133, %137 : vector<1x64xf32>
    %139 = vector.extract_strided_slice %79 {offsets = [12, 0], sizes = [1, 176], strides = [1, 1]} : vector<22x176xf32> to vector<1x176xf32>
    %c12 = arith.constant 12 : index
    %c0_110 = arith.constant 0 : index
    %c0_111 = arith.constant 0 : index
    %140 = vector.load %arg10[%c12, %c0_110, %c0_111] : memref<22x176x64xf32, #tpu.memory_space<vmem>>, vector<1x176x64xf32>
    %141 = vector.shape_cast %140 : vector<1x176x64xf32> to vector<176x64xf32>
    %cst_112 = arith.constant dense<0.000000e+00> : vector<1x64xf32>
    %142 = tpu.matmul %139, %141, %cst_112 {dimension_numbers = #tpu.dot_dimension_numbers<[1], [0], [0], [1], [0, 0, 1, 1], [], []>} : vector<1x176xf32>, vector<176x64xf32>, vector<1x64xf32> -> vector<1x64xf32>
    %143 = arith.addf %138, %142 : vector<1x64xf32>
    %144 = vector.extract_strided_slice %79 {offsets = [13, 0], sizes = [1, 176], strides = [1, 1]} : vector<22x176xf32> to vector<1x176xf32>
    %c13 = arith.constant 13 : index
    %c0_113 = arith.constant 0 : index
    %c0_114 = arith.constant 0 : index
    %145 = vector.load %arg10[%c13, %c0_113, %c0_114] : memref<22x176x64xf32, #tpu.memory_space<vmem>>, vector<1x176x64xf32>
    %146 = vector.shape_cast %145 : vector<1x176x64xf32> to vector<176x64xf32>
    %cst_115 = arith.constant dense<0.000000e+00> : vector<1x64xf32>
    %147 = tpu.matmul %144, %146, %cst_115 {dimension_numbers = #tpu.dot_dimension_numbers<[1], [0], [0], [1], [0, 0, 1, 1], [], []>} : vector<1x176xf32>, vector<176x64xf32>, vector<1x64xf32> -> vector<1x64xf32>
    %148 = arith.addf %143, %147 : vector<1x64xf32>
    %149 = vector.extract_strided_slice %79 {offsets = [14, 0], sizes = [1, 176], strides = [1, 1]} : vector<22x176xf32> to vector<1x176xf32>
    %c14 = arith.constant 14 : index
    %c0_116 = arith.constant 0 : index
    %c0_117 = arith.constant 0 : index
    %150 = vector.load %arg10[%c14, %c0_116, %c0_117] : memref<22x176x64xf32, #tpu.memory_space<vmem>>, vector<1x176x64xf32>
    %151 = vector.shape_cast %150 : vector<1x176x64xf32> to vector<176x64xf32>
    %cst_118 = arith.constant dense<0.000000e+00> : vector<1x64xf32>
    %152 = tpu.matmul %149, %151, %cst_118 {dimension_numbers = #tpu.dot_dimension_numbers<[1], [0], [0], [1], [0, 0, 1, 1], [], []>} : vector<1x176xf32>, vector<176x64xf32>, vector<1x64xf32> -> vector<1x64xf32>
    %153 = arith.addf %148, %152 : vector<1x64xf32>
    %154 = vector.extract_strided_slice %79 {offsets = [15, 0], sizes = [1, 176], strides = [1, 1]} : vector<22x176xf32> to vector<1x176xf32>
    %c15 = arith.constant 15 : index
    %c0_119 = arith.constant 0 : index
    %c0_120 = arith.constant 0 : index
    %155 = vector.load %arg10[%c15, %c0_119, %c0_120] : memref<22x176x64xf32, #tpu.memory_space<vmem>>, vector<1x176x64xf32>
    %156 = vector.shape_cast %155 : vector<1x176x64xf32> to vector<176x64xf32>
    %cst_121 = arith.constant dense<0.000000e+00> : vector<1x64xf32>
    %157 = tpu.matmul %154, %156, %cst_121 {dimension_numbers = #tpu.dot_dimension_numbers<[1], [0], [0], [1], [0, 0, 1, 1], [], []>} : vector<1x176xf32>, vector<176x64xf32>, vector<1x64xf32> -> vector<1x64xf32>
    %158 = arith.addf %153, %157 : vector<1x64xf32>
    %159 = vector.extract_strided_slice %79 {offsets = [16, 0], sizes = [1, 176], strides = [1, 1]} : vector<22x176xf32> to vector<1x176xf32>
    %c16 = arith.constant 16 : index
    %c0_122 = arith.constant 0 : index
    %c0_123 = arith.constant 0 : index
    %160 = vector.load %arg10[%c16, %c0_122, %c0_123] : memref<22x176x64xf32, #tpu.memory_space<vmem>>, vector<1x176x64xf32>
    %161 = vector.shape_cast %160 : vector<1x176x64xf32> to vector<176x64xf32>
    %cst_124 = arith.constant dense<0.000000e+00> : vector<1x64xf32>
    %162 = tpu.matmul %159, %161, %cst_124 {dimension_numbers = #tpu.dot_dimension_numbers<[1], [0], [0], [1], [0, 0, 1, 1], [], []>} : vector<1x176xf32>, vector<176x64xf32>, vector<1x64xf32> -> vector<1x64xf32>
    %163 = arith.addf %158, %162 : vector<1x64xf32>
    %164 = vector.extract_strided_slice %79 {offsets = [17, 0], sizes = [1, 176], strides = [1, 1]} : vector<22x176xf32> to vector<1x176xf32>
    %c17 = arith.constant 17 : index
    %c0_125 = arith.constant 0 : index
    %c0_126 = arith.constant 0 : index
    %165 = vector.load %arg10[%c17, %c0_125, %c0_126] : memref<22x176x64xf32, #tpu.memory_space<vmem>>, vector<1x176x64xf32>
    %166 = vector.shape_cast %165 : vector<1x176x64xf32> to vector<176x64xf32>
    %cst_127 = arith.constant dense<0.000000e+00> : vector<1x64xf32>
    %167 = tpu.matmul %164, %166, %cst_127 {dimension_numbers = #tpu.dot_dimension_numbers<[1], [0], [0], [1], [0, 0, 1, 1], [], []>} : vector<1x176xf32>, vector<176x64xf32>, vector<1x64xf32> -> vector<1x64xf32>
    %168 = arith.addf %163, %167 : vector<1x64xf32>
    %169 = vector.extract_strided_slice %79 {offsets = [18, 0], sizes = [1, 176], strides = [1, 1]} : vector<22x176xf32> to vector<1x176xf32>
    %c18 = arith.constant 18 : index
    %c0_128 = arith.constant 0 : index
    %c0_129 = arith.constant 0 : index
    %170 = vector.load %arg10[%c18, %c0_128, %c0_129] : memref<22x176x64xf32, #tpu.memory_space<vmem>>, vector<1x176x64xf32>
    %171 = vector.shape_cast %170 : vector<1x176x64xf32> to vector<176x64xf32>
    %cst_130 = arith.constant dense<0.000000e+00> : vector<1x64xf32>
    %172 = tpu.matmul %169, %171, %cst_130 {dimension_numbers = #tpu.dot_dimension_numbers<[1], [0], [0], [1], [0, 0, 1, 1], [], []>} : vector<1x176xf32>, vector<176x64xf32>, vector<1x64xf32> -> vector<1x64xf32>
    %173 = arith.addf %168, %172 : vector<1x64xf32>
    %174 = vector.extract_strided_slice %79 {offsets = [19, 0], sizes = [1, 176], strides = [1, 1]} : vector<22x176xf32> to vector<1x176xf32>
    %c19 = arith.constant 19 : index
    %c0_131 = arith.constant 0 : index
    %c0_132 = arith.constant 0 : index
    %175 = vector.load %arg10[%c19, %c0_131, %c0_132] : memref<22x176x64xf32, #tpu.memory_space<vmem>>, vector<1x176x64xf32>
    %176 = vector.shape_cast %175 : vector<1x176x64xf32> to vector<176x64xf32>
    %cst_133 = arith.constant dense<0.000000e+00> : vector<1x64xf32>
    %177 = tpu.matmul %174, %176, %cst_133 {dimension_numbers = #tpu.dot_dimension_numbers<[1], [0], [0], [1], [0, 0, 1, 1], [], []>} : vector<1x176xf32>, vector<176x64xf32>, vector<1x64xf32> -> vector<1x64xf32>
    %178 = arith.addf %173, %177 : vector<1x64xf32>
    %179 = vector.extract_strided_slice %79 {offsets = [20, 0], sizes = [1, 176], strides = [1, 1]} : vector<22x176xf32> to vector<1x176xf32>
    %c20 = arith.constant 20 : index
    %c0_134 = arith.constant 0 : index
    %c0_135 = arith.constant 0 : index
    %180 = vector.load %arg10[%c20, %c0_134, %c0_135] : memref<22x176x64xf32, #tpu.memory_space<vmem>>, vector<1x176x64xf32>
    %181 = vector.shape_cast %180 : vector<1x176x64xf32> to vector<176x64xf32>
    %cst_136 = arith.constant dense<0.000000e+00> : vector<1x64xf32>
    %182 = tpu.matmul %179, %181, %cst_136 {dimension_numbers = #tpu.dot_dimension_numbers<[1], [0], [0], [1], [0, 0, 1, 1], [], []>} : vector<1x176xf32>, vector<176x64xf32>, vector<1x64xf32> -> vector<1x64xf32>
    %183 = arith.addf %178, %182 : vector<1x64xf32>
    %184 = vector.extract_strided_slice %79 {offsets = [21, 0], sizes = [1, 176], strides = [1, 1]} : vector<22x176xf32> to vector<1x176xf32>
    %c21 = arith.constant 21 : index
    %c0_137 = arith.constant 0 : index
    %c0_138 = arith.constant 0 : index
    %185 = vector.load %arg10[%c21, %c0_137, %c0_138] : memref<22x176x64xf32, #tpu.memory_space<vmem>>, vector<1x176x64xf32>
    %186 = vector.shape_cast %185 : vector<1x176x64xf32> to vector<176x64xf32>
    %cst_139 = arith.constant dense<0.000000e+00> : vector<1x64xf32>
    %187 = tpu.matmul %184, %186, %cst_139 {dimension_numbers = #tpu.dot_dimension_numbers<[1], [0], [0], [1], [0, 0, 1, 1], [], []>} : vector<1x176xf32>, vector<176x64xf32>, vector<1x64xf32> -> vector<1x64xf32>
    %188 = arith.addf %183, %187 : vector<1x64xf32>
    %c0_140 = arith.constant 0 : index
    %c0_141 = arith.constant 0 : index
    %189 = vector.load %arg11[%c0_140, %c0_141] : memref<1x64xf32, #tpu.memory_space<vmem>>, vector<1x64xf32>
    %190 = arith.addf %188, %189 : vector<1x64xf32>
    %cst_142 = arith.constant 0.000000e+00 : f32
    %191 = vector.broadcast %cst_142 : f32 to vector<1x64xf32>
    %192 = arith.cmpf oge, %190, %191 : vector<1x64xf32>
    %cst_143 = arith.constant 2.000000e-01 : f32
    %193 = vector.broadcast %cst_143 : f32 to vector<1x64xf32>
    %194 = arith.mulf %193, %190 : vector<1x64xf32>
    %195 = arith.select %192, %190, %194 : vector<1x64xi1>, vector<1x64xf32>
    %c0_144 = arith.constant 0 : index
    %c0_145 = arith.constant 0 : index
    %196 = vector.load %arg12[%c0_144, %c0_145] : memref<64x32xf32, #tpu.memory_space<vmem>>, vector<64x32xf32>
    %cst_146 = arith.constant dense<0.000000e+00> : vector<1x32xf32>
    %197 = tpu.matmul %195, %196, %cst_146 {dimension_numbers = #tpu.dot_dimension_numbers<[1], [0], [0], [1], [0, 0, 1, 1], [], []>} : vector<1x64xf32>, vector<64x32xf32>, vector<1x32xf32> -> vector<1x32xf32>
    %c0_147 = arith.constant 0 : index
    %c0_148 = arith.constant 0 : index
    %198 = vector.load %arg13[%c0_147, %c0_148] : memref<1x32xf32, #tpu.memory_space<vmem>>, vector<1x32xf32>
    %199 = arith.addf %197, %198 : vector<1x32xf32>
    %cst_149 = arith.constant 0.000000e+00 : f32
    %200 = vector.broadcast %cst_149 : f32 to vector<1x32xf32>
    %201 = arith.cmpf oge, %199, %200 : vector<1x32xf32>
    %cst_150 = arith.constant 2.000000e-01 : f32
    %202 = vector.broadcast %cst_150 : f32 to vector<1x32xf32>
    %203 = arith.mulf %202, %199 : vector<1x32xf32>
    %204 = arith.select %201, %199, %203 : vector<1x32xi1>, vector<1x32xf32>
    %c0_151 = arith.constant 0 : index
    %c0_152 = arith.constant 0 : index
    %205 = vector.load %arg14[%c0_151, %c0_152] : memref<32x16xf32, #tpu.memory_space<vmem>>, vector<32x16xf32>
    %cst_153 = arith.constant dense<0.000000e+00> : vector<1x16xf32>
    %206 = tpu.matmul %204, %205, %cst_153 {dimension_numbers = #tpu.dot_dimension_numbers<[1], [0], [0], [1], [0, 0, 1, 1], [], []>} : vector<1x32xf32>, vector<32x16xf32>, vector<1x16xf32> -> vector<1x16xf32>
    %c0_154 = arith.constant 0 : index
    %c0_155 = arith.constant 0 : index
    %207 = vector.load %arg15[%c0_154, %c0_155] : memref<1x16xf32, #tpu.memory_space<vmem>>, vector<1x16xf32>
    %208 = arith.addf %206, %207 : vector<1x16xf32>
    %cst_156 = arith.constant 0.000000e+00 : f32
    %209 = vector.broadcast %cst_156 : f32 to vector<1x16xf32>
    %210 = arith.cmpf oge, %208, %209 : vector<1x16xf32>
    %cst_157 = arith.constant 2.000000e-01 : f32
    %211 = vector.broadcast %cst_157 : f32 to vector<1x16xf32>
    %212 = arith.mulf %211, %208 : vector<1x16xf32>
    %213 = arith.select %210, %208, %212 : vector<1x16xi1>, vector<1x16xf32>
    %c0_158 = arith.constant 0 : index
    %c0_159 = arith.constant 0 : index
    %214 = vector.load %arg16[%c0_158, %c0_159] : memref<16x8xf32, #tpu.memory_space<vmem>>, vector<16x8xf32>
    %cst_160 = arith.constant dense<0.000000e+00> : vector<1x8xf32>
    %215 = tpu.matmul %213, %214, %cst_160 {dimension_numbers = #tpu.dot_dimension_numbers<[1], [0], [0], [1], [0, 0, 1, 1], [], []>} : vector<1x16xf32>, vector<16x8xf32>, vector<1x8xf32> -> vector<1x8xf32>
    %c0_161 = arith.constant 0 : index
    %c0_162 = arith.constant 0 : index
    %216 = vector.load %arg17[%c0_161, %c0_162] : memref<1x8xf32, #tpu.memory_space<vmem>>, vector<1x8xf32>
    %217 = arith.addf %215, %216 : vector<1x8xf32>
    %cst_163 = arith.constant 0.000000e+00 : f32
    %218 = vector.broadcast %cst_163 : f32 to vector<1x8xf32>
    %219 = arith.cmpf oge, %217, %218 : vector<1x8xf32>
    %cst_164 = arith.constant 2.000000e-01 : f32
    %220 = vector.broadcast %cst_164 : f32 to vector<1x8xf32>
    %221 = arith.mulf %220, %217 : vector<1x8xf32>
    %222 = arith.select %219, %217, %221 : vector<1x8xi1>, vector<1x8xf32>
    %c0_165 = arith.constant 0 : index
    %c0_166 = arith.constant 0 : index
    %223 = vector.load %arg18[%c0_165, %c0_166] : memref<8x4xf32, #tpu.memory_space<vmem>>, vector<8x4xf32>
    %cst_167 = arith.constant dense<0.000000e+00> : vector<1x4xf32>
    %224 = tpu.matmul %222, %223, %cst_167 {dimension_numbers = #tpu.dot_dimension_numbers<[1], [0], [0], [1], [0, 0, 1, 1], [], []>} : vector<1x8xf32>, vector<8x4xf32>, vector<1x4xf32> -> vector<1x4xf32>
    %c0_168 = arith.constant 0 : index
    %c0_169 = arith.constant 0 : index
    %225 = vector.load %arg19[%c0_168, %c0_169] : memref<1x4xf32, #tpu.memory_space<vmem>>, vector<1x4xf32>
    %226 = arith.addf %224, %225 : vector<1x4xf32>
    %cst_170 = arith.constant 0.000000e+00 : f32
    %227 = vector.broadcast %cst_170 : f32 to vector<1x4xf32>
    %228 = arith.cmpf oge, %226, %227 : vector<1x4xf32>
    %cst_171 = arith.constant 2.000000e-01 : f32
    %229 = vector.broadcast %cst_171 : f32 to vector<1x4xf32>
    %230 = arith.mulf %229, %226 : vector<1x4xf32>
    %231 = arith.select %228, %226, %230 : vector<1x4xi1>, vector<1x4xf32>
    %cst_172 = arith.constant 0.000000e+00 : f32
    %232 = vector.broadcast %cst_172 : f32 to vector<1x4xf32>
    %233 = arith.subf %232, %231 : vector<1x4xf32>
    %234 = math.exp %233 : vector<1x4xf32>
    %cst_173 = arith.constant 1.000000e+00 : f32
    %235 = vector.broadcast %cst_173 : f32 to vector<1x4xf32>
    %236 = arith.addf %235, %234 : vector<1x4xf32>
    %cst_174 = arith.constant 1.000000e+00 : f32
    %237 = vector.broadcast %cst_174 : f32 to vector<1x4xf32>
    %238 = arith.divf %237, %236 : vector<1x4xf32>
    %c0_175 = arith.constant 0 : index
    %c0_176 = arith.constant 0 : index
    %c0_177 = arith.constant 0 : index
    %239 = vector.load %arg20[%c0_175, %c0_176, %c0_177] : memref<1x1x4xf32, #tpu.memory_space<vmem>>, vector<1x1x4xf32>
    %240 = vector.shape_cast %239 : vector<1x1x4xf32> to vector<1x4xf32>
    %241 = vector.shape_cast %238 : vector<1x4xf32> to vector<1x1x4xf32>
    tpu.vector_store %arg20[%c0_175, %c0_176, %c0_177], %241 {strides = array<i32>} : memref<1x1x4xf32, #tpu.memory_space<vmem>>, vector<1x1x4xf32>,
    return
  }
  func.func @transform_0(%arg0: i32) -> (i32, i32, i32) {
    %c0_i32 = arith.constant 0 : i32
    %c0_i32_0 = arith.constant 0 : i32
    %c0_i32_1 = arith.constant 0 : i32
    return %arg0, %c0_i32, %c0_i32_0 : i32, i32, i32
  }
  func.func @transform_1(%arg0: i32) -> (i32, i32, i32) {
    %c0_i32 = arith.constant 0 : i32
    %c0_i32_0 = arith.constant 0 : i32
    %c0_i32_1 = arith.constant 0 : i32
    %c0_i32_2 = arith.constant 0 : i32
    return %c0_i32, %c0_i32_0, %c0_i32_1 : i32, i32, i32
  }
  func.func @transform_2(%arg0: i32) -> (i32, i32, i32) {
    %c0_i32 = arith.constant 0 : i32
    %c0_i32_0 = arith.constant 0 : i32
    %c0_i32_1 = arith.constant 0 : i32
    %c0_i32_2 = arith.constant 0 : i32
    return %c0_i32, %c0_i32_0, %c0_i32_1 : i32, i32, i32
  }
  func.func @transform_3(%arg0: i32) -> (i32, i32, i32) {
    %c0_i32 = arith.constant 0 : i32
    %c0_i32_0 = arith.constant 0 : i32
    %c0_i32_1 = arith.constant 0 : i32
    %c0_i32_2 = arith.constant 0 : i32
    return %c0_i32, %c0_i32_0, %c0_i32_1 : i32, i32, i32
  }
  func.func @transform_4(%arg0: i32) -> (i32, i32, i32) {
    %c0_i32 = arith.constant 0 : i32
    %c0_i32_0 = arith.constant 0 : i32
    %c0_i32_1 = arith.constant 0 : i32
    %c0_i32_2 = arith.constant 0 : i32
    return %c0_i32, %c0_i32_0, %c0_i32_1 : i32, i32, i32
  }
  func.func @transform_5(%arg0: i32) -> (i32, i32, i32) {
    %c0_i32 = arith.constant 0 : i32
    %c0_i32_0 = arith.constant 0 : i32
    %c0_i32_1 = arith.constant 0 : i32
    %c0_i32_2 = arith.constant 0 : i32
    return %c0_i32, %c0_i32_0, %c0_i32_1 : i32, i32, i32
  }
  func.func @transform_6(%arg0: i32) -> (i32, i32) {
    %c0_i32 = arith.constant 0 : i32
    %c0_i32_0 = arith.constant 0 : i32
    %c0_i32_1 = arith.constant 0 : i32
    return %c0_i32, %c0_i32_0 : i32, i32
  }
  func.func @transform_7(%arg0: i32) -> (i32, i32) {
    %c0_i32 = arith.constant 0 : i32
    %c0_i32_0 = arith.constant 0 : i32
    %c0_i32_1 = arith.constant 0 : i32
    return %c0_i32, %c0_i32_0 : i32, i32
  }
  func.func @transform_8(%arg0: i32) -> (i32, i32) {
    %c0_i32 = arith.constant 0 : i32
    %c0_i32_0 = arith.constant 0 : i32
    %c0_i32_1 = arith.constant 0 : i32
    return %c0_i32, %c0_i32_0 : i32, i32
  }
  func.func @transform_9(%arg0: i32) -> (i32, i32, i32) {
    %c0_i32 = arith.constant 0 : i32
    %c0_i32_0 = arith.constant 0 : i32
    %c0_i32_1 = arith.constant 0 : i32
    %c0_i32_2 = arith.constant 0 : i32
    return %c0_i32, %c0_i32_0, %c0_i32_1 : i32, i32, i32
  }
  func.func @transform_10(%arg0: i32) -> (i32, i32) {
    %c0_i32 = arith.constant 0 : i32
    %c0_i32_0 = arith.constant 0 : i32
    %c0_i32_1 = arith.constant 0 : i32
    return %c0_i32, %c0_i32_0 : i32, i32
  }
  func.func @transform_11(%arg0: i32) -> (i32, i32) {
    %c0_i32 = arith.constant 0 : i32
    %c0_i32_0 = arith.constant 0 : i32
    %c0_i32_1 = arith.constant 0 : i32
    return %c0_i32, %c0_i32_0 : i32, i32
  }
  func.func @transform_12(%arg0: i32) -> (i32, i32) {
    %c0_i32 = arith.constant 0 : i32
    %c0_i32_0 = arith.constant 0 : i32
    %c0_i32_1 = arith.constant 0 : i32
    return %c0_i32, %c0_i32_0 : i32, i32
  }
  func.func @transform_13(%arg0: i32) -> (i32, i32) {
    %c0_i32 = arith.constant 0 : i32
    %c0_i32_0 = arith.constant 0 : i32
    %c0_i32_1 = arith.constant 0 : i32
    return %c0_i32, %c0_i32_0 : i32, i32
  }
  func.func @transform_14(%arg0: i32) -> (i32, i32) {
    %c0_i32 = arith.constant 0 : i32
    %c0_i32_0 = arith.constant 0 : i32
    %c0_i32_1 = arith.constant 0 : i32
    return %c0_i32, %c0_i32_0 : i32, i32
  }
  func.func @transform_15(%arg0: i32) -> (i32, i32) {
    %c0_i32 = arith.constant 0 : i32
    %c0_i32_0 = arith.constant 0 : i32
    %c0_i32_1 = arith.constant 0 : i32
    return %c0_i32, %c0_i32_0 : i32, i32
  }
  func.func @transform_16(%arg0: i32) -> (i32, i32) {
    %c0_i32 = arith.constant 0 : i32
    %c0_i32_0 = arith.constant 0 : i32
    %c0_i32_1 = arith.constant 0 : i32
    return %c0_i32, %c0_i32_0 : i32, i32
  }
  func.func @transform_17(%arg0: i32) -> (i32, i32) {
    %c0_i32 = arith.constant 0 : i32
    %c0_i32_0 = arith.constant 0 : i32
    %c0_i32_1 = arith.constant 0 : i32
    return %c0_i32, %c0_i32_0 : i32, i32
  }
  func.func @transform_18(%arg0: i32) -> (i32, i32) {
    %c0_i32 = arith.constant 0 : i32
    %c0_i32_0 = arith.constant 0 : i32
    %c0_i32_1 = arith.constant 0 : i32
    return %c0_i32, %c0_i32_0 : i32, i32
  }
  func.func @transform_19(%arg0: i32) -> (i32, i32, i32) {
    %c0_i32 = arith.constant 0 : i32
    %c0_i32_0 = arith.constant 0 : i32
    %c0_i32_1 = arith.constant 0 : i32
    return %arg0, %c0_i32, %c0_i32_0 : i32, i32, i32
  }
}

</mosaic_0001>

<llo_original>
// kernel: multi_class_network_forward.1
$region0: #{multi_class_network_forward.1}
  #allocation0 [shape = 'u32[]', space=smem, size = 0x4, offset = 0x4, fixed_abs, tag = 'smem constant byte address 0x4 - core index']
  #allocation1 [shape = 'u32[144,128]{1,0:T(1,128)}', space=vmem, size = 0x12000, scoped, tag = 'internal scratch']
  %s0 = inlined_call_operand.vmem [shape: f32[2,96,288], index: 0, kind: input, shape index: {}]
  %s1 = inlined_call_operand.vmem [shape: f32[3,288,188], index: 1, kind: input, shape index: {}]
  %s2 = inlined_call_operand.vmem [shape: f32[3,46,94], index: 2, kind: input, shape index: {}]
  %s3 = inlined_call_operand.vmem [shape: f32[3,188,184], index: 3, kind: input, shape index: {}]
  %s4 = inlined_call_operand.vmem [shape: f32[3,22,46], index: 4, kind: input, shape index: {}]
  %s5 = inlined_call_operand.vmem [shape: f32[3,184,176], index: 5, kind: input, shape index: {}]
  %s6 = inlined_call_operand.vmem [shape: f32[1,188], index: 6, kind: input, shape index: {}]
  %s7 = inlined_call_operand.vmem [shape: f32[1,184], index: 7, kind: input, shape index: {}]
  %s8 = inlined_call_operand.vmem [shape: f32[1,176], index: 8, kind: input, shape index: {}]
  %s9 = inlined_call_operand.vmem [shape: f32[22,176,64], index: 9, kind: input, shape index: {}]
  %s10 = inlined_call_operand.vmem [shape: f32[1,64], index: 10, kind: input, shape index: {}]
  %s11 = inlined_call_operand.vmem [shape: f32[64,32], index: 11, kind: input, shape index: {}]
  %s12 = inlined_call_operand.vmem [shape: f32[1,32], index: 12, kind: input, shape index: {}]
  %s13 = inlined_call_operand.vmem [shape: f32[32,16], index: 13, kind: input, shape index: {}]
  %s14 = inlined_call_operand.vmem [shape: f32[1,16], index: 14, kind: input, shape index: {}]
  %s15 = inlined_call_operand.vmem [shape: f32[16,8], index: 15, kind: input, shape index: {}]
  %s16 = inlined_call_operand.vmem [shape: f32[1,8], index: 16, kind: input, shape index: {}]
  %s17 = inlined_call_operand.vmem [shape: f32[8,4], index: 17, kind: input, shape index: {}]
  %s18 = inlined_call_operand.vmem [shape: f32[1,4], index: 18, kind: input, shape index: {}]
  %s19 = inlined_call_operand.hbm [shape: f32[2,1,4], index: 19, kind: output, shape index: {}]
  %s20 = sld [smem:[#allocation0]]
  $region109: #{multi_class_network_forward.1} parent=0
    _
  %s22 = ssub.s32 1, %s20
  %s23 = scalar_select 0, %s22, %s20
  $region1: #{multi_class_network_forward.1} parent=0
    #allocation2 [shape = 'u8[1024]{0}', space=vmem, size = 0x400, scoped, tag = 'output window, operand 0']
    #allocation3 [shape = 's32[2]{0}', space=sflag, size = 0x8, scoped, tag = 'scoped memory for multi_class_network_forward.1']
    %24 = vsyncpa [#allocation3], 0
    %s25 = scalar_lea.sflag [#allocation3], 1
    %26 = vsyncpa %s25, 0
    loop: start=0, step=1, limit=4
    $region2: #{multi_class_network_forward.1} parent=1 // loop_pre_header
      _
    $region3: #{multi_class_network_forward.1} parent=1 // loop_header
      %s28 = sphi 0, %s32
      %p29 = scmp.ge.s32.totalorder %s28, 4
      %s38 = sphi 0, %s40
      %s41 = sphi 0, %s38
      %s42 = sphi 0, %s41
      %s58 = sphi 0, %s42
      %s62 = sphi 0, %s62
      %s64 = sphi 0, %s62
      %s65 = sphi 0, %s64
      %s79 = sphi 0, %s65
      %s83 = sphi 0, %s83
      %s85 = sphi 0, %s83
      %s86 = sphi 0, %s85
      %s100 = sphi 0, %s86
      %s104 = sphi 0, %s104
      %s106 = sphi 0, %s104
      %s107 = sphi 0, %s106
      %s121 = sphi 0, %s107
      %s125 = sphi 0, %s125
      %s127 = sphi 0, %s125
      %s128 = sphi 0, %s127
      %s142 = sphi 0, %s128
      %s146 = sphi 0, %s146
      %s148 = sphi 0, %s146
      %s149 = sphi 0, %s148
      %s163 = sphi 0, %s149
      %s167 = sphi 0, %s167
      %s169 = sphi 0, %s167
      %s170 = sphi 0, %s169
      %s184 = sphi 0, %s170
      %s188 = sphi 0, %s188
      %s190 = sphi 0, %s188
      %s191 = sphi 0, %s190
      %s205 = sphi 0, %s191
      %s209 = sphi 0, %s209
      %s211 = sphi 0, %s209
      %s212 = sphi 0, %s211
      %s226 = sphi 0, %s212
      %s230 = sphi 0, %s230
      %s232 = sphi 0, %s230
      %s233 = sphi 0, %s232
      %s247 = sphi 0, %s233
      %s251 = sphi 0, %s251
      %s253 = sphi 0, %s251
      %s254 = sphi 0, %s253
      %s268 = sphi 0, %s254
      %s272 = sphi 0, %s272
      %s274 = sphi 0, %s272
      %s275 = sphi 0, %s274
      %s289 = sphi 0, %s275
      %s293 = sphi 0, %s293
      %s295 = sphi 0, %s293
      %s296 = sphi 0, %s295
      %s310 = sphi 0, %s296
      %s314 = sphi 0, %s314
      %s316 = sphi 0, %s314
      %s317 = sphi 0, %s316
      %s331 = sphi 0, %s317
      %s335 = sphi 0, %s335
      %s337 = sphi 0, %s335
      %s338 = sphi 0, %s337
      %s352 = sphi 0, %s338
      %s356 = sphi 0, %s356
      %s358 = sphi 0, %s356
      %s359 = sphi 0, %s358
      %s373 = sphi 0, %s359
      %s377 = sphi 0, %s377
      %s379 = sphi 0, %s377
      %s380 = sphi 0, %s379
      %s394 = sphi 0, %s380
      %s398 = sphi 0, %s398
      %s400 = sphi 0, %s398
      %s401 = sphi 0, %s400
      %s415 = sphi 0, %s401
      %s419 = sphi 0, %s419
      %s421 = sphi 0, %s419
      %s422 = sphi 0, %s421
      %s436 = sphi 0, %s422
      %s442 = sphi 0, %s444
      %s445 = sphi 0, %s442
      %s446 = sphi 0, %s445
      %s462 = sphi 0, %s446
    $region4: #{multi_class_network_forward.1} parent=1 // loop_header_branch
      %31 = sbr.rel (%p29) target = $region8
    $region5: #{multi_class_network_forward.1} parent=1 // loop_body
      %s33 = ssub.s32 %s28, 1
      %s34 = ssub.s32 %s28, 2
      %s35 = sadd.s32 %s28, 1
      %s36 = ssub.s32 %s28, %s35
      %p37 = scmp.eq.s32.totalorder %s36, 0
      %s39 = sadd.s32 %s38, 1
      %s40 = scalar_select %p37, %s38, %s39
      %p43 = pneg %p37
      %p44 = scmp.eq.s32.totalorder %s28, 1
      %p45 = por %p43, %p44
      %p46 = scmp.ne.s32.totalorder %s38, %s41
      %p47 = scmp.eq.s32.totalorder %s28, 0
      %p48 = por %p46, %p47
      %p49 = scmp.ne.s32.totalorder %s38, %s41
      %p50 = scmp.eq.s32.totalorder %s33, 1
      %p51 = por %p49, %p50
      %p52 = scmp.ne.s32.totalorder %s41, %s42
      %p53 = scmp.eq.s32.totalorder %s33, 0
      %p54 = por %p52, %p53
      %p55 = scmp.ne.s32.totalorder %s41, %s42
      %p56 = scmp.eq.s32.totalorder %s34, 1
      %p57 = por %p55, %p56
      %p59 = scmp.ne.s32.totalorder %s42, %s58
      %p60 = scmp.eq.s32.totalorder %s34, 0
      %p61 = por %p59, %p60
      %s63 = sadd.s32 %s62, 1
      %p66 = scmp.eq.s32.totalorder %s28, 1
      %p67 = scmp.ne.s32.totalorder %s62, %s64
      %p68 = scmp.eq.s32.totalorder %s28, 0
      %p69 = por %p67, %p68
      %p70 = scmp.ne.s32.totalorder %s62, %s64
      %p71 = scmp.eq.s32.totalorder %s33, 1
      %p72 = por %p70, %p71
      %p73 = scmp.ne.s32.totalorder %s64, %s65
      %p74 = scmp.eq.s32.totalorder %s33, 0
      %p75 = por %p73, %p74
      %p76 = scmp.ne.s32.totalorder %s64, %s65
      %p77 = scmp.eq.s32.totalorder %s34, 1
      %p78 = por %p76, %p77
      %p80 = scmp.ne.s32.totalorder %s65, %s79
      %p81 = scmp.eq.s32.totalorder %s34, 0
      %p82 = por %p80, %p81
      %s84 = sadd.s32 %s83, 1
      %p87 = scmp.eq.s32.totalorder %s28, 1
      %p88 = scmp.ne.s32.totalorder %s83, %s85
      %p89 = scmp.eq.s32.totalorder %s28, 0
      %p90 = por %p88, %p89
      %p91 = scmp.ne.s32.totalorder %s83, %s85
      %p92 = scmp.eq.s32.totalorder %s33, 1
      %p93 = por %p91, %p92
      %p94 = scmp.ne.s32.totalorder %s85, %s86
      %p95 = scmp.eq.s32.totalorder %s33, 0
      %p96 = por %p94, %p95
      %p97 = scmp.ne.s32.totalorder %s85, %s86
      %p98 = scmp.eq.s32.totalorder %s34, 1
      %p99 = por %p97, %p98
      %p101 = scmp.ne.s32.totalorder %s86, %s100
      %p102 = scmp.eq.s32.totalorder %s34, 0
      %p103 = por %p101, %p102
      %s105 = sadd.s32 %s104, 1
      %p108 = scmp.eq.s32.totalorder %s28, 1
      %p109 = scmp.ne.s32.totalorder %s104, %s106
      %p110 = scmp.eq.s32.totalorder %s28, 0
      %p111 = por %p109, %p110
      %p112 = scmp.ne.s32.totalorder %s104, %s106
      %p113 = scmp.eq.s32.totalorder %s33, 1
      %p114 = por %p112, %p113
      %p115 = scmp.ne.s32.totalorder %s106, %s107
      %p116 = scmp.eq.s32.totalorder %s33, 0
      %p117 = por %p115, %p116
      %p118 = scmp.ne.s32.totalorder %s106, %s107
      %p119 = scmp.eq.s32.totalorder %s34, 1
      %p120 = por %p118, %p119
      %p122 = scmp.ne.s32.totalorder %s107, %s121
      %p123 = scmp.eq.s32.totalorder %s34, 0
      %p124 = por %p122, %p123
      %s126 = sadd.s32 %s125, 1
      %p129 = scmp.eq.s32.totalorder %s28, 1
      %p130 = scmp.ne.s32.totalorder %s125, %s127
      %p131 = scmp.eq.s32.totalorder %s28, 0
      %p132 = por %p130, %p131
      %p133 = scmp.ne.s32.totalorder %s125, %s127
      %p134 = scmp.eq.s32.totalorder %s33, 1
      %p135 = por %p133, %p134
      %p136 = scmp.ne.s32.totalorder %s127, %s128
      %p137 = scmp.eq.s32.totalorder %s33, 0
      %p138 = por %p136, %p137
      %p139 = scmp.ne.s32.totalorder %s127, %s128
      %p140 = scmp.eq.s32.totalorder %s34, 1
      %p141 = por %p139, %p140
      %p143 = scmp.ne.s32.totalorder %s128, %s142
      %p144 = scmp.eq.s32.totalorder %s34, 0
      %p145 = por %p143, %p144
      %s147 = sadd.s32 %s146, 1
      %p150 = scmp.eq.s32.totalorder %s28, 1
      %p151 = scmp.ne.s32.totalorder %s146, %s148
      %p152 = scmp.eq.s32.totalorder %s28, 0
      %p153 = por %p151, %p152
      %p154 = scmp.ne.s32.totalorder %s146, %s148
      %p155 = scmp.eq.s32.totalorder %s33, 1
      %p156 = por %p154, %p155
      %p157 = scmp.ne.s32.totalorder %s148, %s149
      %p158 = scmp.eq.s32.totalorder %s33, 0
      %p159 = por %p157, %p158
      %p160 = scmp.ne.s32.totalorder %s148, %s149
      %p161 = scmp.eq.s32.totalorder %s34, 1
      %p162 = por %p160, %p161
      %p164 = scmp.ne.s32.totalorder %s149, %s163
      %p165 = scmp.eq.s32.totalorder %s34, 0
      %p166 = por %p164, %p165
      %s168 = sadd.s32 %s167, 1
      %p171 = scmp.eq.s32.totalorder %s28, 1
      %p172 = scmp.ne.s32.totalorder %s167, %s169
      %p173 = scmp.eq.s32.totalorder %s28, 0
      %p174 = por %p172, %p173
      %p175 = scmp.ne.s32.totalorder %s167, %s169
      %p176 = scmp.eq.s32.totalorder %s33, 1
      %p177 = por %p175, %p176
      %p178 = scmp.ne.s32.totalorder %s169, %s170
      %p179 = scmp.eq.s32.totalorder %s33, 0
      %p180 = por %p178, %p179
      %p181 = scmp.ne.s32.totalorder %s169, %s170
      %p182 = scmp.eq.s32.totalorder %s34, 1
      %p183 = por %p181, %p182
      %p185 = scmp.ne.s32.totalorder %s170, %s184
      %p186 = scmp.eq.s32.totalorder %s34, 0
      %p187 = por %p185, %p186
      %s189 = sadd.s32 %s188, 1
      %p192 = scmp.eq.s32.totalorder %s28, 1
      %p193 = scmp.ne.s32.totalorder %s188, %s190
      %p194 = scmp.eq.s32.totalorder %s28, 0
      %p195 = por %p193, %p194
      %p196 = scmp.ne.s32.totalorder %s188, %s190
      %p197 = scmp.eq.s32.totalorder %s33, 1
      %p198 = por %p196, %p197
      %p199 = scmp.ne.s32.totalorder %s190, %s191
      %p200 = scmp.eq.s32.totalorder %s33, 0
      %p201 = por %p199, %p200
      %p202 = scmp.ne.s32.totalorder %s190, %s191
      %p203 = scmp.eq.s32.totalorder %s34, 1
      %p204 = por %p202, %p203
      %p206 = scmp.ne.s32.totalorder %s191, %s205
      %p207 = scmp.eq.s32.totalorder %s34, 0
      %p208 = por %p206, %p207
      %s210 = sadd.s32 %s209, 1
      %p213 = scmp.eq.s32.totalorder %s28, 1
      %p214 = scmp.ne.s32.totalorder %s209, %s211
      %p215 = scmp.eq.s32.totalorder %s28, 0
      %p216 = por %p214, %p215
      %p217 = scmp.ne.s32.totalorder %s209, %s211
      %p218 = scmp.eq.s32.totalorder %s33, 1
      %p219 = por %p217, %p218
      %p220 = scmp.ne.s32.totalorder %s211, %s212
      %p221 = scmp.eq.s32.totalorder %s33, 0
      %p222 = por %p220, %p221
      %p223 = scmp.ne.s32.totalorder %s211, %s212
      %p224 = scmp.eq.s32.totalorder %s34, 1
      %p225 = por %p223, %p224
      %p227 = scmp.ne.s32.totalorder %s212, %s226
      %p228 = scmp.eq.s32.totalorder %s34, 0
      %p229 = por %p227, %p228
      %s231 = sadd.s32 %s230, 1
      %p234 = scmp.eq.s32.totalorder %s28, 1
      %p235 = scmp.ne.s32.totalorder %s230, %s232
      %p236 = scmp.eq.s32.totalorder %s28, 0
      %p237 = por %p235, %p236
      %p238 = scmp.ne.s32.totalorder %s230, %s232
      %p239 = scmp.eq.s32.totalorder %s33, 1
      %p240 = por %p238, %p239
      %p241 = scmp.ne.s32.totalorder %s232, %s233
      %p242 = scmp.eq.s32.totalorder %s33, 0
      %p243 = por %p241, %p242
      %p244 = scmp.ne.s32.totalorder %s232, %s233
      %p245 = scmp.eq.s32.totalorder %s34, 1
      %p246 = por %p244, %p245
      %p248 = scmp.ne.s32.totalorder %s233, %s247
      %p249 = scmp.eq.s32.totalorder %s34, 0
      %p250 = por %p248, %p249
      %s252 = sadd.s32 %s251, 1
      %p255 = scmp.eq.s32.totalorder %s28, 1
      %p256 = scmp.ne.s32.totalorder %s251, %s253
      %p257 = scmp.eq.s32.totalorder %s28, 0
      %p258 = por %p256, %p257
      %p259 = scmp.ne.s32.totalorder %s251, %s253
      %p260 = scmp.eq.s32.totalorder %s33, 1
      %p261 = por %p259, %p260
      %p262 = scmp.ne.s32.totalorder %s253, %s254
      %p263 = scmp.eq.s32.totalorder %s33, 0
      %p264 = por %p262, %p263
      %p265 = scmp.ne.s32.totalorder %s253, %s254
      %p266 = scmp.eq.s32.totalorder %s34, 1
      %p267 = por %p265, %p266
      %p269 = scmp.ne.s32.totalorder %s254, %s268
      %p270 = scmp.eq.s32.totalorder %s34, 0
      %p271 = por %p269, %p270
      %s273 = sadd.s32 %s272, 1
      %p276 = scmp.eq.s32.totalorder %s28, 1
      %p277 = scmp.ne.s32.totalorder %s272, %s274
      %p278 = scmp.eq.s32.totalorder %s28, 0
      %p279 = por %p277, %p278
      %p280 = scmp.ne.s32.totalorder %s272, %s274
      %p281 = scmp.eq.s32.totalorder %s33, 1
      %p282 = por %p280, %p281
      %p283 = scmp.ne.s32.totalorder %s274, %s275
      %p284 = scmp.eq.s32.totalorder %s33, 0
      %p285 = por %p283, %p284
      %p286 = scmp.ne.s32.totalorder %s274, %s275
      %p287 = scmp.eq.s32.totalorder %s34, 1
      %p288 = por %p286, %p287
      %p290 = scmp.ne.s32.totalorder %s275, %s289
      %p291 = scmp.eq.s32.totalorder %s34, 0
      %p292 = por %p290, %p291
      %s294 = sadd.s32 %s293, 1
      %p297 = scmp.eq.s32.totalorder %s28, 1
      %p298 = scmp.ne.s32.totalorder %s293, %s295
      %p299 = scmp.eq.s32.totalorder %s28, 0
      %p300 = por %p298, %p299
      %p301 = scmp.ne.s32.totalorder %s293, %s295
      %p302 = scmp.eq.s32.totalorder %s33, 1
      %p303 = por %p301, %p302
      %p304 = scmp.ne.s32.totalorder %s295, %s296
      %p305 = scmp.eq.s32.totalorder %s33, 0
      %p306 = por %p304, %p305
      %p307 = scmp.ne.s32.totalorder %s295, %s296
      %p308 = scmp.eq.s32.totalorder %s34, 1
      %p309 = por %p307, %p308
      %p311 = scmp.ne.s32.totalorder %s296, %s310
      %p312 = scmp.eq.s32.totalorder %s34, 0
      %p313 = por %p311, %p312
      %s315 = sadd.s32 %s314, 1
      %p318 = scmp.eq.s32.totalorder %s28, 1
      %p319 = scmp.ne.s32.totalorder %s314, %s316
      %p320 = scmp.eq.s32.totalorder %s28, 0
      %p321 = por %p319, %p320
      %p322 = scmp.ne.s32.totalorder %s314, %s316
      %p323 = scmp.eq.s32.totalorder %s33, 1
      %p324 = por %p322, %p323
      %p325 = scmp.ne.s32.totalorder %s316, %s317
      %p326 = scmp.eq.s32.totalorder %s33, 0
      %p327 = por %p325, %p326
      %p328 = scmp.ne.s32.totalorder %s316, %s317
      %p329 = scmp.eq.s32.totalorder %s34, 1
      %p330 = por %p328, %p329
      %p332 = scmp.ne.s32.totalorder %s317, %s331
      %p333 = scmp.eq.s32.totalorder %s34, 0
      %p334 = por %p332, %p333
      %s336 = sadd.s32 %s335, 1
      %p339 = scmp.eq.s32.totalorder %s28, 1
      %p340 = scmp.ne.s32.totalorder %s335, %s337
      %p341 = scmp.eq.s32.totalorder %s28, 0
      %p342 = por %p340, %p341
      %p343 = scmp.ne.s32.totalorder %s335, %s337
      %p344 = scmp.eq.s32.totalorder %s33, 1
      %p345 = por %p343, %p344
      %p346 = scmp.ne.s32.totalorder %s337, %s338
      %p347 = scmp.eq.s32.totalorder %s33, 0
      %p348 = por %p346, %p347
      %p349 = scmp.ne.s32.totalorder %s337, %s338
      %p350 = scmp.eq.s32.totalorder %s34, 1
      %p351 = por %p349, %p350
      %p353 = scmp.ne.s32.totalorder %s338, %s352
      %p354 = scmp.eq.s32.totalorder %s34, 0
      %p355 = por %p353, %p354
      %s357 = sadd.s32 %s356, 1
      %p360 = scmp.eq.s32.totalorder %s28, 1
      %p361 = scmp.ne.s32.totalorder %s356, %s358
      %p362 = scmp.eq.s32.totalorder %s28, 0
      %p363 = por %p361, %p362
      %p364 = scmp.ne.s32.totalorder %s356, %s358
      %p365 = scmp.eq.s32.totalorder %s33, 1
      %p366 = por %p364, %p365
      %p367 = scmp.ne.s32.totalorder %s358, %s359
      %p368 = scmp.eq.s32.totalorder %s33, 0
      %p369 = por %p367, %p368
      %p370 = scmp.ne.s32.totalorder %s358, %s359
      %p371 = scmp.eq.s32.totalorder %s34, 1
      %p372 = por %p370, %p371
      %p374 = scmp.ne.s32.totalorder %s359, %s373
      %p375 = scmp.eq.s32.totalorder %s34, 0
      %p376 = por %p374, %p375
      %s378 = sadd.s32 %s377, 1
      %p381 = scmp.eq.s32.totalorder %s28, 1
      %p382 = scmp.ne.s32.totalorder %s377, %s379
      %p383 = scmp.eq.s32.totalorder %s28, 0
      %p384 = por %p382, %p383
      %p385 = scmp.ne.s32.totalorder %s377, %s379
      %p386 = scmp.eq.s32.totalorder %s33, 1
      %p387 = por %p385, %p386
      %p388 = scmp.ne.s32.totalorder %s379, %s380
      %p389 = scmp.eq.s32.totalorder %s33, 0
      %p390 = por %p388, %p389
      %p391 = scmp.ne.s32.totalorder %s379, %s380
      %p392 = scmp.eq.s32.totalorder %s34, 1
      %p393 = por %p391, %p392
      %p395 = scmp.ne.s32.totalorder %s380, %s394
      %p396 = scmp.eq.s32.totalorder %s34, 0
      %p397 = por %p395, %p396
      %s399 = sadd.s32 %s398, 1
      %p402 = scmp.eq.s32.totalorder %s28, 1
      %p403 = scmp.ne.s32.totalorder %s398, %s400
      %p404 = scmp.eq.s32.totalorder %s28, 0
      %p405 = por %p403, %p404
      %p406 = scmp.ne.s32.totalorder %s398, %s400
      %p407 = scmp.eq.s32.totalorder %s33, 1
      %p408 = por %p406, %p407
      %p409 = scmp.ne.s32.totalorder %s400, %s401
      %p410 = scmp.eq.s32.totalorder %s33, 0
      %p411 = por %p409, %p410
      %p412 = scmp.ne.s32.totalorder %s400, %s401
      %p413 = scmp.eq.s32.totalorder %s34, 1
      %p414 = por %p412, %p413
      %p416 = scmp.ne.s32.totalorder %s401, %s415
      %p417 = scmp.eq.s32.totalorder %s34, 0
      %p418 = por %p416, %p417
      %s420 = sadd.s32 %s419, 1
      %p423 = scmp.eq.s32.totalorder %s28, 1
      %p424 = scmp.ne.s32.totalorder %s419, %s421
      %p425 = scmp.eq.s32.totalorder %s28, 0
      %p426 = por %p424, %p425
      %p427 = scmp.ne.s32.totalorder %s419, %s421
      %p428 = scmp.eq.s32.totalorder %s33, 1
      %p429 = por %p427, %p428
      %p430 = scmp.ne.s32.totalorder %s421, %s422
      %p431 = scmp.eq.s32.totalorder %s33, 0
      %p432 = por %p430, %p431
      %p433 = scmp.ne.s32.totalorder %s421, %s422
      %p434 = scmp.eq.s32.totalorder %s34, 1
      %p435 = por %p433, %p434
      %p437 = scmp.ne.s32.totalorder %s422, %s436
      %p438 = scmp.eq.s32.totalorder %s34, 0
      %p439 = por %p437, %p438
      %s440 = ssub.s32 %s28, %s35
      %p441 = scmp.eq.s32.totalorder %s440, 0
      %s443 = sadd.s32 %s442, 1
      %s444 = scalar_select %p441, %s442, %s443
      %p447 = pneg %p441
      %p448 = scmp.eq.s32.totalorder %s28, 1
      %p449 = por %p447, %p448
      %p450 = scmp.ne.s32.totalorder %s442, %s445
      %p451 = scmp.eq.s32.totalorder %s28, 0
      %p452 = por %p450, %p451
      %p453 = scmp.ne.s32.totalorder %s442, %s445
      %p454 = scmp.eq.s32.totalorder %s33, 1
      %p455 = por %p453, %p454
      %p456 = scmp.ne.s32.totalorder %s445, %s446
      %p457 = scmp.eq.s32.totalorder %s33, 0
      %p458 = por %p456, %p457
      %p459 = scmp.ne.s32.totalorder %s445, %s446
      %p460 = scmp.eq.s32.totalorder %s34, 1
      %p461 = por %p459, %p460
      %p463 = scmp.ne.s32.totalorder %s446, %s462
      %p464 = scmp.eq.s32.totalorder %s34, 0
      %p465 = por %p463, %p464
      %p466 = scmp.le.s32.totalorder 1, %s28
      %p467 = scmp.lt.s32.totalorder %s28, 3
      %p468 = pnand %p466, %p467
      %p469 = pneg %p468
      // Predicated region
      $region9: #{multi_class_network_forward.1} parent=5 // pred_check
        _
      $region10: #{multi_class_network_forward.1} parent=5 // pred_check_branch
        %471 = sbr.rel (%p468) target = $region12
      $region11: #{multi_class_network_forward.1} parent=5 // pred_region
        %s472 = ssub.s32 %s28, 1
        // Predicated region
        $region13: #{multi_class_network_forward.1} parent=11 // pred_check
          %p473 = pneg %p75
        $region14: #{multi_class_network_forward.1} parent=11 // pred_check_branch
          %475 = sbr.rel (%p473) target = $region16
        $region15: #{multi_class_network_forward.1} parent=11 // pred_region
          _
        $region16: #{multi_class_network_forward.1} parent=11 // pred_fallthru
          _
        // Predicated region
        $region17: #{multi_class_network_forward.1} parent=11 // pred_check
          %p476 = pneg %p96
        $region18: #{multi_class_network_forward.1} parent=11 // pred_check_branch
          %478 = sbr.rel (%p476) target = $region20
        $region19: #{multi_class_network_forward.1} parent=11 // pred_region
          _
        $region20: #{multi_class_network_forward.1} parent=11 // pred_fallthru
          _
        // Predicated region
        $region21: #{multi_class_network_forward.1} parent=11 // pred_check
          %p479 = pneg %p117
        $region22: #{multi_class_network_forward.1} parent=11 // pred_check_branch
          %481 = sbr.rel (%p479) target = $region24
        $region23: #{multi_class_network_forward.1} parent=11 // pred_region
          _
        $region24: #{multi_class_network_forward.1} parent=11 // pred_fallthru
          _
        // Predicated region
        $region25: #{multi_class_network_forward.1} parent=11 // pred_check
          %p482 = pneg %p138
        $region26: #{multi_class_network_forward.1} parent=11 // pred_check_branch
          %484 = sbr.rel (%p482) target = $region28
        $region27: #{multi_class_network_forward.1} parent=11 // pred_region
          _
        $region28: #{multi_class_network_forward.1} parent=11 // pred_fallthru
          _
        // Predicated region
        $region29: #{multi_class_network_forward.1} parent=11 // pred_check
          %p485 = pneg %p159
        $region30: #{multi_class_network_forward.1} parent=11 // pred_check_branch
          %487 = sbr.rel (%p485) target = $region32
        $region31: #{multi_class_network_forward.1} parent=11 // pred_region
          _
        $region32: #{multi_class_network_forward.1} parent=11 // pred_fallthru
          _
        // Predicated region
        $region33: #{multi_class_network_forward.1} parent=11 // pred_check
          %p488 = pneg %p180
        $region34: #{multi_class_network_forward.1} parent=11 // pred_check_branch
          %490 = sbr.rel (%p488) target = $region36
        $region35: #{multi_class_network_forward.1} parent=11 // pred_region
          _
        $region36: #{multi_class_network_forward.1} parent=11 // pred_fallthru
          _
        // Predicated region
        $region37: #{multi_class_network_forward.1} parent=11 // pred_check
          %p491 = pneg %p201
        $region38: #{multi_class_network_forward.1} parent=11 // pred_check_branch
          %493 = sbr.rel (%p491) target = $region40
        $region39: #{multi_class_network_forward.1} parent=11 // pred_region
          _
        $region40: #{multi_class_network_forward.1} parent=11 // pred_fallthru
          _
        // Predicated region
        $region41: #{multi_class_network_forward.1} parent=11 // pred_check
          %p494 = pneg %p222
        $region42: #{multi_class_network_forward.1} parent=11 // pred_check_branch
          %496 = sbr.rel (%p494) target = $region44
        $region43: #{multi_class_network_forward.1} parent=11 // pred_region
          _
        $region44: #{multi_class_network_forward.1} parent=11 // pred_fallthru
          _
        // Predicated region
        $region45: #{multi_class_network_forward.1} parent=11 // pred_check
          %p497 = pneg %p243
        $region46: #{multi_class_network_forward.1} parent=11 // pred_check_branch
          %499 = sbr.rel (%p497) target = $region48
        $region47: #{multi_class_network_forward.1} parent=11 // pred_region
          _
        $region48: #{multi_class_network_forward.1} parent=11 // pred_fallthru
          _
        // Predicated region
        $region49: #{multi_class_network_forward.1} parent=11 // pred_check
          %p500 = pneg %p264
        $region50: #{multi_class_network_forward.1} parent=11 // pred_check_branch
          %502 = sbr.rel (%p500) target = $region52
        $region51: #{multi_class_network_forward.1} parent=11 // pred_region
          _
        $region52: #{multi_class_network_forward.1} parent=11 // pred_fallthru
          _
        // Predicated region
        $region53: #{multi_class_network_forward.1} parent=11 // pred_check
          %p503 = pneg %p285
        $region54: #{multi_class_network_forward.1} parent=11 // pred_check_branch
          %505 = sbr.rel (%p503) target = $region56
        $region55: #{multi_class_network_forward.1} parent=11 // pred_region
          _
        $region56: #{multi_class_network_forward.1} parent=11 // pred_fallthru
          _
        // Predicated region
        $region57: #{multi_class_network_forward.1} parent=11 // pred_check
          %p506 = pneg %p306
        $region58: #{multi_class_network_forward.1} parent=11 // pred_check_branch
          %508 = sbr.rel (%p506) target = $region60
        $region59: #{multi_class_network_forward.1} parent=11 // pred_region
          _
        $region60: #{multi_class_network_forward.1} parent=11 // pred_fallthru
          _
        // Predicated region
        $region61: #{multi_class_network_forward.1} parent=11 // pred_check
          %p509 = pneg %p327
        $region62: #{multi_class_network_forward.1} parent=11 // pred_check_branch
          %511 = sbr.rel (%p509) target = $region64
        $region63: #{multi_class_network_forward.1} parent=11 // pred_region
          _
        $region64: #{multi_class_network_forward.1} parent=11 // pred_fallthru
          _
        // Predicated region
        $region65: #{multi_class_network_forward.1} parent=11 // pred_check
          %p512 = pneg %p348
        $region66: #{multi_class_network_forward.1} parent=11 // pred_check_branch
          %514 = sbr.rel (%p512) target = $region68
        $region67: #{multi_class_network_forward.1} parent=11 // pred_region
          _
        $region68: #{multi_class_network_forward.1} parent=11 // pred_fallthru
          _
        // Predicated region
        $region69: #{multi_class_network_forward.1} parent=11 // pred_check
          %p515 = pneg %p369
        $region70: #{multi_class_network_forward.1} parent=11 // pred_check_branch
          %517 = sbr.rel (%p515) target = $region72
        $region71: #{multi_class_network_forward.1} parent=11 // pred_region
          _
        $region72: #{multi_class_network_forward.1} parent=11 // pred_fallthru
          _
        // Predicated region
        $region73: #{multi_class_network_forward.1} parent=11 // pred_check
          %p518 = pneg %p390
        $region74: #{multi_class_network_forward.1} parent=11 // pred_check_branch
          %520 = sbr.rel (%p518) target = $region76
        $region75: #{multi_class_network_forward.1} parent=11 // pred_region
          _
        $region76: #{multi_class_network_forward.1} parent=11 // pred_fallthru
          _
        // Predicated region
        $region77: #{multi_class_network_forward.1} parent=11 // pred_check
          %p521 = pneg %p411
        $region78: #{multi_class_network_forward.1} parent=11 // pred_check_branch
          %523 = sbr.rel (%p521) target = $region80
        $region79: #{multi_class_network_forward.1} parent=11 // pred_region
          _
        $region80: #{multi_class_network_forward.1} parent=11 // pred_fallthru
          _
        // Predicated region
        $region81: #{multi_class_network_forward.1} parent=11 // pred_check
          %p524 = pneg %p432
        $region82: #{multi_class_network_forward.1} parent=11 // pred_check_branch
          %526 = sbr.rel (%p524) target = $region84
        $region83: #{multi_class_network_forward.1} parent=11 // pred_region
          _
        $region84: #{multi_class_network_forward.1} parent=11 // pred_fallthru
          _
      $region12: #{multi_class_network_forward.1} parent=5 // pred_fallthru
        _
      %p527 = scmp.lt.s32.totalorder %s28, 2
      // Predicated region
      $region85: #{multi_class_network_forward.1} parent=5 // pred_check
        %p528 = pneg %p527
      $region86: #{multi_class_network_forward.1} parent=5 // pred_check_branch
        %530 = sbr.rel (%p528) target = $region88
      $region87: #{multi_class_network_forward.1} parent=5 // pred_region
        // Predicated region
        $region89: #{multi_class_network_forward.1} parent=87 // pred_check
          %p531 = pneg %p48
        $region90: #{multi_class_network_forward.1} parent=87 // pred_check_branch
          %533 = sbr.rel (%p531) target = $region92
        $region91: #{multi_class_network_forward.1} parent=87 // pred_region
          %p534 = scmp.lt.s32.totalorder %s28, 1
          %s535 = scalar_select %p534, %s28, 1
          %s536 = smul.addr %s535, 36
          %s537 = smul.addr %s536, 8
          %s538 = scalar_lea.vmem %s0, %s537
        $region92: #{multi_class_network_forward.1} parent=87 // pred_fallthru
          _
      $region88: #{multi_class_network_forward.1} parent=5 // pred_fallthru
        _
      %p539 = scmp.le.s32.totalorder 1, %s28
      %p540 = scmp.lt.s32.totalorder %s28, 3
      %p541 = pnand %p539, %p540
      %p542 = pneg %p541
      // Predicated region
      $region93: #{multi_class_network_forward.1} parent=5 // pred_check
        _
      $region94: #{multi_class_network_forward.1} parent=5 // pred_check_branch
        %544 = sbr.rel (%p541) target = $region96
      $region95: #{multi_class_network_forward.1} parent=5 // pred_region
        %s545 = ssub.s32 %s28, 1
        %p546 = scmp.lt.s32.totalorder %s33, 1
        %s547 = scalar_select %p546, %s33, 1
        %s548 = smul.addr %s547, 36
        %s549 = smul.addr %s548, 8
        %s550 = scalar_lea.vmem %s0, %s549
        %p551 = pneg %p54
        %p552 = pneg %p51
        %p553 = pneg %p75
        %p554 = pneg %p72
        %p555 = pneg %p96
        %p556 = pneg %p93
        %p557 = pneg %p117
        %p558 = pneg %p114
        %p559 = pneg %p138
        %p560 = pneg %p135
        %p561 = pneg %p159
        %p562 = pneg %p156
        %p563 = pneg %p180
        %p564 = pneg %p177
        %p565 = pneg %p201
        %p566 = pneg %p198
        %p567 = pneg %p222
        %p568 = pneg %p219
        %p569 = pneg %p243
        %p570 = pneg %p240
        %p571 = pneg %p264
        %p572 = pneg %p261
        %p573 = pneg %p285
        %p574 = pneg %p282
        %p575 = pneg %p306
        %p576 = pneg %p303
        %p577 = pneg %p327
        %p578 = pneg %p324
        %p579 = pneg %p348
        %p580 = pneg %p345
        %p581 = pneg %p369
        %p582 = pneg %p366
        %p583 = pneg %p390
        %p584 = pneg %p387
        %p585 = pneg %p411
        %p586 = pneg %p408
        %p587 = pneg %p432
        %p588 = pneg %p429
        %p589 = pneg %p458
        %p590 = pneg %p455
        %s591 = sand.u32 %s445, 1
        %s592 = scalar_lea.sflag [#allocation3], %s591
        %s593 = sand.u32 %s445, 1
        %s594 = scalar_lea.vmem [#allocation2], %s593
        %p595 = scmp.lt.s32.totalorder %s33, 1
        %s596 = scalar_select %p595, %s33, 1
        %s597 = smul.addr %s596, 36
        %s598 = smul.addr %s597, 8
        %s599 = scalar_lea.vmem %s0, %s598
        %v600 = vld [vmem:[%s599] sm:$0xff]
        %v601 = vld [vmem:[%s599 + $0x8] sm:$0xff]
        %v602 = vld [vmem:[%s599 + $0x10] sm:$0xff]
        %v603 = vld [vmem:[%s599 + $0x18] sm:$0xff]
        %v604 = vld [vmem:[%s599 + $0x20] sm:$0xff]
        %v605 = vld [vmem:[%s599 + $0x28] sm:$0xff]
        %v606 = vld [vmem:[%s599 + $0x30] sm:$0xff]
        %v607 = vld [vmem:[%s599 + $0x38] sm:$0xff]
        %v608 = vld [vmem:[%s599 + $0x40] sm:$0xff]
        %v609 = vld [vmem:[%s599 + $0x48] sm:$0xff]
        %v610 = vld [vmem:[%s599 + $0x50] sm:$0xff]
        %v611 = vld [vmem:[%s599 + $0x58] sm:$0xff]
        %v612 = vld [vmem:[%s599 + $0x60] sm:$0xff]
        %v613 = vld [vmem:[%s599 + $0x68] sm:$0xff]
        %v614 = vld [vmem:[%s599 + $0x70] sm:$0xff]
        %v615 = vld [vmem:[%s599 + $0x78] sm:$0xff]
        %v616 = vld [vmem:[%s599 + $0x80] sm:$0xff]
        %v617 = vld [vmem:[%s599 + $0x88] sm:$0xff]
        %v618 = vld [vmem:[%s599 + $0x90] sm:$0xff]
        %v619 = vld [vmem:[%s599 + $0x98] sm:$0xff]
        %v620 = vld [vmem:[%s599 + $0xa0] sm:$0xff]
        %v621 = vld [vmem:[%s599 + $0xa8] sm:$0xff]
        %v622 = vld [vmem:[%s599 + $0xb0] sm:$0xff]
        %v623 = vld [vmem:[%s599 + $0xb8] sm:$0xff]
        %v624 = vld [vmem:[%s599 + $0xc0] sm:$0xff]
        %v625 = vld [vmem:[%s599 + $0xc8] sm:$0xff]
        %v626 = vld [vmem:[%s599 + $0xd0] sm:$0xff]
        %v627 = vld [vmem:[%s599 + $0xd8] sm:$0xff]
        %v628 = vld [vmem:[%s599 + $0xe0] sm:$0xff]
        %v629 = vld [vmem:[%s599 + $0xe8] sm:$0xff]
        %v630 = vld [vmem:[%s599 + $0xf0] sm:$0xff]
        %v631 = vld [vmem:[%s599 + $0xf8] sm:$0xff]
        %v632 = vld [vmem:[%s599 + $0x100] sm:$0xff]
        %v633 = vld [vmem:[%s599 + $0x108] sm:$0xff]
        %v634 = vld [vmem:[%s599 + $0x110] sm:$0xff]
        %v635 = vld [vmem:[%s599 + $0x118] sm:$0xff]
        %v636 = vld [vmem:[%s1] sm:$0xff]
        %v637 = vld [vmem:[%s1 + $0x8] sm:$0xff]
        %v638 = vld [vmem:[%s1 + $0x10] sm:$0xff]
        %v639 = vld [vmem:[%s1 + $0x18] sm:$0xff]
        %v640 = vld [vmem:[%s1 + $0x20] sm:$0xff]
        %v641 = vld [vmem:[%s1 + $0x28] sm:$0xff]
        %v642 = vld [vmem:[%s1 + $0x30] sm:$0xff]
        %v643 = vld [vmem:[%s1 + $0x38] sm:$0xff]
        %v644 = vld [vmem:[%s1 + $0x40] sm:$0xff]
        %v645 = vld [vmem:[%s1 + $0x48] sm:$0xff]
        %v646 = vld [vmem:[%s1 + $0x50] sm:$0xff]
        %v647 = vld [vmem:[%s1 + $0x58] sm:$0xff]
        %v648 = vld [vmem:[%s1 + $0x60] sm:$0xff]
        %v649 = vld [vmem:[%s1 + $0x68] sm:$0xff]
        %v650 = vld [vmem:[%s1 + $0x70] sm:$0xff]
        %v651 = vld [vmem:[%s1 + $0x78] sm:$0xff]
        %v652 = vld [vmem:[%s1 + $0x80] sm:$0xff]
        %v653 = vld [vmem:[%s1 + $0x88] sm:$0xff]
        %v654 = vld [vmem:[%s1 + $0x90] sm:$0xff]
        %v655 = vld [vmem:[%s1 + $0x98] sm:$0xff]
        %v656 = vld [vmem:[%s1 + $0xa0] sm:$0xff]
        %v657 = vld [vmem:[%s1 + $0xa8] sm:$0xff]
        %v658 = vld [vmem:[%s1 + $0xb0] sm:$0xff]
        %v659 = vld [vmem:[%s1 + $0xb8] sm:$0xff]
        %v660 = vld [vmem:[%s1 + $0xc0] sm:$0xff]
        %v661 = vld [vmem:[%s1 + $0xc8] sm:$0xff]
        %v662 = vld [vmem:[%s1 + $0xd0] sm:$0xff]
        %v663 = vld [vmem:[%s1 + $0xd8] sm:$0xff]
        %v664 = vld [vmem:[%s1 + $0xe0] sm:$0xff]
        %v665 = vld [vmem:[%s1 + $0xe8] sm:$0xff]
        %v666 = vld [vmem:[%s1 + $0xf0] sm:$0xff]
        %v667 = vld [vmem:[%s1 + $0xf8] sm:$0xff]
        %v668 = vld [vmem:[%s1 + $0x100] sm:$0xff]
        %v669 = vld [vmem:[%s1 + $0x108] sm:$0xff]
        %v670 = vld [vmem:[%s1 + $0x110] sm:$0xff]
        %v671 = vld [vmem:[%s1 + $0x118] sm:$0xff]
        %v672 = vld [vmem:[%s1 + $0x120] sm:$0xff]
        %v673 = vld [vmem:[%s1 + $0x128] sm:$0xff]
        %v674 = vld [vmem:[%s1 + $0x130] sm:$0xff]
        %v675 = vld [vmem:[%s1 + $0x138] sm:$0xff]
        %v676 = vld [vmem:[%s1 + $0x140] sm:$0xff]
        %v677 = vld [vmem:[%s1 + $0x148] sm:$0xff]
        %v678 = vld [vmem:[%s1 + $0x150] sm:$0xff]
        %v679 = vld [vmem:[%s1 + $0x158] sm:$0xff]
        %v680 = vld [vmem:[%s1 + $0x160] sm:$0xff]
        %v681 = vld [vmem:[%s1 + $0x168] sm:$0xff]
        %v682 = vld [vmem:[%s1 + $0x170] sm:$0xff]
        %v683 = vld [vmem:[%s1 + $0x178] sm:$0xff]
        %v684 = vld [vmem:[%s1 + $0x180] sm:$0xff]
        %v685 = vld [vmem:[%s1 + $0x188] sm:$0xff]
        %v686 = vld [vmem:[%s1 + $0x190] sm:$0xff]
        %v687 = vld [vmem:[%s1 + $0x198] sm:$0xff]
        %v688 = vld [vmem:[%s1 + $0x1a0] sm:$0xff]
        %v689 = vld [vmem:[%s1 + $0x1a8] sm:$0xff]
        %v690 = vld [vmem:[%s1 + $0x1b0] sm:$0xff]
        %v691 = vld [vmem:[%s1 + $0x1b8] sm:$0xff]
        %v692 = vld [vmem:[%s1 + $0x1c0] sm:$0xff]
        %v693 = vld [vmem:[%s1 + $0x1c8] sm:$0xff]
        %v694 = vld [vmem:[%s1 + $0x1d0] sm:$0xff]
        %v695 = vld [vmem:[%s1 + $0x1d8] sm:$0xff]
        %v696 = vld [vmem:[%s1 + $0x1e0] sm:$0xff]
        %v697 = vld [vmem:[%s1 + $0x1e8] sm:$0xff]
        %v698 = vld [vmem:[%s1 + $0x1f0] sm:$0xff]
        %v699 = vld [vmem:[%s1 + $0x1f8] sm:$0xff]
        %v700 = vld [vmem:[%s1 + $0x200] sm:$0xff]
        %v701 = vld [vmem:[%s1 + $0x208] sm:$0xff]
        %v702 = vld [vmem:[%s1 + $0x210] sm:$0xff]
        %v703 = vld [vmem:[%s1 + $0x218] sm:$0xff]
        %v704 = vld [vmem:[%s1 + $0x220] sm:$0xff]
        %v705 = vld [vmem:[%s1 + $0x228] sm:$0xff]
        %v706 = vld [vmem:[%s1 + $0x230] sm:$0xff]
        %v707 = vld [vmem:[%s1 + $0x238] sm:$0xff]
        %s708 = scalar_lea.vmem %s1, 576
        %v709 = vld [vmem:[%s708] sm:$0xff]
        %v710 = vld [vmem:[%s708 + $0x8] sm:$0xff]
        %v711 = vld [vmem:[%s708 + $0x10] sm:$0xff]
        %v712 = vld [vmem:[%s708 + $0x18] sm:$0xff]
        %v713 = vld [vmem:[%s708 + $0x20] sm:$0xff]
        %v714 = vld [vmem:[%s708 + $0x28] sm:$0xff]
        %v715 = vld [vmem:[%s708 + $0x30] sm:$0xff]
        %v716 = vld [vmem:[%s708 + $0x38] sm:$0xff]
        %v717 = vld [vmem:[%s708 + $0x40] sm:$0xff]
        %v718 = vld [vmem:[%s708 + $0x48] sm:$0xff]
        %v719 = vld [vmem:[%s708 + $0x50] sm:$0xff]
        %v720 = vld [vmem:[%s708 + $0x58] sm:$0xff]
        %v721 = vld [vmem:[%s708 + $0x60] sm:$0xff]
        %v722 = vld [vmem:[%s708 + $0x68] sm:$0xff]
        %v723 = vld [vmem:[%s708 + $0x70] sm:$0xff]
        %v724 = vld [vmem:[%s708 + $0x78] sm:$0xff]
        %v725 = vld [vmem:[%s708 + $0x80] sm:$0xff]
        %v726 = vld [vmem:[%s708 + $0x88] sm:$0xff]
        %v727 = vld [vmem:[%s708 + $0x90] sm:$0xff]
        %v728 = vld [vmem:[%s708 + $0x98] sm:$0xff]
        %v729 = vld [vmem:[%s708 + $0xa0] sm:$0xff]
        %v730 = vld [vmem:[%s708 + $0xa8] sm:$0xff]
        %v731 = vld [vmem:[%s708 + $0xb0] sm:$0xff]
        %v732 = vld [vmem:[%s708 + $0xb8] sm:$0xff]
        %v733 = vld [vmem:[%s708 + $0xc0] sm:$0xff]
        %v734 = vld [vmem:[%s708 + $0xc8] sm:$0xff]
        %v735 = vld [vmem:[%s708 + $0xd0] sm:$0xff]
        %v736 = vld [vmem:[%s708 + $0xd8] sm:$0xff]
        %v737 = vld [vmem:[%s708 + $0xe0] sm:$0xff]
        %v738 = vld [vmem:[%s708 + $0xe8] sm:$0xff]
        %v739 = vld [vmem:[%s708 + $0xf0] sm:$0xff]
        %v740 = vld [vmem:[%s708 + $0xf8] sm:$0xff]
        %v741 = vld [vmem:[%s708 + $0x100] sm:$0xff]
        %v742 = vld [vmem:[%s708 + $0x108] sm:$0xff]
        %v743 = vld [vmem:[%s708 + $0x110] sm:$0xff]
        %v744 = vld [vmem:[%s708 + $0x118] sm:$0xff]
        %v745 = vld [vmem:[%s708 + $0x120] sm:$0xff]
        %v746 = vld [vmem:[%s708 + $0x128] sm:$0xff]
        %v747 = vld [vmem:[%s708 + $0x130] sm:$0xff]
        %v748 = vld [vmem:[%s708 + $0x138] sm:$0xff]
        %v749 = vld [vmem:[%s708 + $0x140] sm:$0xff]
        %v750 = vld [vmem:[%s708 + $0x148] sm:$0xff]
        %v751 = vld [vmem:[%s708 + $0x150] sm:$0xff]
        %v752 = vld [vmem:[%s708 + $0x158] sm:$0xff]
        %v753 = vld [vmem:[%s708 + $0x160] sm:$0xff]
        %v754 = vld [vmem:[%s708 + $0x168] sm:$0xff]
        %v755 = vld [vmem:[%s708 + $0x170] sm:$0xff]
        %v756 = vld [vmem:[%s708 + $0x178] sm:$0xff]
        %v757 = vld [vmem:[%s708 + $0x180] sm:$0xff]
        %v758 = vld [vmem:[%s708 + $0x188] sm:$0xff]
        %v759 = vld [vmem:[%s708 + $0x190] sm:$0xff]
        %v760 = vld [vmem:[%s708 + $0x198] sm:$0xff]
        %v761 = vld [vmem:[%s708 + $0x1a0] sm:$0xff]
        %v762 = vld [vmem:[%s708 + $0x1a8] sm:$0xff]
        %v763 = vld [vmem:[%s708 + $0x1b0] sm:$0xff]
        %v764 = vld [vmem:[%s708 + $0x1b8] sm:$0xff]
        %v765 = vld [vmem:[%s708 + $0x1c0] sm:$0xff]
        %v766 = vld [vmem:[%s708 + $0x1c8] sm:$0xff]
        %v767 = vld [vmem:[%s708 + $0x1d0] sm:$0xff]
        %v768 = vld [vmem:[%s708 + $0x1d8] sm:$0xff]
        %v769 = vld [vmem:[%s708 + $0x1e0] sm:$0xff]
        %v770 = vld [vmem:[%s708 + $0x1e8] sm:$0xff]
        %v771 = vld [vmem:[%s708 + $0x1f0] sm:$0xff]
        %v772 = vld [vmem:[%s708 + $0x1f8] sm:$0xff]
        %v773 = vld [vmem:[%s708 + $0x200] sm:$0xff]
        %v774 = vld [vmem:[%s708 + $0x208] sm:$0xff]
        %v775 = vld [vmem:[%s708 + $0x210] sm:$0xff]
        %v776 = vld [vmem:[%s708 + $0x218] sm:$0xff]
        %v777 = vld [vmem:[%s708 + $0x220] sm:$0xff]
        %v778 = vld [vmem:[%s708 + $0x228] sm:$0xff]
        %v779 = vld [vmem:[%s708 + $0x230] sm:$0xff]
        %v780 = vld [vmem:[%s708 + $0x238] sm:$0xff]
        %vm817 = vcmask 1046528
        %v818 = vrot.slane %v600, 1
        %v819 = vrot.slane %v603, 1
        %v820 = vsel %vm817, %v818, %v819
        %v821 = vrot.slane %v601, 1
        %v822 = vrot.slane %v604, 1
        %v823 = vsel %vm817, %v821, %v822
        %v824 = vrot.slane %v602, 1
        %v825 = vrot.slane %v605, 1
        %v826 = vsel %vm817, %v824, %v825
        %v827 = vrot.slane %v606, 1
        %v828 = vsel %vm817, %v819, %v827
        %v829 = vrot.slane %v607, 1
        %v830 = vsel %vm817, %v822, %v829
        %v831 = vrot.slane %v608, 1
        %v832 = vsel %vm817, %v825, %v831
        %v833 = vrot.slane %v609, 1
        %v834 = vsel %vm817, %v827, %v833
        %v835 = vrot.slane %v610, 1
        %v836 = vsel %vm817, %v829, %v835
        %v837 = vrot.slane %v611, 1
        %v838 = vsel %vm817, %v831, %v837
        %v839 = vrot.slane %v612, 1
        %v840 = vsel %vm817, %v833, %v839
        %v841 = vrot.slane %v613, 1
        %v842 = vsel %vm817, %v835, %v841
        %v843 = vrot.slane %v614, 1
        %v844 = vsel %vm817, %v837, %v843
        %v845 = vrot.slane %v615, 1
        %v846 = vsel %vm817, %v839, %v845
        %v847 = vrot.slane %v616, 1
        %v848 = vsel %vm817, %v841, %v847
        %v849 = vrot.slane %v617, 1
        %v850 = vsel %vm817, %v843, %v849
        %v851 = vrot.slane %v618, 1
        %v852 = vsel %vm817, %v845, %v851
        %v853 = vrot.slane %v619, 1
        %v854 = vsel %vm817, %v847, %v853
        %v855 = vrot.slane %v620, 1
        %v856 = vsel %vm817, %v849, %v855
        %v857 = vrot.slane %v621, 1
        %v858 = vsel %vm817, %v851, %v857
        %v859 = vrot.slane %v622, 1
        %v860 = vsel %vm817, %v853, %v859
        %v861 = vrot.slane %v623, 1
        %v862 = vsel %vm817, %v855, %v861
        %v863 = vrot.slane %v624, 1
        %v864 = vsel %vm817, %v857, %v863
        %v865 = vrot.slane %v625, 1
        %v866 = vsel %vm817, %v859, %v865
        %v867 = vrot.slane %v626, 1
        %v868 = vsel %vm817, %v861, %v867
        %v869 = vrot.slane %v627, 1
        %v870 = vsel %vm817, %v863, %v869
        %v871 = vrot.slane %v628, 1
        %v872 = vsel %vm817, %v865, %v871
        %v873 = vrot.slane %v629, 1
        %v874 = vsel %vm817, %v867, %v873
        %v875 = vrot.slane %v630, 1
        %v876 = vsel %vm817, %v869, %v875
        %v877 = vrot.slane %v631, 1
        %v878 = vsel %vm817, %v871, %v877
        %v879 = vrot.slane %v632, 1
        %v880 = vsel %vm817, %v873, %v879
        %v881 = vrot.slane %v633, 1
        %v882 = vsel %vm817, %v875, %v881
        %v883 = vrot.slane %v634, 1
        %v884 = vsel %vm817, %v877, %v883
        %v885 = vrot.slane %v635, 1
        %v886 = vsel %vm817, %v879, %v885
        %vm911 = vcmask 261120
        %v912 = vsel %vm911, %v826, 0
        %v914 = vsel %vm911, %v832, 0
        %v916 = vsel %vm911, %v838, 0
        %v918 = vsel %vm911, %v844, 0
        %v920 = vsel %vm911, %v850, 0
        %v922 = vsel %vm911, %v856, 0
        %v924 = vsel %vm911, %v862, 0
        %v926 = vsel %vm911, %v868, 0
        %v928 = vsel %vm911, %v874, 0
        %v930 = vsel %vm911, %v880, 0
        %v932 = vsel %vm911, %v886, 0
        %v934 = vsel %vm911, %v885, 0
        %936 = vmatprep.subr.mxu0 %v710
        %937 = vmatpush1.msra.mxu0 %v709
        %938 = vmatprep.subr.mxu0 %v712
        %939 = vmatpush1.msra.mxu0 %v711
        %940 = vmatprep.subr.mxu0 %v714
        %941 = vmatpush1.msra.mxu0 %v713
        %942 = vmatprep.subr.mxu0 %v716
        %943 = vmatpush1.msra.mxu0 %v715
        %944 = vmatprep.subr.mxu0 %v718
        %945 = vmatpush1.msra.mxu0 %v717
        %946 = vmatprep.subr.mxu0 %v720
        %947 = vmatpush1.msra.mxu0 %v719
        %948 = vmatprep.subr.mxu0 %v722
        %949 = vmatpush1.msra.mxu0 %v721
        %950 = vmatprep.subr.mxu0 %v724
        %951 = vmatpush1.msra.mxu0 %v723
        %952 = vmatprep.subr.mxu0 %v726
        %953 = vmatpush1.msra.mxu0 %v725
        %954 = vmatprep.subr.mxu0 %v728
        %955 = vmatpush1.msra.mxu0 %v727
        %956 = vmatprep.subr.mxu0 %v730
        %957 = vmatpush1.msra.mxu0 %v729
        %958 = vmatprep.subr.mxu0 %v732
        %959 = vmatpush1.msra.mxu0 %v731
        %960 = vmatprep.subr.mxu0 %v734
        %961 = vmatpush1.msra.mxu0 %v733
        %962 = vmatprep.subr.mxu0 %v736
        %963 = vmatpush1.msra.mxu0 %v735
        %964 = vmatprep.subr.mxu0 %v738
        %965 = vmatpush1.msra.mxu0 %v737
        %966 = vmatprep.subr.mxu0 %v740
        %967 = vmatpush1.msra.mxu0 %v739
        %968 = vmatprep.subr.mxu0 %v742
        %969 = vmatpush1.msra.mxu0 %v741
        %970 = vmatprep.subr.mxu0 %v744
        %971 = vmatpush1.msra.mxu0 %v743
        %972 = vmatprep.subr.mxu0 %v746
        %973 = vmatpush1.msra.mxu0 %v745
        %974 = vmatprep.subr.mxu0 %v748
        %975 = vmatpush1.msra.mxu0 %v747
        %976 = vmatprep.subr.mxu0 %v750
        %977 = vmatpush1.msra.mxu0 %v749
        %978 = vmatprep.subr.mxu0 %v752
        %979 = vmatpush1.msra.mxu0 %v751
        %980 = vmatprep.subr.mxu0 %v754
        %981 = vmatpush1.msra.mxu0 %v753
        %982 = vmatprep.subr.mxu0 %v756
        %983 = vmatpush1.msra.mxu0 %v755
        %984 = vmatprep.subr.mxu0 %v758
        %985 = vmatpush1.msra.mxu0 %v757
        %986 = vmatprep.subr.mxu0 %v760
        %987 = vmatpush1.msra.mxu0 %v759
        %988 = vmatprep.subr.mxu0 %v762
        %989 = vmatpush1.msra.mxu0 %v761
        %990 = vmatprep.subr.mxu0 %v764
        %991 = vmatpush1.msra.mxu0 %v763
        %992 = vmatprep.subr.mxu0 %v766
        %993 = vmatpush1.msra.mxu0 %v765
        %994 = vmatprep.subr.mxu0 %v768
        %995 = vmatpush1.msra.mxu0 %v767
        %996 = vmatprep.subr.mxu0 %v770
        %997 = vmatpush1.msra.mxu0 %v769
        %998 = vmatprep.subr.mxu0 %v772
        %999 = vmatpush1.msra.mxu0 %v771
        %1000 = vmatprep.mubr.f32.mxu0 %v823
        %1001 = vmatmul.mubr.f32.gmra.mrb[0].mxu0 %v820
        %v1002 = vpop.f32.mrb[0].mxu0
        %v1003 = vadd.f32 0.0, %v1002
        %v1004 = vpop.f32.mrb[0].mxu0
        %v1005 = vadd.f32 0.0, %v1004
        %1006 = vmatprep.mubr.f32.mxu0 %v830
        %1007 = vmatmul.mubr.f32.gmra.mrb[0].mxu0 %v828
        %v1008 = vpop.f32.mrb[0].mxu0
        %v1009 = vadd.f32 0.0, %v1008
        %v1010 = vpop.f32.mrb[0].mxu0
        %v1011 = vadd.f32 0.0, %v1010
        %1012 = vmatprep.mubr.f32.mxu0 %v836
        %1013 = vmatmul.mubr.f32.gmra.mrb[0].mxu0 %v834
        %v1014 = vpop.f32.mrb[0].mxu0
        %v1015 = vadd.f32 0.0, %v1014
        %v1016 = vpop.f32.mrb[0].mxu0
        %v1017 = vadd.f32 0.0, %v1016
        %1018 = vmatprep.mubr.f32.mxu0 %v842
        %1019 = vmatmul.mubr.f32.gmra.mrb[0].mxu0 %v840
        %v1020 = vpop.f32.mrb[0].mxu0
        %v1021 = vadd.f32 0.0, %v1020
        %v1022 = vpop.f32.mrb[0].mxu0
        %v1023 = vadd.f32 0.0, %v1022
        %1024 = vmatprep.mubr.f32.mxu0 %v848
        %1025 = vmatmul.mubr.f32.gmra.mrb[0].mxu0 %v846
        %v1026 = vpop.f32.mrb[0].mxu0
        %v1027 = vadd.f32 0.0, %v1026
        %v1028 = vpop.f32.mrb[0].mxu0
        %v1029 = vadd.f32 0.0, %v1028
        %1030 = vmatprep.mubr.f32.mxu0 %v854
        %1031 = vmatmul.mubr.f32.gmra.mrb[0].mxu0 %v852
        %v1032 = vpop.f32.mrb[0].mxu0
        %v1033 = vadd.f32 0.0, %v1032
        %v1034 = vpop.f32.mrb[0].mxu0
        %v1035 = vadd.f32 0.0, %v1034
        %1036 = vmatprep.mubr.f32.mxu0 %v860
        %1037 = vmatmul.mubr.f32.gmra.mrb[0].mxu0 %v858
        %v1038 = vpop.f32.mrb[0].mxu0
        %v1039 = vadd.f32 0.0, %v1038
        %v1040 = vpop.f32.mrb[0].mxu0
        %v1041 = vadd.f32 0.0, %v1040
        %1042 = vmatprep.mubr.f32.mxu0 %v866
        %1043 = vmatmul.mubr.f32.gmra.mrb[0].mxu0 %v864
        %v1044 = vpop.f32.mrb[0].mxu0
        %v1045 = vadd.f32 0.0, %v1044
        %v1046 = vpop.f32.mrb[0].mxu0
        %v1047 = vadd.f32 0.0, %v1046
        %1048 = vmatprep.mubr.f32.mxu0 %v872
        %1049 = vmatmul.mubr.f32.gmra.mrb[0].mxu0 %v870
        %v1050 = vpop.f32.mrb[0].mxu0
        %v1051 = vadd.f32 0.0, %v1050
        %v1052 = vpop.f32.mrb[0].mxu0
        %v1053 = vadd.f32 0.0, %v1052
        %1054 = vmatprep.mubr.f32.mxu0 %v878
        %1055 = vmatmul.mubr.f32.gmra.mrb[0].mxu0 %v876
        %v1056 = vpop.f32.mrb[0].mxu0
        %v1057 = vadd.f32 0.0, %v1056
        %v1058 = vpop.f32.mrb[0].mxu0
        %v1059 = vadd.f32 0.0, %v1058
        %1060 = vmatprep.mubr.f32.mxu0 %v884
        %1061 = vmatmul.mubr.f32.gmra.mrb[0].mxu0 %v882
        %v1062 = vpop.f32.mrb[0].mxu0
        %v1063 = vadd.f32 0.0, %v1062
        %v1064 = vpop.f32.mrb[0].mxu0
        %v1065 = vadd.f32 0.0, %v1064
        %1066 = vmatprep.mubr.f32.mxu0 %v883
        %1067 = vmatmul.mubr.f32.gmra.mrb[0].mxu0 %v881
        %v1068 = vpop.f32.mrb[0].mxu0
        %v1069 = vadd.f32 0.0, %v1068
        %v1070 = vpop.f32.mrb[0].mxu0
        %v1071 = vadd.f32 0.0, %v1070
        %1072 = vdwg.mxu0
        %1073 = vmatprep.subr.mxu0 %v774
        %1074 = vmatpush1.msra.mxu0 %v773
        %1075 = vmatprep.subr.mxu0 %v776
        %1076 = vmatpush1.msra.mxu0 %v775
        %1077 = vmatprep.subr.mxu0 %v778
        %1078 = vmatpush1.msra.mxu0 %v777
        %1079 = vmatprep.subr.mxu0 %v780
        %1080 = vmatpush1.msra.mxu0 %v779
        %1081 = vmatprep.subr.mxu0 0.0
        %1082 = vmatpush1.msra.mxu0 0.0
        %1083 = vmatprep.subr.mxu0 0.0
        %1084 = vmatpush1.msra.mxu0 0.0
        %1085 = vmatprep.subr.mxu0 0.0
        %1086 = vmatpush1.msra.mxu0 0.0
        %1087 = vmatprep.subr.mxu0 0.0
        %1088 = vmatpush1.msra.mxu0 0.0
        %1089 = vmatprep.subr.mxu0 0.0
        %1090 = vmatpush1.msra.mxu0 0.0
        %1091 = vmatprep.subr.mxu0 0.0
        %1092 = vmatpush1.msra.mxu0 0.0
        %1093 = vmatprep.subr.mxu0 0.0
        %1094 = vmatpush1.msra.mxu0 0.0
        %1095 = vmatprep.subr.mxu0 0.0
        %1096 = vmatpush1.msra.mxu0 0.0
        %1097 = vmatprep.subr.mxu0 0.0
        %1098 = vmatpush1.msra.mxu0 0.0
        %1099 = vmatprep.subr.mxu0 0.0
        %1100 = vmatpush1.msra.mxu0 0.0
        %1101 = vmatprep.subr.mxu0 0.0
        %1102 = vmatpush1.msra.mxu0 0.0
        %1103 = vmatprep.subr.mxu0 0.0
        %1104 = vmatpush1.msra.mxu0 0.0
        %1105 = vmatprep.subr.mxu0 0.0
        %1106 = vmatpush1.msra.mxu0 0.0
        %1107 = vmatprep.subr.mxu0 0.0
        %1108 = vmatpush1.msra.mxu0 0.0
        %1109 = vmatprep.subr.mxu0 0.0
        %1110 = vmatpush1.msra.mxu0 0.0
        %1111 = vmatprep.subr.mxu0 0.0
        %1112 = vmatpush1.msra.mxu0 0.0
        %1113 = vmatprep.subr.mxu0 0.0
        %1114 = vmatpush1.msra.mxu0 0.0
        %1115 = vmatprep.subr.mxu0 0.0
        %1116 = vmatpush1.msra.mxu0 0.0
        %1117 = vmatprep.subr.mxu0 0.0
        %1118 = vmatpush1.msra.mxu0 0.0
        %1119 = vmatprep.subr.mxu0 0.0
        %1120 = vmatpush1.msra.mxu0 0.0
        %1121 = vmatprep.subr.mxu0 0.0
        %1122 = vmatpush1.msra.mxu0 0.0
        %1123 = vmatprep.subr.mxu0 0.0
        %1124 = vmatpush1.msra.mxu0 0.0
        %1125 = vmatprep.subr.mxu0 0.0
        %1126 = vmatpush1.msra.mxu0 0.0
        %1127 = vmatprep.subr.mxu0 0.0
        %1128 = vmatpush1.msra.mxu0 0.0
        %1129 = vmatprep.subr.mxu0 0.0
        %1130 = vmatpush1.msra.mxu0 0.0
        %1131 = vmatprep.subr.mxu0 0.0
        %1132 = vmatpush1.msra.mxu0 0.0
        %1133 = vmatprep.subr.mxu0 0.0
        %1134 = vmatpush1.msra.mxu0 0.0
        %1135 = vmatprep.subr.mxu0 0.0
        %1136 = vmatpush1.msra.mxu0 0.0
        %1137 = vmatprep.mubr.f32.mxu0 0.0
        %1138 = vmatmul.mubr.f32.gmra.mrb[0].mxu0 %v912
        %v1139 = vpop.f32.mrb[0].mxu0
        %v1140 = vadd.f32 %v1003, %v1139
        %v1141 = vpop.f32.mrb[0].mxu0
        %v1142 = vadd.f32 %v1005, %v1141
        %1143 = vmatprep.mubr.f32.mxu0 0.0
        %1144 = vmatmul.mubr.f32.gmra.mrb[0].mxu0 %v914
        %v1145 = vpop.f32.mrb[0].mxu0
        %v1146 = vadd.f32 %v1009, %v1145
        %v1147 = vpop.f32.mrb[0].mxu0
        %v1148 = vadd.f32 %v1011, %v1147
        %1149 = vmatprep.mubr.f32.mxu0 0.0
        %1150 = vmatmul.mubr.f32.gmra.mrb[0].mxu0 %v916
        %v1151 = vpop.f32.mrb[0].mxu0
        %v1152 = vadd.f32 %v1015, %v1151
        %v1153 = vpop.f32.mrb[0].mxu0
        %v1154 = vadd.f32 %v1017, %v1153
        %1155 = vmatprep.mubr.f32.mxu0 0.0
        %1156 = vmatmul.mubr.f32.gmra.mrb[0].mxu0 %v918
        %v1157 = vpop.f32.mrb[0].mxu0
        %v1158 = vadd.f32 %v1021, %v1157
        %v1159 = vpop.f32.mrb[0].mxu0
        %v1160 = vadd.f32 %v1023, %v1159
        %1161 = vmatprep.mubr.f32.mxu0 0.0
        %1162 = vmatmul.mubr.f32.gmra.mrb[0].mxu0 %v920
        %v1163 = vpop.f32.mrb[0].mxu0
        %v1164 = vadd.f32 %v1027, %v1163
        %v1165 = vpop.f32.mrb[0].mxu0
        %v1166 = vadd.f32 %v1029, %v1165
        %1167 = vmatprep.mubr.f32.mxu0 0.0
        %1168 = vmatmul.mubr.f32.gmra.mrb[0].mxu0 %v922
        %v1169 = vpop.f32.mrb[0].mxu0
        %v1170 = vadd.f32 %v1033, %v1169
        %v1171 = vpop.f32.mrb[0].mxu0
        %v1172 = vadd.f32 %v1035, %v1171
        %1173 = vmatprep.mubr.f32.mxu0 0.0
        %1174 = vmatmul.mubr.f32.gmra.mrb[0].mxu0 %v924
        %v1175 = vpop.f32.mrb[0].mxu0
        %v1176 = vadd.f32 %v1039, %v1175
        %v1177 = vpop.f32.mrb[0].mxu0
        %v1178 = vadd.f32 %v1041, %v1177
        %1179 = vmatprep.mubr.f32.mxu0 0.0
        %1180 = vmatmul.mubr.f32.gmra.mrb[0].mxu0 %v926
        %v1181 = vpop.f32.mrb[0].mxu0
        %v1182 = vadd.f32 %v1045, %v1181
        %v1183 = vpop.f32.mrb[0].mxu0
        %v1184 = vadd.f32 %v1047, %v1183
        %1185 = vmatprep.mubr.f32.mxu0 0.0
        %1186 = vmatmul.mubr.f32.gmra.mrb[0].mxu0 %v928
        %v1187 = vpop.f32.mrb[0].mxu0
        %v1188 = vadd.f32 %v1051, %v1187
        %v1189 = vpop.f32.mrb[0].mxu0
        %v1190 = vadd.f32 %v1053, %v1189
        %1191 = vmatprep.mubr.f32.mxu0 0.0
        %1192 = vmatmul.mubr.f32.gmra.mrb[0].mxu0 %v930
        %v1193 = vpop.f32.mrb[0].mxu0
        %v1194 = vadd.f32 %v1057, %v1193
        %v1195 = vpop.f32.mrb[0].mxu0
        %v1196 = vadd.f32 %v1059, %v1195
        %1197 = vmatprep.mubr.f32.mxu0 0.0
        %1198 = vmatmul.mubr.f32.gmra.mrb[0].mxu0 %v932
        %v1199 = vpop.f32.mrb[0].mxu0
        %v1200 = vadd.f32 %v1063, %v1199
        %v1201 = vpop.f32.mrb[0].mxu0
        %v1202 = vadd.f32 %v1065, %v1201
        %1203 = vmatprep.mubr.f32.mxu0 0.0
        %1204 = vmatmul.mubr.f32.gmra.mrb[0].mxu0 %v934
        %v1205 = vpop.f32.mrb[0].mxu0
        %v1206 = vadd.f32 %v1069, %v1205
        %v1207 = vpop.f32.mrb[0].mxu0
        %v1208 = vadd.f32 %v1071, %v1207
        %1209 = vdwg.mxu0
        %v1210 = vsel %vm911, %v602, 0
        %v1212 = vsel %vm911, %v605, 0
        %v1214 = vsel %vm911, %v608, 0
        %v1216 = vsel %vm911, %v611, 0
        %v1218 = vsel %vm911, %v614, 0
        %v1220 = vsel %vm911, %v617, 0
        %v1222 = vsel %vm911, %v620, 0
        %v1224 = vsel %vm911, %v623, 0
        %v1226 = vsel %vm911, %v626, 0
        %v1228 = vsel %vm911, %v629, 0
        %v1230 = vsel %vm911, %v632, 0
        %v1232 = vsel %vm911, %v635, 0
        %1234 = vmatprep.subr.mxu0 %v637
        %1235 = vmatpush1.msra.mxu0 %v636
        %1236 = vmatprep.subr.mxu0 %v639
        %1237 = vmatpush1.msra.mxu0 %v638
        %1238 = vmatprep.subr.mxu0 %v641
        %1239 = vmatpush1.msra.mxu0 %v640
        %1240 = vmatprep.subr.mxu0 %v643
        %1241 = vmatpush1.msra.mxu0 %v642
        %1242 = vmatprep.subr.mxu0 %v645
        %1243 = vmatpush1.msra.mxu0 %v644
        %1244 = vmatprep.subr.mxu0 %v647
        %1245 = vmatpush1.msra.mxu0 %v646
        %1246 = vmatprep.subr.mxu0 %v649
        %1247 = vmatpush1.msra.mxu0 %v648
        %1248 = vmatprep.subr.mxu0 %v651
        %1249 = vmatpush1.msra.mxu0 %v650
        %1250 = vmatprep.subr.mxu0 %v653
        %1251 = vmatpush1.msra.mxu0 %v652
        %1252 = vmatprep.subr.mxu0 %v655
        %1253 = vmatpush1.msra.mxu0 %v654
        %1254 = vmatprep.subr.mxu0 %v657
        %1255 = vmatpush1.msra.mxu0 %v656
        %1256 = vmatprep.subr.mxu0 %v659
        %1257 = vmatpush1.msra.mxu0 %v658
        %1258 = vmatprep.subr.mxu0 %v661
        %1259 = vmatpush1.msra.mxu0 %v660
        %1260 = vmatprep.subr.mxu0 %v663
        %1261 = vmatpush1.msra.mxu0 %v662
        %1262 = vmatprep.subr.mxu0 %v665
        %1263 = vmatpush1.msra.mxu0 %v664
        %1264 = vmatprep.subr.mxu0 %v667
        %1265 = vmatpush1.msra.mxu0 %v666
        %1266 = vmatprep.subr.mxu0 %v669
        %1267 = vmatpush1.msra.mxu0 %v668
        %1268 = vmatprep.subr.mxu0 %v671
        %1269 = vmatpush1.msra.mxu0 %v670
        %1270 = vmatprep.subr.mxu0 %v673
        %1271 = vmatpush1.msra.mxu0 %v672
        %1272 = vmatprep.subr.mxu0 %v675
        %1273 = vmatpush1.msra.mxu0 %v674
        %1274 = vmatprep.subr.mxu0 %v677
        %1275 = vmatpush1.msra.mxu0 %v676
        %1276 = vmatprep.subr.mxu0 %v679
        %1277 = vmatpush1.msra.mxu0 %v678
        %1278 = vmatprep.subr.mxu0 %v681
        %1279 = vmatpush1.msra.mxu0 %v680
        %1280 = vmatprep.subr.mxu0 %v683
        %1281 = vmatpush1.msra.mxu0 %v682
        %1282 = vmatprep.subr.mxu0 %v685
        %1283 = vmatpush1.msra.mxu0 %v684
        %1284 = vmatprep.subr.mxu0 %v687
        %1285 = vmatpush1.msra.mxu0 %v686
        %1286 = vmatprep.subr.mxu0 %v689
        %1287 = vmatpush1.msra.mxu0 %v688
        %1288 = vmatprep.subr.mxu0 %v691
        %1289 = vmatpush1.msra.mxu0 %v690
        %1290 = vmatprep.subr.mxu0 %v693
        %1291 = vmatpush1.msra.mxu0 %v692
        %1292 = vmatprep.subr.mxu0 %v695
        %1293 = vmatpush1.msra.mxu0 %v694
        %1294 = vmatprep.subr.mxu0 %v697
        %1295 = vmatpush1.msra.mxu0 %v696
        %1296 = vmatprep.subr.mxu0 %v699
        %1297 = vmatpush1.msra.mxu0 %v698
        %1298 = vmatprep.mubr.f32.mxu0 %v601
        %1299 = vmatmul.mubr.f32.gmra.mrb[0].mxu0 %v600
        %v1300 = vpop.f32.mrb[0].mxu0
        %v1301 = vadd.f32 %v1140, %v1300
        %v1302 = vpop.f32.mrb[0].mxu0
        %v1303 = vadd.f32 %v1142, %v1302
        %1304 = vmatprep.mubr.f32.mxu0 %v604
        %1305 = vmatmul.mubr.f32.gmra.mrb[0].mxu0 %v603
        %v1306 = vpop.f32.mrb[0].mxu0
        %v1307 = vadd.f32 %v1146, %v1306
        %v1308 = vpop.f32.mrb[0].mxu0
        %v1309 = vadd.f32 %v1148, %v1308
        %1310 = vmatprep.mubr.f32.mxu0 %v607
        %1311 = vmatmul.mubr.f32.gmra.mrb[0].mxu0 %v606
        %v1312 = vpop.f32.mrb[0].mxu0
        %v1313 = vadd.f32 %v1152, %v1312
        %v1314 = vpop.f32.mrb[0].mxu0
        %v1315 = vadd.f32 %v1154, %v1314
        %1316 = vmatprep.mubr.f32.mxu0 %v610
        %1317 = vmatmul.mubr.f32.gmra.mrb[0].mxu0 %v609
        %v1318 = vpop.f32.mrb[0].mxu0
        %v1319 = vadd.f32 %v1158, %v1318
        %v1320 = vpop.f32.mrb[0].mxu0
        %v1321 = vadd.f32 %v1160, %v1320
        %1322 = vmatprep.mubr.f32.mxu0 %v613
        %1323 = vmatmul.mubr.f32.gmra.mrb[0].mxu0 %v612
        %v1324 = vpop.f32.mrb[0].mxu0
        %v1325 = vadd.f32 %v1164, %v1324
        %v1326 = vpop.f32.mrb[0].mxu0
        %v1327 = vadd.f32 %v1166, %v1326
        %1328 = vmatprep.mubr.f32.mxu0 %v616
        %1329 = vmatmul.mubr.f32.gmra.mrb[0].mxu0 %v615
        %v1330 = vpop.f32.mrb[0].mxu0
        %v1331 = vadd.f32 %v1170, %v1330
        %v1332 = vpop.f32.mrb[0].mxu0
        %v1333 = vadd.f32 %v1172, %v1332
        %1334 = vmatprep.mubr.f32.mxu0 %v619
        %1335 = vmatmul.mubr.f32.gmra.mrb[0].mxu0 %v618
        %v1336 = vpop.f32.mrb[0].mxu0
        %v1337 = vadd.f32 %v1176, %v1336
        %v1338 = vpop.f32.mrb[0].mxu0
        %v1339 = vadd.f32 %v1178, %v1338
        %1340 = vmatprep.mubr.f32.mxu0 %v622
        %1341 = vmatmul.mubr.f32.gmra.mrb[0].mxu0 %v621
        %v1342 = vpop.f32.mrb[0].mxu0
        %v1343 = vadd.f32 %v1182, %v1342
        %v1344 = vpop.f32.mrb[0].mxu0
        %v1345 = vadd.f32 %v1184, %v1344
        %1346 = vmatprep.mubr.f32.mxu0 %v625
        %1347 = vmatmul.mubr.f32.gmra.mrb[0].mxu0 %v624
        %v1348 = vpop.f32.mrb[0].mxu0
        %v1349 = vadd.f32 %v1188, %v1348
        %v1350 = vpop.f32.mrb[0].mxu0
        %v1351 = vadd.f32 %v1190, %v1350
        %1352 = vmatprep.mubr.f32.mxu0 %v628
        %1353 = vmatmul.mubr.f32.gmra.mrb[0].mxu0 %v627
        %v1354 = vpop.f32.mrb[0].mxu0
        %v1355 = vadd.f32 %v1194, %v1354
        %v1356 = vpop.f32.mrb[0].mxu0
        %v1357 = vadd.f32 %v1196, %v1356
        %1358 = vmatprep.mubr.f32.mxu0 %v631
        %1359 = vmatmul.mubr.f32.gmra.mrb[0].mxu0 %v630
        %v1360 = vpop.f32.mrb[0].mxu0
        %v1361 = vadd.f32 %v1200, %v1360
        %v1362 = vpop.f32.mrb[0].mxu0
        %v1363 = vadd.f32 %v1202, %v1362
        %1364 = vmatprep.mubr.f32.mxu0 %v634
        %1365 = vmatmul.mubr.f32.gmra.mrb[0].mxu0 %v633
        %v1366 = vpop.f32.mrb[0].mxu0
        %v1367 = vadd.f32 %v1206, %v1366
        %v1368 = vpop.f32.mrb[0].mxu0
        %v1369 = vadd.f32 %v1208, %v1368
        %1370 = vdwg.mxu0
        %1371 = vmatprep.subr.mxu0 %v701
        %1372 = vmatpush1.msra.mxu0 %v700
        %1373 = vmatprep.subr.mxu0 %v703
        %1374 = vmatpush1.msra.mxu0 %v702
        %1375 = vmatprep.subr.mxu0 %v705
        %1376 = vmatpush1.msra.mxu0 %v704
        %1377 = vmatprep.subr.mxu0 %v707
        %1378 = vmatpush1.msra.mxu0 %v706
        %1379 = vmatprep.subr.mxu0 0.0
        %1380 = vmatpush1.msra.mxu0 0.0
        %1381 = vmatprep.subr.mxu0 0.0
        %1382 = vmatpush1.msra.mxu0 0.0
        %1383 = vmatprep.subr.mxu0 0.0
        %1384 = vmatpush1.msra.mxu0 0.0
        %1385 = vmatprep.subr.mxu0 0.0
        %1386 = vmatpush1.msra.mxu0 0.0
        %1387 = vmatprep.subr.mxu0 0.0
        %1388 = vmatpush1.msra.mxu0 0.0
        %1389 = vmatprep.subr.mxu0 0.0
        %1390 = vmatpush1.msra.mxu0 0.0
        %1391 = vmatprep.subr.mxu0 0.0
        %1392 = vmatpush1.msra.mxu0 0.0
        %1393 = vmatprep.subr.mxu0 0.0
        %1394 = vmatpush1.msra.mxu0 0.0
        %1395 = vmatprep.subr.mxu0 0.0
        %1396 = vmatpush1.msra.mxu0 0.0
        %1397 = vmatprep.subr.mxu0 0.0
        %1398 = vmatpush1.msra.mxu0 0.0
        %1399 = vmatprep.subr.mxu0 0.0
        %1400 = vmatpush1.msra.mxu0 0.0
        %1401 = vmatprep.subr.mxu0 0.0
        %1402 = vmatpush1.msra.mxu0 0.0
        %1403 = vmatprep.subr.mxu0 0.0
        %1404 = vmatpush1.msra.mxu0 0.0
        %1405 = vmatprep.subr.mxu0 0.0
        %1406 = vmatpush1.msra.mxu0 0.0
        %1407 = vmatprep.subr.mxu0 0.0
        %1408 = vmatpush1.msra.mxu0 0.0
        %1409 = vmatprep.subr.mxu0 0.0
        %1410 = vmatpush1.msra.mxu0 0.0
        %1411 = vmatprep.subr.mxu0 0.0
        %1412 = vmatpush1.msra.mxu0 0.0
        %1413 = vmatprep.subr.mxu0 0.0
        %1414 = vmatpush1.msra.mxu0 0.0
        %1415 = vmatprep.subr.mxu0 0.0
        %1416 = vmatpush1.msra.mxu0 0.0
        %1417 = vmatprep.subr.mxu0 0.0
        %1418 = vmatpush1.msra.mxu0 0.0
        %1419 = vmatprep.subr.mxu0 0.0
        %1420 = vmatpush1.msra.mxu0 0.0
        %1421 = vmatprep.subr.mxu0 0.0
        %1422 = vmatpush1.msra.mxu0 0.0
        %1423 = vmatprep.subr.mxu0 0.0
        %1424 = vmatpush1.msra.mxu0 0.0
        %1425 = vmatprep.subr.mxu0 0.0
        %1426 = vmatpush1.msra.mxu0 0.0
        %1427 = vmatprep.subr.mxu0 0.0
        %1428 = vmatpush1.msra.mxu0 0.0
        %1429 = vmatprep.subr.mxu0 0.0
        %1430 = vmatpush1.msra.mxu0 0.0
        %1431 = vmatprep.subr.mxu0 0.0
        %1432 = vmatpush1.msra.mxu0 0.0
        %1433 = vmatprep.subr.mxu0 0.0
        %1434 = vmatpush1.msra.mxu0 0.0
        %1435 = vmatprep.mubr.f32.mxu0 0.0
        %1436 = vmatmul.mubr.f32.gmra.mrb[0].mxu0 %v1210
        %v1437 = vpop.f32.mrb[0].mxu0
        %v1438 = vadd.f32 %v1301, %v1437
        %v1439 = vpop.f32.mrb[0].mxu0
        %v1440 = vadd.f32 %v1303, %v1439
        %1441 = vmatprep.mubr.f32.mxu0 0.0
        %1442 = vmatmul.mubr.f32.gmra.mrb[0].mxu0 %v1212
        %v1443 = vpop.f32.mrb[0].mxu0
        %v1444 = vadd.f32 %v1307, %v1443
        %v1445 = vpop.f32.mrb[0].mxu0
        %v1446 = vadd.f32 %v1309, %v1445
        %1447 = vmatprep.mubr.f32.mxu0 0.0
        %1448 = vmatmul.mubr.f32.gmra.mrb[0].mxu0 %v1214
        %v1449 = vpop.f32.mrb[0].mxu0
        %v1450 = vadd.f32 %v1313, %v1449
        %v1451 = vpop.f32.mrb[0].mxu0
        %v1452 = vadd.f32 %v1315, %v1451
        %1453 = vmatprep.mubr.f32.mxu0 0.0
        %1454 = vmatmul.mubr.f32.gmra.mrb[0].mxu0 %v1216
        %v1455 = vpop.f32.mrb[0].mxu0
        %v1456 = vadd.f32 %v1319, %v1455
        %v1457 = vpop.f32.mrb[0].mxu0
        %v1458 = vadd.f32 %v1321, %v1457
        %1459 = vmatprep.mubr.f32.mxu0 0.0
        %1460 = vmatmul.mubr.f32.gmra.mrb[0].mxu0 %v1218
        %v1461 = vpop.f32.mrb[0].mxu0
        %v1462 = vadd.f32 %v1325, %v1461
        %v1463 = vpop.f32.mrb[0].mxu0
        %v1464 = vadd.f32 %v1327, %v1463
        %1465 = vmatprep.mubr.f32.mxu0 0.0
        %1466 = vmatmul.mubr.f32.gmra.mrb[0].mxu0 %v1220
        %v1467 = vpop.f32.mrb[0].mxu0
        %v1468 = vadd.f32 %v1331, %v1467
        %v1469 = vpop.f32.mrb[0].mxu0
        %v1470 = vadd.f32 %v1333, %v1469
        %1471 = vmatprep.mubr.f32.mxu0 0.0
        %1472 = vmatmul.mubr.f32.gmra.mrb[0].mxu0 %v1222
        %v1473 = vpop.f32.mrb[0].mxu0
        %v1474 = vadd.f32 %v1337, %v1473
        %v1475 = vpop.f32.mrb[0].mxu0
        %v1476 = vadd.f32 %v1339, %v1475
        %1477 = vmatprep.mubr.f32.mxu0 0.0
        %1478 = vmatmul.mubr.f32.gmra.mrb[0].mxu0 %v1224
        %v1479 = vpop.f32.mrb[0].mxu0
        %v1480 = vadd.f32 %v1343, %v1479
        %v1481 = vpop.f32.mrb[0].mxu0
        %v1482 = vadd.f32 %v1345, %v1481
        %1483 = vmatprep.mubr.f32.mxu0 0.0
        %1484 = vmatmul.mubr.f32.gmra.mrb[0].mxu0 %v1226
        %v1485 = vpop.f32.mrb[0].mxu0
        %v1486 = vadd.f32 %v1349, %v1485
        %v1487 = vpop.f32.mrb[0].mxu0
        %v1488 = vadd.f32 %v1351, %v1487
        %1489 = vmatprep.mubr.f32.mxu0 0.0
        %1490 = vmatmul.mubr.f32.gmra.mrb[0].mxu0 %v1228
        %v1491 = vpop.f32.mrb[0].mxu0
        %v1492 = vadd.f32 %v1355, %v1491
        %v1493 = vpop.f32.mrb[0].mxu0
        %v1494 = vadd.f32 %v1357, %v1493
        %1495 = vmatprep.mubr.f32.mxu0 0.0
        %1496 = vmatmul.mubr.f32.gmra.mrb[0].mxu0 %v1230
        %v1497 = vpop.f32.mrb[0].mxu0
        %v1498 = vadd.f32 %v1361, %v1497
        %v1499 = vpop.f32.mrb[0].mxu0
        %v1500 = vadd.f32 %v1363, %v1499
        %1501 = vmatprep.mubr.f32.mxu0 0.0
        %1502 = vmatmul.mubr.f32.gmra.mrb[0].mxu0 %v1232
        %v1503 = vpop.f32.mrb[0].mxu0
        %v1504 = vadd.f32 %v1367, %v1503
        %v1505 = vpop.f32.mrb[0].mxu0
        %v1506 = vadd.f32 %v1369, %v1505
        %1507 = vdwg.mxu0
        %s1508 = scalar_lea.vmem %s1, 1152
        %v1509 = vld [vmem:[%s1508] sm:$0xff]
        %v1510 = vld [vmem:[%s1508 + $0x8] sm:$0xff]
        %v1511 = vld [vmem:[%s1508 + $0x10] sm:$0xff]
        %v1512 = vld [vmem:[%s1508 + $0x18] sm:$0xff]
        %v1513 = vld [vmem:[%s1508 + $0x20] sm:$0xff]
        %v1514 = vld [vmem:[%s1508 + $0x28] sm:$0xff]
        %v1515 = vld [vmem:[%s1508 + $0x30] sm:$0xff]
        %v1516 = vld [vmem:[%s1508 + $0x38] sm:$0xff]
        %v1517 = vld [vmem:[%s1508 + $0x40] sm:$0xff]
        %v1518 = vld [vmem:[%s1508 + $0x48] sm:$0xff]
        %v1519 = vld [vmem:[%s1508 + $0x50] sm:$0xff]
        %v1520 = vld [vmem:[%s1508 + $0x58] sm:$0xff]
        %v1521 = vld [vmem:[%s1508 + $0x60] sm:$0xff]
        %v1522 = vld [vmem:[%s1508 + $0x68] sm:$0xff]
        %v1523 = vld [vmem:[%s1508 + $0x70] sm:$0xff]
        %v1524 = vld [vmem:[%s1508 + $0x78] sm:$0xff]
        %v1525 = vld [vmem:[%s1508 + $0x80] sm:$0xff]
        %v1526 = vld [vmem:[%s1508 + $0x88] sm:$0xff]
        %v1527 = vld [vmem:[%s1508 + $0x90] sm:$0xff]
        %v1528 = vld [vmem:[%s1508 + $0x98] sm:$0xff]
        %v1529 = vld [vmem:[%s1508 + $0xa0] sm:$0xff]
        %v1530 = vld [vmem:[%s1508 + $0xa8] sm:$0xff]
        %v1531 = vld [vmem:[%s1508 + $0xb0] sm:$0xff]
        %v1532 = vld [vmem:[%s1508 + $0xb8] sm:$0xff]
        %v1533 = vld [vmem:[%s1508 + $0xc0] sm:$0xff]
        %v1534 = vld [vmem:[%s1508 + $0xc8] sm:$0xff]
        %v1535 = vld [vmem:[%s1508 + $0xd0] sm:$0xff]
        %v1536 = vld [vmem:[%s1508 + $0xd8] sm:$0xff]
        %v1537 = vld [vmem:[%s1508 + $0xe0] sm:$0xff]
        %v1538 = vld [vmem:[%s1508 + $0xe8] sm:$0xff]
        %v1539 = vld [vmem:[%s1508 + $0xf0] sm:$0xff]
        %v1540 = vld [vmem:[%s1508 + $0xf8] sm:$0xff]
        %v1541 = vld [vmem:[%s1508 + $0x100] sm:$0xff]
        %v1542 = vld [vmem:[%s1508 + $0x108] sm:$0xff]
        %v1543 = vld [vmem:[%s1508 + $0x110] sm:$0xff]
        %v1544 = vld [vmem:[%s1508 + $0x118] sm:$0xff]
        %v1545 = vld [vmem:[%s1508 + $0x120] sm:$0xff]
        %v1546 = vld [vmem:[%s1508 + $0x128] sm:$0xff]
        %v1547 = vld [vmem:[%s1508 + $0x130] sm:$0xff]
        %v1548 = vld [vmem:[%s1508 + $0x138] sm:$0xff]
        %v1549 = vld [vmem:[%s1508 + $0x140] sm:$0xff]
        %v1550 = vld [vmem:[%s1508 + $0x148] sm:$0xff]
        %v1551 = vld [vmem:[%s1508 + $0x150] sm:$0xff]
        %v1552 = vld [vmem:[%s1508 + $0x158] sm:$0xff]
        %v1553 = vld [vmem:[%s1508 + $0x160] sm:$0xff]
        %v1554 = vld [vmem:[%s1508 + $0x168] sm:$0xff]
        %v1555 = vld [vmem:[%s1508 + $0x170] sm:$0xff]
        %v1556 = vld [vmem:[%s1508 + $0x178] sm:$0xff]
        %v1557 = vld [vmem:[%s1508 + $0x180] sm:$0xff]
        %v1558 = vld [vmem:[%s1508 + $0x188] sm:$0xff]
        %v1559 = vld [vmem:[%s1508 + $0x190] sm:$0xff]
        %v1560 = vld [vmem:[%s1508 + $0x198] sm:$0xff]
        %v1561 = vld [vmem:[%s1508 + $0x1a0] sm:$0xff]
        %v1562 = vld [vmem:[%s1508 + $0x1a8] sm:$0xff]
        %v1563 = vld [vmem:[%s1508 + $0x1b0] sm:$0xff]
        %v1564 = vld [vmem:[%s1508 + $0x1b8] sm:$0xff]
        %v1565 = vld [vmem:[%s1508 + $0x1c0] sm:$0xff]
        %v1566 = vld [vmem:[%s1508 + $0x1c8] sm:$0xff]
        %v1567 = vld [vmem:[%s1508 + $0x1d0] sm:$0xff]
        %v1568 = vld [vmem:[%s1508 + $0x1d8] sm:$0xff]
        %v1569 = vld [vmem:[%s1508 + $0x1e0] sm:$0xff]
        %v1570 = vld [vmem:[%s1508 + $0x1e8] sm:$0xff]
        %v1571 = vld [vmem:[%s1508 + $0x1f0] sm:$0xff]
        %v1572 = vld [vmem:[%s1508 + $0x1f8] sm:$0xff]
        %v1573 = vld [vmem:[%s1508 + $0x200] sm:$0xff]
        %v1574 = vld [vmem:[%s1508 + $0x208] sm:$0xff]
        %v1575 = vld [vmem:[%s1508 + $0x210] sm:$0xff]
        %v1576 = vld [vmem:[%s1508 + $0x218] sm:$0xff]
        %v1577 = vld [vmem:[%s1508 + $0x220] sm:$0xff]
        %v1578 = vld [vmem:[%s1508 + $0x228] sm:$0xff]
        %v1579 = vld [vmem:[%s1508 + $0x230] sm:$0xff]
        %v1580 = vld [vmem:[%s1508 + $0x238] sm:$0xff]
        %vm1581 = vcmask 1045504
        %v1582 = vrot.slane %v600, 2
        %v1583 = vrot.slane %v603, 2
        %v1584 = vsel %vm1581, %v1582, %v1583
        %v1585 = vrot.slane %v601, 2
        %v1586 = vrot.slane %v604, 2
        %v1587 = vsel %vm1581, %v1585, %v1586
        %v1588 = vrot.slane %v602, 2
        %v1589 = vrot.slane %v605, 2
        %v1590 = vsel %vm1581, %v1588, %v1589
        %v1591 = vrot.slane %v606, 2
        %v1592 = vsel %vm1581, %v1583, %v1591
        %v1593 = vrot.slane %v607, 2
        %v1594 = vsel %vm1581, %v1586, %v1593
        %v1595 = vrot.slane %v608, 2
        %v1596 = vsel %vm1581, %v1589, %v1595
        %v1597 = vrot.slane %v609, 2
        %v1598 = vsel %vm1581, %v1591, %v1597
        %v1599 = vrot.slane %v610, 2
        %v1600 = vsel %vm1581, %v1593, %v1599
        %v1601 = vrot.slane %v611, 2
        %v1602 = vsel %vm1581, %v1595, %v1601
        %v1603 = vrot.slane %v612, 2
        %v1604 = vsel %vm1581, %v1597, %v1603
        %v1605 = vrot.slane %v613, 2
        %v1606 = vsel %vm1581, %v1599, %v1605
        %v1607 = vrot.slane %v614, 2
        %v1608 = vsel %vm1581, %v1601, %v1607
        %v1609 = vrot.slane %v615, 2
        %v1610 = vsel %vm1581, %v1603, %v1609
        %v1611 = vrot.slane %v616, 2
        %v1612 = vsel %vm1581, %v1605, %v1611
        %v1613 = vrot.slane %v617, 2
        %v1614 = vsel %vm1581, %v1607, %v1613
        %v1615 = vrot.slane %v618, 2
        %v1616 = vsel %vm1581, %v1609, %v1615
        %v1617 = vrot.slane %v619, 2
        %v1618 = vsel %vm1581, %v1611, %v1617
        %v1619 = vrot.slane %v620, 2
        %v1620 = vsel %vm1581, %v1613, %v1619
        %v1621 = vrot.slane %v621, 2
        %v1622 = vsel %vm1581, %v1615, %v1621
        %v1623 = vrot.slane %v622, 2
        %v1624 = vsel %vm1581, %v1617, %v1623
        %v1625 = vrot.slane %v623, 2
        %v1626 = vsel %vm1581, %v1619, %v1625
        %v1627 = vrot.slane %v624, 2
        %v1628 = vsel %vm1581, %v1621, %v1627
        %v1629 = vrot.slane %v625, 2
        %v1630 = vsel %vm1581, %v1623, %v1629
        %v1631 = vrot.slane %v626, 2
        %v1632 = vsel %vm1581, %v1625, %v1631
        %v1633 = vrot.slane %v627, 2
        %v1634 = vsel %vm1581, %v1627, %v1633
        %v1635 = vrot.slane %v628, 2
        %v1636 = vsel %vm1581, %v1629, %v1635
        %v1637 = vrot.slane %v629, 2
        %v1638 = vsel %vm1581, %v1631, %v1637
        %v1639 = vrot.slane %v630, 2
        %v1640 = vsel %vm1581, %v1633, %v1639
        %v1641 = vrot.slane %v631, 2
        %v1642 = vsel %vm1581, %v1635, %v1641
        %v1643 = vrot.slane %v632, 2
        %v1644 = vsel %vm1581, %v1637, %v1643
        %v1645 = vrot.slane %v633, 2
        %v1646 = vsel %vm1581, %v1639, %v1645
        %v1647 = vrot.slane %v634, 2
        %v1648 = vsel %vm1581, %v1641, %v1647
        %v1649 = vrot.slane %v635, 2
        %v1650 = vsel %vm1581, %v1643, %v1649
        %v1675 = vsel %vm911, %v1590, 0
        %v1677 = vsel %vm911, %v1596, 0
        %v1679 = vsel %vm911, %v1602, 0
        %v1681 = vsel %vm911, %v1608, 0
        %v1683 = vsel %vm911, %v1614, 0
        %v1685 = vsel %vm911, %v1620, 0
        %v1687 = vsel %vm911, %v1626, 0
        %v1689 = vsel %vm911, %v1632, 0
        %v1691 = vsel %vm911, %v1638, 0
        %v1693 = vsel %vm911, %v1644, 0
        %v1695 = vsel %vm911, %v1650, 0
        %v1697 = vsel %vm911, %v1649, 0
        %1699 = vmatprep.subr.mxu0 %v1510
        %1700 = vmatpush1.msra.mxu0 %v1509
        %1701 = vmatprep.subr.mxu0 %v1512
        %1702 = vmatpush1.msra.mxu0 %v1511
        %1703 = vmatprep.subr.mxu0 %v1514
        %1704 = vmatpush1.msra.mxu0 %v1513
        %1705 = vmatprep.subr.mxu0 %v1516
        %1706 = vmatpush1.msra.mxu0 %v1515
        %1707 = vmatprep.subr.mxu0 %v1518
        %1708 = vmatpush1.msra.mxu0 %v1517
        %1709 = vmatprep.subr.mxu0 %v1520
        %1710 = vmatpush1.msra.mxu0 %v1519
        %1711 = vmatprep.subr.mxu0 %v1522
        %1712 = vmatpush1.msra.mxu0 %v1521
        %1713 = vmatprep.subr.mxu0 %v1524
        %1714 = vmatpush1.msra.mxu0 %v1523
        %1715 = vmatprep.subr.mxu0 %v1526
        %1716 = vmatpush1.msra.mxu0 %v1525
        %1717 = vmatprep.subr.mxu0 %v1528
        %1718 = vmatpush1.msra.mxu0 %v1527
        %1719 = vmatprep.subr.mxu0 %v1530
        %1720 = vmatpush1.msra.mxu0 %v1529
        %1721 = vmatprep.subr.mxu0 %v1532
        %1722 = vmatpush1.msra.mxu0 %v1531
        %1723 = vmatprep.subr.mxu0 %v1534
        %1724 = vmatpush1.msra.mxu0 %v1533
        %1725 = vmatprep.subr.mxu0 %v1536
        %1726 = vmatpush1.msra.mxu0 %v1535
        %1727 = vmatprep.subr.mxu0 %v1538
        %1728 = vmatpush1.msra.mxu0 %v1537
        %1729 = vmatprep.subr.mxu0 %v1540
        %1730 = vmatpush1.msra.mxu0 %v1539
        %1731 = vmatprep.subr.mxu0 %v1542
        %1732 = vmatpush1.msra.mxu0 %v1541
        %1733 = vmatprep.subr.mxu0 %v1544
        %1734 = vmatpush1.msra.mxu0 %v1543
        %1735 = vmatprep.subr.mxu0 %v1546
        %1736 = vmatpush1.msra.mxu0 %v1545
        %1737 = vmatprep.subr.mxu0 %v1548
        %1738 = vmatpush1.msra.mxu0 %v1547
        %1739 = vmatprep.subr.mxu0 %v1550
        %1740 = vmatpush1.msra.mxu0 %v1549
        %1741 = vmatprep.subr.mxu0 %v1552
        %1742 = vmatpush1.msra.mxu0 %v1551
        %1743 = vmatprep.subr.mxu0 %v1554
        %1744 = vmatpush1.msra.mxu0 %v1553
        %1745 = vmatprep.subr.mxu0 %v1556
        %1746 = vmatpush1.msra.mxu0 %v1555
        %1747 = vmatprep.subr.mxu0 %v1558
        %1748 = vmatpush1.msra.mxu0 %v1557
        %1749 = vmatprep.subr.mxu0 %v1560
        %1750 = vmatpush1.msra.mxu0 %v1559
        %1751 = vmatprep.subr.mxu0 %v1562
        %1752 = vmatpush1.msra.mxu0 %v1561
        %1753 = vmatprep.subr.mxu0 %v1564
        %1754 = vmatpush1.msra.mxu0 %v1563
        %1755 = vmatprep.subr.mxu0 %v1566
        %1756 = vmatpush1.msra.mxu0 %v1565
        %1757 = vmatprep.subr.mxu0 %v1568
        %1758 = vmatpush1.msra.mxu0 %v1567
        %1759 = vmatprep.subr.mxu0 %v1570
        %1760 = vmatpush1.msra.mxu0 %v1569
        %1761 = vmatprep.subr.mxu0 %v1572
        %1762 = vmatpush1.msra.mxu0 %v1571
        %1763 = vmatprep.mubr.f32.mxu0 %v1587
        %1764 = vmatmul.mubr.f32.gmra.mrb[0].mxu0 %v1584
        %v1765 = vpop.f32.mrb[0].mxu0
        %v1766 = vadd.f32 0.0, %v1765
        %v1767 = vpop.f32.mrb[0].mxu0
        %v1768 = vadd.f32 0.0, %v1767
        %1769 = vmatprep.mubr.f32.mxu0 %v1594
        %1770 = vmatmul.mubr.f32.gmra.mrb[0].mxu0 %v1592
        %v1771 = vpop.f32.mrb[0].mxu0
        %v1772 = vadd.f32 0.0, %v1771
        %v1773 = vpop.f32.mrb[0].mxu0
        %v1774 = vadd.f32 0.0, %v1773
        %1775 = vmatprep.mubr.f32.mxu0 %v1600
        %1776 = vmatmul.mubr.f32.gmra.mrb[0].mxu0 %v1598
        %v1777 = vpop.f32.mrb[0].mxu0
        %v1778 = vadd.f32 0.0, %v1777
        %v1779 = vpop.f32.mrb[0].mxu0
        %v1780 = vadd.f32 0.0, %v1779
        %1781 = vmatprep.mubr.f32.mxu0 %v1606
        %1782 = vmatmul.mubr.f32.gmra.mrb[0].mxu0 %v1604
        %v1783 = vpop.f32.mrb[0].mxu0
        %v1784 = vadd.f32 0.0, %v1783
        %v1785 = vpop.f32.mrb[0].mxu0
        %v1786 = vadd.f32 0.0, %v1785
        %1787 = vmatprep.mubr.f32.mxu0 %v1612
        %1788 = vmatmul.mubr.f32.gmra.mrb[0].mxu0 %v1610
        %v1789 = vpop.f32.mrb[0].mxu0
        %v1790 = vadd.f32 0.0, %v1789
        %v1791 = vpop.f32.mrb[0].mxu0
        %v1792 = vadd.f32 0.0, %v1791
        %1793 = vmatprep.mubr.f32.mxu0 %v1618
        %1794 = vmatmul.mubr.f32.gmra.mrb[0].mxu0 %v1616
        %v1795 = vpop.f32.mrb[0].mxu0
        %v1796 = vadd.f32 0.0, %v1795
        %v1797 = vpop.f32.mrb[0].mxu0
        %v1798 = vadd.f32 0.0, %v1797
        %1799 = vmatprep.mubr.f32.mxu0 %v1624
        %1800 = vmatmul.mubr.f32.gmra.mrb[0].mxu0 %v1622
        %v1801 = vpop.f32.mrb[0].mxu0
        %v1802 = vadd.f32 0.0, %v1801
        %v1803 = vpop.f32.mrb[0].mxu0
        %v1804 = vadd.f32 0.0, %v1803
        %1805 = vmatprep.mubr.f32.mxu0 %v1630
        %1806 = vmatmul.mubr.f32.gmra.mrb[0].mxu0 %v1628
        %v1807 = vpop.f32.mrb[0].mxu0
        %v1808 = vadd.f32 0.0, %v1807
        %v1809 = vpop.f32.mrb[0].mxu0
        %v1810 = vadd.f32 0.0, %v1809
        %1811 = vmatprep.mubr.f32.mxu0 %v1636
        %1812 = vmatmul.mubr.f32.gmra.mrb[0].mxu0 %v1634
        %v1813 = vpop.f32.mrb[0].mxu0
        %v1814 = vadd.f32 0.0, %v1813
        %v1815 = vpop.f32.mrb[0].mxu0
        %v1816 = vadd.f32 0.0, %v1815
        %1817 = vmatprep.mubr.f32.mxu0 %v1642
        %1818 = vmatmul.mubr.f32.gmra.mrb[0].mxu0 %v1640
        %v1819 = vpop.f32.mrb[0].mxu0
        %v1820 = vadd.f32 0.0, %v1819
        %v1821 = vpop.f32.mrb[0].mxu0
        %v1822 = vadd.f32 0.0, %v1821
        %1823 = vmatprep.mubr.f32.mxu0 %v1648
        %1824 = vmatmul.mubr.f32.gmra.mrb[0].mxu0 %v1646
        %v1825 = vpop.f32.mrb[0].mxu0
        %v1826 = vadd.f32 0.0, %v1825
        %v1827 = vpop.f32.mrb[0].mxu0
        %v1828 = vadd.f32 0.0, %v1827
        %1829 = vmatprep.mubr.f32.mxu0 %v1647
        %1830 = vmatmul.mubr.f32.gmra.mrb[0].mxu0 %v1645
        %v1831 = vpop.f32.mrb[0].mxu0
        %v1832 = vadd.f32 0.0, %v1831
        %v1833 = vpop.f32.mrb[0].mxu0
        %v1834 = vadd.f32 0.0, %v1833
        %1835 = vdwg.mxu0
        %1836 = vmatprep.subr.mxu0 %v1574
        %1837 = vmatpush1.msra.mxu0 %v1573
        %1838 = vmatprep.subr.mxu0 %v1576
        %1839 = vmatpush1.msra.mxu0 %v1575
        %1840 = vmatprep.subr.mxu0 %v1578
        %1841 = vmatpush1.msra.mxu0 %v1577
        %1842 = vmatprep.subr.mxu0 %v1580
        %1843 = vmatpush1.msra.mxu0 %v1579
        %1844 = vmatprep.subr.mxu0 0.0
        %1845 = vmatpush1.msra.mxu0 0.0
        %1846 = vmatprep.subr.mxu0 0.0
        %1847 = vmatpush1.msra.mxu0 0.0
        %1848 = vmatprep.subr.mxu0 0.0
        %1849 = vmatpush1.msra.mxu0 0.0
        %1850 = vmatprep.subr.mxu0 0.0
        %1851 = vmatpush1.msra.mxu0 0.0
        %1852 = vmatprep.subr.mxu0 0.0
        %1853 = vmatpush1.msra.mxu0 0.0
        %1854 = vmatprep.subr.mxu0 0.0
        %1855 = vmatpush1.msra.mxu0 0.0
        %1856 = vmatprep.subr.mxu0 0.0
        %1857 = vmatpush1.msra.mxu0 0.0
        %1858 = vmatprep.subr.mxu0 0.0
        %1859 = vmatpush1.msra.mxu0 0.0
        %1860 = vmatprep.subr.mxu0 0.0
        %1861 = vmatpush1.msra.mxu0 0.0
        %1862 = vmatprep.subr.mxu0 0.0
        %1863 = vmatpush1.msra.mxu0 0.0
        %1864 = vmatprep.subr.mxu0 0.0
        %1865 = vmatpush1.msra.mxu0 0.0
        %1866 = vmatprep.subr.mxu0 0.0
        %1867 = vmatpush1.msra.mxu0 0.0
        %1868 = vmatprep.subr.mxu0 0.0
        %1869 = vmatpush1.msra.mxu0 0.0
        %1870 = vmatprep.subr.mxu0 0.0
        %1871 = vmatpush1.msra.mxu0 0.0
        %1872 = vmatprep.subr.mxu0 0.0
        %1873 = vmatpush1.msra.mxu0 0.0
        %1874 = vmatprep.subr.mxu0 0.0
        %1875 = vmatpush1.msra.mxu0 0.0
        %1876 = vmatprep.subr.mxu0 0.0
        %1877 = vmatpush1.msra.mxu0 0.0
        %1878 = vmatprep.subr.mxu0 0.0
        %1879 = vmatpush1.msra.mxu0 0.0
        %1880 = vmatprep.subr.mxu0 0.0
        %1881 = vmatpush1.msra.mxu0 0.0
        %1882 = vmatprep.subr.mxu0 0.0
        %1883 = vmatpush1.msra.mxu0 0.0
        %1884 = vmatprep.subr.mxu0 0.0
        %1885 = vmatpush1.msra.mxu0 0.0
        %1886 = vmatprep.subr.mxu0 0.0
        %1887 = vmatpush1.msra.mxu0 0.0
        %1888 = vmatprep.subr.mxu0 0.0
        %1889 = vmatpush1.msra.mxu0 0.0
        %1890 = vmatprep.subr.mxu0 0.0
        %1891 = vmatpush1.msra.mxu0 0.0
        %1892 = vmatprep.subr.mxu0 0.0
        %1893 = vmatpush1.msra.mxu0 0.0
        %1894 = vmatprep.subr.mxu0 0.0
        %1895 = vmatpush1.msra.mxu0 0.0
        %1896 = vmatprep.subr.mxu0 0.0
        %1897 = vmatpush1.msra.mxu0 0.0
        %1898 = vmatprep.subr.mxu0 0.0
        %1899 = vmatpush1.msra.mxu0 0.0
        %1900 = vmatprep.mubr.f32.mxu0 0.0
        %1901 = vmatmul.mubr.f32.gmra.mrb[0].mxu0 %v1675
        %v1902 = vpop.f32.mrb[0].mxu0
        %v1903 = vadd.f32 %v1766, %v1902
        %v1904 = vpop.f32.mrb[0].mxu0
        %v1905 = vadd.f32 %v1768, %v1904
        %1906 = vmatprep.mubr.f32.mxu0 0.0
        %1907 = vmatmul.mubr.f32.gmra.mrb[0].mxu0 %v1677
        %v1908 = vpop.f32.mrb[0].mxu0
        %v1909 = vadd.f32 %v1772, %v1908
        %v1910 = vpop.f32.mrb[0].mxu0
        %v1911 = vadd.f32 %v1774, %v1910
        %1912 = vmatprep.mubr.f32.mxu0 0.0
        %1913 = vmatmul.mubr.f32.gmra.mrb[0].mxu0 %v1679
        %v1914 = vpop.f32.mrb[0].mxu0
        %v1915 = vadd.f32 %v1778, %v1914
        %v1916 = vpop.f32.mrb[0].mxu0
        %v1917 = vadd.f32 %v1780, %v1916
        %1918 = vmatprep.mubr.f32.mxu0 0.0
        %1919 = vmatmul.mubr.f32.gmra.mrb[0].mxu0 %v1681
        %v1920 = vpop.f32.mrb[0].mxu0
        %v1921 = vadd.f32 %v1784, %v1920
        %v1922 = vpop.f32.mrb[0].mxu0
        %v1923 = vadd.f32 %v1786, %v1922
        %1924 = vmatprep.mubr.f32.mxu0 0.0
        %1925 = vmatmul.mubr.f32.gmra.mrb[0].mxu0 %v1683
        %v1926 = vpop.f32.mrb[0].mxu0
        %v1927 = vadd.f32 %v1790, %v1926
        %v1928 = vpop.f32.mrb[0].mxu0
        %v1929 = vadd.f32 %v1792, %v1928
        %1930 = vmatprep.mubr.f32.mxu0 0.0
        %1931 = vmatmul.mubr.f32.gmra.mrb[0].mxu0 %v1685
        %v1932 = vpop.f32.mrb[0].mxu0
        %v1933 = vadd.f32 %v1796, %v1932
        %v1934 = vpop.f32.mrb[0].mxu0
        %v1935 = vadd.f32 %v1798, %v1934
        %1936 = vmatprep.mubr.f32.mxu0 0.0
        %1937 = vmatmul.mubr.f32.gmra.mrb[0].mxu0 %v1687
        %v1938 = vpop.f32.mrb[0].mxu0
        %v1939 = vadd.f32 %v1802, %v1938
        %v1940 = vpop.f32.mrb[0].mxu0
        %v1941 = vadd.f32 %v1804, %v1940
        %1942 = vmatprep.mubr.f32.mxu0 0.0
        %1943 = vmatmul.mubr.f32.gmra.mrb[0].mxu0 %v1689
        %v1944 = vpop.f32.mrb[0].mxu0
        %v1945 = vadd.f32 %v1808, %v1944
        %v1946 = vpop.f32.mrb[0].mxu0
        %v1947 = vadd.f32 %v1810, %v1946
        %1948 = vmatprep.mubr.f32.mxu0 0.0
        %1949 = vmatmul.mubr.f32.gmra.mrb[0].mxu0 %v1691
        %v1950 = vpop.f32.mrb[0].mxu0
        %v1951 = vadd.f32 %v1814, %v1950
        %v1952 = vpop.f32.mrb[0].mxu0
        %v1953 = vadd.f32 %v1816, %v1952
        %1954 = vmatprep.mubr.f32.mxu0 0.0
        %1955 = vmatmul.mubr.f32.gmra.mrb[0].mxu0 %v1693
        %v1956 = vpop.f32.mrb[0].mxu0
        %v1957 = vadd.f32 %v1820, %v1956
        %v1958 = vpop.f32.mrb[0].mxu0
        %v1959 = vadd.f32 %v1822, %v1958
        %1960 = vmatprep.mubr.f32.mxu0 0.0
        %1961 = vmatmul.mubr.f32.gmra.mrb[0].mxu0 %v1695
        %v1962 = vpop.f32.mrb[0].mxu0
        %v1963 = vadd.f32 %v1826, %v1962
        %v1964 = vpop.f32.mrb[0].mxu0
        %v1965 = vadd.f32 %v1828, %v1964
        %1966 = vmatprep.mubr.f32.mxu0 0.0
        %1967 = vmatmul.mubr.f32.gmra.mrb[0].mxu0 %v1697
        %v1968 = vpop.f32.mrb[0].mxu0
        %v1969 = vadd.f32 %v1832, %v1968
        %v1970 = vpop.f32.mrb[0].mxu0
        %v1971 = vadd.f32 %v1834, %v1970
        %1972 = vdwg.mxu0
        %v1973 = vadd.f32 %v1438, %v1903
        %v1974 = vadd.f32 %v1440, %v1905
        %v1975 = vadd.f32 %v1444, %v1909
        %v1976 = vadd.f32 %v1446, %v1911
        %v1977 = vadd.f32 %v1450, %v1915
        %v1978 = vadd.f32 %v1452, %v1917
        %v1979 = vadd.f32 %v1456, %v1921
        %v1980 = vadd.f32 %v1458, %v1923
        %v1981 = vadd.f32 %v1462, %v1927
        %v1982 = vadd.f32 %v1464, %v1929
        %v1983 = vadd.f32 %v1468, %v1933
        %v1984 = vadd.f32 %v1470, %v1935
        %v1985 = vadd.f32 %v1474, %v1939
        %v1986 = vadd.f32 %v1476, %v1941
        %v1987 = vadd.f32 %v1480, %v1945
        %v1988 = vadd.f32 %v1482, %v1947
        %v1989 = vadd.f32 %v1486, %v1951
        %v1990 = vadd.f32 %v1488, %v1953
        %v1991 = vadd.f32 %v1492, %v1957
        %v1992 = vadd.f32 %v1494, %v1959
        %v1993 = vadd.f32 %v1498, %v1963
        %v1994 = vadd.f32 %v1500, %v1965
        %v1995 = vadd.f32 %v1504, %v1969
        %v1996 = vadd.f32 %v1506, %v1971
        %v1997 = vld [vmem:[%s6] sm:$0x3]
        %v1999 = vlaneseq
        %v2000 = vshrl.u32 %v1999, 7
        %v2001 = vsub.s32 0, %v2000
        %v2002 = vrot.slane %v1997, %v2001
        %v2003 = vlaneseq
        %v2004 = vshrl.u32 %v2003, 7
        %v2005 = vsub.s32 1, %v2004
        %v2006 = vrot.slane %v1997, %v2005
        %v2009 = vadd.f32 %v1973, %v2002
        %v2010 = vadd.f32 %v1974, %v2006
        %v2011 = vadd.f32 %v1975, %v2002
        %v2012 = vadd.f32 %v1976, %v2006
        %v2013 = vadd.f32 %v1977, %v2002
        %v2014 = vadd.f32 %v1978, %v2006
        %v2015 = vadd.f32 %v1979, %v2002
        %v2016 = vadd.f32 %v1980, %v2006
        %v2017 = vadd.f32 %v1981, %v2002
        %v2018 = vadd.f32 %v1982, %v2006
        %v2019 = vadd.f32 %v1983, %v2002
        %v2020 = vadd.f32 %v1984, %v2006
        %v2021 = vadd.f32 %v1985, %v2002
        %v2022 = vadd.f32 %v1986, %v2006
        %v2023 = vadd.f32 %v1987, %v2002
        %v2024 = vadd.f32 %v1988, %v2006
        %v2025 = vadd.f32 %v1989, %v2002
        %v2026 = vadd.f32 %v1990, %v2006
        %v2027 = vadd.f32 %v1991, %v2002
        %v2028 = vadd.f32 %v1992, %v2006
        %v2029 = vadd.f32 %v1993, %v2002
        %v2030 = vadd.f32 %v1994, %v2006
        %v2031 = vadd.f32 %v1995, %v2002
        %v2032 = vadd.f32 %v1996, %v2006
        %vm2033 = vcmp.ge.f32.partialorder %v2009, 0.0
        %vm2034 = vcmp.ge.f32.partialorder %v2010, 0.0
        %vm2035 = vcmp.ge.f32.partialorder %v2011, 0.0
        %vm2036 = vcmp.ge.f32.partialorder %v2012, 0.0
        %vm2037 = vcmp.ge.f32.partialorder %v2013, 0.0
        %vm2038 = vcmp.ge.f32.partialorder %v2014, 0.0
        %vm2039 = vcmp.ge.f32.partialorder %v2015, 0.0
        %vm2040 = vcmp.ge.f32.partialorder %v2016, 0.0
        %vm2041 = vcmp.ge.f32.partialorder %v2017, 0.0
        %vm2042 = vcmp.ge.f32.partialorder %v2018, 0.0
        %vm2043 = vcmp.ge.f32.partialorder %v2019, 0.0
        %vm2044 = vcmp.ge.f32.partialorder %v2020, 0.0
        %vm2045 = vcmp.ge.f32.partialorder %v2021, 0.0
        %vm2046 = vcmp.ge.f32.partialorder %v2022, 0.0
        %vm2047 = vcmp.ge.f32.partialorder %v2023, 0.0
        %vm2048 = vcmp.ge.f32.partialorder %v2024, 0.0
        %vm2049 = vcmp.ge.f32.partialorder %v2025, 0.0
        %vm2050 = vcmp.ge.f32.partialorder %v2026, 0.0
        %vm2051 = vcmp.ge.f32.partialorder %v2027, 0.0
        %vm2052 = vcmp.ge.f32.partialorder %v2028, 0.0
        %vm2053 = vcmp.ge.f32.partialorder %v2029, 0.0
        %vm2054 = vcmp.ge.f32.partialorder %v2030, 0.0
        %vm2055 = vcmp.ge.f32.partialorder %v2031, 0.0
        %vm2056 = vcmp.ge.f32.partialorder %v2032, 0.0
        %v2057 = vmul.f32 %v2009, 0.2
        %v2058 = vmul.f32 %v2010, 0.2
        %v2059 = vmul.f32 %v2011, 0.2
        %v2060 = vmul.f32 %v2012, 0.2
        %v2061 = vmul.f32 %v2013, 0.2
        %v2062 = vmul.f32 %v2014, 0.2
        %v2063 = vmul.f32 %v2015, 0.2
        %v2064 = vmul.f32 %v2016, 0.2
        %v2065 = vmul.f32 %v2017, 0.2
        %v2066 = vmul.f32 %v2018, 0.2
        %v2067 = vmul.f32 %v2019, 0.2
        %v2068 = vmul.f32 %v2020, 0.2
        %v2069 = vmul.f32 %v2021, 0.2
        %v2070 = vmul.f32 %v2022, 0.2
        %v2071 = vmul.f32 %v2023, 0.2
        %v2072 = vmul.f32 %v2024, 0.2
        %v2073 = vmul.f32 %v2025, 0.2
        %v2074 = vmul.f32 %v2026, 0.2
        %v2075 = vmul.f32 %v2027, 0.2
        %v2076 = vmul.f32 %v2028, 0.2
        %v2077 = vmul.f32 %v2029, 0.2
        %v2078 = vmul.f32 %v2030, 0.2
        %v2079 = vmul.f32 %v2031, 0.2
        %v2080 = vmul.f32 %v2032, 0.2
        %v2081 = vsel %vm2033, %v2009, %v2057
        %v2082 = vsel %vm2034, %v2010, %v2058
        %v2083 = vsel %vm2035, %v2011, %v2059
        %v2084 = vsel %vm2036, %v2012, %v2060
        %v2085 = vsel %vm2037, %v2013, %v2061
        %v2086 = vsel %vm2038, %v2014, %v2062
        %v2087 = vsel %vm2039, %v2015, %v2063
        %v2088 = vsel %vm2040, %v2016, %v2064
        %v2089 = vsel %vm2041, %v2017, %v2065
        %v2090 = vsel %vm2042, %v2018, %v2066
        %v2091 = vsel %vm2043, %v2019, %v2067
        %v2092 = vsel %vm2044, %v2020, %v2068
        %v2093 = vsel %vm2045, %v2021, %v2069
        %v2094 = vsel %vm2046, %v2022, %v2070
        %v2095 = vsel %vm2047, %v2023, %v2071
        %v2096 = vsel %vm2048, %v2024, %v2072
        %v2097 = vsel %vm2049, %v2025, %v2073
        %v2098 = vsel %vm2050, %v2026, %v2074
        %v2099 = vsel %vm2051, %v2027, %v2075
        %v2100 = vsel %vm2052, %v2028, %v2076
        %v2101 = vsel %vm2053, %v2029, %v2077
        %v2102 = vsel %vm2054, %v2030, %v2078
        %v2103 = vsel %vm2055, %v2031, %v2079
        %v2104 = vsel %vm2056, %v2032, %v2080
        %v2105 = vld [vmem:[%s2] sm:$0xff]
        %v2106 = vld [vmem:[%s2 + $0x8] sm:$0xff]
        %v2107 = vld [vmem:[%s2 + $0x10] sm:$0xff]
        %v2108 = vld [vmem:[%s2 + $0x18] sm:$0xff]
        %v2109 = vld [vmem:[%s2 + $0x20] sm:$0xff]
        %v2110 = vld [vmem:[%s2 + $0x28] sm:$0x3f]
        %vm2111 = vcmask 769024
        %v2113 = vsel %vm2111, %v2105, 0
        %v2116 = vsel %vm2111, %v2106, 0
        %v2119 = vsel %vm2111, %v2107, 0
        %v2122 = vsel %vm2111, %v2108, 0
        %v2125 = vsel %vm2111, %v2109, 0
        %v2128 = vsel %vm2111, %v2110, 0
        %v2131 = vsel %vm1581, %v2103, 0
        %v2134 = vsel %vm1581, %v2104, 0
        %2136 = vmatprep.subr.mxu0 %v2082
        %2137 = vmatpush1.msra.mxu0 %v2081
        %2138 = vmatprep.subr.mxu0 %v2084
        %2139 = vmatpush1.msra.mxu0 %v2083
        %2140 = vmatprep.subr.mxu0 %v2086
        %2141 = vmatpush1.msra.mxu0 %v2085
        %2142 = vmatprep.subr.mxu0 %v2088
        %2143 = vmatpush1.msra.mxu0 %v2087
        %2144 = vmatprep.subr.mxu0 %v2090
        %2145 = vmatpush1.msra.mxu0 %v2089
        %2146 = vmatprep.subr.mxu0 %v2092
        %2147 = vmatpush1.msra.mxu0 %v2091
        %2148 = vmatprep.subr.mxu0 %v2094
        %2149 = vmatpush1.msra.mxu0 %v2093
        %2150 = vmatprep.subr.mxu0 %v2096
        %2151 = vmatpush1.msra.mxu0 %v2095
        %2152 = vmatprep.subr.mxu0 %v2098
        %2153 = vmatpush1.msra.mxu0 %v2097
        %2154 = vmatprep.subr.mxu0 %v2100
        %2155 = vmatpush1.msra.mxu0 %v2099
        %2156 = vmatprep.subr.mxu0 %v2102
        %2157 = vmatpush1.msra.mxu0 %v2101
        %2158 = vmatprep.subr.mxu0 %v2134
        %2159 = vmatpush1.msra.mxu0 %v2131
        %2160 = vmatprep.subr.mxu0 0.0
        %2161 = vmatpush1.msra.mxu0 0.0
        %2162 = vmatprep.subr.mxu0 0.0
        %2163 = vmatpush1.msra.mxu0 0.0
        %2164 = vmatprep.subr.mxu0 0.0
        %2165 = vmatpush1.msra.mxu0 0.0
        %2166 = vmatprep.subr.mxu0 0.0
        %2167 = vmatpush1.msra.mxu0 0.0
        %2168 = vmatprep.subr.mxu0 0.0
        %2169 = vmatpush1.msra.mxu0 0.0
        %2170 = vmatprep.subr.mxu0 0.0
        %2171 = vmatpush1.msra.mxu0 0.0
        %2172 = vmatprep.subr.mxu0 0.0
        %2173 = vmatpush1.msra.mxu0 0.0
        %2174 = vmatprep.subr.mxu0 0.0
        %2175 = vmatpush1.msra.mxu0 0.0
        %2176 = vmatprep.subr.mxu0 0.0
        %2177 = vmatpush1.msra.mxu0 0.0
        %2178 = vmatprep.subr.mxu0 0.0
        %2179 = vmatpush1.msra.mxu0 0.0
        %2180 = vmatprep.subr.mxu0 0.0
        %2181 = vmatpush1.msra.mxu0 0.0
        %2182 = vmatprep.subr.mxu0 0.0
        %2183 = vmatpush1.msra.mxu0 0.0
        %2184 = vmatprep.subr.mxu0 0.0
        %2185 = vmatpush1.msra.mxu0 0.0
        %2186 = vmatprep.subr.mxu0 0.0
        %2187 = vmatpush1.msra.mxu0 0.0
        %2188 = vmatprep.subr.mxu0 0.0
        %2189 = vmatpush1.msra.mxu0 0.0
        %2190 = vmatprep.subr.mxu0 0.0
        %2191 = vmatpush1.msra.mxu0 0.0
        %2192 = vmatprep.subr.mxu0 0.0
        %2193 = vmatpush1.msra.mxu0 0.0
        %2194 = vmatprep.subr.mxu0 0.0
        %2195 = vmatpush1.msra.mxu0 0.0
        %2196 = vmatprep.subr.mxu0 0.0
        %2197 = vmatpush1.msra.mxu0 0.0
        %2198 = vmatprep.subr.mxu0 0.0
        %2199 = vmatpush1.msra.mxu0 0.0
        %2200 = vmatprep.mubr.f32.mxu0 0.0
        %2201 = vmatmul.mubr.f32.gmra.mrb[0].mxu0 %v2113
        %v2202 = vpop.f32.mrb[0].mxu0
        %v2203 = vadd.f32 0.0, %v2202
        %v2204 = vpop.f32.mrb[0].mxu0
        %v2205 = vadd.f32 0.0, %v2204
        %2206 = vmatprep.mubr.f32.mxu0 0.0
        %2207 = vmatmul.mubr.f32.gmra.mrb[0].mxu0 %v2116
        %v2208 = vpop.f32.mrb[0].mxu0
        %v2209 = vadd.f32 0.0, %v2208
        %v2210 = vpop.f32.mrb[0].mxu0
        %v2211 = vadd.f32 0.0, %v2210
        %2212 = vmatprep.mubr.f32.mxu0 0.0
        %2213 = vmatmul.mubr.f32.gmra.mrb[0].mxu0 %v2119
        %v2214 = vpop.f32.mrb[0].mxu0
        %v2215 = vadd.f32 0.0, %v2214
        %v2216 = vpop.f32.mrb[0].mxu0
        %v2217 = vadd.f32 0.0, %v2216
        %2218 = vmatprep.mubr.f32.mxu0 0.0
        %2219 = vmatmul.mubr.f32.gmra.mrb[0].mxu0 %v2122
        %v2220 = vpop.f32.mrb[0].mxu0
        %v2221 = vadd.f32 0.0, %v2220
        %v2222 = vpop.f32.mrb[0].mxu0
        %v2223 = vadd.f32 0.0, %v2222
        %2224 = vmatprep.mubr.f32.mxu0 0.0
        %2225 = vmatmul.mubr.f32.gmra.mrb[0].mxu0 %v2125
        %v2226 = vpop.f32.mrb[0].mxu0
        %v2227 = vadd.f32 0.0, %v2226
        %v2228 = vpop.f32.mrb[0].mxu0
        %v2229 = vadd.f32 0.0, %v2228
        %2230 = vmatprep.mubr.f32.mxu0 0.0
        %2231 = vmatmul.mubr.f32.gmra.mrb[0].mxu0 %v2128
        %v2232 = vpop.f32.mrb[0].mxu0
        %v2233 = vadd.f32 0.0, %v2232
        %v2234 = vpop.f32.mrb[0].mxu0
        %v2235 = vadd.f32 0.0, %v2234
        %2236 = vdwg.mxu0
        %v2237 = vld [vmem:[%s3] sm:$0xff]
        %v2238 = vld [vmem:[%s3 + $0x8] sm:$0xff]
        %v2239 = vld [vmem:[%s3 + $0x10] sm:$0xff]
        %v2240 = vld [vmem:[%s3 + $0x18] sm:$0xff]
        %v2241 = vld [vmem:[%s3 + $0x20] sm:$0xff]
        %v2242 = vld [vmem:[%s3 + $0x28] sm:$0xff]
        %v2243 = vld [vmem:[%s3 + $0x30] sm:$0xff]
        %v2244 = vld [vmem:[%s3 + $0x38] sm:$0xff]
        %v2245 = vld [vmem:[%s3 + $0x40] sm:$0xff]
        %v2246 = vld [vmem:[%s3 + $0x48] sm:$0xff]
        %v2247 = vld [vmem:[%s3 + $0x50] sm:$0xff]
        %v2248 = vld [vmem:[%s3 + $0x58] sm:$0xff]
        %v2249 = vld [vmem:[%s3 + $0x60] sm:$0xff]
        %v2250 = vld [vmem:[%s3 + $0x68] sm:$0xff]
        %v2251 = vld [vmem:[%s3 + $0x70] sm:$0xff]
        %v2252 = vld [vmem:[%s3 + $0x78] sm:$0xff]
        %v2253 = vld [vmem:[%s3 + $0x80] sm:$0xff]
        %v2254 = vld [vmem:[%s3 + $0x88] sm:$0xff]
        %v2255 = vld [vmem:[%s3 + $0x90] sm:$0xff]
        %v2256 = vld [vmem:[%s3 + $0x98] sm:$0xff]
        %v2257 = vld [vmem:[%s3 + $0xa0] sm:$0xff]
        %v2258 = vld [vmem:[%s3 + $0xa8] sm:$0xff]
        %v2259 = vld [vmem:[%s3 + $0xb0] sm:$0xff]
        %v2260 = vld [vmem:[%s3 + $0xb8] sm:$0xff]
        %v2261 = vld [vmem:[%s3 + $0xc0] sm:$0xff]
        %v2262 = vld [vmem:[%s3 + $0xc8] sm:$0xff]
        %v2263 = vld [vmem:[%s3 + $0xd0] sm:$0xff]
        %v2264 = vld [vmem:[%s3 + $0xd8] sm:$0xff]
        %v2265 = vld [vmem:[%s3 + $0xe0] sm:$0xff]
        %v2266 = vld [vmem:[%s3 + $0xe8] sm:$0xff]
        %v2267 = vld [vmem:[%s3 + $0xf0] sm:$0xff]
        %v2268 = vld [vmem:[%s3 + $0xf8] sm:$0xff]
        %v2269 = vld [vmem:[%s3 + $0x100] sm:$0xff]
        %v2270 = vld [vmem:[%s3 + $0x108] sm:$0xff]
        %v2271 = vld [vmem:[%s3 + $0x110] sm:$0xff]
        %v2272 = vld [vmem:[%s3 + $0x118] sm:$0xff]
        %v2273 = vld [vmem:[%s3 + $0x120] sm:$0xff]
        %v2274 = vld [vmem:[%s3 + $0x128] sm:$0xff]
        %v2275 = vld [vmem:[%s3 + $0x130] sm:$0xff]
        %v2276 = vld [vmem:[%s3 + $0x138] sm:$0xff]
        %v2277 = vld [vmem:[%s3 + $0x140] sm:$0xff]
        %v2278 = vld [vmem:[%s3 + $0x148] sm:$0xff]
        %v2279 = vld [vmem:[%s3 + $0x150] sm:$0xff]
        %v2280 = vld [vmem:[%s3 + $0x158] sm:$0xff]
        %v2281 = vld [vmem:[%s3 + $0x160] sm:$0xff]
        %v2282 = vld [vmem:[%s3 + $0x168] sm:$0xff]
        %v2283 = vld [vmem:[%s3 + $0x170] sm:$0xf]
        %v2284 = vld [vmem:[%s3 + $0x178] sm:$0xf]
        %s2285 = scalar_lea.vmem %s2, 48
        %v2286 = vld [vmem:[%s2285] sm:$0xff]
        %v2287 = vld [vmem:[%s2285 + $0x8] sm:$0xff]
        %v2288 = vld [vmem:[%s2285 + $0x10] sm:$0xff]
        %v2289 = vld [vmem:[%s2285 + $0x18] sm:$0xff]
        %v2290 = vld [vmem:[%s2285 + $0x20] sm:$0xff]
        %v2291 = vld [vmem:[%s2285 + $0x28] sm:$0x3f]
        %v2293 = vsel %vm2111, %v2286, 0
        %v2296 = vsel %vm2111, %v2287, 0
        %v2299 = vsel %vm2111, %v2288, 0
        %v2302 = vsel %vm2111, %v2289, 0
        %v2305 = vsel %vm2111, %v2290, 0
        %v2308 = vsel %vm2111, %v2291, 0
        %2310 = vmatprep.subr.mxu0 %v2082
        %2311 = vmatpush1.msra.mxu0 %v2081
        %2312 = vmatprep.subr.mxu0 %v2084
        %2313 = vmatpush1.msra.mxu0 %v2083
        %2314 = vmatprep.subr.mxu0 %v2086
        %2315 = vmatpush1.msra.mxu0 %v2085
        %2316 = vmatprep.subr.mxu0 %v2088
        %2317 = vmatpush1.msra.mxu0 %v2087
        %2318 = vmatprep.subr.mxu0 %v2090
        %2319 = vmatpush1.msra.mxu0 %v2089
        %2320 = vmatprep.subr.mxu0 %v2092
        %2321 = vmatpush1.msra.mxu0 %v2091
        %2322 = vmatprep.subr.mxu0 %v2094
        %2323 = vmatpush1.msra.mxu0 %v2093
        %2324 = vmatprep.subr.mxu0 %v2096
        %2325 = vmatpush1.msra.mxu0 %v2095
        %2326 = vmatprep.subr.mxu0 %v2098
        %2327 = vmatpush1.msra.mxu0 %v2097
        %2328 = vmatprep.subr.mxu0 %v2100
        %2329 = vmatpush1.msra.mxu0 %v2099
        %2330 = vmatprep.subr.mxu0 %v2102
        %2331 = vmatpush1.msra.mxu0 %v2101
        %2332 = vmatprep.subr.mxu0 %v2134
        %2333 = vmatpush1.msra.mxu0 %v2131
        %2334 = vmatprep.subr.mxu0 0.0
        %2335 = vmatpush1.msra.mxu0 0.0
        %2336 = vmatprep.subr.mxu0 0.0
        %2337 = vmatpush1.msra.mxu0 0.0
        %2338 = vmatprep.subr.mxu0 0.0
        %2339 = vmatpush1.msra.mxu0 0.0
        %2340 = vmatprep.subr.mxu0 0.0
        %2341 = vmatpush1.msra.mxu0 0.0
        %2342 = vmatprep.subr.mxu0 0.0
        %2343 = vmatpush1.msra.mxu0 0.0
        %2344 = vmatprep.subr.mxu0 0.0
        %2345 = vmatpush1.msra.mxu0 0.0
        %2346 = vmatprep.subr.mxu0 0.0
        %2347 = vmatpush1.msra.mxu0 0.0
        %2348 = vmatprep.subr.mxu0 0.0
        %2349 = vmatpush1.msra.mxu0 0.0
        %2350 = vmatprep.subr.mxu0 0.0
        %2351 = vmatpush1.msra.mxu0 0.0
        %2352 = vmatprep.subr.mxu0 0.0
        %2353 = vmatpush1.msra.mxu0 0.0
        %2354 = vmatprep.subr.mxu0 0.0
        %2355 = vmatpush1.msra.mxu0 0.0
        %2356 = vmatprep.subr.mxu0 0.0
        %2357 = vmatpush1.msra.mxu0 0.0
        %2358 = vmatprep.subr.mxu0 0.0
        %2359 = vmatpush1.msra.mxu0 0.0
        %2360 = vmatprep.subr.mxu0 0.0
        %2361 = vmatpush1.msra.mxu0 0.0
        %2362 = vmatprep.subr.mxu0 0.0
        %2363 = vmatpush1.msra.mxu0 0.0
        %2364 = vmatprep.subr.mxu0 0.0
        %2365 = vmatpush1.msra.mxu0 0.0
        %2366 = vmatprep.subr.mxu0 0.0
        %2367 = vmatpush1.msra.mxu0 0.0
        %2368 = vmatprep.subr.mxu0 0.0
        %2369 = vmatpush1.msra.mxu0 0.0
        %2370 = vmatprep.subr.mxu0 0.0
        %2371 = vmatpush1.msra.mxu0 0.0
        %2372 = vmatprep.subr.mxu0 0.0
        %2373 = vmatpush1.msra.mxu0 0.0
        %2374 = vmatprep.mubr.f32.mxu0 0.0
        %2375 = vmatmul.mubr.f32.gmra.mrb[0].mxu0 %v2293
        %v2376 = vpop.f32.mrb[0].mxu0
        %v2377 = vadd.f32 0.0, %v2376
        %v2378 = vpop.f32.mrb[0].mxu0
        %v2379 = vadd.f32 0.0, %v2378
        %2380 = vmatprep.mubr.f32.mxu0 0.0
        %2381 = vmatmul.mubr.f32.gmra.mrb[0].mxu0 %v2296
        %v2382 = vpop.f32.mrb[0].mxu0
        %v2383 = vadd.f32 0.0, %v2382
        %v2384 = vpop.f32.mrb[0].mxu0
        %v2385 = vadd.f32 0.0, %v2384
        %2386 = vmatprep.mubr.f32.mxu0 0.0
        %2387 = vmatmul.mubr.f32.gmra.mrb[0].mxu0 %v2299
        %v2388 = vpop.f32.mrb[0].mxu0
        %v2389 = vadd.f32 0.0, %v2388
        %v2390 = vpop.f32.mrb[0].mxu0
        %v2391 = vadd.f32 0.0, %v2390
        %2392 = vmatprep.mubr.f32.mxu0 0.0
        %2393 = vmatmul.mubr.f32.gmra.mrb[0].mxu0 %v2302
        %v2394 = vpop.f32.mrb[0].mxu0
        %v2395 = vadd.f32 0.0, %v2394
        %v2396 = vpop.f32.mrb[0].mxu0
        %v2397 = vadd.f32 0.0, %v2396
        %2398 = vmatprep.mubr.f32.mxu0 0.0
        %2399 = vmatmul.mubr.f32.gmra.mrb[0].mxu0 %v2305
        %v2400 = vpop.f32.mrb[0].mxu0
        %v2401 = vadd.f32 0.0, %v2400
        %v2402 = vpop.f32.mrb[0].mxu0
        %v2403 = vadd.f32 0.0, %v2402
        %2404 = vmatprep.mubr.f32.mxu0 0.0
        %2405 = vmatmul.mubr.f32.gmra.mrb[0].mxu0 %v2308
        %v2406 = vpop.f32.mrb[0].mxu0
        %v2407 = vadd.f32 0.0, %v2406
        %v2408 = vpop.f32.mrb[0].mxu0
        %v2409 = vadd.f32 0.0, %v2408
        %2410 = vdwg.mxu0
        %s2411 = scalar_lea.vmem %s3, 384
        %v2412 = vld [vmem:[%s2411] sm:$0xff]
        %v2413 = vld [vmem:[%s2411 + $0x8] sm:$0xff]
        %v2414 = vld [vmem:[%s2411 + $0x10] sm:$0xff]
        %v2415 = vld [vmem:[%s2411 + $0x18] sm:$0xff]
        %v2416 = vld [vmem:[%s2411 + $0x20] sm:$0xff]
        %v2417 = vld [vmem:[%s2411 + $0x28] sm:$0xff]
        %v2418 = vld [vmem:[%s2411 + $0x30] sm:$0xff]
        %v2419 = vld [vmem:[%s2411 + $0x38] sm:$0xff]
        %v2420 = vld [vmem:[%s2411 + $0x40] sm:$0xff]
        %v2421 = vld [vmem:[%s2411 + $0x48] sm:$0xff]
        %v2422 = vld [vmem:[%s2411 + $0x50] sm:$0xff]
        %v2423 = vld [vmem:[%s2411 + $0x58] sm:$0xff]
        %v2424 = vld [vmem:[%s2411 + $0x60] sm:$0xff]
        %v2425 = vld [vmem:[%s2411 + $0x68] sm:$0xff]
        %v2426 = vld [vmem:[%s2411 + $0x70] sm:$0xff]
        %v2427 = vld [vmem:[%s2411 + $0x78] sm:$0xff]
        %v2428 = vld [vmem:[%s2411 + $0x80] sm:$0xff]
        %v2429 = vld [vmem:[%s2411 + $0x88] sm:$0xff]
        %v2430 = vld [vmem:[%s2411 + $0x90] sm:$0xff]
        %v2431 = vld [vmem:[%s2411 + $0x98] sm:$0xff]
        %v2432 = vld [vmem:[%s2411 + $0xa0] sm:$0xff]
        %v2433 = vld [vmem:[%s2411 + $0xa8] sm:$0xff]
        %v2434 = vld [vmem:[%s2411 + $0xb0] sm:$0xff]
        %v2435 = vld [vmem:[%s2411 + $0xb8] sm:$0xff]
        %v2436 = vld [vmem:[%s2411 + $0xc0] sm:$0xff]
        %v2437 = vld [vmem:[%s2411 + $0xc8] sm:$0xff]
        %v2438 = vld [vmem:[%s2411 + $0xd0] sm:$0xff]
        %v2439 = vld [vmem:[%s2411 + $0xd8] sm:$0xff]
        %v2440 = vld [vmem:[%s2411 + $0xe0] sm:$0xff]
        %v2441 = vld [vmem:[%s2411 + $0xe8] sm:$0xff]
        %v2442 = vld [vmem:[%s2411 + $0xf0] sm:$0xff]
        %v2443 = vld [vmem:[%s2411 + $0xf8] sm:$0xff]
        %v2444 = vld [vmem:[%s2411 + $0x100] sm:$0xff]
        %v2445 = vld [vmem:[%s2411 + $0x108] sm:$0xff]
        %v2446 = vld [vmem:[%s2411 + $0x110] sm:$0xff]
        %v2447 = vld [vmem:[%s2411 + $0x118] sm:$0xff]
        %v2448 = vld [vmem:[%s2411 + $0x120] sm:$0xff]
        %v2449 = vld [vmem:[%s2411 + $0x128] sm:$0xff]
        %v2450 = vld [vmem:[%s2411 + $0x130] sm:$0xff]
        %v2451 = vld [vmem:[%s2411 + $0x138] sm:$0xff]
        %v2452 = vld [vmem:[%s2411 + $0x140] sm:$0xff]
        %v2453 = vld [vmem:[%s2411 + $0x148] sm:$0xff]
        %v2454 = vld [vmem:[%s2411 + $0x150] sm:$0xff]
        %v2455 = vld [vmem:[%s2411 + $0x158] sm:$0xff]
        %v2456 = vld [vmem:[%s2411 + $0x160] sm:$0xff]
        %v2457 = vld [vmem:[%s2411 + $0x168] sm:$0xff]
        %v2458 = vld [vmem:[%s2411 + $0x170] sm:$0xf]
        %v2459 = vld [vmem:[%s2411 + $0x178] sm:$0xf]
        %vm2460 = vcmask 490496
        %v2462 = vsel %vm2460, %v2379, 0
        %v2465 = vsel %vm2460, %v2385, 0
        %v2468 = vsel %vm2460, %v2391, 0
        %v2471 = vsel %vm2460, %v2397, 0
        %v2474 = vsel %vm2460, %v2403, 0
        %v2477 = vsel %vm2460, %v2409, 0
        %vm2479 = vcmask 1043456
        %v2481 = vsel %vm2479, %v2458, 0
        %v2484 = vsel %vm2479, %v2459, 0
        %2486 = vmatprep.subr.mxu0 %v2413
        %2487 = vmatpush1.msra.mxu0 %v2412
        %2488 = vmatprep.subr.mxu0 %v2415
        %2489 = vmatpush1.msra.mxu0 %v2414
        %2490 = vmatprep.subr.mxu0 %v2417
        %2491 = vmatpush1.msra.mxu0 %v2416
        %2492 = vmatprep.subr.mxu0 %v2419
        %2493 = vmatpush1.msra.mxu0 %v2418
        %2494 = vmatprep.subr.mxu0 %v2421
        %2495 = vmatpush1.msra.mxu0 %v2420
        %2496 = vmatprep.subr.mxu0 %v2423
        %2497 = vmatpush1.msra.mxu0 %v2422
        %2498 = vmatprep.subr.mxu0 %v2425
        %2499 = vmatpush1.msra.mxu0 %v2424
        %2500 = vmatprep.subr.mxu0 %v2427
        %2501 = vmatpush1.msra.mxu0 %v2426
        %2502 = vmatprep.subr.mxu0 %v2429
        %2503 = vmatpush1.msra.mxu0 %v2428
        %2504 = vmatprep.subr.mxu0 %v2431
        %2505 = vmatpush1.msra.mxu0 %v2430
        %2506 = vmatprep.subr.mxu0 %v2433
        %2507 = vmatpush1.msra.mxu0 %v2432
        %2508 = vmatprep.subr.mxu0 %v2435
        %2509 = vmatpush1.msra.mxu0 %v2434
        %2510 = vmatprep.subr.mxu0 %v2437
        %2511 = vmatpush1.msra.mxu0 %v2436
        %2512 = vmatprep.subr.mxu0 %v2439
        %2513 = vmatpush1.msra.mxu0 %v2438
        %2514 = vmatprep.subr.mxu0 %v2441
        %2515 = vmatpush1.msra.mxu0 %v2440
        %2516 = vmatprep.subr.mxu0 %v2443
        %2517 = vmatpush1.msra.mxu0 %v2442
        %2518 = vmatprep.subr.mxu0 %v2445
        %2519 = vmatpush1.msra.mxu0 %v2444
        %2520 = vmatprep.subr.mxu0 %v2447
        %2521 = vmatpush1.msra.mxu0 %v2446
        %2522 = vmatprep.subr.mxu0 %v2449
        %2523 = vmatpush1.msra.mxu0 %v2448
        %2524 = vmatprep.subr.mxu0 %v2451
        %2525 = vmatpush1.msra.mxu0 %v2450
        %2526 = vmatprep.subr.mxu0 %v2453
        %2527 = vmatpush1.msra.mxu0 %v2452
        %2528 = vmatprep.subr.mxu0 %v2455
        %2529 = vmatpush1.msra.mxu0 %v2454
        %2530 = vmatprep.subr.mxu0 %v2457
        %2531 = vmatpush1.msra.mxu0 %v2456
        %2532 = vmatprep.subr.mxu0 %v2484
        %2533 = vmatpush1.msra.mxu0 %v2481
        %2534 = vmatprep.subr.mxu0 0.0
        %2535 = vmatpush1.msra.mxu0 0.0
        %2536 = vmatprep.subr.mxu0 0.0
        %2537 = vmatpush1.msra.mxu0 0.0
        %2538 = vmatprep.subr.mxu0 0.0
        %2539 = vmatpush1.msra.mxu0 0.0
        %2540 = vmatprep.subr.mxu0 0.0
        %2541 = vmatpush1.msra.mxu0 0.0
        %2542 = vmatprep.subr.mxu0 0.0
        %2543 = vmatpush1.msra.mxu0 0.0
        %2544 = vmatprep.subr.mxu0 0.0
        %2545 = vmatpush1.msra.mxu0 0.0
        %2546 = vmatprep.subr.mxu0 0.0
        %2547 = vmatpush1.msra.mxu0 0.0
        %2548 = vmatprep.subr.mxu0 0.0
        %2549 = vmatpush1.msra.mxu0 0.0
        %2550 = vmatprep.mubr.f32.mxu0 %v2462
        %2551 = vmatmul.mubr.f32.gmra.mrb[0].mxu0 %v2377
        %v2552 = vpop.f32.mrb[0].mxu0
        %v2553 = vadd.f32 0.0, %v2552
        %v2554 = vpop.f32.mrb[0].mxu0
        %v2555 = vadd.f32 0.0, %v2554
        %2556 = vmatprep.mubr.f32.mxu0 %v2465
        %2557 = vmatmul.mubr.f32.gmra.mrb[0].mxu0 %v2383
        %v2558 = vpop.f32.mrb[0].mxu0
        %v2559 = vadd.f32 0.0, %v2558
        %v2560 = vpop.f32.mrb[0].mxu0
        %v2561 = vadd.f32 0.0, %v2560
        %2562 = vmatprep.mubr.f32.mxu0 %v2468
        %2563 = vmatmul.mubr.f32.gmra.mrb[0].mxu0 %v2389
        %v2564 = vpop.f32.mrb[0].mxu0
        %v2565 = vadd.f32 0.0, %v2564
        %v2566 = vpop.f32.mrb[0].mxu0
        %v2567 = vadd.f32 0.0, %v2566
        %2568 = vmatprep.mubr.f32.mxu0 %v2471
        %2569 = vmatmul.mubr.f32.gmra.mrb[0].mxu0 %v2395
        %v2570 = vpop.f32.mrb[0].mxu0
        %v2571 = vadd.f32 0.0, %v2570
        %v2572 = vpop.f32.mrb[0].mxu0
        %v2573 = vadd.f32 0.0, %v2572
        %2574 = vmatprep.mubr.f32.mxu0 %v2474
        %2575 = vmatmul.mubr.f32.gmra.mrb[0].mxu0 %v2401
        %v2576 = vpop.f32.mrb[0].mxu0
        %v2577 = vadd.f32 0.0, %v2576
        %v2578 = vpop.f32.mrb[0].mxu0
        %v2579 = vadd.f32 0.0, %v2578
        %2580 = vmatprep.mubr.f32.mxu0 %v2477
        %2581 = vmatmul.mubr.f32.gmra.mrb[0].mxu0 %v2407
        %v2582 = vpop.f32.mrb[0].mxu0
        %v2583 = vadd.f32 0.0, %v2582
        %v2584 = vpop.f32.mrb[0].mxu0
        %v2585 = vadd.f32 0.0, %v2584
        %2586 = vdwg.mxu0
        %v2588 = vsel %vm2460, %v2205, 0
        %v2591 = vsel %vm2460, %v2211, 0
        %v2594 = vsel %vm2460, %v2217, 0
        %v2597 = vsel %vm2460, %v2223, 0
        %v2600 = vsel %vm2460, %v2229, 0
        %v2603 = vsel %vm2460, %v2235, 0
        %v2606 = vsel %vm2479, %v2283, 0
        %v2609 = vsel %vm2479, %v2284, 0
        %2611 = vmatprep.subr.mxu0 %v2238
        %2612 = vmatpush1.msra.mxu0 %v2237
        %2613 = vmatprep.subr.mxu0 %v2240
        %2614 = vmatpush1.msra.mxu0 %v2239
        %2615 = vmatprep.subr.mxu0 %v2242
        %2616 = vmatpush1.msra.mxu0 %v2241
        %2617 = vmatprep.subr.mxu0 %v2244
        %2618 = vmatpush1.msra.mxu0 %v2243
        %2619 = vmatprep.subr.mxu0 %v2246
        %2620 = vmatpush1.msra.mxu0 %v2245
        %2621 = vmatprep.subr.mxu0 %v2248
        %2622 = vmatpush1.msra.mxu0 %v2247
        %2623 = vmatprep.subr.mxu0 %v2250
        %2624 = vmatpush1.msra.mxu0 %v2249
        %2625 = vmatprep.subr.mxu0 %v2252
        %2626 = vmatpush1.msra.mxu0 %v2251
        %2627 = vmatprep.subr.mxu0 %v2254
        %2628 = vmatpush1.msra.mxu0 %v2253
        %2629 = vmatprep.subr.mxu0 %v2256
        %2630 = vmatpush1.msra.mxu0 %v2255
        %2631 = vmatprep.subr.mxu0 %v2258
        %2632 = vmatpush1.msra.mxu0 %v2257
        %2633 = vmatprep.subr.mxu0 %v2260
        %2634 = vmatpush1.msra.mxu0 %v2259
        %2635 = vmatprep.subr.mxu0 %v2262
        %2636 = vmatpush1.msra.mxu0 %v2261
        %2637 = vmatprep.subr.mxu0 %v2264
        %2638 = vmatpush1.msra.mxu0 %v2263
        %2639 = vmatprep.subr.mxu0 %v2266
        %2640 = vmatpush1.msra.mxu0 %v2265
        %2641 = vmatprep.subr.mxu0 %v2268
        %2642 = vmatpush1.msra.mxu0 %v2267
        %2643 = vmatprep.subr.mxu0 %v2270
        %2644 = vmatpush1.msra.mxu0 %v2269
        %2645 = vmatprep.subr.mxu0 %v2272
        %2646 = vmatpush1.msra.mxu0 %v2271
        %2647 = vmatprep.subr.mxu0 %v2274
        %2648 = vmatpush1.msra.mxu0 %v2273
        %2649 = vmatprep.subr.mxu0 %v2276
        %2650 = vmatpush1.msra.mxu0 %v2275
        %2651 = vmatprep.subr.mxu0 %v2278
        %2652 = vmatpush1.msra.mxu0 %v2277
        %2653 = vmatprep.subr.mxu0 %v2280
        %2654 = vmatpush1.msra.mxu0 %v2279
        %2655 = vmatprep.subr.mxu0 %v2282
        %2656 = vmatpush1.msra.mxu0 %v2281
        %2657 = vmatprep.subr.mxu0 %v2609
        %2658 = vmatpush1.msra.mxu0 %v2606
        %2659 = vmatprep.subr.mxu0 0.0
        %2660 = vmatpush1.msra.mxu0 0.0
        %2661 = vmatprep.subr.mxu0 0.0
        %2662 = vmatpush1.msra.mxu0 0.0
        %2663 = vmatprep.subr.mxu0 0.0
        %2664 = vmatpush1.msra.mxu0 0.0
        %2665 = vmatprep.subr.mxu0 0.0
        %2666 = vmatpush1.msra.mxu0 0.0
        %2667 = vmatprep.subr.mxu0 0.0
        %2668 = vmatpush1.msra.mxu0 0.0
        %2669 = vmatprep.subr.mxu0 0.0
        %2670 = vmatpush1.msra.mxu0 0.0
        %2671 = vmatprep.subr.mxu0 0.0
        %2672 = vmatpush1.msra.mxu0 0.0
        %2673 = vmatprep.subr.mxu0 0.0
        %2674 = vmatpush1.msra.mxu0 0.0
        %2675 = vmatprep.mubr.f32.mxu0 %v2588
        %2676 = vmatmul.mubr.f32.gmra.mrb[0].mxu0 %v2203
        %v2677 = vpop.f32.mrb[0].mxu0
        %v2678 = vadd.f32 %v2553, %v2677
        %v2679 = vpop.f32.mrb[0].mxu0
        %v2680 = vadd.f32 %v2555, %v2679
        %2681 = vmatprep.mubr.f32.mxu0 %v2591
        %2682 = vmatmul.mubr.f32.gmra.mrb[0].mxu0 %v2209
        %v2683 = vpop.f32.mrb[0].mxu0
        %v2684 = vadd.f32 %v2559, %v2683
        %v2685 = vpop.f32.mrb[0].mxu0
        %v2686 = vadd.f32 %v2561, %v2685
        %2687 = vmatprep.mubr.f32.mxu0 %v2594
        %2688 = vmatmul.mubr.f32.gmra.mrb[0].mxu0 %v2215
        %v2689 = vpop.f32.mrb[0].mxu0
        %v2690 = vadd.f32 %v2565, %v2689
        %v2691 = vpop.f32.mrb[0].mxu0
        %v2692 = vadd.f32 %v2567, %v2691
        %2693 = vmatprep.mubr.f32.mxu0 %v2597
        %2694 = vmatmul.mubr.f32.gmra.mrb[0].mxu0 %v2221
        %v2695 = vpop.f32.mrb[0].mxu0
        %v2696 = vadd.f32 %v2571, %v2695
        %v2697 = vpop.f32.mrb[0].mxu0
        %v2698 = vadd.f32 %v2573, %v2697
        %2699 = vmatprep.mubr.f32.mxu0 %v2600
        %2700 = vmatmul.mubr.f32.gmra.mrb[0].mxu0 %v2227
        %v2701 = vpop.f32.mrb[0].mxu0
        %v2702 = vadd.f32 %v2577, %v2701
        %v2703 = vpop.f32.mrb[0].mxu0
        %v2704 = vadd.f32 %v2579, %v2703
        %2705 = vmatprep.mubr.f32.mxu0 %v2603
        %2706 = vmatmul.mubr.f32.gmra.mrb[0].mxu0 %v2233
        %v2707 = vpop.f32.mrb[0].mxu0
        %v2708 = vadd.f32 %v2583, %v2707
        %v2709 = vpop.f32.mrb[0].mxu0
        %v2710 = vadd.f32 %v2585, %v2709
        %2711 = vdwg.mxu0
        %s2712 = scalar_lea.vmem %s2, 96
        %v2713 = vld [vmem:[%s2712] sm:$0xff]
        %v2714 = vld [vmem:[%s2712 + $0x8] sm:$0xff]
        %v2715 = vld [vmem:[%s2712 + $0x10] sm:$0xff]
        %v2716 = vld [vmem:[%s2712 + $0x18] sm:$0xff]
        %v2717 = vld [vmem:[%s2712 + $0x20] sm:$0xff]
        %v2718 = vld [vmem:[%s2712 + $0x28] sm:$0x3f]
        %v2720 = vsel %vm2111, %v2713, 0
        %v2723 = vsel %vm2111, %v2714, 0
        %v2726 = vsel %vm2111, %v2715, 0
        %v2729 = vsel %vm2111, %v2716, 0
        %v2732 = vsel %vm2111, %v2717, 0
        %v2735 = vsel %vm2111, %v2718, 0
        %2737 = vmatprep.subr.mxu0 %v2082
        %2738 = vmatpush1.msra.mxu0 %v2081
        %2739 = vmatprep.subr.mxu0 %v2084
        %2740 = vmatpush1.msra.mxu0 %v2083
        %2741 = vmatprep.subr.mxu0 %v2086
        %2742 = vmatpush1.msra.mxu0 %v2085
        %2743 = vmatprep.subr.mxu0 %v2088
        %2744 = vmatpush1.msra.mxu0 %v2087
        %2745 = vmatprep.subr.mxu0 %v2090
        %2746 = vmatpush1.msra.mxu0 %v2089
        %2747 = vmatprep.subr.mxu0 %v2092
        %2748 = vmatpush1.msra.mxu0 %v2091
        %2749 = vmatprep.subr.mxu0 %v2094
        %2750 = vmatpush1.msra.mxu0 %v2093
        %2751 = vmatprep.subr.mxu0 %v2096
        %2752 = vmatpush1.msra.mxu0 %v2095
        %2753 = vmatprep.subr.mxu0 %v2098
        %2754 = vmatpush1.msra.mxu0 %v2097
        %2755 = vmatprep.subr.mxu0 %v2100
        %2756 = vmatpush1.msra.mxu0 %v2099
        %2757 = vmatprep.subr.mxu0 %v2102
        %2758 = vmatpush1.msra.mxu0 %v2101
        %2759 = vmatprep.subr.mxu0 %v2134
        %2760 = vmatpush1.msra.mxu0 %v2131
        %2761 = vmatprep.subr.mxu0 0.0
        %2762 = vmatpush1.msra.mxu0 0.0
        %2763 = vmatprep.subr.mxu0 0.0
        %2764 = vmatpush1.msra.mxu0 0.0
        %2765 = vmatprep.subr.mxu0 0.0
        %2766 = vmatpush1.msra.mxu0 0.0
        %2767 = vmatprep.subr.mxu0 0.0
        %2768 = vmatpush1.msra.mxu0 0.0
        %2769 = vmatprep.subr.mxu0 0.0
        %2770 = vmatpush1.msra.mxu0 0.0
        %2771 = vmatprep.subr.mxu0 0.0
        %2772 = vmatpush1.msra.mxu0 0.0
        %2773 = vmatprep.subr.mxu0 0.0
        %2774 = vmatpush1.msra.mxu0 0.0
        %2775 = vmatprep.subr.mxu0 0.0
        %2776 = vmatpush1.msra.mxu0 0.0
        %2777 = vmatprep.subr.mxu0 0.0
        %2778 = vmatpush1.msra.mxu0 0.0
        %2779 = vmatprep.subr.mxu0 0.0
        %2780 = vmatpush1.msra.mxu0 0.0
        %2781 = vmatprep.subr.mxu0 0.0
        %2782 = vmatpush1.msra.mxu0 0.0
        %2783 = vmatprep.subr.mxu0 0.0
        %2784 = vmatpush1.msra.mxu0 0.0
        %2785 = vmatprep.subr.mxu0 0.0
        %2786 = vmatpush1.msra.mxu0 0.0
        %2787 = vmatprep.subr.mxu0 0.0
        %2788 = vmatpush1.msra.mxu0 0.0
        %2789 = vmatprep.subr.mxu0 0.0
        %2790 = vmatpush1.msra.mxu0 0.0
        %2791 = vmatprep.subr.mxu0 0.0
        %2792 = vmatpush1.msra.mxu0 0.0
        %2793 = vmatprep.subr.mxu0 0.0
        %2794 = vmatpush1.msra.mxu0 0.0
        %2795 = vmatprep.subr.mxu0 0.0
        %2796 = vmatpush1.msra.mxu0 0.0
        %2797 = vmatprep.subr.mxu0 0.0
        %2798 = vmatpush1.msra.mxu0 0.0
        %2799 = vmatprep.subr.mxu0 0.0
        %2800 = vmatpush1.msra.mxu0 0.0
        %2801 = vmatprep.mubr.f32.mxu0 0.0
        %2802 = vmatmul.mubr.f32.gmra.mrb[0].mxu0 %v2720
        %v2803 = vpop.f32.mrb[0].mxu0
        %v2804 = vadd.f32 0.0, %v2803
        %v2805 = vpop.f32.mrb[0].mxu0
        %v2806 = vadd.f32 0.0, %v2805
        %2807 = vmatprep.mubr.f32.mxu0 0.0
        %2808 = vmatmul.mubr.f32.gmra.mrb[0].mxu0 %v2723
        %v2809 = vpop.f32.mrb[0].mxu0
        %v2810 = vadd.f32 0.0, %v2809
        %v2811 = vpop.f32.mrb[0].mxu0
        %v2812 = vadd.f32 0.0, %v2811
        %2813 = vmatprep.mubr.f32.mxu0 0.0
        %2814 = vmatmul.mubr.f32.gmra.mrb[0].mxu0 %v2726
        %v2815 = vpop.f32.mrb[0].mxu0
        %v2816 = vadd.f32 0.0, %v2815
        %v2817 = vpop.f32.mrb[0].mxu0
        %v2818 = vadd.f32 0.0, %v2817
        %2819 = vmatprep.mubr.f32.mxu0 0.0
        %2820 = vmatmul.mubr.f32.gmra.mrb[0].mxu0 %v2729
        %v2821 = vpop.f32.mrb[0].mxu0
        %v2822 = vadd.f32 0.0, %v2821
        %v2823 = vpop.f32.mrb[0].mxu0
        %v2824 = vadd.f32 0.0, %v2823
        %2825 = vmatprep.mubr.f32.mxu0 0.0
        %2826 = vmatmul.mubr.f32.gmra.mrb[0].mxu0 %v2732
        %v2827 = vpop.f32.mrb[0].mxu0
        %v2828 = vadd.f32 0.0, %v2827
        %v2829 = vpop.f32.mrb[0].mxu0
        %v2830 = vadd.f32 0.0, %v2829
        %2831 = vmatprep.mubr.f32.mxu0 0.0
        %2832 = vmatmul.mubr.f32.gmra.mrb[0].mxu0 %v2735
        %v2833 = vpop.f32.mrb[0].mxu0
        %v2834 = vadd.f32 0.0, %v2833
        %v2835 = vpop.f32.mrb[0].mxu0
        %v2836 = vadd.f32 0.0, %v2835
        %2837 = vdwg.mxu0
        %s2838 = scalar_lea.vmem %s3, 768
        %v2839 = vld [vmem:[%s2838] sm:$0xff]
        %v2840 = vld [vmem:[%s2838 + $0x8] sm:$0xff]
        %v2841 = vld [vmem:[%s2838 + $0x10] sm:$0xff]
        %v2842 = vld [vmem:[%s2838 + $0x18] sm:$0xff]
        %v2843 = vld [vmem:[%s2838 + $0x20] sm:$0xff]
        %v2844 = vld [vmem:[%s2838 + $0x28] sm:$0xff]
        %v2845 = vld [vmem:[%s2838 + $0x30] sm:$0xff]
        %v2846 = vld [vmem:[%s2838 + $0x38] sm:$0xff]
        %v2847 = vld [vmem:[%s2838 + $0x40] sm:$0xff]
        %v2848 = vld [vmem:[%s2838 + $0x48] sm:$0xff]
        %v2849 = vld [vmem:[%s2838 + $0x50] sm:$0xff]
        %v2850 = vld [vmem:[%s2838 + $0x58] sm:$0xff]
        %v2851 = vld [vmem:[%s2838 + $0x60] sm:$0xff]
        %v2852 = vld [vmem:[%s2838 + $0x68] sm:$0xff]
        %v2853 = vld [vmem:[%s2838 + $0x70] sm:$0xff]
        %v2854 = vld [vmem:[%s2838 + $0x78] sm:$0xff]
        %v2855 = vld [vmem:[%s2838 + $0x80] sm:$0xff]
        %v2856 = vld [vmem:[%s2838 + $0x88] sm:$0xff]
        %v2857 = vld [vmem:[%s2838 + $0x90] sm:$0xff]
        %v2858 = vld [vmem:[%s2838 + $0x98] sm:$0xff]
        %v2859 = vld [vmem:[%s2838 + $0xa0] sm:$0xff]
        %v2860 = vld [vmem:[%s2838 + $0xa8] sm:$0xff]
        %v2861 = vld [vmem:[%s2838 + $0xb0] sm:$0xff]
        %v2862 = vld [vmem:[%s2838 + $0xb8] sm:$0xff]
        %v2863 = vld [vmem:[%s2838 + $0xc0] sm:$0xff]
        %v2864 = vld [vmem:[%s2838 + $0xc8] sm:$0xff]
        %v2865 = vld [vmem:[%s2838 + $0xd0] sm:$0xff]
        %v2866 = vld [vmem:[%s2838 + $0xd8] sm:$0xff]
        %v2867 = vld [vmem:[%s2838 + $0xe0] sm:$0xff]
        %v2868 = vld [vmem:[%s2838 + $0xe8] sm:$0xff]
        %v2869 = vld [vmem:[%s2838 + $0xf0] sm:$0xff]
        %v2870 = vld [vmem:[%s2838 + $0xf8] sm:$0xff]
        %v2871 = vld [vmem:[%s2838 + $0x100] sm:$0xff]
        %v2872 = vld [vmem:[%s2838 + $0x108] sm:$0xff]
        %v2873 = vld [vmem:[%s2838 + $0x110] sm:$0xff]
        %v2874 = vld [vmem:[%s2838 + $0x118] sm:$0xff]
        %v2875 = vld [vmem:[%s2838 + $0x120] sm:$0xff]
        %v2876 = vld [vmem:[%s2838 + $0x128] sm:$0xff]
        %v2877 = vld [vmem:[%s2838 + $0x130] sm:$0xff]
        %v2878 = vld [vmem:[%s2838 + $0x138] sm:$0xff]
        %v2879 = vld [vmem:[%s2838 + $0x140] sm:$0xff]
        %v2880 = vld [vmem:[%s2838 + $0x148] sm:$0xff]
        %v2881 = vld [vmem:[%s2838 + $0x150] sm:$0xff]
        %v2882 = vld [vmem:[%s2838 + $0x158] sm:$0xff]
        %v2883 = vld [vmem:[%s2838 + $0x160] sm:$0xff]
        %v2884 = vld [vmem:[%s2838 + $0x168] sm:$0xff]
        %v2885 = vld [vmem:[%s2838 + $0x170] sm:$0xf]
        %v2886 = vld [vmem:[%s2838 + $0x178] sm:$0xf]
        %v2888 = vsel %vm2460, %v2806, 0
        %v2891 = vsel %vm2460, %v2812, 0
        %v2894 = vsel %vm2460, %v2818, 0
        %v2897 = vsel %vm2460, %v2824, 0
        %v2900 = vsel %vm2460, %v2830, 0
        %v2903 = vsel %vm2460, %v2836, 0
        %v2906 = vsel %vm2479, %v2885, 0
        %v2909 = vsel %vm2479, %v2886, 0
        %2911 = vmatprep.subr.mxu0 %v2840
        %2912 = vmatpush1.msra.mxu0 %v2839
        %2913 = vmatprep.subr.mxu0 %v2842
        %2914 = vmatpush1.msra.mxu0 %v2841
        %2915 = vmatprep.subr.mxu0 %v2844
        %2916 = vmatpush1.msra.mxu0 %v2843
        %2917 = vmatprep.subr.mxu0 %v2846
        %2918 = vmatpush1.msra.mxu0 %v2845
        %2919 = vmatprep.subr.mxu0 %v2848
        %2920 = vmatpush1.msra.mxu0 %v2847
        %2921 = vmatprep.subr.mxu0 %v2850
        %2922 = vmatpush1.msra.mxu0 %v2849
        %2923 = vmatprep.subr.mxu0 %v2852
        %2924 = vmatpush1.msra.mxu0 %v2851
        %2925 = vmatprep.subr.mxu0 %v2854
        %2926 = vmatpush1.msra.mxu0 %v2853
        %2927 = vmatprep.subr.mxu0 %v2856
        %2928 = vmatpush1.msra.mxu0 %v2855
        %2929 = vmatprep.subr.mxu0 %v2858
        %2930 = vmatpush1.msra.mxu0 %v2857
        %2931 = vmatprep.subr.mxu0 %v2860
        %2932 = vmatpush1.msra.mxu0 %v2859
        %2933 = vmatprep.subr.mxu0 %v2862
        %2934 = vmatpush1.msra.mxu0 %v2861
        %2935 = vmatprep.subr.mxu0 %v2864
        %2936 = vmatpush1.msra.mxu0 %v2863
        %2937 = vmatprep.subr.mxu0 %v2866
        %2938 = vmatpush1.msra.mxu0 %v2865
        %2939 = vmatprep.subr.mxu0 %v2868
        %2940 = vmatpush1.msra.mxu0 %v2867
        %2941 = vmatprep.subr.mxu0 %v2870
        %2942 = vmatpush1.msra.mxu0 %v2869
        %2943 = vmatprep.subr.mxu0 %v2872
        %2944 = vmatpush1.msra.mxu0 %v2871
        %2945 = vmatprep.subr.mxu0 %v2874
        %2946 = vmatpush1.msra.mxu0 %v2873
        %2947 = vmatprep.subr.mxu0 %v2876
        %2948 = vmatpush1.msra.mxu0 %v2875
        %2949 = vmatprep.subr.mxu0 %v2878
        %2950 = vmatpush1.msra.mxu0 %v2877
        %2951 = vmatprep.subr.mxu0 %v2880
        %2952 = vmatpush1.msra.mxu0 %v2879
        %2953 = vmatprep.subr.mxu0 %v2882
        %2954 = vmatpush1.msra.mxu0 %v2881
        %2955 = vmatprep.subr.mxu0 %v2884
        %2956 = vmatpush1.msra.mxu0 %v2883
        %2957 = vmatprep.subr.mxu0 %v2909
        %2958 = vmatpush1.msra.mxu0 %v2906
        %2959 = vmatprep.subr.mxu0 0.0
        %2960 = vmatpush1.msra.mxu0 0.0
        %2961 = vmatprep.subr.mxu0 0.0
        %2962 = vmatpush1.msra.mxu0 0.0
        %2963 = vmatprep.subr.mxu0 0.0
        %2964 = vmatpush1.msra.mxu0 0.0
        %2965 = vmatprep.subr.mxu0 0.0
        %2966 = vmatpush1.msra.mxu0 0.0
        %2967 = vmatprep.subr.mxu0 0.0
        %2968 = vmatpush1.msra.mxu0 0.0
        %2969 = vmatprep.subr.mxu0 0.0
        %2970 = vmatpush1.msra.mxu0 0.0
        %2971 = vmatprep.subr.mxu0 0.0
        %2972 = vmatpush1.msra.mxu0 0.0
        %2973 = vmatprep.subr.mxu0 0.0
        %2974 = vmatpush1.msra.mxu0 0.0
        %2975 = vmatprep.mubr.f32.mxu0 %v2888
        %2976 = vmatmul.mubr.f32.gmra.mrb[0].mxu0 %v2804
        %v2977 = vpop.f32.mrb[0].mxu0
        %v2978 = vadd.f32 0.0, %v2977
        %v2979 = vpop.f32.mrb[0].mxu0
        %v2980 = vadd.f32 0.0, %v2979
        %2981 = vmatprep.mubr.f32.mxu0 %v2891
        %2982 = vmatmul.mubr.f32.gmra.mrb[0].mxu0 %v2810
        %v2983 = vpop.f32.mrb[0].mxu0
        %v2984 = vadd.f32 0.0, %v2983
        %v2985 = vpop.f32.mrb[0].mxu0
        %v2986 = vadd.f32 0.0, %v2985
        %2987 = vmatprep.mubr.f32.mxu0 %v2894
        %2988 = vmatmul.mubr.f32.gmra.mrb[0].mxu0 %v2816
        %v2989 = vpop.f32.mrb[0].mxu0
        %v2990 = vadd.f32 0.0, %v2989
        %v2991 = vpop.f32.mrb[0].mxu0
        %v2992 = vadd.f32 0.0, %v2991
        %2993 = vmatprep.mubr.f32.mxu0 %v2897
        %2994 = vmatmul.mubr.f32.gmra.mrb[0].mxu0 %v2822
        %v2995 = vpop.f32.mrb[0].mxu0
        %v2996 = vadd.f32 0.0, %v2995
        %v2997 = vpop.f32.mrb[0].mxu0
        %v2998 = vadd.f32 0.0, %v2997
        %2999 = vmatprep.mubr.f32.mxu0 %v2900
        %3000 = vmatmul.mubr.f32.gmra.mrb[0].mxu0 %v2828
        %v3001 = vpop.f32.mrb[0].mxu0
        %v3002 = vadd.f32 0.0, %v3001
        %v3003 = vpop.f32.mrb[0].mxu0
        %v3004 = vadd.f32 0.0, %v3003
        %3005 = vmatprep.mubr.f32.mxu0 %v2903
        %3006 = vmatmul.mubr.f32.gmra.mrb[0].mxu0 %v2834
        %v3007 = vpop.f32.mrb[0].mxu0
        %v3008 = vadd.f32 0.0, %v3007
        %v3009 = vpop.f32.mrb[0].mxu0
        %v3010 = vadd.f32 0.0, %v3009
        %3011 = vdwg.mxu0
        %v3012 = vadd.f32 %v2678, %v2978
        %v3013 = vadd.f32 %v2680, %v2980
        %v3014 = vadd.f32 %v2684, %v2984
        %v3015 = vadd.f32 %v2686, %v2986
        %v3016 = vadd.f32 %v2690, %v2990
        %v3017 = vadd.f32 %v2692, %v2992
        %v3018 = vadd.f32 %v2696, %v2996
        %v3019 = vadd.f32 %v2698, %v2998
        %v3020 = vadd.f32 %v2702, %v3002
        %v3021 = vadd.f32 %v2704, %v3004
        %v3022 = vadd.f32 %v2708, %v3008
        %v3023 = vadd.f32 %v2710, %v3010
        %v3024 = vld [vmem:[%s7] sm:$0x3]
        %v3026 = vlaneseq
        %v3027 = vshrl.u32 %v3026, 7
        %v3028 = vsub.s32 0, %v3027
        %v3029 = vrot.slane %v3024, %v3028
        %v3030 = vlaneseq
        %v3031 = vshrl.u32 %v3030, 7
        %v3032 = vsub.s32 1, %v3031
        %v3033 = vrot.slane %v3024, %v3032
        %v3036 = vadd.f32 %v3012, %v3029
        %v3037 = vadd.f32 %v3013, %v3033
        %v3038 = vadd.f32 %v3014, %v3029
        %v3039 = vadd.f32 %v3015, %v3033
        %v3040 = vadd.f32 %v3016, %v3029
        %v3041 = vadd.f32 %v3017, %v3033
        %v3042 = vadd.f32 %v3018, %v3029
        %v3043 = vadd.f32 %v3019, %v3033
        %v3044 = vadd.f32 %v3020, %v3029
        %v3045 = vadd.f32 %v3021, %v3033
        %v3046 = vadd.f32 %v3022, %v3029
        %v3047 = vadd.f32 %v3023, %v3033
        %vm3048 = vcmp.ge.f32.partialorder %v3036, 0.0
        %vm3049 = vcmp.ge.f32.partialorder %v3037, 0.0
        %vm3050 = vcmp.ge.f32.partialorder %v3038, 0.0
        %vm3051 = vcmp.ge.f32.partialorder %v3039, 0.0
        %vm3052 = vcmp.ge.f32.partialorder %v3040, 0.0
        %vm3053 = vcmp.ge.f32.partialorder %v3041, 0.0
        %vm3054 = vcmp.ge.f32.partialorder %v3042, 0.0
        %vm3055 = vcmp.ge.f32.partialorder %v3043, 0.0
        %vm3056 = vcmp.ge.f32.partialorder %v3044, 0.0
        %vm3057 = vcmp.ge.f32.partialorder %v3045, 0.0
        %vm3058 = vcmp.ge.f32.partialorder %v3046, 0.0
        %vm3059 = vcmp.ge.f32.partialorder %v3047, 0.0
        %v3060 = vmul.f32 %v3036, 0.2
        %v3061 = vmul.f32 %v3037, 0.2
        %v3062 = vmul.f32 %v3038, 0.2
        %v3063 = vmul.f32 %v3039, 0.2
        %v3064 = vmul.f32 %v3040, 0.2
        %v3065 = vmul.f32 %v3041, 0.2
        %v3066 = vmul.f32 %v3042, 0.2
        %v3067 = vmul.f32 %v3043, 0.2
        %v3068 = vmul.f32 %v3044, 0.2
        %v3069 = vmul.f32 %v3045, 0.2
        %v3070 = vmul.f32 %v3046, 0.2
        %v3071 = vmul.f32 %v3047, 0.2
        %v3072 = vsel %vm3048, %v3036, %v3060
        %v3073 = vsel %vm3049, %v3037, %v3061
        %v3074 = vsel %vm3050, %v3038, %v3062
        %v3075 = vsel %vm3051, %v3039, %v3063
        %v3076 = vsel %vm3052, %v3040, %v3064
        %v3077 = vsel %vm3053, %v3041, %v3065
        %v3078 = vsel %vm3054, %v3042, %v3066
        %v3079 = vsel %vm3055, %v3043, %v3067
        %v3080 = vsel %vm3056, %v3044, %v3068
        %v3081 = vsel %vm3057, %v3045, %v3069
        %v3082 = vsel %vm3058, %v3046, %v3070
        %v3083 = vsel %vm3059, %v3047, %v3071
        %v3084 = vld [vmem:[%s4] sm:$0xff]
        %v3085 = vld [vmem:[%s4 + $0x8] sm:$0xff]
        %v3086 = vld [vmem:[%s4 + $0x10] sm:$0x3f]
        %vm3087 = vcmask 375808
        %v3089 = vsel %vm3087, %v3084, 0
        %v3092 = vsel %vm3087, %v3085, 0
        %v3095 = vsel %vm3087, %v3086, 0
        %v3098 = vsel %vm1581, %v3082, 0
        %v3101 = vsel %vm1581, %v3083, 0
        %3103 = vmatprep.subr.mxu0 %v3073
        %3104 = vmatpush1.msra.mxu0 %v3072
        %3105 = vmatprep.subr.mxu0 %v3075
        %3106 = vmatpush1.msra.mxu0 %v3074
        %3107 = vmatprep.subr.mxu0 %v3077
        %3108 = vmatpush1.msra.mxu0 %v3076
        %3109 = vmatprep.subr.mxu0 %v3079
        %3110 = vmatpush1.msra.mxu0 %v3078
        %3111 = vmatprep.subr.mxu0 %v3081
        %3112 = vmatpush1.msra.mxu0 %v3080
        %3113 = vmatprep.subr.mxu0 %v3101
        %3114 = vmatpush1.msra.mxu0 %v3098
        %3115 = vmatprep.subr.mxu0 0.0
        %3116 = vmatpush1.msra.mxu0 0.0
        %3117 = vmatprep.subr.mxu0 0.0
        %3118 = vmatpush1.msra.mxu0 0.0
        %3119 = vmatprep.subr.mxu0 0.0
        %3120 = vmatpush1.msra.mxu0 0.0
        %3121 = vmatprep.subr.mxu0 0.0
        %3122 = vmatpush1.msra.mxu0 0.0
        %3123 = vmatprep.subr.mxu0 0.0
        %3124 = vmatpush1.msra.mxu0 0.0
        %3125 = vmatprep.subr.mxu0 0.0
        %3126 = vmatpush1.msra.mxu0 0.0
        %3127 = vmatprep.subr.mxu0 0.0
        %3128 = vmatpush1.msra.mxu0 0.0
        %3129 = vmatprep.subr.mxu0 0.0
        %3130 = vmatpush1.msra.mxu0 0.0
        %3131 = vmatprep.subr.mxu0 0.0
        %3132 = vmatpush1.msra.mxu0 0.0
        %3133 = vmatprep.subr.mxu0 0.0
        %3134 = vmatpush1.msra.mxu0 0.0
        %3135 = vmatprep.subr.mxu0 0.0
        %3136 = vmatpush1.msra.mxu0 0.0
        %3137 = vmatprep.subr.mxu0 0.0
        %3138 = vmatpush1.msra.mxu0 0.0
        %3139 = vmatprep.subr.mxu0 0.0
        %3140 = vmatpush1.msra.mxu0 0.0
        %3141 = vmatprep.subr.mxu0 0.0
        %3142 = vmatpush1.msra.mxu0 0.0
        %3143 = vmatprep.subr.mxu0 0.0
        %3144 = vmatpush1.msra.mxu0 0.0
        %3145 = vmatprep.subr.mxu0 0.0
        %3146 = vmatpush1.msra.mxu0 0.0
        %3147 = vmatprep.subr.mxu0 0.0
        %3148 = vmatpush1.msra.mxu0 0.0
        %3149 = vmatprep.subr.mxu0 0.0
        %3150 = vmatpush1.msra.mxu0 0.0
        %3151 = vmatprep.subr.mxu0 0.0
        %3152 = vmatpush1.msra.mxu0 0.0
        %3153 = vmatprep.subr.mxu0 0.0
        %3154 = vmatpush1.msra.mxu0 0.0
        %3155 = vmatprep.subr.mxu0 0.0
        %3156 = vmatpush1.msra.mxu0 0.0
        %3157 = vmatprep.subr.mxu0 0.0
        %3158 = vmatpush1.msra.mxu0 0.0
        %3159 = vmatprep.subr.mxu0 0.0
        %3160 = vmatpush1.msra.mxu0 0.0
        %3161 = vmatprep.subr.mxu0 0.0
        %3162 = vmatpush1.msra.mxu0 0.0
        %3163 = vmatprep.subr.mxu0 0.0
        %3164 = vmatpush1.msra.mxu0 0.0
        %3165 = vmatprep.subr.mxu0 0.0
        %3166 = vmatpush1.msra.mxu0 0.0
        %3167 = vmatprep.mubr.f32.mxu0 0.0
        %3168 = vmatmul.mubr.f32.gmra.mrb[0].mxu0 %v3089
        %v3169 = vpop.f32.mrb[0].mxu0
        %v3170 = vadd.f32 0.0, %v3169
        %v3171 = vpop.f32.mrb[0].mxu0
        %v3172 = vadd.f32 0.0, %v3171
        %3173 = vmatprep.mubr.f32.mxu0 0.0
        %3174 = vmatmul.mubr.f32.gmra.mrb[0].mxu0 %v3092
        %v3175 = vpop.f32.mrb[0].mxu0
        %v3176 = vadd.f32 0.0, %v3175
        %v3177 = vpop.f32.mrb[0].mxu0
        %v3178 = vadd.f32 0.0, %v3177
        %3179 = vmatprep.mubr.f32.mxu0 0.0
        %3180 = vmatmul.mubr.f32.gmra.mrb[0].mxu0 %v3095
        %v3181 = vpop.f32.mrb[0].mxu0
        %v3182 = vadd.f32 0.0, %v3181
        %v3183 = vpop.f32.mrb[0].mxu0
        %v3184 = vadd.f32 0.0, %v3183
        %3185 = vdwg.mxu0
        %v3186 = vld [vmem:[%s5] sm:$0xff]
        %v3187 = vld [vmem:[%s5 + $0x8] sm:$0xff]
        %v3188 = vld [vmem:[%s5 + $0x10] sm:$0xff]
        %v3189 = vld [vmem:[%s5 + $0x18] sm:$0xff]
        %v3190 = vld [vmem:[%s5 + $0x20] sm:$0xff]
        %v3191 = vld [vmem:[%s5 + $0x28] sm:$0xff]
        %v3192 = vld [vmem:[%s5 + $0x30] sm:$0xff]
        %v3193 = vld [vmem:[%s5 + $0x38] sm:$0xff]
        %v3194 = vld [vmem:[%s5 + $0x40] sm:$0xff]
        %v3195 = vld [vmem:[%s5 + $0x48] sm:$0xff]
        %v3196 = vld [vmem:[%s5 + $0x50] sm:$0xff]
        %v3197 = vld [vmem:[%s5 + $0x58] sm:$0xff]
        %v3198 = vld [vmem:[%s5 + $0x60] sm:$0xff]
        %v3199 = vld [vmem:[%s5 + $0x68] sm:$0xff]
        %v3200 = vld [vmem:[%s5 + $0x70] sm:$0xff]
        %v3201 = vld [vmem:[%s5 + $0x78] sm:$0xff]
        %v3202 = vld [vmem:[%s5 + $0x80] sm:$0xff]
        %v3203 = vld [vmem:[%s5 + $0x88] sm:$0xff]
        %v3204 = vld [vmem:[%s5 + $0x90] sm:$0xff]
        %v3205 = vld [vmem:[%s5 + $0x98] sm:$0xff]
        %v3206 = vld [vmem:[%s5 + $0xa0] sm:$0xff]
        %v3207 = vld [vmem:[%s5 + $0xa8] sm:$0xff]
        %v3208 = vld [vmem:[%s5 + $0xb0] sm:$0xff]
        %v3209 = vld [vmem:[%s5 + $0xb8] sm:$0xff]
        %v3210 = vld [vmem:[%s5 + $0xc0] sm:$0xff]
        %v3211 = vld [vmem:[%s5 + $0xc8] sm:$0xff]
        %v3212 = vld [vmem:[%s5 + $0xd0] sm:$0xff]
        %v3213 = vld [vmem:[%s5 + $0xd8] sm:$0xff]
        %v3214 = vld [vmem:[%s5 + $0xe0] sm:$0xff]
        %v3215 = vld [vmem:[%s5 + $0xe8] sm:$0xff]
        %v3216 = vld [vmem:[%s5 + $0xf0] sm:$0xff]
        %v3217 = vld [vmem:[%s5 + $0xf8] sm:$0xff]
        %v3218 = vld [vmem:[%s5 + $0x100] sm:$0xff]
        %v3219 = vld [vmem:[%s5 + $0x108] sm:$0xff]
        %v3220 = vld [vmem:[%s5 + $0x110] sm:$0xff]
        %v3221 = vld [vmem:[%s5 + $0x118] sm:$0xff]
        %v3222 = vld [vmem:[%s5 + $0x120] sm:$0xff]
        %v3223 = vld [vmem:[%s5 + $0x128] sm:$0xff]
        %v3224 = vld [vmem:[%s5 + $0x130] sm:$0xff]
        %v3225 = vld [vmem:[%s5 + $0x138] sm:$0xff]
        %v3226 = vld [vmem:[%s5 + $0x140] sm:$0xff]
        %v3227 = vld [vmem:[%s5 + $0x148] sm:$0xff]
        %v3228 = vld [vmem:[%s5 + $0x150] sm:$0xff]
        %v3229 = vld [vmem:[%s5 + $0x158] sm:$0xff]
        %v3230 = vld [vmem:[%s5 + $0x160] sm:$0xff]
        %v3231 = vld [vmem:[%s5 + $0x168] sm:$0xff]
        %s3232 = scalar_lea.vmem %s4, 24
        %v3233 = vld [vmem:[%s3232] sm:$0xff]
        %v3234 = vld [vmem:[%s3232 + $0x8] sm:$0xff]
        %v3235 = vld [vmem:[%s3232 + $0x10] sm:$0x3f]
        %v3237 = vsel %vm3087, %v3233, 0
        %v3240 = vsel %vm3087, %v3234, 0
        %v3243 = vsel %vm3087, %v3235, 0
        %3245 = vmatprep.subr.mxu0 %v3073
        %3246 = vmatpush1.msra.mxu0 %v3072
        %3247 = vmatprep.subr.mxu0 %v3075
        %3248 = vmatpush1.msra.mxu0 %v3074
        %3249 = vmatprep.subr.mxu0 %v3077
        %3250 = vmatpush1.msra.mxu0 %v3076
        %3251 = vmatprep.subr.mxu0 %v3079
        %3252 = vmatpush1.msra.mxu0 %v3078
        %3253 = vmatprep.subr.mxu0 %v3081
        %3254 = vmatpush1.msra.mxu0 %v3080
        %3255 = vmatprep.subr.mxu0 %v3101
        %3256 = vmatpush1.msra.mxu0 %v3098
        %3257 = vmatprep.subr.mxu0 0.0
        %3258 = vmatpush1.msra.mxu0 0.0
        %3259 = vmatprep.subr.mxu0 0.0
        %3260 = vmatpush1.msra.mxu0 0.0
        %3261 = vmatprep.subr.mxu0 0.0
        %3262 = vmatpush1.msra.mxu0 0.0
        %3263 = vmatprep.subr.mxu0 0.0
        %3264 = vmatpush1.msra.mxu0 0.0
        %3265 = vmatprep.subr.mxu0 0.0
        %3266 = vmatpush1.msra.mxu0 0.0
        %3267 = vmatprep.subr.mxu0 0.0
        %3268 = vmatpush1.msra.mxu0 0.0
        %3269 = vmatprep.subr.mxu0 0.0
        %3270 = vmatpush1.msra.mxu0 0.0
        %3271 = vmatprep.subr.mxu0 0.0
        %3272 = vmatpush1.msra.mxu0 0.0
        %3273 = vmatprep.subr.mxu0 0.0
        %3274 = vmatpush1.msra.mxu0 0.0
        %3275 = vmatprep.subr.mxu0 0.0
        %3276 = vmatpush1.msra.mxu0 0.0
        %3277 = vmatprep.subr.mxu0 0.0
        %3278 = vmatpush1.msra.mxu0 0.0
        %3279 = vmatprep.subr.mxu0 0.0
        %3280 = vmatpush1.msra.mxu0 0.0
        %3281 = vmatprep.subr.mxu0 0.0
        %3282 = vmatpush1.msra.mxu0 0.0
        %3283 = vmatprep.subr.mxu0 0.0
        %3284 = vmatpush1.msra.mxu0 0.0
        %3285 = vmatprep.subr.mxu0 0.0
        %3286 = vmatpush1.msra.mxu0 0.0
        %3287 = vmatprep.subr.mxu0 0.0
        %3288 = vmatpush1.msra.mxu0 0.0
        %3289 = vmatprep.subr.mxu0 0.0
        %3290 = vmatpush1.msra.mxu0 0.0
        %3291 = vmatprep.subr.mxu0 0.0
        %3292 = vmatpush1.msra.mxu0 0.0
        %3293 = vmatprep.subr.mxu0 0.0
        %3294 = vmatpush1.msra.mxu0 0.0
        %3295 = vmatprep.subr.mxu0 0.0
        %3296 = vmatpush1.msra.mxu0 0.0
        %3297 = vmatprep.subr.mxu0 0.0
        %3298 = vmatpush1.msra.mxu0 0.0
        %3299 = vmatprep.subr.mxu0 0.0
        %3300 = vmatpush1.msra.mxu0 0.0
        %3301 = vmatprep.subr.mxu0 0.0
        %3302 = vmatpush1.msra.mxu0 0.0
        %3303 = vmatprep.subr.mxu0 0.0
        %3304 = vmatpush1.msra.mxu0 0.0
        %3305 = vmatprep.subr.mxu0 0.0
        %3306 = vmatpush1.msra.mxu0 0.0
        %3307 = vmatprep.subr.mxu0 0.0
        %3308 = vmatpush1.msra.mxu0 0.0
        %3309 = vmatprep.mubr.f32.mxu0 0.0
        %3310 = vmatmul.mubr.f32.gmra.mrb[0].mxu0 %v3237
        %v3311 = vpop.f32.mrb[0].mxu0
        %v3312 = vadd.f32 0.0, %v3311
        %v3313 = vpop.f32.mrb[0].mxu0
        %v3314 = vadd.f32 0.0, %v3313
        %3315 = vmatprep.mubr.f32.mxu0 0.0
        %3316 = vmatmul.mubr.f32.gmra.mrb[0].mxu0 %v3240
        %v3317 = vpop.f32.mrb[0].mxu0
        %v3318 = vadd.f32 0.0, %v3317
        %v3319 = vpop.f32.mrb[0].mxu0
        %v3320 = vadd.f32 0.0, %v3319
        %3321 = vmatprep.mubr.f32.mxu0 0.0
        %3322 = vmatmul.mubr.f32.gmra.mrb[0].mxu0 %v3243
        %v3323 = vpop.f32.mrb[0].mxu0
        %v3324 = vadd.f32 0.0, %v3323
        %v3325 = vpop.f32.mrb[0].mxu0
        %v3326 = vadd.f32 0.0, %v3325
        %3327 = vdwg.mxu0
        %s3328 = scalar_lea.vmem %s5, 368
        %v3329 = vld [vmem:[%s3328] sm:$0xff]
        %v3330 = vld [vmem:[%s3328 + $0x8] sm:$0xff]
        %v3331 = vld [vmem:[%s3328 + $0x10] sm:$0xff]
        %v3332 = vld [vmem:[%s3328 + $0x18] sm:$0xff]
        %v3333 = vld [vmem:[%s3328 + $0x20] sm:$0xff]
        %v3334 = vld [vmem:[%s3328 + $0x28] sm:$0xff]
        %v3335 = vld [vmem:[%s3328 + $0x30] sm:$0xff]
        %v3336 = vld [vmem:[%s3328 + $0x38] sm:$0xff]
        %v3337 = vld [vmem:[%s3328 + $0x40] sm:$0xff]
        %v3338 = vld [vmem:[%s3328 + $0x48] sm:$0xff]
        %v3339 = vld [vmem:[%s3328 + $0x50] sm:$0xff]
        %v3340 = vld [vmem:[%s3328 + $0x58] sm:$0xff]
        %v3341 = vld [vmem:[%s3328 + $0x60] sm:$0xff]
        %v3342 = vld [vmem:[%s3328 + $0x68] sm:$0xff]
        %v3343 = vld [vmem:[%s3328 + $0x70] sm:$0xff]
        %v3344 = vld [vmem:[%s3328 + $0x78] sm:$0xff]
        %v3345 = vld [vmem:[%s3328 + $0x80] sm:$0xff]
        %v3346 = vld [vmem:[%s3328 + $0x88] sm:$0xff]
        %v3347 = vld [vmem:[%s3328 + $0x90] sm:$0xff]
        %v3348 = vld [vmem:[%s3328 + $0x98] sm:$0xff]
        %v3349 = vld [vmem:[%s3328 + $0xa0] sm:$0xff]
        %v3350 = vld [vmem:[%s3328 + $0xa8] sm:$0xff]
        %v3351 = vld [vmem:[%s3328 + $0xb0] sm:$0xff]
        %v3352 = vld [vmem:[%s3328 + $0xb8] sm:$0xff]
        %v3353 = vld [vmem:[%s3328 + $0xc0] sm:$0xff]
        %v3354 = vld [vmem:[%s3328 + $0xc8] sm:$0xff]
        %v3355 = vld [vmem:[%s3328 + $0xd0] sm:$0xff]
        %v3356 = vld [vmem:[%s3328 + $0xd8] sm:$0xff]
        %v3357 = vld [vmem:[%s3328 + $0xe0] sm:$0xff]
        %v3358 = vld [vmem:[%s3328 + $0xe8] sm:$0xff]
        %v3359 = vld [vmem:[%s3328 + $0xf0] sm:$0xff]
        %v3360 = vld [vmem:[%s3328 + $0xf8] sm:$0xff]
        %v3361 = vld [vmem:[%s3328 + $0x100] sm:$0xff]
        %v3362 = vld [vmem:[%s3328 + $0x108] sm:$0xff]
        %v3363 = vld [vmem:[%s3328 + $0x110] sm:$0xff]
        %v3364 = vld [vmem:[%s3328 + $0x118] sm:$0xff]
        %v3365 = vld [vmem:[%s3328 + $0x120] sm:$0xff]
        %v3366 = vld [vmem:[%s3328 + $0x128] sm:$0xff]
        %v3367 = vld [vmem:[%s3328 + $0x130] sm:$0xff]
        %v3368 = vld [vmem:[%s3328 + $0x138] sm:$0xff]
        %v3369 = vld [vmem:[%s3328 + $0x140] sm:$0xff]
        %v3370 = vld [vmem:[%s3328 + $0x148] sm:$0xff]
        %v3371 = vld [vmem:[%s3328 + $0x150] sm:$0xff]
        %v3372 = vld [vmem:[%s3328 + $0x158] sm:$0xff]
        %v3373 = vld [vmem:[%s3328 + $0x160] sm:$0xff]
        %v3374 = vld [vmem:[%s3328 + $0x168] sm:$0xff]
        %vm3375 = vcmask 457728
        %v3377 = vsel %vm3375, %v3314, 0
        %v3380 = vsel %vm3375, %v3320, 0
        %v3383 = vsel %vm3375, %v3326, 0
        %3385 = vmatprep.subr.mxu0 %v3330
        %3386 = vmatpush1.msra.mxu0 %v3329
        %3387 = vmatprep.subr.mxu0 %v3332
        %3388 = vmatpush1.msra.mxu0 %v3331
        %3389 = vmatprep.subr.mxu0 %v3334
        %3390 = vmatpush1.msra.mxu0 %v3333
        %3391 = vmatprep.subr.mxu0 %v3336
        %3392 = vmatpush1.msra.mxu0 %v3335
        %3393 = vmatprep.subr.mxu0 %v3338
        %3394 = vmatpush1.msra.mxu0 %v3337
        %3395 = vmatprep.subr.mxu0 %v3340
        %3396 = vmatpush1.msra.mxu0 %v3339
        %3397 = vmatprep.subr.mxu0 %v3342
        %3398 = vmatpush1.msra.mxu0 %v3341
        %3399 = vmatprep.subr.mxu0 %v3344
        %3400 = vmatpush1.msra.mxu0 %v3343
        %3401 = vmatprep.subr.mxu0 %v3346
        %3402 = vmatpush1.msra.mxu0 %v3345
        %3403 = vmatprep.subr.mxu0 %v3348
        %3404 = vmatpush1.msra.mxu0 %v3347
        %3405 = vmatprep.subr.mxu0 %v3350
        %3406 = vmatpush1.msra.mxu0 %v3349
        %3407 = vmatprep.subr.mxu0 %v3352
        %3408 = vmatpush1.msra.mxu0 %v3351
        %3409 = vmatprep.subr.mxu0 %v3354
        %3410 = vmatpush1.msra.mxu0 %v3353
        %3411 = vmatprep.subr.mxu0 %v3356
        %3412 = vmatpush1.msra.mxu0 %v3355
        %3413 = vmatprep.subr.mxu0 %v3358
        %3414 = vmatpush1.msra.mxu0 %v3357
        %3415 = vmatprep.subr.mxu0 %v3360
        %3416 = vmatpush1.msra.mxu0 %v3359
        %3417 = vmatprep.subr.mxu0 %v3362
        %3418 = vmatpush1.msra.mxu0 %v3361
        %3419 = vmatprep.subr.mxu0 %v3364
        %3420 = vmatpush1.msra.mxu0 %v3363
        %3421 = vmatprep.subr.mxu0 %v3366
        %3422 = vmatpush1.msra.mxu0 %v3365
        %3423 = vmatprep.subr.mxu0 %v3368
        %3424 = vmatpush1.msra.mxu0 %v3367
        %3425 = vmatprep.subr.mxu0 %v3370
        %3426 = vmatpush1.msra.mxu0 %v3369
        %3427 = vmatprep.subr.mxu0 %v3372
        %3428 = vmatpush1.msra.mxu0 %v3371
        %3429 = vmatprep.subr.mxu0 %v3374
        %3430 = vmatpush1.msra.mxu0 %v3373
        %3431 = vmatprep.subr.mxu0 0.0
        %3432 = vmatpush1.msra.mxu0 0.0
        %3433 = vmatprep.subr.mxu0 0.0
        %3434 = vmatpush1.msra.mxu0 0.0
        %3435 = vmatprep.subr.mxu0 0.0
        %3436 = vmatpush1.msra.mxu0 0.0
        %3437 = vmatprep.subr.mxu0 0.0
        %3438 = vmatpush1.msra.mxu0 0.0
        %3439 = vmatprep.subr.mxu0 0.0
        %3440 = vmatpush1.msra.mxu0 0.0
        %3441 = vmatprep.subr.mxu0 0.0
        %3442 = vmatpush1.msra.mxu0 0.0
        %3443 = vmatprep.subr.mxu0 0.0
        %3444 = vmatpush1.msra.mxu0 0.0
        %3445 = vmatprep.subr.mxu0 0.0
        %3446 = vmatpush1.msra.mxu0 0.0
        %3447 = vmatprep.subr.mxu0 0.0
        %3448 = vmatpush1.msra.mxu0 0.0
        %3449 = vmatprep.mubr.f32.mxu0 %v3377
        %3450 = vmatmul.mubr.f32.gmra.mrb[0].mxu0 %v3312
        %v3451 = vpop.f32.mrb[0].mxu0
        %v3452 = vadd.f32 0.0, %v3451
        %v3453 = vpop.f32.mrb[0].mxu0
        %v3454 = vadd.f32 0.0, %v3453
        %3455 = vmatprep.mubr.f32.mxu0 %v3380
        %3456 = vmatmul.mubr.f32.gmra.mrb[0].mxu0 %v3318
        %v3457 = vpop.f32.mrb[0].mxu0
        %v3458 = vadd.f32 0.0, %v3457
        %v3459 = vpop.f32.mrb[0].mxu0
        %v3460 = vadd.f32 0.0, %v3459
        %3461 = vmatprep.mubr.f32.mxu0 %v3383
        %3462 = vmatmul.mubr.f32.gmra.mrb[0].mxu0 %v3324
        %v3463 = vpop.f32.mrb[0].mxu0
        %v3464 = vadd.f32 0.0, %v3463
        %v3465 = vpop.f32.mrb[0].mxu0
        %v3466 = vadd.f32 0.0, %v3465
        %3467 = vdwg.mxu0
        %v3469 = vsel %vm3375, %v3172, 0
        %v3472 = vsel %vm3375, %v3178, 0
        %v3475 = vsel %vm3375, %v3184, 0
        %3477 = vmatprep.subr.mxu0 %v3187
        %3478 = vmatpush1.msra.mxu0 %v3186
        %3479 = vmatprep.subr.mxu0 %v3189
        %3480 = vmatpush1.msra.mxu0 %v3188
        %3481 = vmatprep.subr.mxu0 %v3191
        %3482 = vmatpush1.msra.mxu0 %v3190
        %3483 = vmatprep.subr.mxu0 %v3193
        %3484 = vmatpush1.msra.mxu0 %v3192
        %3485 = vmatprep.subr.mxu0 %v3195
        %3486 = vmatpush1.msra.mxu0 %v3194
        %3487 = vmatprep.subr.mxu0 %v3197
        %3488 = vmatpush1.msra.mxu0 %v3196
        %3489 = vmatprep.subr.mxu0 %v3199
        %3490 = vmatpush1.msra.mxu0 %v3198
        %3491 = vmatprep.subr.mxu0 %v3201
        %3492 = vmatpush1.msra.mxu0 %v3200
        %3493 = vmatprep.subr.mxu0 %v3203
        %3494 = vmatpush1.msra.mxu0 %v3202
        %3495 = vmatprep.subr.mxu0 %v3205
        %3496 = vmatpush1.msra.mxu0 %v3204
        %3497 = vmatprep.subr.mxu0 %v3207
        %3498 = vmatpush1.msra.mxu0 %v3206
        %3499 = vmatprep.subr.mxu0 %v3209
        %3500 = vmatpush1.msra.mxu0 %v3208
        %3501 = vmatprep.subr.mxu0 %v3211
        %3502 = vmatpush1.msra.mxu0 %v3210
        %3503 = vmatprep.subr.mxu0 %v3213
        %3504 = vmatpush1.msra.mxu0 %v3212
        %3505 = vmatprep.subr.mxu0 %v3215
        %3506 = vmatpush1.msra.mxu0 %v3214
        %3507 = vmatprep.subr.mxu0 %v3217
        %3508 = vmatpush1.msra.mxu0 %v3216
        %3509 = vmatprep.subr.mxu0 %v3219
        %3510 = vmatpush1.msra.mxu0 %v3218
        %3511 = vmatprep.subr.mxu0 %v3221
        %3512 = vmatpush1.msra.mxu0 %v3220
        %3513 = vmatprep.subr.mxu0 %v3223
        %3514 = vmatpush1.msra.mxu0 %v3222
        %3515 = vmatprep.subr.mxu0 %v3225
        %3516 = vmatpush1.msra.mxu0 %v3224
        %3517 = vmatprep.subr.mxu0 %v3227
        %3518 = vmatpush1.msra.mxu0 %v3226
        %3519 = vmatprep.subr.mxu0 %v3229
        %3520 = vmatpush1.msra.mxu0 %v3228
        %3521 = vmatprep.subr.mxu0 %v3231
        %3522 = vmatpush1.msra.mxu0 %v3230
        %3523 = vmatprep.subr.mxu0 0.0
        %3524 = vmatpush1.msra.mxu0 0.0
        %3525 = vmatprep.subr.mxu0 0.0
        %3526 = vmatpush1.msra.mxu0 0.0
        %3527 = vmatprep.subr.mxu0 0.0
        %3528 = vmatpush1.msra.mxu0 0.0
        %3529 = vmatprep.subr.mxu0 0.0
        %3530 = vmatpush1.msra.mxu0 0.0
        %3531 = vmatprep.subr.mxu0 0.0
        %3532 = vmatpush1.msra.mxu0 0.0
        %3533 = vmatprep.subr.mxu0 0.0
        %3534 = vmatpush1.msra.mxu0 0.0
        %3535 = vmatprep.subr.mxu0 0.0
        %3536 = vmatpush1.msra.mxu0 0.0
        %3537 = vmatprep.subr.mxu0 0.0
        %3538 = vmatpush1.msra.mxu0 0.0
        %3539 = vmatprep.subr.mxu0 0.0
        %3540 = vmatpush1.msra.mxu0 0.0
        %3541 = vmatprep.mubr.f32.mxu0 %v3469
        %3542 = vmatmul.mubr.f32.gmra.mrb[0].mxu0 %v3170
        %v3543 = vpop.f32.mrb[0].mxu0
        %v3544 = vadd.f32 %v3452, %v3543
        %v3545 = vpop.f32.mrb[0].mxu0
        %v3546 = vadd.f32 %v3454, %v3545
        %3547 = vmatprep.mubr.f32.mxu0 %v3472
        %3548 = vmatmul.mubr.f32.gmra.mrb[0].mxu0 %v3176
        %v3549 = vpop.f32.mrb[0].mxu0
        %v3550 = vadd.f32 %v3458, %v3549
        %v3551 = vpop.f32.mrb[0].mxu0
        %v3552 = vadd.f32 %v3460, %v3551
        %3553 = vmatprep.mubr.f32.mxu0 %v3475
        %3554 = vmatmul.mubr.f32.gmra.mrb[0].mxu0 %v3182
        %v3555 = vpop.f32.mrb[0].mxu0
        %v3556 = vadd.f32 %v3464, %v3555
        %v3557 = vpop.f32.mrb[0].mxu0
        %v3558 = vadd.f32 %v3466, %v3557
        %3559 = vdwg.mxu0
        %s3560 = scalar_lea.vmem %s4, 48
        %v3561 = vld [vmem:[%s3560] sm:$0xff]
        %v3562 = vld [vmem:[%s3560 + $0x8] sm:$0xff]
        %v3563 = vld [vmem:[%s3560 + $0x10] sm:$0x3f]
        %v3565 = vsel %vm3087, %v3561, 0
        %v3568 = vsel %vm3087, %v3562, 0
        %v3571 = vsel %vm3087, %v3563, 0
        %3573 = vmatprep.subr.mxu0 %v3073
        %3574 = vmatpush1.msra.mxu0 %v3072
        %3575 = vmatprep.subr.mxu0 %v3075
        %3576 = vmatpush1.msra.mxu0 %v3074
        %3577 = vmatprep.subr.mxu0 %v3077
        %3578 = vmatpush1.msra.mxu0 %v3076
        %3579 = vmatprep.subr.mxu0 %v3079
        %3580 = vmatpush1.msra.mxu0 %v3078
        %3581 = vmatprep.subr.mxu0 %v3081
        %3582 = vmatpush1.msra.mxu0 %v3080
        %3583 = vmatprep.subr.mxu0 %v3101
        %3584 = vmatpush1.msra.mxu0 %v3098
        %3585 = vmatprep.subr.mxu0 0.0
        %3586 = vmatpush1.msra.mxu0 0.0
        %3587 = vmatprep.subr.mxu0 0.0
        %3588 = vmatpush1.msra.mxu0 0.0
        %3589 = vmatprep.subr.mxu0 0.0
        %3590 = vmatpush1.msra.mxu0 0.0
        %3591 = vmatprep.subr.mxu0 0.0
        %3592 = vmatpush1.msra.mxu0 0.0
        %3593 = vmatprep.subr.mxu0 0.0
        %3594 = vmatpush1.msra.mxu0 0.0
        %3595 = vmatprep.subr.mxu0 0.0
        %3596 = vmatpush1.msra.mxu0 0.0
        %3597 = vmatprep.subr.mxu0 0.0
        %3598 = vmatpush1.msra.mxu0 0.0
        %3599 = vmatprep.subr.mxu0 0.0
        %3600 = vmatpush1.msra.mxu0 0.0
        %3601 = vmatprep.subr.mxu0 0.0
        %3602 = vmatpush1.msra.mxu0 0.0
        %3603 = vmatprep.subr.mxu0 0.0
        %3604 = vmatpush1.msra.mxu0 0.0
        %3605 = vmatprep.subr.mxu0 0.0
        %3606 = vmatpush1.msra.mxu0 0.0
        %3607 = vmatprep.subr.mxu0 0.0
        %3608 = vmatpush1.msra.mxu0 0.0
        %3609 = vmatprep.subr.mxu0 0.0
        %3610 = vmatpush1.msra.mxu0 0.0
        %3611 = vmatprep.subr.mxu0 0.0
        %3612 = vmatpush1.msra.mxu0 0.0
        %3613 = vmatprep.subr.mxu0 0.0
        %3614 = vmatpush1.msra.mxu0 0.0
        %3615 = vmatprep.subr.mxu0 0.0
        %3616 = vmatpush1.msra.mxu0 0.0
        %3617 = vmatprep.subr.mxu0 0.0
        %3618 = vmatpush1.msra.mxu0 0.0
        %3619 = vmatprep.subr.mxu0 0.0
        %3620 = vmatpush1.msra.mxu0 0.0
        %3621 = vmatprep.subr.mxu0 0.0
        %3622 = vmatpush1.msra.mxu0 0.0
        %3623 = vmatprep.subr.mxu0 0.0
        %3624 = vmatpush1.msra.mxu0 0.0
        %3625 = vmatprep.subr.mxu0 0.0
        %3626 = vmatpush1.msra.mxu0 0.0
        %3627 = vmatprep.subr.mxu0 0.0
        %3628 = vmatpush1.msra.mxu0 0.0
        %3629 = vmatprep.subr.mxu0 0.0
        %3630 = vmatpush1.msra.mxu0 0.0
        %3631 = vmatprep.subr.mxu0 0.0
        %3632 = vmatpush1.msra.mxu0 0.0
        %3633 = vmatprep.subr.mxu0 0.0
        %3634 = vmatpush1.msra.mxu0 0.0
        %3635 = vmatprep.subr.mxu0 0.0
        %3636 = vmatpush1.msra.mxu0 0.0
        %3637 = vmatprep.mubr.f32.mxu0 0.0
        %3638 = vmatmul.mubr.f32.gmra.mrb[0].mxu0 %v3565
        %v3639 = vpop.f32.mrb[0].mxu0
        %v3640 = vadd.f32 0.0, %v3639
        %v3641 = vpop.f32.mrb[0].mxu0
        %v3642 = vadd.f32 0.0, %v3641
        %3643 = vmatprep.mubr.f32.mxu0 0.0
        %3644 = vmatmul.mubr.f32.gmra.mrb[0].mxu0 %v3568
        %v3645 = vpop.f32.mrb[0].mxu0
        %v3646 = vadd.f32 0.0, %v3645
        %v3647 = vpop.f32.mrb[0].mxu0
        %v3648 = vadd.f32 0.0, %v3647
        %3649 = vmatprep.mubr.f32.mxu0 0.0
        %3650 = vmatmul.mubr.f32.gmra.mrb[0].mxu0 %v3571
        %v3651 = vpop.f32.mrb[0].mxu0
        %v3652 = vadd.f32 0.0, %v3651
        %v3653 = vpop.f32.mrb[0].mxu0
        %v3654 = vadd.f32 0.0, %v3653
        %3655 = vdwg.mxu0
        %s3656 = scalar_lea.vmem %s5, 736
        %v3657 = vld [vmem:[%s3656] sm:$0xff]
        %v3658 = vld [vmem:[%s3656 + $0x8] sm:$0xff]
        %v3659 = vld [vmem:[%s3656 + $0x10] sm:$0xff]
        %v3660 = vld [vmem:[%s3656 + $0x18] sm:$0xff]
        %v3661 = vld [vmem:[%s3656 + $0x20] sm:$0xff]
        %v3662 = vld [vmem:[%s3656 + $0x28] sm:$0xff]
        %v3663 = vld [vmem:[%s3656 + $0x30] sm:$0xff]
        %v3664 = vld [vmem:[%s3656 + $0x38] sm:$0xff]
        %v3665 = vld [vmem:[%s3656 + $0x40] sm:$0xff]
        %v3666 = vld [vmem:[%s3656 + $0x48] sm:$0xff]
        %v3667 = vld [vmem:[%s3656 + $0x50] sm:$0xff]
        %v3668 = vld [vmem:[%s3656 + $0x58] sm:$0xff]
        %v3669 = vld [vmem:[%s3656 + $0x60] sm:$0xff]
        %v3670 = vld [vmem:[%s3656 + $0x68] sm:$0xff]
        %v3671 = vld [vmem:[%s3656 + $0x70] sm:$0xff]
        %v3672 = vld [vmem:[%s3656 + $0x78] sm:$0xff]
        %v3673 = vld [vmem:[%s3656 + $0x80] sm:$0xff]
        %v3674 = vld [vmem:[%s3656 + $0x88] sm:$0xff]
        %v3675 = vld [vmem:[%s3656 + $0x90] sm:$0xff]
        %v3676 = vld [vmem:[%s3656 + $0x98] sm:$0xff]
        %v3677 = vld [vmem:[%s3656 + $0xa0] sm:$0xff]
        %v3678 = vld [vmem:[%s3656 + $0xa8] sm:$0xff]
        %v3679 = vld [vmem:[%s3656 + $0xb0] sm:$0xff]
        %v3680 = vld [vmem:[%s3656 + $0xb8] sm:$0xff]
        %v3681 = vld [vmem:[%s3656 + $0xc0] sm:$0xff]
        %v3682 = vld [vmem:[%s3656 + $0xc8] sm:$0xff]
        %v3683 = vld [vmem:[%s3656 + $0xd0] sm:$0xff]
        %v3684 = vld [vmem:[%s3656 + $0xd8] sm:$0xff]
        %v3685 = vld [vmem:[%s3656 + $0xe0] sm:$0xff]
        %v3686 = vld [vmem:[%s3656 + $0xe8] sm:$0xff]
        %v3687 = vld [vmem:[%s3656 + $0xf0] sm:$0xff]
        %v3688 = vld [vmem:[%s3656 + $0xf8] sm:$0xff]
        %v3689 = vld [vmem:[%s3656 + $0x100] sm:$0xff]
        %v3690 = vld [vmem:[%s3656 + $0x108] sm:$0xff]
        %v3691 = vld [vmem:[%s3656 + $0x110] sm:$0xff]
        %v3692 = vld [vmem:[%s3656 + $0x118] sm:$0xff]
        %v3693 = vld [vmem:[%s3656 + $0x120] sm:$0xff]
        %v3694 = vld [vmem:[%s3656 + $0x128] sm:$0xff]
        %v3695 = vld [vmem:[%s3656 + $0x130] sm:$0xff]
        %v3696 = vld [vmem:[%s3656 + $0x138] sm:$0xff]
        %v3697 = vld [vmem:[%s3656 + $0x140] sm:$0xff]
        %v3698 = vld [vmem:[%s3656 + $0x148] sm:$0xff]
        %v3699 = vld [vmem:[%s3656 + $0x150] sm:$0xff]
        %v3700 = vld [vmem:[%s3656 + $0x158] sm:$0xff]
        %v3701 = vld [vmem:[%s3656 + $0x160] sm:$0xff]
        %v3702 = vld [vmem:[%s3656 + $0x168] sm:$0xff]
        %v3704 = vsel %vm3375, %v3642, 0
        %v3707 = vsel %vm3375, %v3648, 0
        %v3710 = vsel %vm3375, %v3654, 0
        %3712 = vmatprep.subr.mxu0 %v3658
        %3713 = vmatpush1.msra.mxu0 %v3657
        %3714 = vmatprep.subr.mxu0 %v3660
        %3715 = vmatpush1.msra.mxu0 %v3659
        %3716 = vmatprep.subr.mxu0 %v3662
        %3717 = vmatpush1.msra.mxu0 %v3661
        %3718 = vmatprep.subr.mxu0 %v3664
        %3719 = vmatpush1.msra.mxu0 %v3663
        %3720 = vmatprep.subr.mxu0 %v3666
        %3721 = vmatpush1.msra.mxu0 %v3665
        %3722 = vmatprep.subr.mxu0 %v3668
        %3723 = vmatpush1.msra.mxu0 %v3667
        %3724 = vmatprep.subr.mxu0 %v3670
        %3725 = vmatpush1.msra.mxu0 %v3669
        %3726 = vmatprep.subr.mxu0 %v3672
        %3727 = vmatpush1.msra.mxu0 %v3671
        %3728 = vmatprep.subr.mxu0 %v3674
        %3729 = vmatpush1.msra.mxu0 %v3673
        %3730 = vmatprep.subr.mxu0 %v3676
        %3731 = vmatpush1.msra.mxu0 %v3675
        %3732 = vmatprep.subr.mxu0 %v3678
        %3733 = vmatpush1.msra.mxu0 %v3677
        %3734 = vmatprep.subr.mxu0 %v3680
        %3735 = vmatpush1.msra.mxu0 %v3679
        %3736 = vmatprep.subr.mxu0 %v3682
        %3737 = vmatpush1.msra.mxu0 %v3681
        %3738 = vmatprep.subr.mxu0 %v3684
        %3739 = vmatpush1.msra.mxu0 %v3683
        %3740 = vmatprep.subr.mxu0 %v3686
        %3741 = vmatpush1.msra.mxu0 %v3685
        %3742 = vmatprep.subr.mxu0 %v3688
        %3743 = vmatpush1.msra.mxu0 %v3687
        %3744 = vmatprep.subr.mxu0 %v3690
        %3745 = vmatpush1.msra.mxu0 %v3689
        %3746 = vmatprep.subr.mxu0 %v3692
        %3747 = vmatpush1.msra.mxu0 %v3691
        %3748 = vmatprep.subr.mxu0 %v3694
        %3749 = vmatpush1.msra.mxu0 %v3693
        %3750 = vmatprep.subr.mxu0 %v3696
        %3751 = vmatpush1.msra.mxu0 %v3695
        %3752 = vmatprep.subr.mxu0 %v3698
        %3753 = vmatpush1.msra.mxu0 %v3697
        %3754 = vmatprep.subr.mxu0 %v3700
        %3755 = vmatpush1.msra.mxu0 %v3699
        %3756 = vmatprep.subr.mxu0 %v3702
        %3757 = vmatpush1.msra.mxu0 %v3701
        %3758 = vmatprep.subr.mxu0 0.0
        %3759 = vmatpush1.msra.mxu0 0.0
        %3760 = vmatprep.subr.mxu0 0.0
        %3761 = vmatpush1.msra.mxu0 0.0
        %3762 = vmatprep.subr.mxu0 0.0
        %3763 = vmatpush1.msra.mxu0 0.0
        %3764 = vmatprep.subr.mxu0 0.0
        %3765 = vmatpush1.msra.mxu0 0.0
        %3766 = vmatprep.subr.mxu0 0.0
        %3767 = vmatpush1.msra.mxu0 0.0
        %3768 = vmatprep.subr.mxu0 0.0
        %3769 = vmatpush1.msra.mxu0 0.0
        %3770 = vmatprep.subr.mxu0 0.0
        %3771 = vmatpush1.msra.mxu0 0.0
        %3772 = vmatprep.subr.mxu0 0.0
        %3773 = vmatpush1.msra.mxu0 0.0
        %3774 = vmatprep.subr.mxu0 0.0
        %3775 = vmatpush1.msra.mxu0 0.0
        %3776 = vmatprep.mubr.f32.mxu0 %v3704
        %3777 = vmatmul.mubr.f32.gmra.mrb[0].mxu0 %v3640
        %v3778 = vpop.f32.mrb[0].mxu0
        %v3779 = vadd.f32 0.0, %v3778
        %v3780 = vpop.f32.mrb[0].mxu0
        %v3781 = vadd.f32 0.0, %v3780
        %3782 = vmatprep.mubr.f32.mxu0 %v3707
        %3783 = vmatmul.mubr.f32.gmra.mrb[0].mxu0 %v3646
        %v3784 = vpop.f32.mrb[0].mxu0
        %v3785 = vadd.f32 0.0, %v3784
        %v3786 = vpop.f32.mrb[0].mxu0
        %v3787 = vadd.f32 0.0, %v3786
        %3788 = vmatprep.mubr.f32.mxu0 %v3710
        %3789 = vmatmul.mubr.f32.gmra.mrb[0].mxu0 %v3652
        %v3790 = vpop.f32.mrb[0].mxu0
        %v3791 = vadd.f32 0.0, %v3790
        %v3792 = vpop.f32.mrb[0].mxu0
        %v3793 = vadd.f32 0.0, %v3792
        %3794 = vdwg.mxu0
        %v3795 = vadd.f32 %v3544, %v3779
        %v3796 = vadd.f32 %v3546, %v3781
        %v3797 = vadd.f32 %v3550, %v3785
        %v3798 = vadd.f32 %v3552, %v3787
        %v3799 = vadd.f32 %v3556, %v3791
        %v3800 = vadd.f32 %v3558, %v3793
        %v3801 = vld [vmem:[%s8] sm:$0x3]
        %v3803 = vlaneseq
        %v3804 = vshrl.u32 %v3803, 7
        %v3805 = vsub.s32 0, %v3804
        %v3806 = vrot.slane %v3801, %v3805
        %v3807 = vlaneseq
        %v3808 = vshrl.u32 %v3807, 7
        %v3809 = vsub.s32 1, %v3808
        %v3810 = vrot.slane %v3801, %v3809
        %v3813 = vadd.f32 %v3795, %v3806
        %v3814 = vadd.f32 %v3796, %v3810
        %v3815 = vadd.f32 %v3797, %v3806
        %v3816 = vadd.f32 %v3798, %v3810
        %v3817 = vadd.f32 %v3799, %v3806
        %v3818 = vadd.f32 %v3800, %v3810
        %vm3819 = vcmp.ge.f32.partialorder %v3813, 0.0
        %vm3820 = vcmp.ge.f32.partialorder %v3814, 0.0
        %vm3821 = vcmp.ge.f32.partialorder %v3815, 0.0
        %vm3822 = vcmp.ge.f32.partialorder %v3816, 0.0
        %vm3823 = vcmp.ge.f32.partialorder %v3817, 0.0
        %vm3824 = vcmp.ge.f32.partialorder %v3818, 0.0
        %v3825 = vmul.f32 %v3813, 0.2
        %v3826 = vmul.f32 %v3814, 0.2
        %v3827 = vmul.f32 %v3815, 0.2
        %v3828 = vmul.f32 %v3816, 0.2
        %v3829 = vmul.f32 %v3817, 0.2
        %v3830 = vmul.f32 %v3818, 0.2
        %v3831 = vsel %vm3819, %v3813, %v3825
        %v3832 = vsel %vm3820, %v3814, %v3826
        %v3833 = vsel %vm3821, %v3815, %v3827
        %v3834 = vsel %vm3822, %v3816, %v3828
        %v3835 = vsel %vm3823, %v3817, %v3829
        %v3836 = vsel %vm3824, %v3818, %v3830
        %v3837 = vld [vmem:[%s9] sm:$0xff]
        %v3838 = vld [vmem:[%s9 + $0x8] sm:$0xff]
        %v3839 = vld [vmem:[%s9 + $0x10] sm:$0xff]
        %v3840 = vld [vmem:[%s9 + $0x18] sm:$0xff]
        %v3841 = vld [vmem:[%s9 + $0x20] sm:$0xff]
        %v3842 = vld [vmem:[%s9 + $0x28] sm:$0xff]
        %v3843 = vld [vmem:[%s9 + $0x30] sm:$0xff]
        %v3844 = vld [vmem:[%s9 + $0x38] sm:$0xff]
        %v3845 = vld [vmem:[%s9 + $0x40] sm:$0xff]
        %v3846 = vld [vmem:[%s9 + $0x48] sm:$0xff]
        %v3847 = vld [vmem:[%s9 + $0x50] sm:$0xff]
        %v3848 = vld [vmem:[%s9 + $0x58] sm:$0xff]
        %v3849 = vld [vmem:[%s9 + $0x60] sm:$0xff]
        %v3850 = vld [vmem:[%s9 + $0x68] sm:$0xff]
        %v3851 = vld [vmem:[%s9 + $0x70] sm:$0xff]
        %v3852 = vld [vmem:[%s9 + $0x78] sm:$0xff]
        %v3853 = vld [vmem:[%s9 + $0x80] sm:$0xff]
        %v3854 = vld [vmem:[%s9 + $0x88] sm:$0xff]
        %v3855 = vld [vmem:[%s9 + $0x90] sm:$0xff]
        %v3856 = vld [vmem:[%s9 + $0x98] sm:$0xff]
        %v3857 = vld [vmem:[%s9 + $0xa0] sm:$0xff]
        %v3858 = vld [vmem:[%s9 + $0xa8] sm:$0xff]
        %s3859 = scalar_lea.vmem %s9, 176
        %v3860 = vld [vmem:[%s3859] sm:$0xff]
        %v3861 = vld [vmem:[%s3859 + $0x8] sm:$0xff]
        %v3862 = vld [vmem:[%s3859 + $0x10] sm:$0xff]
        %v3863 = vld [vmem:[%s3859 + $0x18] sm:$0xff]
        %v3864 = vld [vmem:[%s3859 + $0x20] sm:$0xff]
        %v3865 = vld [vmem:[%s3859 + $0x28] sm:$0xff]
        %v3866 = vld [vmem:[%s3859 + $0x30] sm:$0xff]
        %v3867 = vld [vmem:[%s3859 + $0x38] sm:$0xff]
        %v3868 = vld [vmem:[%s3859 + $0x40] sm:$0xff]
        %v3869 = vld [vmem:[%s3859 + $0x48] sm:$0xff]
        %v3870 = vld [vmem:[%s3859 + $0x50] sm:$0xff]
        %v3871 = vld [vmem:[%s3859 + $0x58] sm:$0xff]
        %v3872 = vld [vmem:[%s3859 + $0x60] sm:$0xff]
        %v3873 = vld [vmem:[%s3859 + $0x68] sm:$0xff]
        %v3874 = vld [vmem:[%s3859 + $0x70] sm:$0xff]
        %v3875 = vld [vmem:[%s3859 + $0x78] sm:$0xff]
        %v3876 = vld [vmem:[%s3859 + $0x80] sm:$0xff]
        %v3877 = vld [vmem:[%s3859 + $0x88] sm:$0xff]
        %v3878 = vld [vmem:[%s3859 + $0x90] sm:$0xff]
        %v3879 = vld [vmem:[%s3859 + $0x98] sm:$0xff]
        %v3880 = vld [vmem:[%s3859 + $0xa0] sm:$0xff]
        %v3881 = vld [vmem:[%s3859 + $0xa8] sm:$0xff]
        %v3884 = vrot.slane %v3831, 1
        %v3885 = vrot.slane %v3832, 1
        %vm3887 = vcmask 392192
        %v3888 = vsel %vm3887, %v3885, 0
        %3890 = vmatprep.subr.mxu0 0.0
        %3891 = vmatpush1.msra.mxu0 %v3860
        %3892 = vmatprep.subr.mxu0 0.0
        %3893 = vmatpush1.msra.mxu0 %v3861
        %3894 = vmatprep.subr.mxu0 0.0
        %3895 = vmatpush1.msra.mxu0 %v3862
        %3896 = vmatprep.subr.mxu0 0.0
        %3897 = vmatpush1.msra.mxu0 %v3863
        %3898 = vmatprep.subr.mxu0 0.0
        %3899 = vmatpush1.msra.mxu0 %v3864
        %3900 = vmatprep.subr.mxu0 0.0
        %3901 = vmatpush1.msra.mxu0 %v3865
        %3902 = vmatprep.subr.mxu0 0.0
        %3903 = vmatpush1.msra.mxu0 %v3866
        %3904 = vmatprep.subr.mxu0 0.0
        %3905 = vmatpush1.msra.mxu0 %v3867
        %3906 = vmatprep.subr.mxu0 0.0
        %3907 = vmatpush1.msra.mxu0 %v3868
        %3908 = vmatprep.subr.mxu0 0.0
        %3909 = vmatpush1.msra.mxu0 %v3869
        %3910 = vmatprep.subr.mxu0 0.0
        %3911 = vmatpush1.msra.mxu0 %v3870
        %3912 = vmatprep.subr.mxu0 0.0
        %3913 = vmatpush1.msra.mxu0 %v3871
        %3914 = vmatprep.subr.mxu0 0.0
        %3915 = vmatpush1.msra.mxu0 %v3872
        %3916 = vmatprep.subr.mxu0 0.0
        %3917 = vmatpush1.msra.mxu0 %v3873
        %3918 = vmatprep.subr.mxu0 0.0
        %3919 = vmatpush1.msra.mxu0 %v3874
        %3920 = vmatprep.subr.mxu0 0.0
        %3921 = vmatpush1.msra.mxu0 %v3875
        %3922 = vmatprep.subr.mxu0 0.0
        %3923 = vmatpush1.msra.mxu0 %v3876
        %3924 = vmatprep.subr.mxu0 0.0
        %3925 = vmatpush1.msra.mxu0 %v3877
        %3926 = vmatprep.subr.mxu0 0.0
        %3927 = vmatpush1.msra.mxu0 %v3878
        %3928 = vmatprep.subr.mxu0 0.0
        %3929 = vmatpush1.msra.mxu0 %v3879
        %3930 = vmatprep.subr.mxu0 0.0
        %3931 = vmatpush1.msra.mxu0 %v3880
        %3932 = vmatprep.subr.mxu0 0.0
        %3933 = vmatpush1.msra.mxu0 %v3881
        %3934 = vmatprep.subr.mxu0 0.0
        %3935 = vmatpush1.msra.mxu0 0.0
        %3936 = vmatprep.subr.mxu0 0.0
        %3937 = vmatpush1.msra.mxu0 0.0
        %3938 = vmatprep.subr.mxu0 0.0
        %3939 = vmatpush1.msra.mxu0 0.0
        %3940 = vmatprep.subr.mxu0 0.0
        %3941 = vmatpush1.msra.mxu0 0.0
        %3942 = vmatprep.subr.mxu0 0.0
        %3943 = vmatpush1.msra.mxu0 0.0
        %3944 = vmatprep.subr.mxu0 0.0
        %3945 = vmatpush1.msra.mxu0 0.0
        %3946 = vmatprep.subr.mxu0 0.0
        %3947 = vmatpush1.msra.mxu0 0.0
        %3948 = vmatprep.subr.mxu0 0.0
        %3949 = vmatpush1.msra.mxu0 0.0
        %3950 = vmatprep.subr.mxu0 0.0
        %3951 = vmatpush1.msra.mxu0 0.0
        %3952 = vmatprep.subr.mxu0 0.0
        %3953 = vmatpush1.msra.mxu0 0.0
        %3954 = vmatprep.mubr.f32.mxu0 %v3888
        %3955 = vmatmul.mubr.f32.gmra.mrb[0].mxu0 %v3884
        %v3956 = vpop.f32.mrb[0].mxu0
        %v3957 = vadd.f32 0.0, %v3956
        %v3958 = vpop.f32.mrb[0].mxu0
        %3959 = vdwg.mxu0
        %v3960 = vsel %vm3887, %v3832, 0
        %3962 = vmatprep.subr.mxu0 0.0
        %3963 = vmatpush1.msra.mxu0 %v3837
        %3964 = vmatprep.subr.mxu0 0.0
        %3965 = vmatpush1.msra.mxu0 %v3838
        %3966 = vmatprep.subr.mxu0 0.0
        %3967 = vmatpush1.msra.mxu0 %v3839
        %3968 = vmatprep.subr.mxu0 0.0
        %3969 = vmatpush1.msra.mxu0 %v3840
        %3970 = vmatprep.subr.mxu0 0.0
        %3971 = vmatpush1.msra.mxu0 %v3841
        %3972 = vmatprep.subr.mxu0 0.0
        %3973 = vmatpush1.msra.mxu0 %v3842
        %3974 = vmatprep.subr.mxu0 0.0
        %3975 = vmatpush1.msra.mxu0 %v3843
        %3976 = vmatprep.subr.mxu0 0.0
        %3977 = vmatpush1.msra.mxu0 %v3844
        %3978 = vmatprep.subr.mxu0 0.0
        %3979 = vmatpush1.msra.mxu0 %v3845
        %3980 = vmatprep.subr.mxu0 0.0
        %3981 = vmatpush1.msra.mxu0 %v3846
        %3982 = vmatprep.subr.mxu0 0.0
        %3983 = vmatpush1.msra.mxu0 %v3847
        %3984 = vmatprep.subr.mxu0 0.0
        %3985 = vmatpush1.msra.mxu0 %v3848
        %3986 = vmatprep.subr.mxu0 0.0
        %3987 = vmatpush1.msra.mxu0 %v3849
        %3988 = vmatprep.subr.mxu0 0.0
        %3989 = vmatpush1.msra.mxu0 %v3850
        %3990 = vmatprep.subr.mxu0 0.0
        %3991 = vmatpush1.msra.mxu0 %v3851
        %3992 = vmatprep.subr.mxu0 0.0
        %3993 = vmatpush1.msra.mxu0 %v3852
        %3994 = vmatprep.subr.mxu0 0.0
        %3995 = vmatpush1.msra.mxu0 %v3853
        %3996 = vmatprep.subr.mxu0 0.0
        %3997 = vmatpush1.msra.mxu0 %v3854
        %3998 = vmatprep.subr.mxu0 0.0
        %3999 = vmatpush1.msra.mxu0 %v3855
        %4000 = vmatprep.subr.mxu0 0.0
        %4001 = vmatpush1.msra.mxu0 %v3856
        %4002 = vmatprep.subr.mxu0 0.0
        %4003 = vmatpush1.msra.mxu0 %v3857
        %4004 = vmatprep.subr.mxu0 0.0
        %4005 = vmatpush1.msra.mxu0 %v3858
        %4006 = vmatprep.subr.mxu0 0.0
        %4007 = vmatpush1.msra.mxu0 0.0
        %4008 = vmatprep.subr.mxu0 0.0
        %4009 = vmatpush1.msra.mxu0 0.0
        %4010 = vmatprep.subr.mxu0 0.0
        %4011 = vmatpush1.msra.mxu0 0.0
        %4012 = vmatprep.subr.mxu0 0.0
        %4013 = vmatpush1.msra.mxu0 0.0
        %4014 = vmatprep.subr.mxu0 0.0
        %4015 = vmatpush1.msra.mxu0 0.0
        %4016 = vmatprep.subr.mxu0 0.0
        %4017 = vmatpush1.msra.mxu0 0.0
        %4018 = vmatprep.subr.mxu0 0.0
        %4019 = vmatpush1.msra.mxu0 0.0
        %4020 = vmatprep.subr.mxu0 0.0
        %4021 = vmatpush1.msra.mxu0 0.0
        %4022 = vmatprep.subr.mxu0 0.0
        %4023 = vmatpush1.msra.mxu0 0.0
        %4024 = vmatprep.subr.mxu0 0.0
        %4025 = vmatpush1.msra.mxu0 0.0
        %4026 = vmatprep.mubr.f32.mxu0 %v3960
        %4027 = vmatmul.mubr.f32.gmra.mrb[0].mxu0 %v3831
        %v4028 = vpop.f32.mrb[0].mxu0
        %v4029 = vadd.f32 %v3957, %v4028
        %v4030 = vpop.f32.mrb[0].mxu0
        %4031 = vdwg.mxu0
        %s4032 = scalar_lea.vmem %s9, 352
        %v4033 = vld [vmem:[%s4032] sm:$0xff]
        %v4034 = vld [vmem:[%s4032 + $0x8] sm:$0xff]
        %v4035 = vld [vmem:[%s4032 + $0x10] sm:$0xff]
        %v4036 = vld [vmem:[%s4032 + $0x18] sm:$0xff]
        %v4037 = vld [vmem:[%s4032 + $0x20] sm:$0xff]
        %v4038 = vld [vmem:[%s4032 + $0x28] sm:$0xff]
        %v4039 = vld [vmem:[%s4032 + $0x30] sm:$0xff]
        %v4040 = vld [vmem:[%s4032 + $0x38] sm:$0xff]
        %v4041 = vld [vmem:[%s4032 + $0x40] sm:$0xff]
        %v4042 = vld [vmem:[%s4032 + $0x48] sm:$0xff]
        %v4043 = vld [vmem:[%s4032 + $0x50] sm:$0xff]
        %v4044 = vld [vmem:[%s4032 + $0x58] sm:$0xff]
        %v4045 = vld [vmem:[%s4032 + $0x60] sm:$0xff]
        %v4046 = vld [vmem:[%s4032 + $0x68] sm:$0xff]
        %v4047 = vld [vmem:[%s4032 + $0x70] sm:$0xff]
        %v4048 = vld [vmem:[%s4032 + $0x78] sm:$0xff]
        %v4049 = vld [vmem:[%s4032 + $0x80] sm:$0xff]
        %v4050 = vld [vmem:[%s4032 + $0x88] sm:$0xff]
        %v4051 = vld [vmem:[%s4032 + $0x90] sm:$0xff]
        %v4052 = vld [vmem:[%s4032 + $0x98] sm:$0xff]
        %v4053 = vld [vmem:[%s4032 + $0xa0] sm:$0xff]
        %v4054 = vld [vmem:[%s4032 + $0xa8] sm:$0xff]
        %v4055 = vrot.slane %v3831, 2
        %v4056 = vrot.slane %v3832, 2
        %v4058 = vsel %vm3887, %v4056, 0
        %4060 = vmatprep.subr.mxu0 0.0
        %4061 = vmatpush1.msra.mxu0 %v4033
        %4062 = vmatprep.subr.mxu0 0.0
        %4063 = vmatpush1.msra.mxu0 %v4034
        %4064 = vmatprep.subr.mxu0 0.0
        %4065 = vmatpush1.msra.mxu0 %v4035
        %4066 = vmatprep.subr.mxu0 0.0
        %4067 = vmatpush1.msra.mxu0 %v4036
        %4068 = vmatprep.subr.mxu0 0.0
        %4069 = vmatpush1.msra.mxu0 %v4037
        %4070 = vmatprep.subr.mxu0 0.0
        %4071 = vmatpush1.msra.mxu0 %v4038
        %4072 = vmatprep.subr.mxu0 0.0
        %4073 = vmatpush1.msra.mxu0 %v4039
        %4074 = vmatprep.subr.mxu0 0.0
        %4075 = vmatpush1.msra.mxu0 %v4040
        %4076 = vmatprep.subr.mxu0 0.0
        %4077 = vmatpush1.msra.mxu0 %v4041
        %4078 = vmatprep.subr.mxu0 0.0
        %4079 = vmatpush1.msra.mxu0 %v4042
        %4080 = vmatprep.subr.mxu0 0.0
        %4081 = vmatpush1.msra.mxu0 %v4043
        %4082 = vmatprep.subr.mxu0 0.0
        %4083 = vmatpush1.msra.mxu0 %v4044
        %4084 = vmatprep.subr.mxu0 0.0
        %4085 = vmatpush1.msra.mxu0 %v4045
        %4086 = vmatprep.subr.mxu0 0.0
        %4087 = vmatpush1.msra.mxu0 %v4046
        %4088 = vmatprep.subr.mxu0 0.0
        %4089 = vmatpush1.msra.mxu0 %v4047
        %4090 = vmatprep.subr.mxu0 0.0
        %4091 = vmatpush1.msra.mxu0 %v4048
        %4092 = vmatprep.subr.mxu0 0.0
        %4093 = vmatpush1.msra.mxu0 %v4049
        %4094 = vmatprep.subr.mxu0 0.0
        %4095 = vmatpush1.msra.mxu0 %v4050
        %4096 = vmatprep.subr.mxu0 0.0
        %4097 = vmatpush1.msra.mxu0 %v4051
        %4098 = vmatprep.subr.mxu0 0.0
        %4099 = vmatpush1.msra.mxu0 %v4052
        %4100 = vmatprep.subr.mxu0 0.0
        %4101 = vmatpush1.msra.mxu0 %v4053
        %4102 = vmatprep.subr.mxu0 0.0
        %4103 = vmatpush1.msra.mxu0 %v4054
        %4104 = vmatprep.subr.mxu0 0.0
        %4105 = vmatpush1.msra.mxu0 0.0
        %4106 = vmatprep.subr.mxu0 0.0
        %4107 = vmatpush1.msra.mxu0 0.0
        %4108 = vmatprep.subr.mxu0 0.0
        %4109 = vmatpush1.msra.mxu0 0.0
        %4110 = vmatprep.subr.mxu0 0.0
        %4111 = vmatpush1.msra.mxu0 0.0
        %4112 = vmatprep.subr.mxu0 0.0
        %4113 = vmatpush1.msra.mxu0 0.0
        %4114 = vmatprep.subr.mxu0 0.0
        %4115 = vmatpush1.msra.mxu0 0.0
        %4116 = vmatprep.subr.mxu0 0.0
        %4117 = vmatpush1.msra.mxu0 0.0
        %4118 = vmatprep.subr.mxu0 0.0
        %4119 = vmatpush1.msra.mxu0 0.0
        %4120 = vmatprep.subr.mxu0 0.0
        %4121 = vmatpush1.msra.mxu0 0.0
        %4122 = vmatprep.subr.mxu0 0.0
        %4123 = vmatpush1.msra.mxu0 0.0
        %4124 = vmatprep.mubr.f32.mxu0 %v4058
        %4125 = vmatmul.mubr.f32.gmra.mrb[0].mxu0 %v4055
        %v4126 = vpop.f32.mrb[0].mxu0
        %v4127 = vadd.f32 0.0, %v4126
        %v4128 = vpop.f32.mrb[0].mxu0
        %4129 = vdwg.mxu0
        %v4130 = vadd.f32 %v4029, %v4127
        %s4131 = scalar_lea.vmem %s9, 528
        %v4132 = vld [vmem:[%s4131] sm:$0xff]
        %v4133 = vld [vmem:[%s4131 + $0x8] sm:$0xff]
        %v4134 = vld [vmem:[%s4131 + $0x10] sm:$0xff]
        %v4135 = vld [vmem:[%s4131 + $0x18] sm:$0xff]
        %v4136 = vld [vmem:[%s4131 + $0x20] sm:$0xff]
        %v4137 = vld [vmem:[%s4131 + $0x28] sm:$0xff]
        %v4138 = vld [vmem:[%s4131 + $0x30] sm:$0xff]
        %v4139 = vld [vmem:[%s4131 + $0x38] sm:$0xff]
        %v4140 = vld [vmem:[%s4131 + $0x40] sm:$0xff]
        %v4141 = vld [vmem:[%s4131 + $0x48] sm:$0xff]
        %v4142 = vld [vmem:[%s4131 + $0x50] sm:$0xff]
        %v4143 = vld [vmem:[%s4131 + $0x58] sm:$0xff]
        %v4144 = vld [vmem:[%s4131 + $0x60] sm:$0xff]
        %v4145 = vld [vmem:[%s4131 + $0x68] sm:$0xff]
        %v4146 = vld [vmem:[%s4131 + $0x70] sm:$0xff]
        %v4147 = vld [vmem:[%s4131 + $0x78] sm:$0xff]
        %v4148 = vld [vmem:[%s4131 + $0x80] sm:$0xff]
        %v4149 = vld [vmem:[%s4131 + $0x88] sm:$0xff]
        %v4150 = vld [vmem:[%s4131 + $0x90] sm:$0xff]
        %v4151 = vld [vmem:[%s4131 + $0x98] sm:$0xff]
        %v4152 = vld [vmem:[%s4131 + $0xa0] sm:$0xff]
        %v4153 = vld [vmem:[%s4131 + $0xa8] sm:$0xff]
        %v4154 = vrot.slane %v3831, 3
        %v4155 = vrot.slane %v3832, 3
        %v4157 = vsel %vm3887, %v4155, 0
        %4159 = vmatprep.subr.mxu0 0.0
        %4160 = vmatpush1.msra.mxu0 %v4132
        %4161 = vmatprep.subr.mxu0 0.0
        %4162 = vmatpush1.msra.mxu0 %v4133
        %4163 = vmatprep.subr.mxu0 0.0
        %4164 = vmatpush1.msra.mxu0 %v4134
        %4165 = vmatprep.subr.mxu0 0.0
        %4166 = vmatpush1.msra.mxu0 %v4135
        %4167 = vmatprep.subr.mxu0 0.0
        %4168 = vmatpush1.msra.mxu0 %v4136
        %4169 = vmatprep.subr.mxu0 0.0
        %4170 = vmatpush1.msra.mxu0 %v4137
        %4171 = vmatprep.subr.mxu0 0.0
        %4172 = vmatpush1.msra.mxu0 %v4138
        %4173 = vmatprep.subr.mxu0 0.0
        %4174 = vmatpush1.msra.mxu0 %v4139
        %4175 = vmatprep.subr.mxu0 0.0
        %4176 = vmatpush1.msra.mxu0 %v4140
        %4177 = vmatprep.subr.mxu0 0.0
        %4178 = vmatpush1.msra.mxu0 %v4141
        %4179 = vmatprep.subr.mxu0 0.0
        %4180 = vmatpush1.msra.mxu0 %v4142
        %4181 = vmatprep.subr.mxu0 0.0
        %4182 = vmatpush1.msra.mxu0 %v4143
        %4183 = vmatprep.subr.mxu0 0.0
        %4184 = vmatpush1.msra.mxu0 %v4144
        %4185 = vmatprep.subr.mxu0 0.0
        %4186 = vmatpush1.msra.mxu0 %v4145
        %4187 = vmatprep.subr.mxu0 0.0
        %4188 = vmatpush1.msra.mxu0 %v4146
        %4189 = vmatprep.subr.mxu0 0.0
        %4190 = vmatpush1.msra.mxu0 %v4147
        %4191 = vmatprep.subr.mxu0 0.0
        %4192 = vmatpush1.msra.mxu0 %v4148
        %4193 = vmatprep.subr.mxu0 0.0
        %4194 = vmatpush1.msra.mxu0 %v4149
        %4195 = vmatprep.subr.mxu0 0.0
        %4196 = vmatpush1.msra.mxu0 %v4150
        %4197 = vmatprep.subr.mxu0 0.0
        %4198 = vmatpush1.msra.mxu0 %v4151
        %4199 = vmatprep.subr.mxu0 0.0
        %4200 = vmatpush1.msra.mxu0 %v4152
        %4201 = vmatprep.subr.mxu0 0.0
        %4202 = vmatpush1.msra.mxu0 %v4153
        %4203 = vmatprep.subr.mxu0 0.0
        %4204 = vmatpush1.msra.mxu0 0.0
        %4205 = vmatprep.subr.mxu0 0.0
        %4206 = vmatpush1.msra.mxu0 0.0
        %4207 = vmatprep.subr.mxu0 0.0
        %4208 = vmatpush1.msra.mxu0 0.0
        %4209 = vmatprep.subr.mxu0 0.0
        %4210 = vmatpush1.msra.mxu0 0.0
        %4211 = vmatprep.subr.mxu0 0.0
        %4212 = vmatpush1.msra.mxu0 0.0
        %4213 = vmatprep.subr.mxu0 0.0
        %4214 = vmatpush1.msra.mxu0 0.0
        %4215 = vmatprep.subr.mxu0 0.0
        %4216 = vmatpush1.msra.mxu0 0.0
        %4217 = vmatprep.subr.mxu0 0.0
        %4218 = vmatpush1.msra.mxu0 0.0
        %4219 = vmatprep.subr.mxu0 0.0
        %4220 = vmatpush1.msra.mxu0 0.0
        %4221 = vmatprep.subr.mxu0 0.0
        %4222 = vmatpush1.msra.mxu0 0.0
        %4223 = vmatprep.mubr.f32.mxu0 %v4157
        %4224 = vmatmul.mubr.f32.gmra.mrb[0].mxu0 %v4154
        %v4225 = vpop.f32.mrb[0].mxu0
        %v4226 = vadd.f32 0.0, %v4225
        %v4227 = vpop.f32.mrb[0].mxu0
        %4228 = vdwg.mxu0
        %v4229 = vadd.f32 %v4130, %v4226
        %s4230 = scalar_lea.vmem %s9, 704
        %v4231 = vld [vmem:[%s4230] sm:$0xff]
        %v4232 = vld [vmem:[%s4230 + $0x8] sm:$0xff]
        %v4233 = vld [vmem:[%s4230 + $0x10] sm:$0xff]
        %v4234 = vld [vmem:[%s4230 + $0x18] sm:$0xff]
        %v4235 = vld [vmem:[%s4230 + $0x20] sm:$0xff]
        %v4236 = vld [vmem:[%s4230 + $0x28] sm:$0xff]
        %v4237 = vld [vmem:[%s4230 + $0x30] sm:$0xff]
        %v4238 = vld [vmem:[%s4230 + $0x38] sm:$0xff]
        %v4239 = vld [vmem:[%s4230 + $0x40] sm:$0xff]
        %v4240 = vld [vmem:[%s4230 + $0x48] sm:$0xff]
        %v4241 = vld [vmem:[%s4230 + $0x50] sm:$0xff]
        %v4242 = vld [vmem:[%s4230 + $0x58] sm:$0xff]
        %v4243 = vld [vmem:[%s4230 + $0x60] sm:$0xff]
        %v4244 = vld [vmem:[%s4230 + $0x68] sm:$0xff]
        %v4245 = vld [vmem:[%s4230 + $0x70] sm:$0xff]
        %v4246 = vld [vmem:[%s4230 + $0x78] sm:$0xff]
        %v4247 = vld [vmem:[%s4230 + $0x80] sm:$0xff]
        %v4248 = vld [vmem:[%s4230 + $0x88] sm:$0xff]
        %v4249 = vld [vmem:[%s4230 + $0x90] sm:$0xff]
        %v4250 = vld [vmem:[%s4230 + $0x98] sm:$0xff]
        %v4251 = vld [vmem:[%s4230 + $0xa0] sm:$0xff]
        %v4252 = vld [vmem:[%s4230 + $0xa8] sm:$0xff]
        %v4253 = vrot.slane %v3831, 4
        %v4254 = vrot.slane %v3832, 4
        %v4256 = vsel %vm3887, %v4254, 0
        %4258 = vmatprep.subr.mxu0 0.0
        %4259 = vmatpush1.msra.mxu0 %v4231
        %4260 = vmatprep.subr.mxu0 0.0
        %4261 = vmatpush1.msra.mxu0 %v4232
        %4262 = vmatprep.subr.mxu0 0.0
        %4263 = vmatpush1.msra.mxu0 %v4233
        %4264 = vmatprep.subr.mxu0 0.0
        %4265 = vmatpush1.msra.mxu0 %v4234
        %4266 = vmatprep.subr.mxu0 0.0
        %4267 = vmatpush1.msra.mxu0 %v4235
        %4268 = vmatprep.subr.mxu0 0.0
        %4269 = vmatpush1.msra.mxu0 %v4236
        %4270 = vmatprep.subr.mxu0 0.0
        %4271 = vmatpush1.msra.mxu0 %v4237
        %4272 = vmatprep.subr.mxu0 0.0
        %4273 = vmatpush1.msra.mxu0 %v4238
        %4274 = vmatprep.subr.mxu0 0.0
        %4275 = vmatpush1.msra.mxu0 %v4239
        %4276 = vmatprep.subr.mxu0 0.0
        %4277 = vmatpush1.msra.mxu0 %v4240
        %4278 = vmatprep.subr.mxu0 0.0
        %4279 = vmatpush1.msra.mxu0 %v4241
        %4280 = vmatprep.subr.mxu0 0.0
        %4281 = vmatpush1.msra.mxu0 %v4242
        %4282 = vmatprep.subr.mxu0 0.0
        %4283 = vmatpush1.msra.mxu0 %v4243
        %4284 = vmatprep.subr.mxu0 0.0
        %4285 = vmatpush1.msra.mxu0 %v4244
        %4286 = vmatprep.subr.mxu0 0.0
        %4287 = vmatpush1.msra.mxu0 %v4245
        %4288 = vmatprep.subr.mxu0 0.0
        %4289 = vmatpush1.msra.mxu0 %v4246
        %4290 = vmatprep.subr.mxu0 0.0
        %4291 = vmatpush1.msra.mxu0 %v4247
        %4292 = vmatprep.subr.mxu0 0.0
        %4293 = vmatpush1.msra.mxu0 %v4248
        %4294 = vmatprep.subr.mxu0 0.0
        %4295 = vmatpush1.msra.mxu0 %v4249
        %4296 = vmatprep.subr.mxu0 0.0
        %4297 = vmatpush1.msra.mxu0 %v4250
        %4298 = vmatprep.subr.mxu0 0.0
        %4299 = vmatpush1.msra.mxu0 %v4251
        %4300 = vmatprep.subr.mxu0 0.0
        %4301 = vmatpush1.msra.mxu0 %v4252
        %4302 = vmatprep.subr.mxu0 0.0
        %4303 = vmatpush1.msra.mxu0 0.0
        %4304 = vmatprep.subr.mxu0 0.0
        %4305 = vmatpush1.msra.mxu0 0.0
        %4306 = vmatprep.subr.mxu0 0.0
        %4307 = vmatpush1.msra.mxu0 0.0
        %4308 = vmatprep.subr.mxu0 0.0
        %4309 = vmatpush1.msra.mxu0 0.0
        %4310 = vmatprep.subr.mxu0 0.0
        %4311 = vmatpush1.msra.mxu0 0.0
        %4312 = vmatprep.subr.mxu0 0.0
        %4313 = vmatpush1.msra.mxu0 0.0
        %4314 = vmatprep.subr.mxu0 0.0
        %4315 = vmatpush1.msra.mxu0 0.0
        %4316 = vmatprep.subr.mxu0 0.0
        %4317 = vmatpush1.msra.mxu0 0.0
        %4318 = vmatprep.subr.mxu0 0.0
        %4319 = vmatpush1.msra.mxu0 0.0
        %4320 = vmatprep.subr.mxu0 0.0
        %4321 = vmatpush1.msra.mxu0 0.0
        %4322 = vmatprep.mubr.f32.mxu0 %v4256
        %4323 = vmatmul.mubr.f32.gmra.mrb[0].mxu0 %v4253
        %v4324 = vpop.f32.mrb[0].mxu0
        %v4325 = vadd.f32 0.0, %v4324
        %v4326 = vpop.f32.mrb[0].mxu0
        %4327 = vdwg.mxu0
        %v4328 = vadd.f32 %v4229, %v4325
        %s4329 = scalar_lea.vmem %s9, 880
        %v4330 = vld [vmem:[%s4329] sm:$0xff]
        %v4331 = vld [vmem:[%s4329 + $0x8] sm:$0xff]
        %v4332 = vld [vmem:[%s4329 + $0x10] sm:$0xff]
        %v4333 = vld [vmem:[%s4329 + $0x18] sm:$0xff]
        %v4334 = vld [vmem:[%s4329 + $0x20] sm:$0xff]
        %v4335 = vld [vmem:[%s4329 + $0x28] sm:$0xff]
        %v4336 = vld [vmem:[%s4329 + $0x30] sm:$0xff]
        %v4337 = vld [vmem:[%s4329 + $0x38] sm:$0xff]
        %v4338 = vld [vmem:[%s4329 + $0x40] sm:$0xff]
        %v4339 = vld [vmem:[%s4329 + $0x48] sm:$0xff]
        %v4340 = vld [vmem:[%s4329 + $0x50] sm:$0xff]
        %v4341 = vld [vmem:[%s4329 + $0x58] sm:$0xff]
        %v4342 = vld [vmem:[%s4329 + $0x60] sm:$0xff]
        %v4343 = vld [vmem:[%s4329 + $0x68] sm:$0xff]
        %v4344 = vld [vmem:[%s4329 + $0x70] sm:$0xff]
        %v4345 = vld [vmem:[%s4329 + $0x78] sm:$0xff]
        %v4346 = vld [vmem:[%s4329 + $0x80] sm:$0xff]
        %v4347 = vld [vmem:[%s4329 + $0x88] sm:$0xff]
        %v4348 = vld [vmem:[%s4329 + $0x90] sm:$0xff]
        %v4349 = vld [vmem:[%s4329 + $0x98] sm:$0xff]
        %v4350 = vld [vmem:[%s4329 + $0xa0] sm:$0xff]
        %v4351 = vld [vmem:[%s4329 + $0xa8] sm:$0xff]
        %v4352 = vrot.slane %v3831, 5
        %v4353 = vrot.slane %v3832, 5
        %v4355 = vsel %vm3887, %v4353, 0
        %4357 = vmatprep.subr.mxu0 0.0
        %4358 = vmatpush1.msra.mxu0 %v4330
        %4359 = vmatprep.subr.mxu0 0.0
        %4360 = vmatpush1.msra.mxu0 %v4331
        %4361 = vmatprep.subr.mxu0 0.0
        %4362 = vmatpush1.msra.mxu0 %v4332
        %4363 = vmatprep.subr.mxu0 0.0
        %4364 = vmatpush1.msra.mxu0 %v4333
        %4365 = vmatprep.subr.mxu0 0.0
        %4366 = vmatpush1.msra.mxu0 %v4334
        %4367 = vmatprep.subr.mxu0 0.0
        %4368 = vmatpush1.msra.mxu0 %v4335
        %4369 = vmatprep.subr.mxu0 0.0
        %4370 = vmatpush1.msra.mxu0 %v4336
        %4371 = vmatprep.subr.mxu0 0.0
        %4372 = vmatpush1.msra.mxu0 %v4337
        %4373 = vmatprep.subr.mxu0 0.0
        %4374 = vmatpush1.msra.mxu0 %v4338
        %4375 = vmatprep.subr.mxu0 0.0
        %4376 = vmatpush1.msra.mxu0 %v4339
        %4377 = vmatprep.subr.mxu0 0.0
        %4378 = vmatpush1.msra.mxu0 %v4340
        %4379 = vmatprep.subr.mxu0 0.0
        %4380 = vmatpush1.msra.mxu0 %v4341
        %4381 = vmatprep.subr.mxu0 0.0
        %4382 = vmatpush1.msra.mxu0 %v4342
        %4383 = vmatprep.subr.mxu0 0.0
        %4384 = vmatpush1.msra.mxu0 %v4343
        %4385 = vmatprep.subr.mxu0 0.0
        %4386 = vmatpush1.msra.mxu0 %v4344
        %4387 = vmatprep.subr.mxu0 0.0
        %4388 = vmatpush1.msra.mxu0 %v4345
        %4389 = vmatprep.subr.mxu0 0.0
        %4390 = vmatpush1.msra.mxu0 %v4346
        %4391 = vmatprep.subr.mxu0 0.0
        %4392 = vmatpush1.msra.mxu0 %v4347
        %4393 = vmatprep.subr.mxu0 0.0
        %4394 = vmatpush1.msra.mxu0 %v4348
        %4395 = vmatprep.subr.mxu0 0.0
        %4396 = vmatpush1.msra.mxu0 %v4349
        %4397 = vmatprep.subr.mxu0 0.0
        %4398 = vmatpush1.msra.mxu0 %v4350
        %4399 = vmatprep.subr.mxu0 0.0
        %4400 = vmatpush1.msra.mxu0 %v4351
        %4401 = vmatprep.subr.mxu0 0.0
        %4402 = vmatpush1.msra.mxu0 0.0
        %4403 = vmatprep.subr.mxu0 0.0
        %4404 = vmatpush1.msra.mxu0 0.0
        %4405 = vmatprep.subr.mxu0 0.0
        %4406 = vmatpush1.msra.mxu0 0.0
        %4407 = vmatprep.subr.mxu0 0.0
        %4408 = vmatpush1.msra.mxu0 0.0
        %4409 = vmatprep.subr.mxu0 0.0
        %4410 = vmatpush1.msra.mxu0 0.0
        %4411 = vmatprep.subr.mxu0 0.0
        %4412 = vmatpush1.msra.mxu0 0.0
        %4413 = vmatprep.subr.mxu0 0.0
        %4414 = vmatpush1.msra.mxu0 0.0
        %4415 = vmatprep.subr.mxu0 0.0
        %4416 = vmatpush1.msra.mxu0 0.0
        %4417 = vmatprep.subr.mxu0 0.0
        %4418 = vmatpush1.msra.mxu0 0.0
        %4419 = vmatprep.subr.mxu0 0.0
        %4420 = vmatpush1.msra.mxu0 0.0
        %4421 = vmatprep.mubr.f32.mxu0 %v4355
        %4422 = vmatmul.mubr.f32.gmra.mrb[0].mxu0 %v4352
        %v4423 = vpop.f32.mrb[0].mxu0
        %v4424 = vadd.f32 0.0, %v4423
        %v4425 = vpop.f32.mrb[0].mxu0
        %4426 = vdwg.mxu0
        %v4427 = vadd.f32 %v4328, %v4424
        %s4428 = scalar_lea.vmem %s9, 1056
        %v4429 = vld [vmem:[%s4428] sm:$0xff]
        %v4430 = vld [vmem:[%s4428 + $0x8] sm:$0xff]
        %v4431 = vld [vmem:[%s4428 + $0x10] sm:$0xff]
        %v4432 = vld [vmem:[%s4428 + $0x18] sm:$0xff]
        %v4433 = vld [vmem:[%s4428 + $0x20] sm:$0xff]
        %v4434 = vld [vmem:[%s4428 + $0x28] sm:$0xff]
        %v4435 = vld [vmem:[%s4428 + $0x30] sm:$0xff]
        %v4436 = vld [vmem:[%s4428 + $0x38] sm:$0xff]
        %v4437 = vld [vmem:[%s4428 + $0x40] sm:$0xff]
        %v4438 = vld [vmem:[%s4428 + $0x48] sm:$0xff]
        %v4439 = vld [vmem:[%s4428 + $0x50] sm:$0xff]
        %v4440 = vld [vmem:[%s4428 + $0x58] sm:$0xff]
        %v4441 = vld [vmem:[%s4428 + $0x60] sm:$0xff]
        %v4442 = vld [vmem:[%s4428 + $0x68] sm:$0xff]
        %v4443 = vld [vmem:[%s4428 + $0x70] sm:$0xff]
        %v4444 = vld [vmem:[%s4428 + $0x78] sm:$0xff]
        %v4445 = vld [vmem:[%s4428 + $0x80] sm:$0xff]
        %v4446 = vld [vmem:[%s4428 + $0x88] sm:$0xff]
        %v4447 = vld [vmem:[%s4428 + $0x90] sm:$0xff]
        %v4448 = vld [vmem:[%s4428 + $0x98] sm:$0xff]
        %v4449 = vld [vmem:[%s4428 + $0xa0] sm:$0xff]
        %v4450 = vld [vmem:[%s4428 + $0xa8] sm:$0xff]
        %v4451 = vrot.slane %v3831, 6
        %v4452 = vrot.slane %v3832, 6
        %v4454 = vsel %vm3887, %v4452, 0
        %4456 = vmatprep.subr.mxu0 0.0
        %4457 = vmatpush1.msra.mxu0 %v4429
        %4458 = vmatprep.subr.mxu0 0.0
        %4459 = vmatpush1.msra.mxu0 %v4430
        %4460 = vmatprep.subr.mxu0 0.0
        %4461 = vmatpush1.msra.mxu0 %v4431
        %4462 = vmatprep.subr.mxu0 0.0
        %4463 = vmatpush1.msra.mxu0 %v4432
        %4464 = vmatprep.subr.mxu0 0.0
        %4465 = vmatpush1.msra.mxu0 %v4433
        %4466 = vmatprep.subr.mxu0 0.0
        %4467 = vmatpush1.msra.mxu0 %v4434
        %4468 = vmatprep.subr.mxu0 0.0
        %4469 = vmatpush1.msra.mxu0 %v4435
        %4470 = vmatprep.subr.mxu0 0.0
        %4471 = vmatpush1.msra.mxu0 %v4436
        %4472 = vmatprep.subr.mxu0 0.0
        %4473 = vmatpush1.msra.mxu0 %v4437
        %4474 = vmatprep.subr.mxu0 0.0
        %4475 = vmatpush1.msra.mxu0 %v4438
        %4476 = vmatprep.subr.mxu0 0.0
        %4477 = vmatpush1.msra.mxu0 %v4439
        %4478 = vmatprep.subr.mxu0 0.0
        %4479 = vmatpush1.msra.mxu0 %v4440
        %4480 = vmatprep.subr.mxu0 0.0
        %4481 = vmatpush1.msra.mxu0 %v4441
        %4482 = vmatprep.subr.mxu0 0.0
        %4483 = vmatpush1.msra.mxu0 %v4442
        %4484 = vmatprep.subr.mxu0 0.0
        %4485 = vmatpush1.msra.mxu0 %v4443
        %4486 = vmatprep.subr.mxu0 0.0
        %4487 = vmatpush1.msra.mxu0 %v4444
        %4488 = vmatprep.subr.mxu0 0.0
        %4489 = vmatpush1.msra.mxu0 %v4445
        %4490 = vmatprep.subr.mxu0 0.0
        %4491 = vmatpush1.msra.mxu0 %v4446
        %4492 = vmatprep.subr.mxu0 0.0
        %4493 = vmatpush1.msra.mxu0 %v4447
        %4494 = vmatprep.subr.mxu0 0.0
        %4495 = vmatpush1.msra.mxu0 %v4448
        %4496 = vmatprep.subr.mxu0 0.0
        %4497 = vmatpush1.msra.mxu0 %v4449
        %4498 = vmatprep.subr.mxu0 0.0
        %4499 = vmatpush1.msra.mxu0 %v4450
        %4500 = vmatprep.subr.mxu0 0.0
        %4501 = vmatpush1.msra.mxu0 0.0
        %4502 = vmatprep.subr.mxu0 0.0
        %4503 = vmatpush1.msra.mxu0 0.0
        %4504 = vmatprep.subr.mxu0 0.0
        %4505 = vmatpush1.msra.mxu0 0.0
        %4506 = vmatprep.subr.mxu0 0.0
        %4507 = vmatpush1.msra.mxu0 0.0
        %4508 = vmatprep.subr.mxu0 0.0
        %4509 = vmatpush1.msra.mxu0 0.0
        %4510 = vmatprep.subr.mxu0 0.0
        %4511 = vmatpush1.msra.mxu0 0.0
        %4512 = vmatprep.subr.mxu0 0.0
        %4513 = vmatpush1.msra.mxu0 0.0
        %4514 = vmatprep.subr.mxu0 0.0
        %4515 = vmatpush1.msra.mxu0 0.0
        %4516 = vmatprep.subr.mxu0 0.0
        %4517 = vmatpush1.msra.mxu0 0.0
        %4518 = vmatprep.subr.mxu0 0.0
        %4519 = vmatpush1.msra.mxu0 0.0
        %4520 = vmatprep.mubr.f32.mxu0 %v4454
        %4521 = vmatmul.mubr.f32.gmra.mrb[0].mxu0 %v4451
        %v4522 = vpop.f32.mrb[0].mxu0
        %v4523 = vadd.f32 0.0, %v4522
        %v4524 = vpop.f32.mrb[0].mxu0
        %4525 = vdwg.mxu0
        %v4526 = vadd.f32 %v4427, %v4523
        %s4527 = scalar_lea.vmem %s9, 1232
        %v4528 = vld [vmem:[%s4527] sm:$0xff]
        %v4529 = vld [vmem:[%s4527 + $0x8] sm:$0xff]
        %v4530 = vld [vmem:[%s4527 + $0x10] sm:$0xff]
        %v4531 = vld [vmem:[%s4527 + $0x18] sm:$0xff]
        %v4532 = vld [vmem:[%s4527 + $0x20] sm:$0xff]
        %v4533 = vld [vmem:[%s4527 + $0x28] sm:$0xff]
        %v4534 = vld [vmem:[%s4527 + $0x30] sm:$0xff]
        %v4535 = vld [vmem:[%s4527 + $0x38] sm:$0xff]
        %v4536 = vld [vmem:[%s4527 + $0x40] sm:$0xff]
        %v4537 = vld [vmem:[%s4527 + $0x48] sm:$0xff]
        %v4538 = vld [vmem:[%s4527 + $0x50] sm:$0xff]
        %v4539 = vld [vmem:[%s4527 + $0x58] sm:$0xff]
        %v4540 = vld [vmem:[%s4527 + $0x60] sm:$0xff]
        %v4541 = vld [vmem:[%s4527 + $0x68] sm:$0xff]
        %v4542 = vld [vmem:[%s4527 + $0x70] sm:$0xff]
        %v4543 = vld [vmem:[%s4527 + $0x78] sm:$0xff]
        %v4544 = vld [vmem:[%s4527 + $0x80] sm:$0xff]
        %v4545 = vld [vmem:[%s4527 + $0x88] sm:$0xff]
        %v4546 = vld [vmem:[%s4527 + $0x90] sm:$0xff]
        %v4547 = vld [vmem:[%s4527 + $0x98] sm:$0xff]
        %v4548 = vld [vmem:[%s4527 + $0xa0] sm:$0xff]
        %v4549 = vld [vmem:[%s4527 + $0xa8] sm:$0xff]
        %v4550 = vrot.slane %v3831, 7
        %v4551 = vrot.slane %v3832, 7
        %v4553 = vsel %vm3887, %v4551, 0
        %4555 = vmatprep.subr.mxu0 0.0
        %4556 = vmatpush1.msra.mxu0 %v4528
        %4557 = vmatprep.subr.mxu0 0.0
        %4558 = vmatpush1.msra.mxu0 %v4529
        %4559 = vmatprep.subr.mxu0 0.0
        %4560 = vmatpush1.msra.mxu0 %v4530
        %4561 = vmatprep.subr.mxu0 0.0
        %4562 = vmatpush1.msra.mxu0 %v4531
        %4563 = vmatprep.subr.mxu0 0.0
        %4564 = vmatpush1.msra.mxu0 %v4532
        %4565 = vmatprep.subr.mxu0 0.0
        %4566 = vmatpush1.msra.mxu0 %v4533
        %4567 = vmatprep.subr.mxu0 0.0
        %4568 = vmatpush1.msra.mxu0 %v4534
        %4569 = vmatprep.subr.mxu0 0.0
        %4570 = vmatpush1.msra.mxu0 %v4535
        %4571 = vmatprep.subr.mxu0 0.0
        %4572 = vmatpush1.msra.mxu0 %v4536
        %4573 = vmatprep.subr.mxu0 0.0
        %4574 = vmatpush1.msra.mxu0 %v4537
        %4575 = vmatprep.subr.mxu0 0.0
        %4576 = vmatpush1.msra.mxu0 %v4538
        %4577 = vmatprep.subr.mxu0 0.0
        %4578 = vmatpush1.msra.mxu0 %v4539
        %4579 = vmatprep.subr.mxu0 0.0
        %4580 = vmatpush1.msra.mxu0 %v4540
        %4581 = vmatprep.subr.mxu0 0.0
        %4582 = vmatpush1.msra.mxu0 %v4541
        %4583 = vmatprep.subr.mxu0 0.0
        %4584 = vmatpush1.msra.mxu0 %v4542
        %4585 = vmatprep.subr.mxu0 0.0
        %4586 = vmatpush1.msra.mxu0 %v4543
        %4587 = vmatprep.subr.mxu0 0.0
        %4588 = vmatpush1.msra.mxu0 %v4544
        %4589 = vmatprep.subr.mxu0 0.0
        %4590 = vmatpush1.msra.mxu0 %v4545
        %4591 = vmatprep.subr.mxu0 0.0
        %4592 = vmatpush1.msra.mxu0 %v4546
        %4593 = vmatprep.subr.mxu0 0.0
        %4594 = vmatpush1.msra.mxu0 %v4547
        %4595 = vmatprep.subr.mxu0 0.0
        %4596 = vmatpush1.msra.mxu0 %v4548
        %4597 = vmatprep.subr.mxu0 0.0
        %4598 = vmatpush1.msra.mxu0 %v4549
        %4599 = vmatprep.subr.mxu0 0.0
        %4600 = vmatpush1.msra.mxu0 0.0
        %4601 = vmatprep.subr.mxu0 0.0
        %4602 = vmatpush1.msra.mxu0 0.0
        %4603 = vmatprep.subr.mxu0 0.0
        %4604 = vmatpush1.msra.mxu0 0.0
        %4605 = vmatprep.subr.mxu0 0.0
        %4606 = vmatpush1.msra.mxu0 0.0
        %4607 = vmatprep.subr.mxu0 0.0
        %4608 = vmatpush1.msra.mxu0 0.0
        %4609 = vmatprep.subr.mxu0 0.0
        %4610 = vmatpush1.msra.mxu0 0.0
        %4611 = vmatprep.subr.mxu0 0.0
        %4612 = vmatpush1.msra.mxu0 0.0
        %4613 = vmatprep.subr.mxu0 0.0
        %4614 = vmatpush1.msra.mxu0 0.0
        %4615 = vmatprep.subr.mxu0 0.0
        %4616 = vmatpush1.msra.mxu0 0.0
        %4617 = vmatprep.subr.mxu0 0.0
        %4618 = vmatpush1.msra.mxu0 0.0
        %4619 = vmatprep.mubr.f32.mxu0 %v4553
        %4620 = vmatmul.mubr.f32.gmra.mrb[0].mxu0 %v4550
        %v4621 = vpop.f32.mrb[0].mxu0
        %v4622 = vadd.f32 0.0, %v4621
        %v4623 = vpop.f32.mrb[0].mxu0
        %4624 = vdwg.mxu0
        %v4625 = vadd.f32 %v4526, %v4622
        %s4626 = scalar_lea.vmem %s9, 1408
        %v4627 = vld [vmem:[%s4626] sm:$0xff]
        %v4628 = vld [vmem:[%s4626 + $0x8] sm:$0xff]
        %v4629 = vld [vmem:[%s4626 + $0x10] sm:$0xff]
        %v4630 = vld [vmem:[%s4626 + $0x18] sm:$0xff]
        %v4631 = vld [vmem:[%s4626 + $0x20] sm:$0xff]
        %v4632 = vld [vmem:[%s4626 + $0x28] sm:$0xff]
        %v4633 = vld [vmem:[%s4626 + $0x30] sm:$0xff]
        %v4634 = vld [vmem:[%s4626 + $0x38] sm:$0xff]
        %v4635 = vld [vmem:[%s4626 + $0x40] sm:$0xff]
        %v4636 = vld [vmem:[%s4626 + $0x48] sm:$0xff]
        %v4637 = vld [vmem:[%s4626 + $0x50] sm:$0xff]
        %v4638 = vld [vmem:[%s4626 + $0x58] sm:$0xff]
        %v4639 = vld [vmem:[%s4626 + $0x60] sm:$0xff]
        %v4640 = vld [vmem:[%s4626 + $0x68] sm:$0xff]
        %v4641 = vld [vmem:[%s4626 + $0x70] sm:$0xff]
        %v4642 = vld [vmem:[%s4626 + $0x78] sm:$0xff]
        %v4643 = vld [vmem:[%s4626 + $0x80] sm:$0xff]
        %v4644 = vld [vmem:[%s4626 + $0x88] sm:$0xff]
        %v4645 = vld [vmem:[%s4626 + $0x90] sm:$0xff]
        %v4646 = vld [vmem:[%s4626 + $0x98] sm:$0xff]
        %v4647 = vld [vmem:[%s4626 + $0xa0] sm:$0xff]
        %v4648 = vld [vmem:[%s4626 + $0xa8] sm:$0xff]
        %v4650 = vsel %vm3887, %v3834, 0
        %4652 = vmatprep.subr.mxu0 0.0
        %4653 = vmatpush1.msra.mxu0 %v4627
        %4654 = vmatprep.subr.mxu0 0.0
        %4655 = vmatpush1.msra.mxu0 %v4628
        %4656 = vmatprep.subr.mxu0 0.0
        %4657 = vmatpush1.msra.mxu0 %v4629
        %4658 = vmatprep.subr.mxu0 0.0
        %4659 = vmatpush1.msra.mxu0 %v4630
        %4660 = vmatprep.subr.mxu0 0.0
        %4661 = vmatpush1.msra.mxu0 %v4631
        %4662 = vmatprep.subr.mxu0 0.0
        %4663 = vmatpush1.msra.mxu0 %v4632
        %4664 = vmatprep.subr.mxu0 0.0
        %4665 = vmatpush1.msra.mxu0 %v4633
        %4666 = vmatprep.subr.mxu0 0.0
        %4667 = vmatpush1.msra.mxu0 %v4634
        %4668 = vmatprep.subr.mxu0 0.0
        %4669 = vmatpush1.msra.mxu0 %v4635
        %4670 = vmatprep.subr.mxu0 0.0
        %4671 = vmatpush1.msra.mxu0 %v4636
        %4672 = vmatprep.subr.mxu0 0.0
        %4673 = vmatpush1.msra.mxu0 %v4637
        %4674 = vmatprep.subr.mxu0 0.0
        %4675 = vmatpush1.msra.mxu0 %v4638
        %4676 = vmatprep.subr.mxu0 0.0
        %4677 = vmatpush1.msra.mxu0 %v4639
        %4678 = vmatprep.subr.mxu0 0.0
        %4679 = vmatpush1.msra.mxu0 %v4640
        %4680 = vmatprep.subr.mxu0 0.0
        %4681 = vmatpush1.msra.mxu0 %v4641
        %4682 = vmatprep.subr.mxu0 0.0
        %4683 = vmatpush1.msra.mxu0 %v4642
        %4684 = vmatprep.subr.mxu0 0.0
        %4685 = vmatpush1.msra.mxu0 %v4643
        %4686 = vmatprep.subr.mxu0 0.0
        %4687 = vmatpush1.msra.mxu0 %v4644
        %4688 = vmatprep.subr.mxu0 0.0
        %4689 = vmatpush1.msra.mxu0 %v4645
        %4690 = vmatprep.subr.mxu0 0.0
        %4691 = vmatpush1.msra.mxu0 %v4646
        %4692 = vmatprep.subr.mxu0 0.0
        %4693 = vmatpush1.msra.mxu0 %v4647
        %4694 = vmatprep.subr.mxu0 0.0
        %4695 = vmatpush1.msra.mxu0 %v4648
        %4696 = vmatprep.subr.mxu0 0.0
        %4697 = vmatpush1.msra.mxu0 0.0
        %4698 = vmatprep.subr.mxu0 0.0
        %4699 = vmatpush1.msra.mxu0 0.0
        %4700 = vmatprep.subr.mxu0 0.0
        %4701 = vmatpush1.msra.mxu0 0.0
        %4702 = vmatprep.subr.mxu0 0.0
        %4703 = vmatpush1.msra.mxu0 0.0
        %4704 = vmatprep.subr.mxu0 0.0
        %4705 = vmatpush1.msra.mxu0 0.0
        %4706 = vmatprep.subr.mxu0 0.0
        %4707 = vmatpush1.msra.mxu0 0.0
        %4708 = vmatprep.subr.mxu0 0.0
        %4709 = vmatpush1.msra.mxu0 0.0
        %4710 = vmatprep.subr.mxu0 0.0
        %4711 = vmatpush1.msra.mxu0 0.0
        %4712 = vmatprep.subr.mxu0 0.0
        %4713 = vmatpush1.msra.mxu0 0.0
        %4714 = vmatprep.subr.mxu0 0.0
        %4715 = vmatpush1.msra.mxu0 0.0
        %4716 = vmatprep.mubr.f32.mxu0 %v4650
        %4717 = vmatmul.mubr.f32.gmra.mrb[0].mxu0 %v3833
        %v4718 = vpop.f32.mrb[0].mxu0
        %v4719 = vadd.f32 0.0, %v4718
        %v4720 = vpop.f32.mrb[0].mxu0
        %4721 = vdwg.mxu0
        %v4722 = vadd.f32 %v4625, %v4719
        %s4723 = scalar_lea.vmem %s9, 1584
        %v4724 = vld [vmem:[%s4723] sm:$0xff]
        %v4725 = vld [vmem:[%s4723 + $0x8] sm:$0xff]
        %v4726 = vld [vmem:[%s4723 + $0x10] sm:$0xff]
        %v4727 = vld [vmem:[%s4723 + $0x18] sm:$0xff]
        %v4728 = vld [vmem:[%s4723 + $0x20] sm:$0xff]
        %v4729 = vld [vmem:[%s4723 + $0x28] sm:$0xff]
        %v4730 = vld [vmem:[%s4723 + $0x30] sm:$0xff]
        %v4731 = vld [vmem:[%s4723 + $0x38] sm:$0xff]
        %v4732 = vld [vmem:[%s4723 + $0x40] sm:$0xff]
        %v4733 = vld [vmem:[%s4723 + $0x48] sm:$0xff]
        %v4734 = vld [vmem:[%s4723 + $0x50] sm:$0xff]
        %v4735 = vld [vmem:[%s4723 + $0x58] sm:$0xff]
        %v4736 = vld [vmem:[%s4723 + $0x60] sm:$0xff]
        %v4737 = vld [vmem:[%s4723 + $0x68] sm:$0xff]
        %v4738 = vld [vmem:[%s4723 + $0x70] sm:$0xff]
        %v4739 = vld [vmem:[%s4723 + $0x78] sm:$0xff]
        %v4740 = vld [vmem:[%s4723 + $0x80] sm:$0xff]
        %v4741 = vld [vmem:[%s4723 + $0x88] sm:$0xff]
        %v4742 = vld [vmem:[%s4723 + $0x90] sm:$0xff]
        %v4743 = vld [vmem:[%s4723 + $0x98] sm:$0xff]
        %v4744 = vld [vmem:[%s4723 + $0xa0] sm:$0xff]
        %v4745 = vld [vmem:[%s4723 + $0xa8] sm:$0xff]
        %v4747 = vrot.slane %v3833, 1
        %v4748 = vrot.slane %v3834, 1
        %v4750 = vsel %vm3887, %v4748, 0
        %4752 = vmatprep.subr.mxu0 0.0
        %4753 = vmatpush1.msra.mxu0 %v4724
        %4754 = vmatprep.subr.mxu0 0.0
        %4755 = vmatpush1.msra.mxu0 %v4725
        %4756 = vmatprep.subr.mxu0 0.0
        %4757 = vmatpush1.msra.mxu0 %v4726
        %4758 = vmatprep.subr.mxu0 0.0
        %4759 = vmatpush1.msra.mxu0 %v4727
        %4760 = vmatprep.subr.mxu0 0.0
        %4761 = vmatpush1.msra.mxu0 %v4728
        %4762 = vmatprep.subr.mxu0 0.0
        %4763 = vmatpush1.msra.mxu0 %v4729
        %4764 = vmatprep.subr.mxu0 0.0
        %4765 = vmatpush1.msra.mxu0 %v4730
        %4766 = vmatprep.subr.mxu0 0.0
        %4767 = vmatpush1.msra.mxu0 %v4731
        %4768 = vmatprep.subr.mxu0 0.0
        %4769 = vmatpush1.msra.mxu0 %v4732
        %4770 = vmatprep.subr.mxu0 0.0
        %4771 = vmatpush1.msra.mxu0 %v4733
        %4772 = vmatprep.subr.mxu0 0.0
        %4773 = vmatpush1.msra.mxu0 %v4734
        %4774 = vmatprep.subr.mxu0 0.0
        %4775 = vmatpush1.msra.mxu0 %v4735
        %4776 = vmatprep.subr.mxu0 0.0
        %4777 = vmatpush1.msra.mxu0 %v4736
        %4778 = vmatprep.subr.mxu0 0.0
        %4779 = vmatpush1.msra.mxu0 %v4737
        %4780 = vmatprep.subr.mxu0 0.0
        %4781 = vmatpush1.msra.mxu0 %v4738
        %4782 = vmatprep.subr.mxu0 0.0
        %4783 = vmatpush1.msra.mxu0 %v4739
        %4784 = vmatprep.subr.mxu0 0.0
        %4785 = vmatpush1.msra.mxu0 %v4740
        %4786 = vmatprep.subr.mxu0 0.0
        %4787 = vmatpush1.msra.mxu0 %v4741
        %4788 = vmatprep.subr.mxu0 0.0
        %4789 = vmatpush1.msra.mxu0 %v4742
        %4790 = vmatprep.subr.mxu0 0.0
        %4791 = vmatpush1.msra.mxu0 %v4743
        %4792 = vmatprep.subr.mxu0 0.0
        %4793 = vmatpush1.msra.mxu0 %v4744
        %4794 = vmatprep.subr.mxu0 0.0
        %4795 = vmatpush1.msra.mxu0 %v4745
        %4796 = vmatprep.subr.mxu0 0.0
        %4797 = vmatpush1.msra.mxu0 0.0
        %4798 = vmatprep.subr.mxu0 0.0
        %4799 = vmatpush1.msra.mxu0 0.0
        %4800 = vmatprep.subr.mxu0 0.0
        %4801 = vmatpush1.msra.mxu0 0.0
        %4802 = vmatprep.subr.mxu0 0.0
        %4803 = vmatpush1.msra.mxu0 0.0
        %4804 = vmatprep.subr.mxu0 0.0
        %4805 = vmatpush1.msra.mxu0 0.0
        %4806 = vmatprep.subr.mxu0 0.0
        %4807 = vmatpush1.msra.mxu0 0.0
        %4808 = vmatprep.subr.mxu0 0.0
        %4809 = vmatpush1.msra.mxu0 0.0
        %4810 = vmatprep.subr.mxu0 0.0
        %4811 = vmatpush1.msra.mxu0 0.0
        %4812 = vmatprep.subr.mxu0 0.0
        %4813 = vmatpush1.msra.mxu0 0.0
        %4814 = vmatprep.subr.mxu0 0.0
        %4815 = vmatpush1.msra.mxu0 0.0
        %4816 = vmatprep.mubr.f32.mxu0 %v4750
        %4817 = vmatmul.mubr.f32.gmra.mrb[0].mxu0 %v4747
        %v4818 = vpop.f32.mrb[0].mxu0
        %v4819 = vadd.f32 0.0, %v4818
        %v4820 = vpop.f32.mrb[0].mxu0
        %4821 = vdwg.mxu0
        %v4822 = vadd.f32 %v4722, %v4819
        %s4823 = scalar_lea.vmem %s9, 1760
        %v4824 = vld [vmem:[%s4823] sm:$0xff]
        %v4825 = vld [vmem:[%s4823 + $0x8] sm:$0xff]
        %v4826 = vld [vmem:[%s4823 + $0x10] sm:$0xff]
        %v4827 = vld [vmem:[%s4823 + $0x18] sm:$0xff]
        %v4828 = vld [vmem:[%s4823 + $0x20] sm:$0xff]
        %v4829 = vld [vmem:[%s4823 + $0x28] sm:$0xff]
        %v4830 = vld [vmem:[%s4823 + $0x30] sm:$0xff]
        %v4831 = vld [vmem:[%s4823 + $0x38] sm:$0xff]
        %v4832 = vld [vmem:[%s4823 + $0x40] sm:$0xff]
        %v4833 = vld [vmem:[%s4823 + $0x48] sm:$0xff]
        %v4834 = vld [vmem:[%s4823 + $0x50] sm:$0xff]
        %v4835 = vld [vmem:[%s4823 + $0x58] sm:$0xff]
        %v4836 = vld [vmem:[%s4823 + $0x60] sm:$0xff]
        %v4837 = vld [vmem:[%s4823 + $0x68] sm:$0xff]
        %v4838 = vld [vmem:[%s4823 + $0x70] sm:$0xff]
        %v4839 = vld [vmem:[%s4823 + $0x78] sm:$0xff]
        %v4840 = vld [vmem:[%s4823 + $0x80] sm:$0xff]
        %v4841 = vld [vmem:[%s4823 + $0x88] sm:$0xff]
        %v4842 = vld [vmem:[%s4823 + $0x90] sm:$0xff]
        %v4843 = vld [vmem:[%s4823 + $0x98] sm:$0xff]
        %v4844 = vld [vmem:[%s4823 + $0xa0] sm:$0xff]
        %v4845 = vld [vmem:[%s4823 + $0xa8] sm:$0xff]
        %v4846 = vrot.slane %v3833, 2
        %v4847 = vrot.slane %v3834, 2
        %v4849 = vsel %vm3887, %v4847, 0
        %4851 = vmatprep.subr.mxu0 0.0
        %4852 = vmatpush1.msra.mxu0 %v4824
        %4853 = vmatprep.subr.mxu0 0.0
        %4854 = vmatpush1.msra.mxu0 %v4825
        %4855 = vmatprep.subr.mxu0 0.0
        %4856 = vmatpush1.msra.mxu0 %v4826
        %4857 = vmatprep.subr.mxu0 0.0
        %4858 = vmatpush1.msra.mxu0 %v4827
        %4859 = vmatprep.subr.mxu0 0.0
        %4860 = vmatpush1.msra.mxu0 %v4828
        %4861 = vmatprep.subr.mxu0 0.0
        %4862 = vmatpush1.msra.mxu0 %v4829
        %4863 = vmatprep.subr.mxu0 0.0
        %4864 = vmatpush1.msra.mxu0 %v4830
        %4865 = vmatprep.subr.mxu0 0.0
        %4866 = vmatpush1.msra.mxu0 %v4831
        %4867 = vmatprep.subr.mxu0 0.0
        %4868 = vmatpush1.msra.mxu0 %v4832
        %4869 = vmatprep.subr.mxu0 0.0
        %4870 = vmatpush1.msra.mxu0 %v4833
        %4871 = vmatprep.subr.mxu0 0.0
        %4872 = vmatpush1.msra.mxu0 %v4834
        %4873 = vmatprep.subr.mxu0 0.0
        %4874 = vmatpush1.msra.mxu0 %v4835
        %4875 = vmatprep.subr.mxu0 0.0
        %4876 = vmatpush1.msra.mxu0 %v4836
        %4877 = vmatprep.subr.mxu0 0.0
        %4878 = vmatpush1.msra.mxu0 %v4837
        %4879 = vmatprep.subr.mxu0 0.0
        %4880 = vmatpush1.msra.mxu0 %v4838
        %4881 = vmatprep.subr.mxu0 0.0
        %4882 = vmatpush1.msra.mxu0 %v4839
        %4883 = vmatprep.subr.mxu0 0.0
        %4884 = vmatpush1.msra.mxu0 %v4840
        %4885 = vmatprep.subr.mxu0 0.0
        %4886 = vmatpush1.msra.mxu0 %v4841
        %4887 = vmatprep.subr.mxu0 0.0
        %4888 = vmatpush1.msra.mxu0 %v4842
        %4889 = vmatprep.subr.mxu0 0.0
        %4890 = vmatpush1.msra.mxu0 %v4843
        %4891 = vmatprep.subr.mxu0 0.0
        %4892 = vmatpush1.msra.mxu0 %v4844
        %4893 = vmatprep.subr.mxu0 0.0
        %4894 = vmatpush1.msra.mxu0 %v4845
        %4895 = vmatprep.subr.mxu0 0.0
        %4896 = vmatpush1.msra.mxu0 0.0
        %4897 = vmatprep.subr.mxu0 0.0
        %4898 = vmatpush1.msra.mxu0 0.0
        %4899 = vmatprep.subr.mxu0 0.0
        %4900 = vmatpush1.msra.mxu0 0.0
        %4901 = vmatprep.subr.mxu0 0.0
        %4902 = vmatpush1.msra.mxu0 0.0
        %4903 = vmatprep.subr.mxu0 0.0
        %4904 = vmatpush1.msra.mxu0 0.0
        %4905 = vmatprep.subr.mxu0 0.0
        %4906 = vmatpush1.msra.mxu0 0.0
        %4907 = vmatprep.subr.mxu0 0.0
        %4908 = vmatpush1.msra.mxu0 0.0
        %4909 = vmatprep.subr.mxu0 0.0
        %4910 = vmatpush1.msra.mxu0 0.0
        %4911 = vmatprep.subr.mxu0 0.0
        %4912 = vmatpush1.msra.mxu0 0.0
        %4913 = vmatprep.subr.mxu0 0.0
        %4914 = vmatpush1.msra.mxu0 0.0
        %4915 = vmatprep.mubr.f32.mxu0 %v4849
        %4916 = vmatmul.mubr.f32.gmra.mrb[0].mxu0 %v4846
        %v4917 = vpop.f32.mrb[0].mxu0
        %v4918 = vadd.f32 0.0, %v4917
        %v4919 = vpop.f32.mrb[0].mxu0
        %4920 = vdwg.mxu0
        %v4921 = vadd.f32 %v4822, %v4918
        %s4922 = scalar_lea.vmem %s9, 1936
        %v4923 = vld [vmem:[%s4922] sm:$0xff]
        %v4924 = vld [vmem:[%s4922 + $0x8] sm:$0xff]
        %v4925 = vld [vmem:[%s4922 + $0x10] sm:$0xff]
        %v4926 = vld [vmem:[%s4922 + $0x18] sm:$0xff]
        %v4927 = vld [vmem:[%s4922 + $0x20] sm:$0xff]
        %v4928 = vld [vmem:[%s4922 + $0x28] sm:$0xff]
        %v4929 = vld [vmem:[%s4922 + $0x30] sm:$0xff]
        %v4930 = vld [vmem:[%s4922 + $0x38] sm:$0xff]
        %v4931 = vld [vmem:[%s4922 + $0x40] sm:$0xff]
        %v4932 = vld [vmem:[%s4922 + $0x48] sm:$0xff]
        %v4933 = vld [vmem:[%s4922 + $0x50] sm:$0xff]
        %v4934 = vld [vmem:[%s4922 + $0x58] sm:$0xff]
        %v4935 = vld [vmem:[%s4922 + $0x60] sm:$0xff]
        %v4936 = vld [vmem:[%s4922 + $0x68] sm:$0xff]
        %v4937 = vld [vmem:[%s4922 + $0x70] sm:$0xff]
        %v4938 = vld [vmem:[%s4922 + $0x78] sm:$0xff]
        %v4939 = vld [vmem:[%s4922 + $0x80] sm:$0xff]
        %v4940 = vld [vmem:[%s4922 + $0x88] sm:$0xff]
        %v4941 = vld [vmem:[%s4922 + $0x90] sm:$0xff]
        %v4942 = vld [vmem:[%s4922 + $0x98] sm:$0xff]
        %v4943 = vld [vmem:[%s4922 + $0xa0] sm:$0xff]
        %v4944 = vld [vmem:[%s4922 + $0xa8] sm:$0xff]
        %v4945 = vrot.slane %v3833, 3
        %v4946 = vrot.slane %v3834, 3
        %v4948 = vsel %vm3887, %v4946, 0
        %4950 = vmatprep.subr.mxu0 0.0
        %4951 = vmatpush1.msra.mxu0 %v4923
        %4952 = vmatprep.subr.mxu0 0.0
        %4953 = vmatpush1.msra.mxu0 %v4924
        %4954 = vmatprep.subr.mxu0 0.0
        %4955 = vmatpush1.msra.mxu0 %v4925
        %4956 = vmatprep.subr.mxu0 0.0
        %4957 = vmatpush1.msra.mxu0 %v4926
        %4958 = vmatprep.subr.mxu0 0.0
        %4959 = vmatpush1.msra.mxu0 %v4927
        %4960 = vmatprep.subr.mxu0 0.0
        %4961 = vmatpush1.msra.mxu0 %v4928
        %4962 = vmatprep.subr.mxu0 0.0
        %4963 = vmatpush1.msra.mxu0 %v4929
        %4964 = vmatprep.subr.mxu0 0.0
        %4965 = vmatpush1.msra.mxu0 %v4930
        %4966 = vmatprep.subr.mxu0 0.0
        %4967 = vmatpush1.msra.mxu0 %v4931
        %4968 = vmatprep.subr.mxu0 0.0
        %4969 = vmatpush1.msra.mxu0 %v4932
        %4970 = vmatprep.subr.mxu0 0.0
        %4971 = vmatpush1.msra.mxu0 %v4933
        %4972 = vmatprep.subr.mxu0 0.0
        %4973 = vmatpush1.msra.mxu0 %v4934
        %4974 = vmatprep.subr.mxu0 0.0
        %4975 = vmatpush1.msra.mxu0 %v4935
        %4976 = vmatprep.subr.mxu0 0.0
        %4977 = vmatpush1.msra.mxu0 %v4936
        %4978 = vmatprep.subr.mxu0 0.0
        %4979 = vmatpush1.msra.mxu0 %v4937
        %4980 = vmatprep.subr.mxu0 0.0
        %4981 = vmatpush1.msra.mxu0 %v4938
        %4982 = vmatprep.subr.mxu0 0.0
        %4983 = vmatpush1.msra.mxu0 %v4939
        %4984 = vmatprep.subr.mxu0 0.0
        %4985 = vmatpush1.msra.mxu0 %v4940
        %4986 = vmatprep.subr.mxu0 0.0
        %4987 = vmatpush1.msra.mxu0 %v4941
        %4988 = vmatprep.subr.mxu0 0.0
        %4989 = vmatpush1.msra.mxu0 %v4942
        %4990 = vmatprep.subr.mxu0 0.0
        %4991 = vmatpush1.msra.mxu0 %v4943
        %4992 = vmatprep.subr.mxu0 0.0
        %4993 = vmatpush1.msra.mxu0 %v4944
        %4994 = vmatprep.subr.mxu0 0.0
        %4995 = vmatpush1.msra.mxu0 0.0
        %4996 = vmatprep.subr.mxu0 0.0
        %4997 = vmatpush1.msra.mxu0 0.0
        %4998 = vmatprep.subr.mxu0 0.0
        %4999 = vmatpush1.msra.mxu0 0.0
        %5000 = vmatprep.subr.mxu0 0.0
        %5001 = vmatpush1.msra.mxu0 0.0
        %5002 = vmatprep.subr.mxu0 0.0
        %5003 = vmatpush1.msra.mxu0 0.0
        %5004 = vmatprep.subr.mxu0 0.0
        %5005 = vmatpush1.msra.mxu0 0.0
        %5006 = vmatprep.subr.mxu0 0.0
        %5007 = vmatpush1.msra.mxu0 0.0
        %5008 = vmatprep.subr.mxu0 0.0
        %5009 = vmatpush1.msra.mxu0 0.0
        %5010 = vmatprep.subr.mxu0 0.0
        %5011 = vmatpush1.msra.mxu0 0.0
        %5012 = vmatprep.subr.mxu0 0.0
        %5013 = vmatpush1.msra.mxu0 0.0
        %5014 = vmatprep.mubr.f32.mxu0 %v4948
        %5015 = vmatmul.mubr.f32.gmra.mrb[0].mxu0 %v4945
        %v5016 = vpop.f32.mrb[0].mxu0
        %v5017 = vadd.f32 0.0, %v5016
        %v5018 = vpop.f32.mrb[0].mxu0
        %5019 = vdwg.mxu0
        %v5020 = vadd.f32 %v4921, %v5017
        %s5021 = scalar_lea.vmem %s9, 2112
        %v5022 = vld [vmem:[%s5021] sm:$0xff]
        %v5023 = vld [vmem:[%s5021 + $0x8] sm:$0xff]
        %v5024 = vld [vmem:[%s5021 + $0x10] sm:$0xff]
        %v5025 = vld [vmem:[%s5021 + $0x18] sm:$0xff]
        %v5026 = vld [vmem:[%s5021 + $0x20] sm:$0xff]
        %v5027 = vld [vmem:[%s5021 + $0x28] sm:$0xff]
        %v5028 = vld [vmem:[%s5021 + $0x30] sm:$0xff]
        %v5029 = vld [vmem:[%s5021 + $0x38] sm:$0xff]
        %v5030 = vld [vmem:[%s5021 + $0x40] sm:$0xff]
        %v5031 = vld [vmem:[%s5021 + $0x48] sm:$0xff]
        %v5032 = vld [vmem:[%s5021 + $0x50] sm:$0xff]
        %v5033 = vld [vmem:[%s5021 + $0x58] sm:$0xff]
        %v5034 = vld [vmem:[%s5021 + $0x60] sm:$0xff]
        %v5035 = vld [vmem:[%s5021 + $0x68] sm:$0xff]
        %v5036 = vld [vmem:[%s5021 + $0x70] sm:$0xff]
        %v5037 = vld [vmem:[%s5021 + $0x78] sm:$0xff]
        %v5038 = vld [vmem:[%s5021 + $0x80] sm:$0xff]
        %v5039 = vld [vmem:[%s5021 + $0x88] sm:$0xff]
        %v5040 = vld [vmem:[%s5021 + $0x90] sm:$0xff]
        %v5041 = vld [vmem:[%s5021 + $0x98] sm:$0xff]
        %v5042 = vld [vmem:[%s5021 + $0xa0] sm:$0xff]
        %v5043 = vld [vmem:[%s5021 + $0xa8] sm:$0xff]
        %v5044 = vrot.slane %v3833, 4
        %v5045 = vrot.slane %v3834, 4
        %v5047 = vsel %vm3887, %v5045, 0
        %5049 = vmatprep.subr.mxu0 0.0
        %5050 = vmatpush1.msra.mxu0 %v5022
        %5051 = vmatprep.subr.mxu0 0.0
        %5052 = vmatpush1.msra.mxu0 %v5023
        %5053 = vmatprep.subr.mxu0 0.0
        %5054 = vmatpush1.msra.mxu0 %v5024
        %5055 = vmatprep.subr.mxu0 0.0
        %5056 = vmatpush1.msra.mxu0 %v5025
        %5057 = vmatprep.subr.mxu0 0.0
        %5058 = vmatpush1.msra.mxu0 %v5026
        %5059 = vmatprep.subr.mxu0 0.0
        %5060 = vmatpush1.msra.mxu0 %v5027
        %5061 = vmatprep.subr.mxu0 0.0
        %5062 = vmatpush1.msra.mxu0 %v5028
        %5063 = vmatprep.subr.mxu0 0.0
        %5064 = vmatpush1.msra.mxu0 %v5029
        %5065 = vmatprep.subr.mxu0 0.0
        %5066 = vmatpush1.msra.mxu0 %v5030
        %5067 = vmatprep.subr.mxu0 0.0
        %5068 = vmatpush1.msra.mxu0 %v5031
        %5069 = vmatprep.subr.mxu0 0.0
        %5070 = vmatpush1.msra.mxu0 %v5032
        %5071 = vmatprep.subr.mxu0 0.0
        %5072 = vmatpush1.msra.mxu0 %v5033
        %5073 = vmatprep.subr.mxu0 0.0
        %5074 = vmatpush1.msra.mxu0 %v5034
        %5075 = vmatprep.subr.mxu0 0.0
        %5076 = vmatpush1.msra.mxu0 %v5035
        %5077 = vmatprep.subr.mxu0 0.0
        %5078 = vmatpush1.msra.mxu0 %v5036
        %5079 = vmatprep.subr.mxu0 0.0
        %5080 = vmatpush1.msra.mxu0 %v5037
        %5081 = vmatprep.subr.mxu0 0.0
        %5082 = vmatpush1.msra.mxu0 %v5038
        %5083 = vmatprep.subr.mxu0 0.0
        %5084 = vmatpush1.msra.mxu0 %v5039
        %5085 = vmatprep.subr.mxu0 0.0
        %5086 = vmatpush1.msra.mxu0 %v5040
        %5087 = vmatprep.subr.mxu0 0.0
        %5088 = vmatpush1.msra.mxu0 %v5041
        %5089 = vmatprep.subr.mxu0 0.0
        %5090 = vmatpush1.msra.mxu0 %v5042
        %5091 = vmatprep.subr.mxu0 0.0
        %5092 = vmatpush1.msra.mxu0 %v5043
        %5093 = vmatprep.subr.mxu0 0.0
        %5094 = vmatpush1.msra.mxu0 0.0
        %5095 = vmatprep.subr.mxu0 0.0
        %5096 = vmatpush1.msra.mxu0 0.0
        %5097 = vmatprep.subr.mxu0 0.0
        %5098 = vmatpush1.msra.mxu0 0.0
        %5099 = vmatprep.subr.mxu0 0.0
        %5100 = vmatpush1.msra.mxu0 0.0
        %5101 = vmatprep.subr.mxu0 0.0
        %5102 = vmatpush1.msra.mxu0 0.0
        %5103 = vmatprep.subr.mxu0 0.0
        %5104 = vmatpush1.msra.mxu0 0.0
        %5105 = vmatprep.subr.mxu0 0.0
        %5106 = vmatpush1.msra.mxu0 0.0
        %5107 = vmatprep.subr.mxu0 0.0
        %5108 = vmatpush1.msra.mxu0 0.0
        %5109 = vmatprep.subr.mxu0 0.0
        %5110 = vmatpush1.msra.mxu0 0.0
        %5111 = vmatprep.subr.mxu0 0.0
        %5112 = vmatpush1.msra.mxu0 0.0
        %5113 = vmatprep.mubr.f32.mxu0 %v5047
        %5114 = vmatmul.mubr.f32.gmra.mrb[0].mxu0 %v5044
        %v5115 = vpop.f32.mrb[0].mxu0
        %v5116 = vadd.f32 0.0, %v5115
        %v5117 = vpop.f32.mrb[0].mxu0
        %5118 = vdwg.mxu0
        %v5119 = vadd.f32 %v5020, %v5116
        %s5120 = scalar_lea.vmem %s9, 2288
        %v5121 = vld [vmem:[%s5120] sm:$0xff]
        %v5122 = vld [vmem:[%s5120 + $0x8] sm:$0xff]
        %v5123 = vld [vmem:[%s5120 + $0x10] sm:$0xff]
        %v5124 = vld [vmem:[%s5120 + $0x18] sm:$0xff]
        %v5125 = vld [vmem:[%s5120 + $0x20] sm:$0xff]
        %v5126 = vld [vmem:[%s5120 + $0x28] sm:$0xff]
        %v5127 = vld [vmem:[%s5120 + $0x30] sm:$0xff]
        %v5128 = vld [vmem:[%s5120 + $0x38] sm:$0xff]
        %v5129 = vld [vmem:[%s5120 + $0x40] sm:$0xff]
        %v5130 = vld [vmem:[%s5120 + $0x48] sm:$0xff]
        %v5131 = vld [vmem:[%s5120 + $0x50] sm:$0xff]
        %v5132 = vld [vmem:[%s5120 + $0x58] sm:$0xff]
        %v5133 = vld [vmem:[%s5120 + $0x60] sm:$0xff]
        %v5134 = vld [vmem:[%s5120 + $0x68] sm:$0xff]
        %v5135 = vld [vmem:[%s5120 + $0x70] sm:$0xff]
        %v5136 = vld [vmem:[%s5120 + $0x78] sm:$0xff]
        %v5137 = vld [vmem:[%s5120 + $0x80] sm:$0xff]
        %v5138 = vld [vmem:[%s5120 + $0x88] sm:$0xff]
        %v5139 = vld [vmem:[%s5120 + $0x90] sm:$0xff]
        %v5140 = vld [vmem:[%s5120 + $0x98] sm:$0xff]
        %v5141 = vld [vmem:[%s5120 + $0xa0] sm:$0xff]
        %v5142 = vld [vmem:[%s5120 + $0xa8] sm:$0xff]
        %v5143 = vrot.slane %v3833, 5
        %v5144 = vrot.slane %v3834, 5
        %v5146 = vsel %vm3887, %v5144, 0
        %5148 = vmatprep.subr.mxu0 0.0
        %5149 = vmatpush1.msra.mxu0 %v5121
        %5150 = vmatprep.subr.mxu0 0.0
        %5151 = vmatpush1.msra.mxu0 %v5122
        %5152 = vmatprep.subr.mxu0 0.0
        %5153 = vmatpush1.msra.mxu0 %v5123
        %5154 = vmatprep.subr.mxu0 0.0
        %5155 = vmatpush1.msra.mxu0 %v5124
        %5156 = vmatprep.subr.mxu0 0.0
        %5157 = vmatpush1.msra.mxu0 %v5125
        %5158 = vmatprep.subr.mxu0 0.0
        %5159 = vmatpush1.msra.mxu0 %v5126
        %5160 = vmatprep.subr.mxu0 0.0
        %5161 = vmatpush1.msra.mxu0 %v5127
        %5162 = vmatprep.subr.mxu0 0.0
        %5163 = vmatpush1.msra.mxu0 %v5128
        %5164 = vmatprep.subr.mxu0 0.0
        %5165 = vmatpush1.msra.mxu0 %v5129
        %5166 = vmatprep.subr.mxu0 0.0
        %5167 = vmatpush1.msra.mxu0 %v5130
        %5168 = vmatprep.subr.mxu0 0.0
        %5169 = vmatpush1.msra.mxu0 %v5131
        %5170 = vmatprep.subr.mxu0 0.0
        %5171 = vmatpush1.msra.mxu0 %v5132
        %5172 = vmatprep.subr.mxu0 0.0
        %5173 = vmatpush1.msra.mxu0 %v5133
        %5174 = vmatprep.subr.mxu0 0.0
        %5175 = vmatpush1.msra.mxu0 %v5134
        %5176 = vmatprep.subr.mxu0 0.0
        %5177 = vmatpush1.msra.mxu0 %v5135
        %5178 = vmatprep.subr.mxu0 0.0
        %5179 = vmatpush1.msra.mxu0 %v5136
        %5180 = vmatprep.subr.mxu0 0.0
        %5181 = vmatpush1.msra.mxu0 %v5137
        %5182 = vmatprep.subr.mxu0 0.0
        %5183 = vmatpush1.msra.mxu0 %v5138
        %5184 = vmatprep.subr.mxu0 0.0
        %5185 = vmatpush1.msra.mxu0 %v5139
        %5186 = vmatprep.subr.mxu0 0.0
        %5187 = vmatpush1.msra.mxu0 %v5140
        %5188 = vmatprep.subr.mxu0 0.0
        %5189 = vmatpush1.msra.mxu0 %v5141
        %5190 = vmatprep.subr.mxu0 0.0
        %5191 = vmatpush1.msra.mxu0 %v5142
        %5192 = vmatprep.subr.mxu0 0.0
        %5193 = vmatpush1.msra.mxu0 0.0
        %5194 = vmatprep.subr.mxu0 0.0
        %5195 = vmatpush1.msra.mxu0 0.0
        %5196 = vmatprep.subr.mxu0 0.0
        %5197 = vmatpush1.msra.mxu0 0.0
        %5198 = vmatprep.subr.mxu0 0.0
        %5199 = vmatpush1.msra.mxu0 0.0
        %5200 = vmatprep.subr.mxu0 0.0
        %5201 = vmatpush1.msra.mxu0 0.0
        %5202 = vmatprep.subr.mxu0 0.0
        %5203 = vmatpush1.msra.mxu0 0.0
        %5204 = vmatprep.subr.mxu0 0.0
        %5205 = vmatpush1.msra.mxu0 0.0
        %5206 = vmatprep.subr.mxu0 0.0
        %5207 = vmatpush1.msra.mxu0 0.0
        %5208 = vmatprep.subr.mxu0 0.0
        %5209 = vmatpush1.msra.mxu0 0.0
        %5210 = vmatprep.subr.mxu0 0.0
        %5211 = vmatpush1.msra.mxu0 0.0
        %5212 = vmatprep.mubr.f32.mxu0 %v5146
        %5213 = vmatmul.mubr.f32.gmra.mrb[0].mxu0 %v5143
        %v5214 = vpop.f32.mrb[0].mxu0
        %v5215 = vadd.f32 0.0, %v5214
        %v5216 = vpop.f32.mrb[0].mxu0
        %5217 = vdwg.mxu0
        %v5218 = vadd.f32 %v5119, %v5215
        %s5219 = scalar_lea.vmem %s9, 2464
        %v5220 = vld [vmem:[%s5219] sm:$0xff]
        %v5221 = vld [vmem:[%s5219 + $0x8] sm:$0xff]
        %v5222 = vld [vmem:[%s5219 + $0x10] sm:$0xff]
        %v5223 = vld [vmem:[%s5219 + $0x18] sm:$0xff]
        %v5224 = vld [vmem:[%s5219 + $0x20] sm:$0xff]
        %v5225 = vld [vmem:[%s5219 + $0x28] sm:$0xff]
        %v5226 = vld [vmem:[%s5219 + $0x30] sm:$0xff]
        %v5227 = vld [vmem:[%s5219 + $0x38] sm:$0xff]
        %v5228 = vld [vmem:[%s5219 + $0x40] sm:$0xff]
        %v5229 = vld [vmem:[%s5219 + $0x48] sm:$0xff]
        %v5230 = vld [vmem:[%s5219 + $0x50] sm:$0xff]
        %v5231 = vld [vmem:[%s5219 + $0x58] sm:$0xff]
        %v5232 = vld [vmem:[%s5219 + $0x60] sm:$0xff]
        %v5233 = vld [vmem:[%s5219 + $0x68] sm:$0xff]
        %v5234 = vld [vmem:[%s5219 + $0x70] sm:$0xff]
        %v5235 = vld [vmem:[%s5219 + $0x78] sm:$0xff]
        %v5236 = vld [vmem:[%s5219 + $0x80] sm:$0xff]
        %v5237 = vld [vmem:[%s5219 + $0x88] sm:$0xff]
        %v5238 = vld [vmem:[%s5219 + $0x90] sm:$0xff]
        %v5239 = vld [vmem:[%s5219 + $0x98] sm:$0xff]
        %v5240 = vld [vmem:[%s5219 + $0xa0] sm:$0xff]
        %v5241 = vld [vmem:[%s5219 + $0xa8] sm:$0xff]
        %v5242 = vrot.slane %v3833, 6
        %v5243 = vrot.slane %v3834, 6
        %v5245 = vsel %vm3887, %v5243, 0
        %5247 = vmatprep.subr.mxu0 0.0
        %5248 = vmatpush1.msra.mxu0 %v5220
        %5249 = vmatprep.subr.mxu0 0.0
        %5250 = vmatpush1.msra.mxu0 %v5221
        %5251 = vmatprep.subr.mxu0 0.0
        %5252 = vmatpush1.msra.mxu0 %v5222
        %5253 = vmatprep.subr.mxu0 0.0
        %5254 = vmatpush1.msra.mxu0 %v5223
        %5255 = vmatprep.subr.mxu0 0.0
        %5256 = vmatpush1.msra.mxu0 %v5224
        %5257 = vmatprep.subr.mxu0 0.0
        %5258 = vmatpush1.msra.mxu0 %v5225
        %5259 = vmatprep.subr.mxu0 0.0
        %5260 = vmatpush1.msra.mxu0 %v5226
        %5261 = vmatprep.subr.mxu0 0.0
        %5262 = vmatpush1.msra.mxu0 %v5227
        %5263 = vmatprep.subr.mxu0 0.0
        %5264 = vmatpush1.msra.mxu0 %v5228
        %5265 = vmatprep.subr.mxu0 0.0
        %5266 = vmatpush1.msra.mxu0 %v5229
        %5267 = vmatprep.subr.mxu0 0.0
        %5268 = vmatpush1.msra.mxu0 %v5230
        %5269 = vmatprep.subr.mxu0 0.0
        %5270 = vmatpush1.msra.mxu0 %v5231
        %5271 = vmatprep.subr.mxu0 0.0
        %5272 = vmatpush1.msra.mxu0 %v5232
        %5273 = vmatprep.subr.mxu0 0.0
        %5274 = vmatpush1.msra.mxu0 %v5233
        %5275 = vmatprep.subr.mxu0 0.0
        %5276 = vmatpush1.msra.mxu0 %v5234
        %5277 = vmatprep.subr.mxu0 0.0
        %5278 = vmatpush1.msra.mxu0 %v5235
        %5279 = vmatprep.subr.mxu0 0.0
        %5280 = vmatpush1.msra.mxu0 %v5236
        %5281 = vmatprep.subr.mxu0 0.0
        %5282 = vmatpush1.msra.mxu0 %v5237
        %5283 = vmatprep.subr.mxu0 0.0
        %5284 = vmatpush1.msra.mxu0 %v5238
        %5285 = vmatprep.subr.mxu0 0.0
        %5286 = vmatpush1.msra.mxu0 %v5239
        %5287 = vmatprep.subr.mxu0 0.0
        %5288 = vmatpush1.msra.mxu0 %v5240
        %5289 = vmatprep.subr.mxu0 0.0
        %5290 = vmatpush1.msra.mxu0 %v5241
        %5291 = vmatprep.subr.mxu0 0.0
        %5292 = vmatpush1.msra.mxu0 0.0
        %5293 = vmatprep.subr.mxu0 0.0
        %5294 = vmatpush1.msra.mxu0 0.0
        %5295 = vmatprep.subr.mxu0 0.0
        %5296 = vmatpush1.msra.mxu0 0.0
        %5297 = vmatprep.subr.mxu0 0.0
        %5298 = vmatpush1.msra.mxu0 0.0
        %5299 = vmatprep.subr.mxu0 0.0
        %5300 = vmatpush1.msra.mxu0 0.0
        %5301 = vmatprep.subr.mxu0 0.0
        %5302 = vmatpush1.msra.mxu0 0.0
        %5303 = vmatprep.subr.mxu0 0.0
        %5304 = vmatpush1.msra.mxu0 0.0
        %5305 = vmatprep.subr.mxu0 0.0
        %5306 = vmatpush1.msra.mxu0 0.0
        %5307 = vmatprep.subr.mxu0 0.0
        %5308 = vmatpush1.msra.mxu0 0.0
        %5309 = vmatprep.subr.mxu0 0.0
        %5310 = vmatpush1.msra.mxu0 0.0
        %5311 = vmatprep.mubr.f32.mxu0 %v5245
        %5312 = vmatmul.mubr.f32.gmra.mrb[0].mxu0 %v5242
        %v5313 = vpop.f32.mrb[0].mxu0
        %v5314 = vadd.f32 0.0, %v5313
        %v5315 = vpop.f32.mrb[0].mxu0
        %5316 = vdwg.mxu0
        %v5317 = vadd.f32 %v5218, %v5314
        %s5318 = scalar_lea.vmem %s9, 2640
        %v5319 = vld [vmem:[%s5318] sm:$0xff]
        %v5320 = vld [vmem:[%s5318 + $0x8] sm:$0xff]
        %v5321 = vld [vmem:[%s5318 + $0x10] sm:$0xff]
        %v5322 = vld [vmem:[%s5318 + $0x18] sm:$0xff]
        %v5323 = vld [vmem:[%s5318 + $0x20] sm:$0xff]
        %v5324 = vld [vmem:[%s5318 + $0x28] sm:$0xff]
        %v5325 = vld [vmem:[%s5318 + $0x30] sm:$0xff]
        %v5326 = vld [vmem:[%s5318 + $0x38] sm:$0xff]
        %v5327 = vld [vmem:[%s5318 + $0x40] sm:$0xff]
        %v5328 = vld [vmem:[%s5318 + $0x48] sm:$0xff]
        %v5329 = vld [vmem:[%s5318 + $0x50] sm:$0xff]
        %v5330 = vld [vmem:[%s5318 + $0x58] sm:$0xff]
        %v5331 = vld [vmem:[%s5318 + $0x60] sm:$0xff]
        %v5332 = vld [vmem:[%s5318 + $0x68] sm:$0xff]
        %v5333 = vld [vmem:[%s5318 + $0x70] sm:$0xff]
        %v5334 = vld [vmem:[%s5318 + $0x78] sm:$0xff]
        %v5335 = vld [vmem:[%s5318 + $0x80] sm:$0xff]
        %v5336 = vld [vmem:[%s5318 + $0x88] sm:$0xff]
        %v5337 = vld [vmem:[%s5318 + $0x90] sm:$0xff]
        %v5338 = vld [vmem:[%s5318 + $0x98] sm:$0xff]
        %v5339 = vld [vmem:[%s5318 + $0xa0] sm:$0xff]
        %v5340 = vld [vmem:[%s5318 + $0xa8] sm:$0xff]
        %v5341 = vrot.slane %v3833, 7
        %v5342 = vrot.slane %v3834, 7
        %v5344 = vsel %vm3887, %v5342, 0
        %5346 = vmatprep.subr.mxu0 0.0
        %5347 = vmatpush1.msra.mxu0 %v5319
        %5348 = vmatprep.subr.mxu0 0.0
        %5349 = vmatpush1.msra.mxu0 %v5320
        %5350 = vmatprep.subr.mxu0 0.0
        %5351 = vmatpush1.msra.mxu0 %v5321
        %5352 = vmatprep.subr.mxu0 0.0
        %5353 = vmatpush1.msra.mxu0 %v5322
        %5354 = vmatprep.subr.mxu0 0.0
        %5355 = vmatpush1.msra.mxu0 %v5323
        %5356 = vmatprep.subr.mxu0 0.0
        %5357 = vmatpush1.msra.mxu0 %v5324
        %5358 = vmatprep.subr.mxu0 0.0
        %5359 = vmatpush1.msra.mxu0 %v5325
        %5360 = vmatprep.subr.mxu0 0.0
        %5361 = vmatpush1.msra.mxu0 %v5326
        %5362 = vmatprep.subr.mxu0 0.0
        %5363 = vmatpush1.msra.mxu0 %v5327
        %5364 = vmatprep.subr.mxu0 0.0
        %5365 = vmatpush1.msra.mxu0 %v5328
        %5366 = vmatprep.subr.mxu0 0.0
        %5367 = vmatpush1.msra.mxu0 %v5329
        %5368 = vmatprep.subr.mxu0 0.0
        %5369 = vmatpush1.msra.mxu0 %v5330
        %5370 = vmatprep.subr.mxu0 0.0
        %5371 = vmatpush1.msra.mxu0 %v5331
        %5372 = vmatprep.subr.mxu0 0.0
        %5373 = vmatpush1.msra.mxu0 %v5332
        %5374 = vmatprep.subr.mxu0 0.0
        %5375 = vmatpush1.msra.mxu0 %v5333
        %5376 = vmatprep.subr.mxu0 0.0
        %5377 = vmatpush1.msra.mxu0 %v5334
        %5378 = vmatprep.subr.mxu0 0.0
        %5379 = vmatpush1.msra.mxu0 %v5335
        %5380 = vmatprep.subr.mxu0 0.0
        %5381 = vmatpush1.msra.mxu0 %v5336
        %5382 = vmatprep.subr.mxu0 0.0
        %5383 = vmatpush1.msra.mxu0 %v5337
        %5384 = vmatprep.subr.mxu0 0.0
        %5385 = vmatpush1.msra.mxu0 %v5338
        %5386 = vmatprep.subr.mxu0 0.0
        %5387 = vmatpush1.msra.mxu0 %v5339
        %5388 = vmatprep.subr.mxu0 0.0
        %5389 = vmatpush1.msra.mxu0 %v5340
        %5390 = vmatprep.subr.mxu0 0.0
        %5391 = vmatpush1.msra.mxu0 0.0
        %5392 = vmatprep.subr.mxu0 0.0
        %5393 = vmatpush1.msra.mxu0 0.0
        %5394 = vmatprep.subr.mxu0 0.0
        %5395 = vmatpush1.msra.mxu0 0.0
        %5396 = vmatprep.subr.mxu0 0.0
        %5397 = vmatpush1.msra.mxu0 0.0
        %5398 = vmatprep.subr.mxu0 0.0
        %5399 = vmatpush1.msra.mxu0 0.0
        %5400 = vmatprep.subr.mxu0 0.0
        %5401 = vmatpush1.msra.mxu0 0.0
        %5402 = vmatprep.subr.mxu0 0.0
        %5403 = vmatpush1.msra.mxu0 0.0
        %5404 = vmatprep.subr.mxu0 0.0
        %5405 = vmatpush1.msra.mxu0 0.0
        %5406 = vmatprep.subr.mxu0 0.0
        %5407 = vmatpush1.msra.mxu0 0.0
        %5408 = vmatprep.subr.mxu0 0.0
        %5409 = vmatpush1.msra.mxu0 0.0
        %5410 = vmatprep.mubr.f32.mxu0 %v5344
        %5411 = vmatmul.mubr.f32.gmra.mrb[0].mxu0 %v5341
        %v5412 = vpop.f32.mrb[0].mxu0
        %v5413 = vadd.f32 0.0, %v5412
        %v5414 = vpop.f32.mrb[0].mxu0
        %5415 = vdwg.mxu0
        %v5416 = vadd.f32 %v5317, %v5413
        %s5417 = scalar_lea.vmem %s9, 2816
        %v5418 = vld [vmem:[%s5417] sm:$0xff]
        %v5419 = vld [vmem:[%s5417 + $0x8] sm:$0xff]
        %v5420 = vld [vmem:[%s5417 + $0x10] sm:$0xff]
        %v5421 = vld [vmem:[%s5417 + $0x18] sm:$0xff]
        %v5422 = vld [vmem:[%s5417 + $0x20] sm:$0xff]
        %v5423 = vld [vmem:[%s5417 + $0x28] sm:$0xff]
        %v5424 = vld [vmem:[%s5417 + $0x30] sm:$0xff]
        %v5425 = vld [vmem:[%s5417 + $0x38] sm:$0xff]
        %v5426 = vld [vmem:[%s5417 + $0x40] sm:$0xff]
        %v5427 = vld [vmem:[%s5417 + $0x48] sm:$0xff]
        %v5428 = vld [vmem:[%s5417 + $0x50] sm:$0xff]
        %v5429 = vld [vmem:[%s5417 + $0x58] sm:$0xff]
        %v5430 = vld [vmem:[%s5417 + $0x60] sm:$0xff]
        %v5431 = vld [vmem:[%s5417 + $0x68] sm:$0xff]
        %v5432 = vld [vmem:[%s5417 + $0x70] sm:$0xff]
        %v5433 = vld [vmem:[%s5417 + $0x78] sm:$0xff]
        %v5434 = vld [vmem:[%s5417 + $0x80] sm:$0xff]
        %v5435 = vld [vmem:[%s5417 + $0x88] sm:$0xff]
        %v5436 = vld [vmem:[%s5417 + $0x90] sm:$0xff]
        %v5437 = vld [vmem:[%s5417 + $0x98] sm:$0xff]
        %v5438 = vld [vmem:[%s5417 + $0xa0] sm:$0xff]
        %v5439 = vld [vmem:[%s5417 + $0xa8] sm:$0xff]
        %v5441 = vsel %vm3887, %v3836, 0
        %5443 = vmatprep.subr.mxu0 0.0
        %5444 = vmatpush1.msra.mxu0 %v5418
        %5445 = vmatprep.subr.mxu0 0.0
        %5446 = vmatpush1.msra.mxu0 %v5419
        %5447 = vmatprep.subr.mxu0 0.0
        %5448 = vmatpush1.msra.mxu0 %v5420
        %5449 = vmatprep.subr.mxu0 0.0
        %5450 = vmatpush1.msra.mxu0 %v5421
        %5451 = vmatprep.subr.mxu0 0.0
        %5452 = vmatpush1.msra.mxu0 %v5422
        %5453 = vmatprep.subr.mxu0 0.0
        %5454 = vmatpush1.msra.mxu0 %v5423
        %5455 = vmatprep.subr.mxu0 0.0
        %5456 = vmatpush1.msra.mxu0 %v5424
        %5457 = vmatprep.subr.mxu0 0.0
        %5458 = vmatpush1.msra.mxu0 %v5425
        %5459 = vmatprep.subr.mxu0 0.0
        %5460 = vmatpush1.msra.mxu0 %v5426
        %5461 = vmatprep.subr.mxu0 0.0
        %5462 = vmatpush1.msra.mxu0 %v5427
        %5463 = vmatprep.subr.mxu0 0.0
        %5464 = vmatpush1.msra.mxu0 %v5428
        %5465 = vmatprep.subr.mxu0 0.0
        %5466 = vmatpush1.msra.mxu0 %v5429
        %5467 = vmatprep.subr.mxu0 0.0
        %5468 = vmatpush1.msra.mxu0 %v5430
        %5469 = vmatprep.subr.mxu0 0.0
        %5470 = vmatpush1.msra.mxu0 %v5431
        %5471 = vmatprep.subr.mxu0 0.0
        %5472 = vmatpush1.msra.mxu0 %v5432
        %5473 = vmatprep.subr.mxu0 0.0
        %5474 = vmatpush1.msra.mxu0 %v5433
        %5475 = vmatprep.subr.mxu0 0.0
        %5476 = vmatpush1.msra.mxu0 %v5434
        %5477 = vmatprep.subr.mxu0 0.0
        %5478 = vmatpush1.msra.mxu0 %v5435
        %5479 = vmatprep.subr.mxu0 0.0
        %5480 = vmatpush1.msra.mxu0 %v5436
        %5481 = vmatprep.subr.mxu0 0.0
        %5482 = vmatpush1.msra.mxu0 %v5437
        %5483 = vmatprep.subr.mxu0 0.0
        %5484 = vmatpush1.msra.mxu0 %v5438
        %5485 = vmatprep.subr.mxu0 0.0
        %5486 = vmatpush1.msra.mxu0 %v5439
        %5487 = vmatprep.subr.mxu0 0.0
        %5488 = vmatpush1.msra.mxu0 0.0
        %5489 = vmatprep.subr.mxu0 0.0
        %5490 = vmatpush1.msra.mxu0 0.0
        %5491 = vmatprep.subr.mxu0 0.0
        %5492 = vmatpush1.msra.mxu0 0.0
        %5493 = vmatprep.subr.mxu0 0.0
        %5494 = vmatpush1.msra.mxu0 0.0
        %5495 = vmatprep.subr.mxu0 0.0
        %5496 = vmatpush1.msra.mxu0 0.0
        %5497 = vmatprep.subr.mxu0 0.0
        %5498 = vmatpush1.msra.mxu0 0.0
        %5499 = vmatprep.subr.mxu0 0.0
        %5500 = vmatpush1.msra.mxu0 0.0
        %5501 = vmatprep.subr.mxu0 0.0
        %5502 = vmatpush1.msra.mxu0 0.0
        %5503 = vmatprep.subr.mxu0 0.0
        %5504 = vmatpush1.msra.mxu0 0.0
        %5505 = vmatprep.subr.mxu0 0.0
        %5506 = vmatpush1.msra.mxu0 0.0
        %5507 = vmatprep.mubr.f32.mxu0 %v5441
        %5508 = vmatmul.mubr.f32.gmra.mrb[0].mxu0 %v3835
        %v5509 = vpop.f32.mrb[0].mxu0
        %v5510 = vadd.f32 0.0, %v5509
        %v5511 = vpop.f32.mrb[0].mxu0
        %5512 = vdwg.mxu0
        %v5513 = vadd.f32 %v5416, %v5510
        %s5514 = scalar_lea.vmem %s9, 2992
        %v5515 = vld [vmem:[%s5514] sm:$0xff]
        %v5516 = vld [vmem:[%s5514 + $0x8] sm:$0xff]
        %v5517 = vld [vmem:[%s5514 + $0x10] sm:$0xff]
        %v5518 = vld [vmem:[%s5514 + $0x18] sm:$0xff]
        %v5519 = vld [vmem:[%s5514 + $0x20] sm:$0xff]
        %v5520 = vld [vmem:[%s5514 + $0x28] sm:$0xff]
        %v5521 = vld [vmem:[%s5514 + $0x30] sm:$0xff]
        %v5522 = vld [vmem:[%s5514 + $0x38] sm:$0xff]
        %v5523 = vld [vmem:[%s5514 + $0x40] sm:$0xff]
        %v5524 = vld [vmem:[%s5514 + $0x48] sm:$0xff]
        %v5525 = vld [vmem:[%s5514 + $0x50] sm:$0xff]
        %v5526 = vld [vmem:[%s5514 + $0x58] sm:$0xff]
        %v5527 = vld [vmem:[%s5514 + $0x60] sm:$0xff]
        %v5528 = vld [vmem:[%s5514 + $0x68] sm:$0xff]
        %v5529 = vld [vmem:[%s5514 + $0x70] sm:$0xff]
        %v5530 = vld [vmem:[%s5514 + $0x78] sm:$0xff]
        %v5531 = vld [vmem:[%s5514 + $0x80] sm:$0xff]
        %v5532 = vld [vmem:[%s5514 + $0x88] sm:$0xff]
        %v5533 = vld [vmem:[%s5514 + $0x90] sm:$0xff]
        %v5534 = vld [vmem:[%s5514 + $0x98] sm:$0xff]
        %v5535 = vld [vmem:[%s5514 + $0xa0] sm:$0xff]
        %v5536 = vld [vmem:[%s5514 + $0xa8] sm:$0xff]
        %v5538 = vrot.slane %v3835, 1
        %v5539 = vrot.slane %v3836, 1
        %v5541 = vsel %vm3887, %v5539, 0
        %5543 = vmatprep.subr.mxu0 0.0
        %5544 = vmatpush1.msra.mxu0 %v5515
        %5545 = vmatprep.subr.mxu0 0.0
        %5546 = vmatpush1.msra.mxu0 %v5516
        %5547 = vmatprep.subr.mxu0 0.0
        %5548 = vmatpush1.msra.mxu0 %v5517
        %5549 = vmatprep.subr.mxu0 0.0
        %5550 = vmatpush1.msra.mxu0 %v5518
        %5551 = vmatprep.subr.mxu0 0.0
        %5552 = vmatpush1.msra.mxu0 %v5519
        %5553 = vmatprep.subr.mxu0 0.0
        %5554 = vmatpush1.msra.mxu0 %v5520
        %5555 = vmatprep.subr.mxu0 0.0
        %5556 = vmatpush1.msra.mxu0 %v5521
        %5557 = vmatprep.subr.mxu0 0.0
        %5558 = vmatpush1.msra.mxu0 %v5522
        %5559 = vmatprep.subr.mxu0 0.0
        %5560 = vmatpush1.msra.mxu0 %v5523
        %5561 = vmatprep.subr.mxu0 0.0
        %5562 = vmatpush1.msra.mxu0 %v5524
        %5563 = vmatprep.subr.mxu0 0.0
        %5564 = vmatpush1.msra.mxu0 %v5525
        %5565 = vmatprep.subr.mxu0 0.0
        %5566 = vmatpush1.msra.mxu0 %v5526
        %5567 = vmatprep.subr.mxu0 0.0
        %5568 = vmatpush1.msra.mxu0 %v5527
        %5569 = vmatprep.subr.mxu0 0.0
        %5570 = vmatpush1.msra.mxu0 %v5528
        %5571 = vmatprep.subr.mxu0 0.0
        %5572 = vmatpush1.msra.mxu0 %v5529
        %5573 = vmatprep.subr.mxu0 0.0
        %5574 = vmatpush1.msra.mxu0 %v5530
        %5575 = vmatprep.subr.mxu0 0.0
        %5576 = vmatpush1.msra.mxu0 %v5531
        %5577 = vmatprep.subr.mxu0 0.0
        %5578 = vmatpush1.msra.mxu0 %v5532
        %5579 = vmatprep.subr.mxu0 0.0
        %5580 = vmatpush1.msra.mxu0 %v5533
        %5581 = vmatprep.subr.mxu0 0.0
        %5582 = vmatpush1.msra.mxu0 %v5534
        %5583 = vmatprep.subr.mxu0 0.0
        %5584 = vmatpush1.msra.mxu0 %v5535
        %5585 = vmatprep.subr.mxu0 0.0
        %5586 = vmatpush1.msra.mxu0 %v5536
        %5587 = vmatprep.subr.mxu0 0.0
        %5588 = vmatpush1.msra.mxu0 0.0
        %5589 = vmatprep.subr.mxu0 0.0
        %5590 = vmatpush1.msra.mxu0 0.0
        %5591 = vmatprep.subr.mxu0 0.0
        %5592 = vmatpush1.msra.mxu0 0.0
        %5593 = vmatprep.subr.mxu0 0.0
        %5594 = vmatpush1.msra.mxu0 0.0
        %5595 = vmatprep.subr.mxu0 0.0
        %5596 = vmatpush1.msra.mxu0 0.0
        %5597 = vmatprep.subr.mxu0 0.0
        %5598 = vmatpush1.msra.mxu0 0.0
        %5599 = vmatprep.subr.mxu0 0.0
        %5600 = vmatpush1.msra.mxu0 0.0
        %5601 = vmatprep.subr.mxu0 0.0
        %5602 = vmatpush1.msra.mxu0 0.0
        %5603 = vmatprep.subr.mxu0 0.0
        %5604 = vmatpush1.msra.mxu0 0.0
        %5605 = vmatprep.subr.mxu0 0.0
        %5606 = vmatpush1.msra.mxu0 0.0
        %5607 = vmatprep.mubr.f32.mxu0 %v5541
        %5608 = vmatmul.mubr.f32.gmra.mrb[0].mxu0 %v5538
        %v5609 = vpop.f32.mrb[0].mxu0
        %v5610 = vadd.f32 0.0, %v5609
        %v5611 = vpop.f32.mrb[0].mxu0
        %5612 = vdwg.mxu0
        %v5613 = vadd.f32 %v5513, %v5610
        %s5614 = scalar_lea.vmem %s9, 3168
        %v5615 = vld [vmem:[%s5614] sm:$0xff]
        %v5616 = vld [vmem:[%s5614 + $0x8] sm:$0xff]
        %v5617 = vld [vmem:[%s5614 + $0x10] sm:$0xff]
        %v5618 = vld [vmem:[%s5614 + $0x18] sm:$0xff]
        %v5619 = vld [vmem:[%s5614 + $0x20] sm:$0xff]
        %v5620 = vld [vmem:[%s5614 + $0x28] sm:$0xff]
        %v5621 = vld [vmem:[%s5614 + $0x30] sm:$0xff]
        %v5622 = vld [vmem:[%s5614 + $0x38] sm:$0xff]
        %v5623 = vld [vmem:[%s5614 + $0x40] sm:$0xff]
        %v5624 = vld [vmem:[%s5614 + $0x48] sm:$0xff]
        %v5625 = vld [vmem:[%s5614 + $0x50] sm:$0xff]
        %v5626 = vld [vmem:[%s5614 + $0x58] sm:$0xff]
        %v5627 = vld [vmem:[%s5614 + $0x60] sm:$0xff]
        %v5628 = vld [vmem:[%s5614 + $0x68] sm:$0xff]
        %v5629 = vld [vmem:[%s5614 + $0x70] sm:$0xff]
        %v5630 = vld [vmem:[%s5614 + $0x78] sm:$0xff]
        %v5631 = vld [vmem:[%s5614 + $0x80] sm:$0xff]
        %v5632 = vld [vmem:[%s5614 + $0x88] sm:$0xff]
        %v5633 = vld [vmem:[%s5614 + $0x90] sm:$0xff]
        %v5634 = vld [vmem:[%s5614 + $0x98] sm:$0xff]
        %v5635 = vld [vmem:[%s5614 + $0xa0] sm:$0xff]
        %v5636 = vld [vmem:[%s5614 + $0xa8] sm:$0xff]
        %v5637 = vrot.slane %v3835, 2
        %v5638 = vrot.slane %v3836, 2
        %v5640 = vsel %vm3887, %v5638, 0
        %5642 = vmatprep.subr.mxu0 0.0
        %5643 = vmatpush1.msra.mxu0 %v5615
        %5644 = vmatprep.subr.mxu0 0.0
        %5645 = vmatpush1.msra.mxu0 %v5616
        %5646 = vmatprep.subr.mxu0 0.0
        %5647 = vmatpush1.msra.mxu0 %v5617
        %5648 = vmatprep.subr.mxu0 0.0
        %5649 = vmatpush1.msra.mxu0 %v5618
        %5650 = vmatprep.subr.mxu0 0.0
        %5651 = vmatpush1.msra.mxu0 %v5619
        %5652 = vmatprep.subr.mxu0 0.0
        %5653 = vmatpush1.msra.mxu0 %v5620
        %5654 = vmatprep.subr.mxu0 0.0
        %5655 = vmatpush1.msra.mxu0 %v5621
        %5656 = vmatprep.subr.mxu0 0.0
        %5657 = vmatpush1.msra.mxu0 %v5622
        %5658 = vmatprep.subr.mxu0 0.0
        %5659 = vmatpush1.msra.mxu0 %v5623
        %5660 = vmatprep.subr.mxu0 0.0
        %5661 = vmatpush1.msra.mxu0 %v5624
        %5662 = vmatprep.subr.mxu0 0.0
        %5663 = vmatpush1.msra.mxu0 %v5625
        %5664 = vmatprep.subr.mxu0 0.0
        %5665 = vmatpush1.msra.mxu0 %v5626
        %5666 = vmatprep.subr.mxu0 0.0
        %5667 = vmatpush1.msra.mxu0 %v5627
        %5668 = vmatprep.subr.mxu0 0.0
        %5669 = vmatpush1.msra.mxu0 %v5628
        %5670 = vmatprep.subr.mxu0 0.0
        %5671 = vmatpush1.msra.mxu0 %v5629
        %5672 = vmatprep.subr.mxu0 0.0
        %5673 = vmatpush1.msra.mxu0 %v5630
        %5674 = vmatprep.subr.mxu0 0.0
        %5675 = vmatpush1.msra.mxu0 %v5631
        %5676 = vmatprep.subr.mxu0 0.0
        %5677 = vmatpush1.msra.mxu0 %v5632
        %5678 = vmatprep.subr.mxu0 0.0
        %5679 = vmatpush1.msra.mxu0 %v5633
        %5680 = vmatprep.subr.mxu0 0.0
        %5681 = vmatpush1.msra.mxu0 %v5634
        %5682 = vmatprep.subr.mxu0 0.0
        %5683 = vmatpush1.msra.mxu0 %v5635
        %5684 = vmatprep.subr.mxu0 0.0
        %5685 = vmatpush1.msra.mxu0 %v5636
        %5686 = vmatprep.subr.mxu0 0.0
        %5687 = vmatpush1.msra.mxu0 0.0
        %5688 = vmatprep.subr.mxu0 0.0
        %5689 = vmatpush1.msra.mxu0 0.0
        %5690 = vmatprep.subr.mxu0 0.0
        %5691 = vmatpush1.msra.mxu0 0.0
        %5692 = vmatprep.subr.mxu0 0.0
        %5693 = vmatpush1.msra.mxu0 0.0
        %5694 = vmatprep.subr.mxu0 0.0
        %5695 = vmatpush1.msra.mxu0 0.0
        %5696 = vmatprep.subr.mxu0 0.0
        %5697 = vmatpush1.msra.mxu0 0.0
        %5698 = vmatprep.subr.mxu0 0.0
        %5699 = vmatpush1.msra.mxu0 0.0
        %5700 = vmatprep.subr.mxu0 0.0
        %5701 = vmatpush1.msra.mxu0 0.0
        %5702 = vmatprep.subr.mxu0 0.0
        %5703 = vmatpush1.msra.mxu0 0.0
        %5704 = vmatprep.subr.mxu0 0.0
        %5705 = vmatpush1.msra.mxu0 0.0
        %5706 = vmatprep.mubr.f32.mxu0 %v5640
        %5707 = vmatmul.mubr.f32.gmra.mrb[0].mxu0 %v5637
        %v5708 = vpop.f32.mrb[0].mxu0
        %v5709 = vadd.f32 0.0, %v5708
        %v5710 = vpop.f32.mrb[0].mxu0
        %5711 = vdwg.mxu0
        %v5712 = vadd.f32 %v5613, %v5709
        %s5713 = scalar_lea.vmem %s9, 3344
        %v5714 = vld [vmem:[%s5713] sm:$0xff]
        %v5715 = vld [vmem:[%s5713 + $0x8] sm:$0xff]
        %v5716 = vld [vmem:[%s5713 + $0x10] sm:$0xff]
        %v5717 = vld [vmem:[%s5713 + $0x18] sm:$0xff]
        %v5718 = vld [vmem:[%s5713 + $0x20] sm:$0xff]
        %v5719 = vld [vmem:[%s5713 + $0x28] sm:$0xff]
        %v5720 = vld [vmem:[%s5713 + $0x30] sm:$0xff]
        %v5721 = vld [vmem:[%s5713 + $0x38] sm:$0xff]
        %v5722 = vld [vmem:[%s5713 + $0x40] sm:$0xff]
        %v5723 = vld [vmem:[%s5713 + $0x48] sm:$0xff]
        %v5724 = vld [vmem:[%s5713 + $0x50] sm:$0xff]
        %v5725 = vld [vmem:[%s5713 + $0x58] sm:$0xff]
        %v5726 = vld [vmem:[%s5713 + $0x60] sm:$0xff]
        %v5727 = vld [vmem:[%s5713 + $0x68] sm:$0xff]
        %v5728 = vld [vmem:[%s5713 + $0x70] sm:$0xff]
        %v5729 = vld [vmem:[%s5713 + $0x78] sm:$0xff]
        %v5730 = vld [vmem:[%s5713 + $0x80] sm:$0xff]
        %v5731 = vld [vmem:[%s5713 + $0x88] sm:$0xff]
        %v5732 = vld [vmem:[%s5713 + $0x90] sm:$0xff]
        %v5733 = vld [vmem:[%s5713 + $0x98] sm:$0xff]
        %v5734 = vld [vmem:[%s5713 + $0xa0] sm:$0xff]
        %v5735 = vld [vmem:[%s5713 + $0xa8] sm:$0xff]
        %v5736 = vrot.slane %v3835, 3
        %v5737 = vrot.slane %v3836, 3
        %v5739 = vsel %vm3887, %v5737, 0
        %5741 = vmatprep.subr.mxu0 0.0
        %5742 = vmatpush1.msra.mxu0 %v5714
        %5743 = vmatprep.subr.mxu0 0.0
        %5744 = vmatpush1.msra.mxu0 %v5715
        %5745 = vmatprep.subr.mxu0 0.0
        %5746 = vmatpush1.msra.mxu0 %v5716
        %5747 = vmatprep.subr.mxu0 0.0
        %5748 = vmatpush1.msra.mxu0 %v5717
        %5749 = vmatprep.subr.mxu0 0.0
        %5750 = vmatpush1.msra.mxu0 %v5718
        %5751 = vmatprep.subr.mxu0 0.0
        %5752 = vmatpush1.msra.mxu0 %v5719
        %5753 = vmatprep.subr.mxu0 0.0
        %5754 = vmatpush1.msra.mxu0 %v5720
        %5755 = vmatprep.subr.mxu0 0.0
        %5756 = vmatpush1.msra.mxu0 %v5721
        %5757 = vmatprep.subr.mxu0 0.0
        %5758 = vmatpush1.msra.mxu0 %v5722
        %5759 = vmatprep.subr.mxu0 0.0
        %5760 = vmatpush1.msra.mxu0 %v5723
        %5761 = vmatprep.subr.mxu0 0.0
        %5762 = vmatpush1.msra.mxu0 %v5724
        %5763 = vmatprep.subr.mxu0 0.0
        %5764 = vmatpush1.msra.mxu0 %v5725
        %5765 = vmatprep.subr.mxu0 0.0
        %5766 = vmatpush1.msra.mxu0 %v5726
        %5767 = vmatprep.subr.mxu0 0.0
        %5768 = vmatpush1.msra.mxu0 %v5727
        %5769 = vmatprep.subr.mxu0 0.0
        %5770 = vmatpush1.msra.mxu0 %v5728
        %5771 = vmatprep.subr.mxu0 0.0
        %5772 = vmatpush1.msra.mxu0 %v5729
        %5773 = vmatprep.subr.mxu0 0.0
        %5774 = vmatpush1.msra.mxu0 %v5730
        %5775 = vmatprep.subr.mxu0 0.0
        %5776 = vmatpush1.msra.mxu0 %v5731
        %5777 = vmatprep.subr.mxu0 0.0
        %5778 = vmatpush1.msra.mxu0 %v5732
        %5779 = vmatprep.subr.mxu0 0.0
        %5780 = vmatpush1.msra.mxu0 %v5733
        %5781 = vmatprep.subr.mxu0 0.0
        %5782 = vmatpush1.msra.mxu0 %v5734
        %5783 = vmatprep.subr.mxu0 0.0
        %5784 = vmatpush1.msra.mxu0 %v5735
        %5785 = vmatprep.subr.mxu0 0.0
        %5786 = vmatpush1.msra.mxu0 0.0
        %5787 = vmatprep.subr.mxu0 0.0
        %5788 = vmatpush1.msra.mxu0 0.0
        %5789 = vmatprep.subr.mxu0 0.0
        %5790 = vmatpush1.msra.mxu0 0.0
        %5791 = vmatprep.subr.mxu0 0.0
        %5792 = vmatpush1.msra.mxu0 0.0
        %5793 = vmatprep.subr.mxu0 0.0
        %5794 = vmatpush1.msra.mxu0 0.0
        %5795 = vmatprep.subr.mxu0 0.0
        %5796 = vmatpush1.msra.mxu0 0.0
        %5797 = vmatprep.subr.mxu0 0.0
        %5798 = vmatpush1.msra.mxu0 0.0
        %5799 = vmatprep.subr.mxu0 0.0
        %5800 = vmatpush1.msra.mxu0 0.0
        %5801 = vmatprep.subr.mxu0 0.0
        %5802 = vmatpush1.msra.mxu0 0.0
        %5803 = vmatprep.subr.mxu0 0.0
        %5804 = vmatpush1.msra.mxu0 0.0
        %5805 = vmatprep.mubr.f32.mxu0 %v5739
        %5806 = vmatmul.mubr.f32.gmra.mrb[0].mxu0 %v5736
        %v5807 = vpop.f32.mrb[0].mxu0
        %v5808 = vadd.f32 0.0, %v5807
        %v5809 = vpop.f32.mrb[0].mxu0
        %5810 = vdwg.mxu0
        %v5811 = vadd.f32 %v5712, %v5808
        %s5812 = scalar_lea.vmem %s9, 3520
        %v5813 = vld [vmem:[%s5812] sm:$0xff]
        %v5814 = vld [vmem:[%s5812 + $0x8] sm:$0xff]
        %v5815 = vld [vmem:[%s5812 + $0x10] sm:$0xff]
        %v5816 = vld [vmem:[%s5812 + $0x18] sm:$0xff]
        %v5817 = vld [vmem:[%s5812 + $0x20] sm:$0xff]
        %v5818 = vld [vmem:[%s5812 + $0x28] sm:$0xff]
        %v5819 = vld [vmem:[%s5812 + $0x30] sm:$0xff]
        %v5820 = vld [vmem:[%s5812 + $0x38] sm:$0xff]
        %v5821 = vld [vmem:[%s5812 + $0x40] sm:$0xff]
        %v5822 = vld [vmem:[%s5812 + $0x48] sm:$0xff]
        %v5823 = vld [vmem:[%s5812 + $0x50] sm:$0xff]
        %v5824 = vld [vmem:[%s5812 + $0x58] sm:$0xff]
        %v5825 = vld [vmem:[%s5812 + $0x60] sm:$0xff]
        %v5826 = vld [vmem:[%s5812 + $0x68] sm:$0xff]
        %v5827 = vld [vmem:[%s5812 + $0x70] sm:$0xff]
        %v5828 = vld [vmem:[%s5812 + $0x78] sm:$0xff]
        %v5829 = vld [vmem:[%s5812 + $0x80] sm:$0xff]
        %v5830 = vld [vmem:[%s5812 + $0x88] sm:$0xff]
        %v5831 = vld [vmem:[%s5812 + $0x90] sm:$0xff]
        %v5832 = vld [vmem:[%s5812 + $0x98] sm:$0xff]
        %v5833 = vld [vmem:[%s5812 + $0xa0] sm:$0xff]
        %v5834 = vld [vmem:[%s5812 + $0xa8] sm:$0xff]
        %v5835 = vrot.slane %v3835, 4
        %v5836 = vrot.slane %v3836, 4
        %v5838 = vsel %vm3887, %v5836, 0
        %5840 = vmatprep.subr.mxu0 0.0
        %5841 = vmatpush1.msra.mxu0 %v5813
        %5842 = vmatprep.subr.mxu0 0.0
        %5843 = vmatpush1.msra.mxu0 %v5814
        %5844 = vmatprep.subr.mxu0 0.0
        %5845 = vmatpush1.msra.mxu0 %v5815
        %5846 = vmatprep.subr.mxu0 0.0
        %5847 = vmatpush1.msra.mxu0 %v5816
        %5848 = vmatprep.subr.mxu0 0.0
        %5849 = vmatpush1.msra.mxu0 %v5817
        %5850 = vmatprep.subr.mxu0 0.0
        %5851 = vmatpush1.msra.mxu0 %v5818
        %5852 = vmatprep.subr.mxu0 0.0
        %5853 = vmatpush1.msra.mxu0 %v5819
        %5854 = vmatprep.subr.mxu0 0.0
        %5855 = vmatpush1.msra.mxu0 %v5820
        %5856 = vmatprep.subr.mxu0 0.0
        %5857 = vmatpush1.msra.mxu0 %v5821
        %5858 = vmatprep.subr.mxu0 0.0
        %5859 = vmatpush1.msra.mxu0 %v5822
        %5860 = vmatprep.subr.mxu0 0.0
        %5861 = vmatpush1.msra.mxu0 %v5823
        %5862 = vmatprep.subr.mxu0 0.0
        %5863 = vmatpush1.msra.mxu0 %v5824
        %5864 = vmatprep.subr.mxu0 0.0
        %5865 = vmatpush1.msra.mxu0 %v5825
        %5866 = vmatprep.subr.mxu0 0.0
        %5867 = vmatpush1.msra.mxu0 %v5826
        %5868 = vmatprep.subr.mxu0 0.0
        %5869 = vmatpush1.msra.mxu0 %v5827
        %5870 = vmatprep.subr.mxu0 0.0
        %5871 = vmatpush1.msra.mxu0 %v5828
        %5872 = vmatprep.subr.mxu0 0.0
        %5873 = vmatpush1.msra.mxu0 %v5829
        %5874 = vmatprep.subr.mxu0 0.0
        %5875 = vmatpush1.msra.mxu0 %v5830
        %5876 = vmatprep.subr.mxu0 0.0
        %5877 = vmatpush1.msra.mxu0 %v5831
        %5878 = vmatprep.subr.mxu0 0.0
        %5879 = vmatpush1.msra.mxu0 %v5832
        %5880 = vmatprep.subr.mxu0 0.0
        %5881 = vmatpush1.msra.mxu0 %v5833
        %5882 = vmatprep.subr.mxu0 0.0
        %5883 = vmatpush1.msra.mxu0 %v5834
        %5884 = vmatprep.subr.mxu0 0.0
        %5885 = vmatpush1.msra.mxu0 0.0
        %5886 = vmatprep.subr.mxu0 0.0
        %5887 = vmatpush1.msra.mxu0 0.0
        %5888 = vmatprep.subr.mxu0 0.0
        %5889 = vmatpush1.msra.mxu0 0.0
        %5890 = vmatprep.subr.mxu0 0.0
        %5891 = vmatpush1.msra.mxu0 0.0
        %5892 = vmatprep.subr.mxu0 0.0
        %5893 = vmatpush1.msra.mxu0 0.0
        %5894 = vmatprep.subr.mxu0 0.0
        %5895 = vmatpush1.msra.mxu0 0.0
        %5896 = vmatprep.subr.mxu0 0.0
        %5897 = vmatpush1.msra.mxu0 0.0
        %5898 = vmatprep.subr.mxu0 0.0
        %5899 = vmatpush1.msra.mxu0 0.0
        %5900 = vmatprep.subr.mxu0 0.0
        %5901 = vmatpush1.msra.mxu0 0.0
        %5902 = vmatprep.subr.mxu0 0.0
        %5903 = vmatpush1.msra.mxu0 0.0
        %5904 = vmatprep.mubr.f32.mxu0 %v5838
        %5905 = vmatmul.mubr.f32.gmra.mrb[0].mxu0 %v5835
        %v5906 = vpop.f32.mrb[0].mxu0
        %v5907 = vadd.f32 0.0, %v5906
        %v5908 = vpop.f32.mrb[0].mxu0
        %5909 = vdwg.mxu0
        %v5910 = vadd.f32 %v5811, %v5907
        %s5911 = scalar_lea.vmem %s9, 3696
        %v5912 = vld [vmem:[%s5911] sm:$0xff]
        %v5913 = vld [vmem:[%s5911 + $0x8] sm:$0xff]
        %v5914 = vld [vmem:[%s5911 + $0x10] sm:$0xff]
        %v5915 = vld [vmem:[%s5911 + $0x18] sm:$0xff]
        %v5916 = vld [vmem:[%s5911 + $0x20] sm:$0xff]
        %v5917 = vld [vmem:[%s5911 + $0x28] sm:$0xff]
        %v5918 = vld [vmem:[%s5911 + $0x30] sm:$0xff]
        %v5919 = vld [vmem:[%s5911 + $0x38] sm:$0xff]
        %v5920 = vld [vmem:[%s5911 + $0x40] sm:$0xff]
        %v5921 = vld [vmem:[%s5911 + $0x48] sm:$0xff]
        %v5922 = vld [vmem:[%s5911 + $0x50] sm:$0xff]
        %v5923 = vld [vmem:[%s5911 + $0x58] sm:$0xff]
        %v5924 = vld [vmem:[%s5911 + $0x60] sm:$0xff]
        %v5925 = vld [vmem:[%s5911 + $0x68] sm:$0xff]
        %v5926 = vld [vmem:[%s5911 + $0x70] sm:$0xff]
        %v5927 = vld [vmem:[%s5911 + $0x78] sm:$0xff]
        %v5928 = vld [vmem:[%s5911 + $0x80] sm:$0xff]
        %v5929 = vld [vmem:[%s5911 + $0x88] sm:$0xff]
        %v5930 = vld [vmem:[%s5911 + $0x90] sm:$0xff]
        %v5931 = vld [vmem:[%s5911 + $0x98] sm:$0xff]
        %v5932 = vld [vmem:[%s5911 + $0xa0] sm:$0xff]
        %v5933 = vld [vmem:[%s5911 + $0xa8] sm:$0xff]
        %v5934 = vrot.slane %v3835, 5
        %v5935 = vrot.slane %v3836, 5
        %v5937 = vsel %vm3887, %v5935, 0
        %5939 = vmatprep.subr.mxu0 0.0
        %5940 = vmatpush1.msra.mxu0 %v5912
        %5941 = vmatprep.subr.mxu0 0.0
        %5942 = vmatpush1.msra.mxu0 %v5913
        %5943 = vmatprep.subr.mxu0 0.0
        %5944 = vmatpush1.msra.mxu0 %v5914
        %5945 = vmatprep.subr.mxu0 0.0
        %5946 = vmatpush1.msra.mxu0 %v5915
        %5947 = vmatprep.subr.mxu0 0.0
        %5948 = vmatpush1.msra.mxu0 %v5916
        %5949 = vmatprep.subr.mxu0 0.0
        %5950 = vmatpush1.msra.mxu0 %v5917
        %5951 = vmatprep.subr.mxu0 0.0
        %5952 = vmatpush1.msra.mxu0 %v5918
        %5953 = vmatprep.subr.mxu0 0.0
        %5954 = vmatpush1.msra.mxu0 %v5919
        %5955 = vmatprep.subr.mxu0 0.0
        %5956 = vmatpush1.msra.mxu0 %v5920
        %5957 = vmatprep.subr.mxu0 0.0
        %5958 = vmatpush1.msra.mxu0 %v5921
        %5959 = vmatprep.subr.mxu0 0.0
        %5960 = vmatpush1.msra.mxu0 %v5922
        %5961 = vmatprep.subr.mxu0 0.0
        %5962 = vmatpush1.msra.mxu0 %v5923
        %5963 = vmatprep.subr.mxu0 0.0
        %5964 = vmatpush1.msra.mxu0 %v5924
        %5965 = vmatprep.subr.mxu0 0.0
        %5966 = vmatpush1.msra.mxu0 %v5925
        %5967 = vmatprep.subr.mxu0 0.0
        %5968 = vmatpush1.msra.mxu0 %v5926
        %5969 = vmatprep.subr.mxu0 0.0
        %5970 = vmatpush1.msra.mxu0 %v5927
        %5971 = vmatprep.subr.mxu0 0.0
        %5972 = vmatpush1.msra.mxu0 %v5928
        %5973 = vmatprep.subr.mxu0 0.0
        %5974 = vmatpush1.msra.mxu0 %v5929
        %5975 = vmatprep.subr.mxu0 0.0
        %5976 = vmatpush1.msra.mxu0 %v5930
        %5977 = vmatprep.subr.mxu0 0.0
        %5978 = vmatpush1.msra.mxu0 %v5931
        %5979 = vmatprep.subr.mxu0 0.0
        %5980 = vmatpush1.msra.mxu0 %v5932
        %5981 = vmatprep.subr.mxu0 0.0
        %5982 = vmatpush1.msra.mxu0 %v5933
        %5983 = vmatprep.subr.mxu0 0.0
        %5984 = vmatpush1.msra.mxu0 0.0
        %5985 = vmatprep.subr.mxu0 0.0
        %5986 = vmatpush1.msra.mxu0 0.0
        %5987 = vmatprep.subr.mxu0 0.0
        %5988 = vmatpush1.msra.mxu0 0.0
        %5989 = vmatprep.subr.mxu0 0.0
        %5990 = vmatpush1.msra.mxu0 0.0
        %5991 = vmatprep.subr.mxu0 0.0
        %5992 = vmatpush1.msra.mxu0 0.0
        %5993 = vmatprep.subr.mxu0 0.0
        %5994 = vmatpush1.msra.mxu0 0.0
        %5995 = vmatprep.subr.mxu0 0.0
        %5996 = vmatpush1.msra.mxu0 0.0
        %5997 = vmatprep.subr.mxu0 0.0
        %5998 = vmatpush1.msra.mxu0 0.0
        %5999 = vmatprep.subr.mxu0 0.0
        %6000 = vmatpush1.msra.mxu0 0.0
        %6001 = vmatprep.subr.mxu0 0.0
        %6002 = vmatpush1.msra.mxu0 0.0
        %6003 = vmatprep.mubr.f32.mxu0 %v5937
        %6004 = vmatmul.mubr.f32.gmra.mrb[0].mxu0 %v5934
        %v6005 = vpop.f32.mrb[0].mxu0
        %v6006 = vadd.f32 0.0, %v6005
        %v6007 = vpop.f32.mrb[0].mxu0
        %6008 = vdwg.mxu0
        %v6009 = vadd.f32 %v5910, %v6006
        %v6010 = vld [vmem:[%s10] sm:$0x1]
        %v6011 = vadd.f32 %v6009, %v6010
        %vm6012 = vcmp.ge.f32.partialorder %v6011, 0.0
        %v6013 = vmul.f32 %v6011, 0.2
        %v6014 = vsel %vm6012, %v6011, %v6013
        %v6015 = vld [vmem:[%s11] sm:$0xff]
        %v6016 = vld [vmem:[%s11 + $0x8] sm:$0xff]
        %v6017 = vld [vmem:[%s11 + $0x10] sm:$0xff]
        %v6018 = vld [vmem:[%s11 + $0x18] sm:$0xff]
        %v6019 = vld [vmem:[%s11 + $0x20] sm:$0xff]
        %v6020 = vld [vmem:[%s11 + $0x28] sm:$0xff]
        %v6021 = vld [vmem:[%s11 + $0x30] sm:$0xff]
        %v6022 = vld [vmem:[%s11 + $0x38] sm:$0xff]
        %v6023 = vld [vmem:[%s12] sm:$0x1]
        %vm6024 = vcmask 523264
        %v6026 = vsel %vm6024, %v6014, 0
        %6028 = vmatprep.subr.mxu0 0.0
        %6029 = vmatpush1.msra.mxu0 %v6015
        %6030 = vmatprep.subr.mxu0 0.0
        %6031 = vmatpush1.msra.mxu0 %v6016
        %6032 = vmatprep.subr.mxu0 0.0
        %6033 = vmatpush1.msra.mxu0 %v6017
        %6034 = vmatprep.subr.mxu0 0.0
        %6035 = vmatpush1.msra.mxu0 %v6018
        %6036 = vmatprep.subr.mxu0 0.0
        %6037 = vmatpush1.msra.mxu0 %v6019
        %6038 = vmatprep.subr.mxu0 0.0
        %6039 = vmatpush1.msra.mxu0 %v6020
        %6040 = vmatprep.subr.mxu0 0.0
        %6041 = vmatpush1.msra.mxu0 %v6021
        %6042 = vmatprep.subr.mxu0 0.0
        %6043 = vmatpush1.msra.mxu0 %v6022
        %6044 = vmatprep.subr.mxu0 0.0
        %6045 = vmatpush1.msra.mxu0 0.0
        %6046 = vmatprep.subr.mxu0 0.0
        %6047 = vmatpush1.msra.mxu0 0.0
        %6048 = vmatprep.subr.mxu0 0.0
        %6049 = vmatpush1.msra.mxu0 0.0
        %6050 = vmatprep.subr.mxu0 0.0
        %6051 = vmatpush1.msra.mxu0 0.0
        %6052 = vmatprep.subr.mxu0 0.0
        %6053 = vmatpush1.msra.mxu0 0.0
        %6054 = vmatprep.subr.mxu0 0.0
        %6055 = vmatpush1.msra.mxu0 0.0
        %6056 = vmatprep.subr.mxu0 0.0
        %6057 = vmatpush1.msra.mxu0 0.0
        %6058 = vmatprep.subr.mxu0 0.0
        %6059 = vmatpush1.msra.mxu0 0.0
        %6060 = vmatprep.subr.mxu0 0.0
        %6061 = vmatpush1.msra.mxu0 0.0
        %6062 = vmatprep.subr.mxu0 0.0
        %6063 = vmatpush1.msra.mxu0 0.0
        %6064 = vmatprep.subr.mxu0 0.0
        %6065 = vmatpush1.msra.mxu0 0.0
        %6066 = vmatprep.subr.mxu0 0.0
        %6067 = vmatpush1.msra.mxu0 0.0
        %6068 = vmatprep.subr.mxu0 0.0
        %6069 = vmatpush1.msra.mxu0 0.0
        %6070 = vmatprep.subr.mxu0 0.0
        %6071 = vmatpush1.msra.mxu0 0.0
        %6072 = vmatprep.subr.mxu0 0.0
        %6073 = vmatpush1.msra.mxu0 0.0
        %6074 = vmatprep.subr.mxu0 0.0
        %6075 = vmatpush1.msra.mxu0 0.0
        %6076 = vmatprep.subr.mxu0 0.0
        %6077 = vmatpush1.msra.mxu0 0.0
        %6078 = vmatprep.subr.mxu0 0.0
        %6079 = vmatpush1.msra.mxu0 0.0
        %6080 = vmatprep.subr.mxu0 0.0
        %6081 = vmatpush1.msra.mxu0 0.0
        %6082 = vmatprep.subr.mxu0 0.0
        %6083 = vmatpush1.msra.mxu0 0.0
        %6084 = vmatprep.subr.mxu0 0.0
        %6085 = vmatpush1.msra.mxu0 0.0
        %6086 = vmatprep.subr.mxu0 0.0
        %6087 = vmatpush1.msra.mxu0 0.0
        %6088 = vmatprep.subr.mxu0 0.0
        %6089 = vmatpush1.msra.mxu0 0.0
        %6090 = vmatprep.subr.mxu0 0.0
        %6091 = vmatpush1.msra.mxu0 0.0
        %6092 = vmatprep.mubr.f32.mxu0 0.0
        %6093 = vmatmul.mubr.f32.gmra.mrb[0].mxu0 %v6026
        %v6094 = vpop.f32.mrb[0].mxu0
        %v6095 = vadd.f32 %v6023, %v6094
        %v6096 = vpop.f32.mrb[0].mxu0
        %6097 = vdwg.mxu0
        %vm6098 = vcmp.ge.f32.partialorder %v6095, 0.0
        %v6099 = vmul.f32 %v6095, 0.2
        %v6100 = vsel %vm6098, %v6095, %v6099
        %v6101 = vld [vmem:[%s13] sm:$0xff]
        %v6102 = vld [vmem:[%s13 + $0x8] sm:$0xff]
        %v6103 = vld [vmem:[%s13 + $0x10] sm:$0xff]
        %v6104 = vld [vmem:[%s13 + $0x18] sm:$0xff]
        %v6105 = vld [vmem:[%s14] sm:$0x1]
        %v6107 = vsel %vm911, %v6100, 0
        %6109 = vmatprep.subr.mxu0 0.0
        %6110 = vmatpush1.msra.mxu0 %v6101
        %6111 = vmatprep.subr.mxu0 0.0
        %6112 = vmatpush1.msra.mxu0 %v6102
        %6113 = vmatprep.subr.mxu0 0.0
        %6114 = vmatpush1.msra.mxu0 %v6103
        %6115 = vmatprep.subr.mxu0 0.0
        %6116 = vmatpush1.msra.mxu0 %v6104
        %6117 = vmatprep.subr.mxu0 0.0
        %6118 = vmatpush1.msra.mxu0 0.0
        %6119 = vmatprep.subr.mxu0 0.0
        %6120 = vmatpush1.msra.mxu0 0.0
        %6121 = vmatprep.subr.mxu0 0.0
        %6122 = vmatpush1.msra.mxu0 0.0
        %6123 = vmatprep.subr.mxu0 0.0
        %6124 = vmatpush1.msra.mxu0 0.0
        %6125 = vmatprep.subr.mxu0 0.0
        %6126 = vmatpush1.msra.mxu0 0.0
        %6127 = vmatprep.subr.mxu0 0.0
        %6128 = vmatpush1.msra.mxu0 0.0
        %6129 = vmatprep.subr.mxu0 0.0
        %6130 = vmatpush1.msra.mxu0 0.0
        %6131 = vmatprep.subr.mxu0 0.0
        %6132 = vmatpush1.msra.mxu0 0.0
        %6133 = vmatprep.subr.mxu0 0.0
        %6134 = vmatpush1.msra.mxu0 0.0
        %6135 = vmatprep.subr.mxu0 0.0
        %6136 = vmatpush1.msra.mxu0 0.0
        %6137 = vmatprep.subr.mxu0 0.0
        %6138 = vmatpush1.msra.mxu0 0.0
        %6139 = vmatprep.subr.mxu0 0.0
        %6140 = vmatpush1.msra.mxu0 0.0
        %6141 = vmatprep.subr.mxu0 0.0
        %6142 = vmatpush1.msra.mxu0 0.0
        %6143 = vmatprep.subr.mxu0 0.0
        %6144 = vmatpush1.msra.mxu0 0.0
        %6145 = vmatprep.subr.mxu0 0.0
        %6146 = vmatpush1.msra.mxu0 0.0
        %6147 = vmatprep.subr.mxu0 0.0
        %6148 = vmatpush1.msra.mxu0 0.0
        %6149 = vmatprep.subr.mxu0 0.0
        %6150 = vmatpush1.msra.mxu0 0.0
        %6151 = vmatprep.subr.mxu0 0.0
        %6152 = vmatpush1.msra.mxu0 0.0
        %6153 = vmatprep.subr.mxu0 0.0
        %6154 = vmatpush1.msra.mxu0 0.0
        %6155 = vmatprep.subr.mxu0 0.0
        %6156 = vmatpush1.msra.mxu0 0.0
        %6157 = vmatprep.subr.mxu0 0.0
        %6158 = vmatpush1.msra.mxu0 0.0
        %6159 = vmatprep.subr.mxu0 0.0
        %6160 = vmatpush1.msra.mxu0 0.0
        %6161 = vmatprep.subr.mxu0 0.0
        %6162 = vmatpush1.msra.mxu0 0.0
        %6163 = vmatprep.subr.mxu0 0.0
        %6164 = vmatpush1.msra.mxu0 0.0
        %6165 = vmatprep.subr.mxu0 0.0
        %6166 = vmatpush1.msra.mxu0 0.0
        %6167 = vmatprep.subr.mxu0 0.0
        %6168 = vmatpush1.msra.mxu0 0.0
        %6169 = vmatprep.subr.mxu0 0.0
        %6170 = vmatpush1.msra.mxu0 0.0
        %6171 = vmatprep.subr.mxu0 0.0
        %6172 = vmatpush1.msra.mxu0 0.0
        %6173 = vmatprep.mubr.f32.mxu0 0.0
        %6174 = vmatmul.mubr.f32.gmra.mrb[0].mxu0 %v6107
        %v6175 = vpop.f32.mrb[0].mxu0
        %v6176 = vadd.f32 %v6105, %v6175
        %v6177 = vpop.f32.mrb[0].mxu0
        %6178 = vdwg.mxu0
        %vm6179 = vcmp.ge.f32.partialorder %v6176, 0.0
        %v6180 = vmul.f32 %v6176, 0.2
        %v6181 = vsel %vm6179, %v6176, %v6180
        %v6182 = vld [vmem:[%s15] sm:$0xff]
        %v6183 = vld [vmem:[%s15 + $0x8] sm:$0xff]
        %v6184 = vld [vmem:[%s16] sm:$0x1]
        %vm6185 = vcmask 130048
        %v6187 = vsel %vm6185, %v6181, 0
        %6189 = vmatprep.subr.mxu0 0.0
        %6190 = vmatpush1.msra.mxu0 %v6182
        %6191 = vmatprep.subr.mxu0 0.0
        %6192 = vmatpush1.msra.mxu0 %v6183
        %6193 = vmatprep.subr.mxu0 0.0
        %6194 = vmatpush1.msra.mxu0 0.0
        %6195 = vmatprep.subr.mxu0 0.0
        %6196 = vmatpush1.msra.mxu0 0.0
        %6197 = vmatprep.subr.mxu0 0.0
        %6198 = vmatpush1.msra.mxu0 0.0
        %6199 = vmatprep.subr.mxu0 0.0
        %6200 = vmatpush1.msra.mxu0 0.0
        %6201 = vmatprep.subr.mxu0 0.0
        %6202 = vmatpush1.msra.mxu0 0.0
        %6203 = vmatprep.subr.mxu0 0.0
        %6204 = vmatpush1.msra.mxu0 0.0
        %6205 = vmatprep.subr.mxu0 0.0
        %6206 = vmatpush1.msra.mxu0 0.0
        %6207 = vmatprep.subr.mxu0 0.0
        %6208 = vmatpush1.msra.mxu0 0.0
        %6209 = vmatprep.subr.mxu0 0.0
        %6210 = vmatpush1.msra.mxu0 0.0
        %6211 = vmatprep.subr.mxu0 0.0
        %6212 = vmatpush1.msra.mxu0 0.0
        %6213 = vmatprep.subr.mxu0 0.0
        %6214 = vmatpush1.msra.mxu0 0.0
        %6215 = vmatprep.subr.mxu0 0.0
        %6216 = vmatpush1.msra.mxu0 0.0
        %6217 = vmatprep.subr.mxu0 0.0
        %6218 = vmatpush1.msra.mxu0 0.0
        %6219 = vmatprep.subr.mxu0 0.0
        %6220 = vmatpush1.msra.mxu0 0.0
        %6221 = vmatprep.subr.mxu0 0.0
        %6222 = vmatpush1.msra.mxu0 0.0
        %6223 = vmatprep.subr.mxu0 0.0
        %6224 = vmatpush1.msra.mxu0 0.0
        %6225 = vmatprep.subr.mxu0 0.0
        %6226 = vmatpush1.msra.mxu0 0.0
        %6227 = vmatprep.subr.mxu0 0.0
        %6228 = vmatpush1.msra.mxu0 0.0
        %6229 = vmatprep.subr.mxu0 0.0
        %6230 = vmatpush1.msra.mxu0 0.0
        %6231 = vmatprep.subr.mxu0 0.0
        %6232 = vmatpush1.msra.mxu0 0.0
        %6233 = vmatprep.subr.mxu0 0.0
        %6234 = vmatpush1.msra.mxu0 0.0
        %6235 = vmatprep.subr.mxu0 0.0
        %6236 = vmatpush1.msra.mxu0 0.0
        %6237 = vmatprep.subr.mxu0 0.0
        %6238 = vmatpush1.msra.mxu0 0.0
        %6239 = vmatprep.subr.mxu0 0.0
        %6240 = vmatpush1.msra.mxu0 0.0
        %6241 = vmatprep.subr.mxu0 0.0
        %6242 = vmatpush1.msra.mxu0 0.0
        %6243 = vmatprep.subr.mxu0 0.0
        %6244 = vmatpush1.msra.mxu0 0.0
        %6245 = vmatprep.subr.mxu0 0.0
        %6246 = vmatpush1.msra.mxu0 0.0
        %6247 = vmatprep.subr.mxu0 0.0
        %6248 = vmatpush1.msra.mxu0 0.0
        %6249 = vmatprep.subr.mxu0 0.0
        %6250 = vmatpush1.msra.mxu0 0.0
        %6251 = vmatprep.subr.mxu0 0.0
        %6252 = vmatpush1.msra.mxu0 0.0
        %6253 = vmatprep.mubr.f32.mxu0 0.0
        %6254 = vmatmul.mubr.f32.gmra.mrb[0].mxu0 %v6187
        %v6255 = vpop.f32.mrb[0].mxu0
        %v6256 = vadd.f32 %v6184, %v6255
        %v6257 = vpop.f32.mrb[0].mxu0
        %6258 = vdwg.mxu0
        %vm6259 = vcmp.ge.f32.partialorder %v6256, 0.0
        %v6260 = vmul.f32 %v6256, 0.2
        %v6261 = vsel %vm6259, %v6256, %v6260
        %v6262 = vld [vmem:[%s17] sm:$0xff]
        %v6263 = vld [vmem:[%s18] sm:$0x1]
        %vm6264 = vcmask 64512
        %v6266 = vsel %vm6264, %v6261, 0
        %6268 = vmatprep.subr.mxu0 0.0
        %6269 = vmatpush1.msra.mxu0 %v6262
        %6270 = vmatprep.subr.mxu0 0.0
        %6271 = vmatpush1.msra.mxu0 0.0
        %6272 = vmatprep.subr.mxu0 0.0
        %6273 = vmatpush1.msra.mxu0 0.0
        %6274 = vmatprep.subr.mxu0 0.0
        %6275 = vmatpush1.msra.mxu0 0.0
        %6276 = vmatprep.subr.mxu0 0.0
        %6277 = vmatpush1.msra.mxu0 0.0
        %6278 = vmatprep.subr.mxu0 0.0
        %6279 = vmatpush1.msra.mxu0 0.0
        %6280 = vmatprep.subr.mxu0 0.0
        %6281 = vmatpush1.msra.mxu0 0.0
        %6282 = vmatprep.subr.mxu0 0.0
        %6283 = vmatpush1.msra.mxu0 0.0
        %6284 = vmatprep.subr.mxu0 0.0
        %6285 = vmatpush1.msra.mxu0 0.0
        %6286 = vmatprep.subr.mxu0 0.0
        %6287 = vmatpush1.msra.mxu0 0.0
        %6288 = vmatprep.subr.mxu0 0.0
        %6289 = vmatpush1.msra.mxu0 0.0
        %6290 = vmatprep.subr.mxu0 0.0
        %6291 = vmatpush1.msra.mxu0 0.0
        %6292 = vmatprep.subr.mxu0 0.0
        %6293 = vmatpush1.msra.mxu0 0.0
        %6294 = vmatprep.subr.mxu0 0.0
        %6295 = vmatpush1.msra.mxu0 0.0
        %6296 = vmatprep.subr.mxu0 0.0
        %6297 = vmatpush1.msra.mxu0 0.0
        %6298 = vmatprep.subr.mxu0 0.0
        %6299 = vmatpush1.msra.mxu0 0.0
        %6300 = vmatprep.subr.mxu0 0.0
        %6301 = vmatpush1.msra.mxu0 0.0
        %6302 = vmatprep.subr.mxu0 0.0
        %6303 = vmatpush1.msra.mxu0 0.0
        %6304 = vmatprep.subr.mxu0 0.0
        %6305 = vmatpush1.msra.mxu0 0.0
        %6306 = vmatprep.subr.mxu0 0.0
        %6307 = vmatpush1.msra.mxu0 0.0
        %6308 = vmatprep.subr.mxu0 0.0
        %6309 = vmatpush1.msra.mxu0 0.0
        %6310 = vmatprep.subr.mxu0 0.0
        %6311 = vmatpush1.msra.mxu0 0.0
        %6312 = vmatprep.subr.mxu0 0.0
        %6313 = vmatpush1.msra.mxu0 0.0
        %6314 = vmatprep.subr.mxu0 0.0
        %6315 = vmatpush1.msra.mxu0 0.0
        %6316 = vmatprep.subr.mxu0 0.0
        %6317 = vmatpush1.msra.mxu0 0.0
        %6318 = vmatprep.subr.mxu0 0.0
        %6319 = vmatpush1.msra.mxu0 0.0
        %6320 = vmatprep.subr.mxu0 0.0
        %6321 = vmatpush1.msra.mxu0 0.0
        %6322 = vmatprep.subr.mxu0 0.0
        %6323 = vmatpush1.msra.mxu0 0.0
        %6324 = vmatprep.subr.mxu0 0.0
        %6325 = vmatpush1.msra.mxu0 0.0
        %6326 = vmatprep.subr.mxu0 0.0
        %6327 = vmatpush1.msra.mxu0 0.0
        %6328 = vmatprep.subr.mxu0 0.0
        %6329 = vmatpush1.msra.mxu0 0.0
        %6330 = vmatprep.subr.mxu0 0.0
        %6331 = vmatpush1.msra.mxu0 0.0
        %6332 = vmatprep.mubr.f32.mxu0 0.0
        %6333 = vmatmul.mubr.f32.gmra.mrb[0].mxu0 %v6266
        %v6334 = vpop.f32.mrb[0].mxu0
        %v6335 = vadd.f32 %v6263, %v6334
        %v6336 = vpop.f32.mrb[0].mxu0
        %6337 = vdwg.mxu0
        %vm6338 = vcmp.ge.f32.partialorder %v6335, 0.0
        %v6339 = vmul.f32 %v6335, 0.2
        %v6340 = vsel %vm6338, %v6335, %v6339
        %v6341 = vsub.f32 0.0, %v6340
        %v6342 = vmul.f32 %v6341, 1.442695
        %v6343 = vpow.pop %v6342
        %v6344 = vadd.f32 %v6343, 1.0
        %v6345 = vrcp.pop %v6344
        %v6346 = vmul.f32 1.0, %v6345
        %vm6347 = vcmask 24576
        %6348 = vst.msk [vmem:[%s594] sm:$0x1] %vm6347, %v6346
        %s6349 = sand.u32 %s445, 1
        %s6350 = scalar_lea.sflag [#allocation3], %s6349
        %s6351 = sand.u32 %s445, 1
        %s6352 = scalar_lea.vmem [#allocation2], %s6351
        // Predicated region
        $region97: #{multi_class_network_forward.1} parent=95 // pred_check
          %p6353 = pneg %p455
        $region98: #{multi_class_network_forward.1} parent=95 // pred_check_branch
          %6355 = sbr.rel (%p6353) target = $region100
        $region99: #{multi_class_network_forward.1} parent=95 // pred_region
          %s6357 = ssub.s32 16, 16
          %6358 = vsyncadd %s6350, %s6357
          %s6359 = smul.addr %s33, 16
          %s6360 = scalar_lea.hbm %s19, %s6359
          %s6362 = sshll.u32 %s6352, 4
          %s6363 = int_to_ptr.vmem [resolvable:$true] %s6362
          %6365 = dma.vmem_to_hbm [thread:$0]  %s6363, 16, %s6360, %s6350
        $region100: #{multi_class_network_forward.1} parent=95 // pred_fallthru
          _
      $region96: #{multi_class_network_forward.1} parent=5 // pred_fallthru
        _
      %p6366 = scmp.le.s32.totalorder 2, %s28
      // Predicated region
      $region101: #{multi_class_network_forward.1} parent=5 // pred_check
        %p6367 = pneg %p6366
      $region102: #{multi_class_network_forward.1} parent=5 // pred_check_branch
        %6369 = sbr.rel (%p6367) target = $region104
      $region103: #{multi_class_network_forward.1} parent=5 // pred_region
        %s6370 = ssub.s32 %s28, 2
        // Predicated region
        $region105: #{multi_class_network_forward.1} parent=103 // pred_check
          %p6371 = pneg %p461
        $region106: #{multi_class_network_forward.1} parent=103 // pred_check_branch
          %6373 = sbr.rel (%p6371) target = $region108
        $region107: #{multi_class_network_forward.1} parent=103 // pred_region
          %s6374 = sand.u32 %s446, 1
          %s6375 = scalar_lea.sflag [#allocation3], %s6374
          %s6376 = sand.u32 %s446, 1
          %s6377 = scalar_lea.vmem [#allocation2], %s6376
          %6378 = dma.done %s6375, 16
        $region108: #{multi_class_network_forward.1} parent=103 // pred_fallthru
          _
      $region104: #{multi_class_network_forward.1} parent=5 // pred_fallthru
        _
    $region6: #{multi_class_network_forward.1} parent=1 // loop_footer
      %s32 = sadd.s32 1, %s28
    $region7: #{multi_class_network_forward.1} parent=1 // loop_footer_branch
      %27 = sbr.rel target = $region3
    $region8: #{multi_class_network_forward.1} parent=1 // loop_exit
      _
    %6379 = vsyncpa [#allocation3], 1
    %s6380 = scalar_lea.sflag [#allocation3], 1
    %6381 = vsyncpa %s6380, 1

</llo_original>
